<compile_context>
chip_gen: v7x
topology: tpu7x:2x2x1
jax: 0.10.0
libtpu: 0.0.40
codegen_flags: <defaults>
</compile_context>

<pallas_src>
import jax
import jax.numpy as jnp
from jax.experimental import pallas as pl
from jax.experimental.pallas import tpu as pltpu

_LANE = 128


def _round_up(x, m):
    return (x + m - 1) // m * m


def _tiled_vmem_bytes(shape, dtype):
    """Physical VMEM footprint: minor dim padded to 128 lanes, second-minor
    padded to the packing-dependent sublane tile (8 f32 / 16 bf16)."""
    itemsize = jnp.dtype(dtype).itemsize
    sublane = 8 * (4 // itemsize)
    if len(shape) == 0:
        shape = (1, 1)
    elif len(shape) == 1:
        shape = (1,) + tuple(shape)
    lead = 1
    for d in shape[:-2]:
        lead *= int(d)
    return (lead * _round_up(int(shape[-2]), sublane)
            * _round_up(int(shape[-1]), _LANE) * itemsize)


def _basic_block_kernel(x_ref, w1_ref, b1_ref, w2_ref, b2_ref, o_ref,
                        pad_ref, col_ref):
    # x_ref : (B, H, W, C)   f32  unpadded NHWC input (also the identity)
    # w1_ref: (9*Cp, P)      bf16 conv1 weights, BN1 scale folded, tap stride Cp
    # w2_ref: (9*Cp, P)      bf16 conv2 weights, BN2 scale folded
    # b1_ref, b2_ref: (1, P) f32  folded BN biases
    # o_ref : (B, P, H*W)    f32  lane-dense output (H*W on the lane axis)
    # pad_ref: VMEM (B, H+2, W+2, Cp) f32  shared zero-padded buffer
    # col_ref: VMEM (B, H, W, 9*Cp)  bf16  im2col slab, 128-lane-aligned taps
    B, H, W, C = x_ref.shape
    P = o_ref.shape[1]
    Cp = pad_ref.shape[3]
    HW = H * W
    BHW = B * HW

    # Zero the padded scratch once per grid step: the border ring must be true
    # zeros; channel-pad lanes only need to be finite (their weight rows are
    # zero).  Re-done every step so it stays correct if the parallel batch
    # axis is split across TensorCores (each with its own scratch).
    pad_ref[...] = jnp.zeros(pad_ref.shape, pad_ref.dtype)

    def conv3x3(src_bhwc, w_ref):
        csrc = src_bhwc.shape[-1]
        # Write only the interior; border ring + channel padding stay zero.
        pad_ref[:, 1:H + 1, 1:W + 1, 0:csrc] = src_bhwc.astype(pad_ref.dtype)
        # Gather the 9 taps straight from the ref into 128-lane-aligned slots
        # of the slab: plain dense 4-D copies, no per-tap reshape/rotate.
        for kh in range(3):
            for kw in range(3):
                t = kh * 3 + kw
                col_ref[:, :, :, t * Cp:(t + 1) * Cp] = (
                    pad_ref[:, kh:kh + H, kw:kw + W, :].astype(col_ref.dtype))
        # One layout-preserving reshape (W % 8 == 0) and ONE MXU matmul with
        # bf16 operands and an f32 accumulator.
        slab = col_ref[...].reshape(BHW, 9 * Cp)
        return jnp.dot(slab, w_ref[...], preferred_element_type=jnp.float32)

    identity = x_ref[...].reshape(BHW, C)                        # (BHW, C) f32

    # conv1 (BN1 scale folded) + bias + ReLU — elementwise kept in f32 (v5e VPU).
    out1 = jnp.maximum(conv3x3(x_ref[...], w1_ref) + b1_ref[...], 0.0)

    # conv2 (BN2 scale folded) + bias + residual + ReLU.
    out2 = conv3x3(out1.reshape(B, H, W, P), w2_ref) + b2_ref[...]
    out2 = jnp.maximum(out2 + identity, 0.0)                     # (BHW, P)

    # Lane-dense store: per image (P, HW) with HW on the 128-lane axis.
    out2 = out2.reshape(B, HW, P)
    for b in range(B):
        o_ref[b] = out2[b].T.astype(o_ref.dtype)


def basic_block(x_nchw, w1, g1, beta1, m1, v1, w2, g2, beta2, m2, v2,
                eps=1e-5, batch_block=None):
    """x_nchw: (N, C, H, W) float32.  Conv weights in HWIO: (3, 3, Cin, P)."""
    N, C, H, W = x_nchw.shape
    P = w1.shape[3]
    assert C == P, "residual add requires inplanes == planes (downsample=None)"
    assert W % 8 == 0, "layout-free reshapes need W % 8 == 0"
    HW = H * W

    # Whole batch per grid step at small sizes (folds batch into matmul M);
    # set batch_block to split the grid (e.g. even #steps for v7x's two TCs).
    B = N if batch_block is None else batch_block
    assert N % B == 0

    # 128-lane-aligned per-tap channel stride.
    Cp = _round_up(C, _LANE)

    # Fold BatchNorm (inference mode): scale into conv weights, keep the bias.
    s1 = g1 / jnp.sqrt(v1 + eps)
    s2 = g2 / jnp.sqrt(v2 + eps)
    b1 = (beta1 - m1 * s1).reshape(1, P).astype(jnp.float32)
    b2 = (beta2 - m2 * s2).reshape(1, P).astype(jnp.float32)

    def fold_weights(w, s):
        wm = (w.astype(jnp.float32) * s).reshape(9, -1, P)        # (9, Cin, P)
        cin = wm.shape[1]
        wp = jnp.zeros((9, Cp, P), jnp.float32).at[:, :cin, :].set(wm)
        return wp.reshape(9 * Cp, P).astype(jnp.bfloat16)         # bf16 MXU operand

    w1_mat = fold_weights(w1, s1)
    w2_mat = fold_weights(w2, s2)

    # NCHW -> NHWC (in a full residual stack activations would stay NHWC and
    # this single transpose disappears).
    x_nhwc = jnp.transpose(x_nchw, (0, 2, 3, 1)).astype(jnp.float32)

    # VMEM budget from tiled physical footprints (not logical element counts).
    tb = _tiled_vmem_bytes
    vmem_limit = (
        2 * tb((B, H, W, C), jnp.float32)            # input block (double-buffered)
        + 2 * tb((B, P, HW), jnp.float32)            # output block (double-buffered)
        + 2 * (2 * tb((9 * Cp, P), jnp.bfloat16)     # weights (double-buffered; see TODO)
               + 2 * tb((1, P), jnp.float32))        # biases
        + tb((B, H + 2, W + 2, Cp), jnp.float32)     # padded scratch
        + tb((B, H, W, 9 * Cp), jnp.bfloat16)        # im2col slab
        + (2 << 20)                                  # compiler headroom
    )

    out_flat = pl.pallas_call(
        _basic_block_kernel,
        out_shape=jax.ShapeDtypeStruct((N, P, HW), jnp.float32),
        grid_spec=pltpu.PrefetchScalarGridSpec(
            num_scalar_prefetch=0,
            grid=(N // B,),
            in_specs=[
                pl.BlockSpec((B, H, W, C), lambda n: (n, 0, 0, 0)),
                pl.BlockSpec((9 * Cp, P), lambda n: (0, 0)),
                pl.BlockSpec((1, P), lambda n: (0, 0)),
                pl.BlockSpec((9 * Cp, P), lambda n: (0, 0)),
                pl.BlockSpec((1, P), lambda n: (0, 0)),
            ],
            out_specs=pl.BlockSpec((B, P, HW), lambda n: (n, 0, 0)),
            scratch_shapes=[
                pltpu.VMEM((B, H + 2, W + 2, Cp), jnp.float32),   # padded buffer
                pltpu.VMEM((B, H, W, 9 * Cp), jnp.bfloat16),      # im2col slab
            ],
        ),
        compiler_params=pltpu.CompilerParams(
            dimension_semantics=("parallel",),
            vmem_limit_bytes=int(vmem_limit)),
    )(x_nhwc, w1_mat, b1, w2_mat, b2)

    # (N, P, H*W) is already channel-major: a free reshape gives NCHW.
    return out_flat.reshape(N, P, H, W)


def _reference(x_nchw, w1, g1, beta1, m1, v1, w2, g2, beta2, m2, v2,
               eps=1e-5):
    """Pure-JAX reference (lax.conv), NCHW, for correctness check."""
    def conv3x3(x, w_hwio):
        return jax.lax.conv_general_dilated(
            x, w_hwio, window_strides=(1, 1), padding=((1, 1), (1, 1)),
            dimension_numbers=("NCHW", "HWIO", "NCHW"))

    def bn(x, g, b, m, v):
        sc = (g / jnp.sqrt(v + eps)).reshape(1, -1, 1, 1)
        bi = (b - m * g / jnp.sqrt(v + eps)).reshape(1, -1, 1, 1)
        return x * sc + bi

    out = jnp.maximum(bn(conv3x3(x_nchw, w1), g1, beta1, m1, v1), 0.0)
    out = bn(conv3x3(out, w2), g2, beta2, m2, v2)
    return jnp.maximum(out + x_nchw, 0.0)


if __name__ == "__main__":
    key = jax.random.PRNGKey(0)
    N, C, H, W = 2, 4, 16, 16   # inplanes = planes = 4, stride = 1
    P = C

    ks = jax.random.split(key, 9)
    x = jax.random.normal(ks[0], (N, C, H, W), jnp.float32)

    # Conv weights in HWIO layout, deterministic init.
    w1 = jax.random.normal(ks[1], (3, 3, C, P), jnp.float32) * 0.1
    w2 = jax.random.normal(ks[2], (3, 3, P, P), jnp.float32) * 0.1

    # BatchNorm params + running stats (inference mode).
    g1 = 1.0 + 0.1 * jax.random.normal(ks[3], (P,), jnp.float32)
    beta1 = 0.1 * jax.random.normal(ks[4], (P,), jnp.float32)
    m1 = 0.1 * jax.random.normal(ks[5], (P,), jnp.float32)
    v1 = 0.5 + jax.random.uniform(ks[6], (P,), jnp.float32)

    g2 = 1.0 + 0.1 * jax.random.normal(ks[7], (P,), jnp.float32)
    beta2 = 0.1 * jax.random.normal(ks[8], (P,), jnp.float32)
    m2 = jnp.zeros((P,), jnp.float32)
    v2 = jnp.ones((P,), jnp.float32)

    out = basic_block(x, w1, g1, beta1, m1, v1, w2, g2, beta2, m2, v2)
    out = jax.block_until_ready(out)

    ref = _reference(x, w1, g1, beta1, m1, v1, w2, g2, beta2, m2, v2)
    assert out.shape == (N, P, H, W)
    # bf16 MXU operands (f32 accumulation) -> slightly looser tolerance.
    assert jnp.allclose(out, ref, atol=3e-2, rtol=3e-2)

    print("KERNEL_OK")
</pallas_src>

<mosaic_0001>
module attributes {stable_mosaic.version = 11 : i64} {
  func.func @_basic_block_kernel(%arg0: i32, %arg1: memref<2x16x16x4xf32, #tpu.memory_space<vmem>>, %arg2: memref<1152x4xbf16, #tpu.memory_space<vmem>>, %arg3: memref<1x4xf32, #tpu.memory_space<vmem>>, %arg4: memref<1152x4xbf16, #tpu.memory_space<vmem>>, %arg5: memref<1x4xf32, #tpu.memory_space<vmem>>, %arg6: memref<2x4x256xf32, #tpu.memory_space<vmem>>, %arg7: memref<2x18x18x128xf32, #tpu.memory_space<vmem>>, %arg8: memref<2x16x16x1152xbf16, #tpu.memory_space<vmem>>) attributes {dimension_semantics = [#tpu.dimension_semantics<parallel>], iteration_bounds = array<i64: 1>, scalar_prefetch = 0 : i64, scratch_operands = 2 : i64, tpu.core_type = #tpu.core_type<tc>, window_params = [{transform_indices = @transform_0, window_bounds = array<i64: 2, 16, 16, 4>}, {pipeline_mode = #tpu.pipeline_mode<synchronous>, transform_indices = @transform_1, window_bounds = array<i64: 1152, 4>}, {pipeline_mode = #tpu.pipeline_mode<synchronous>, transform_indices = @transform_2, window_bounds = array<i64: 1, 4>}, {pipeline_mode = #tpu.pipeline_mode<synchronous>, transform_indices = @transform_3, window_bounds = array<i64: 1152, 4>}, {pipeline_mode = #tpu.pipeline_mode<synchronous>, transform_indices = @transform_4, window_bounds = array<i64: 1, 4>}, {transform_indices = @transform_5, window_bounds = array<i64: 2, 4, 256>}]} {
    %cst = arith.constant 0.000000e+00 : f32
    %0 = vector.broadcast %cst : f32 to vector<2x18x18x128xf32>
    %c0 = arith.constant 0 : index
    %c0_0 = arith.constant 0 : index
    %c0_1 = arith.constant 0 : index
    %c0_2 = arith.constant 0 : index
    %1 = vector.load %arg7[%c0, %c0_0, %c0_1, %c0_2] : memref<2x18x18x128xf32, #tpu.memory_space<vmem>>, vector<2x18x18x128xf32>
    tpu.vector_store %arg7[%c0, %c0_0, %c0_1, %c0_2], %0 {strides = array<i32>} : memref<2x18x18x128xf32, #tpu.memory_space<vmem>>, vector<2x18x18x128xf32>,
    %c0_3 = arith.constant 0 : index
    %c0_4 = arith.constant 0 : index
    %c0_5 = arith.constant 0 : index
    %c0_6 = arith.constant 0 : index
    %2 = vector.load %arg1[%c0_3, %c0_4, %c0_5, %c0_6] : memref<2x16x16x4xf32, #tpu.memory_space<vmem>>, vector<2x16x16x4xf32>
    %3 = vector.shape_cast %2 : vector<2x16x16x4xf32> to vector<512x4xf32>
    %c0_7 = arith.constant 0 : index
    %c0_8 = arith.constant 0 : index
    %c0_9 = arith.constant 0 : index
    %c0_10 = arith.constant 0 : index
    %4 = vector.load %arg1[%c0_7, %c0_8, %c0_9, %c0_10] : memref<2x16x16x4xf32, #tpu.memory_space<vmem>>, vector<2x16x16x4xf32>
    %c0_11 = arith.constant 0 : index
    %c1 = arith.constant 1 : index
    %c1_12 = arith.constant 1 : index
    %c0_13 = arith.constant 0 : index
    %5 = vector.load %arg7[%c0_11, %c1, %c1_12, %c0_13] : memref<2x18x18x128xf32, #tpu.memory_space<vmem>>, vector<2x16x16x4xf32>
    tpu.vector_store %arg7[%c0_11, %c1, %c1_12, %c0_13], %4 {strides = array<i32>} : memref<2x18x18x128xf32, #tpu.memory_space<vmem>>, vector<2x16x16x4xf32>,
    %c0_14 = arith.constant 0 : index
    %c0_15 = arith.constant 0 : index
    %c0_16 = arith.constant 0 : index
    %c0_17 = arith.constant 0 : index
    %6 = vector.load %arg7[%c0_14, %c0_15, %c0_16, %c0_17] : memref<2x18x18x128xf32, #tpu.memory_space<vmem>>, vector<2x16x16x128xf32>
    %7 = arith.truncf %6 : vector<2x16x16x128xf32> to vector<2x16x16x128xbf16>
    %c0_18 = arith.constant 0 : index
    %c0_19 = arith.constant 0 : index
    %c0_20 = arith.constant 0 : index
    %c0_21 = arith.constant 0 : index
    %8 = vector.load %arg8[%c0_18, %c0_19, %c0_20, %c0_21] : memref<2x16x16x1152xbf16, #tpu.memory_space<vmem>>, vector<2x16x16x128xbf16>
    tpu.vector_store %arg8[%c0_18, %c0_19, %c0_20, %c0_21], %7 {strides = array<i32>} : memref<2x16x16x1152xbf16, #tpu.memory_space<vmem>>, vector<2x16x16x128xbf16>,
    %c0_22 = arith.constant 0 : index
    %c0_23 = arith.constant 0 : index
    %c1_24 = arith.constant 1 : index
    %c0_25 = arith.constant 0 : index
    %9 = vector.load %arg7[%c0_22, %c0_23, %c1_24, %c0_25] : memref<2x18x18x128xf32, #tpu.memory_space<vmem>>, vector<2x16x16x128xf32>
    %10 = arith.truncf %9 : vector<2x16x16x128xf32> to vector<2x16x16x128xbf16>
    %c0_26 = arith.constant 0 : index
    %c0_27 = arith.constant 0 : index
    %c0_28 = arith.constant 0 : index
    %c128 = arith.constant 128 : index
    %11 = vector.load %arg8[%c0_26, %c0_27, %c0_28, %c128] : memref<2x16x16x1152xbf16, #tpu.memory_space<vmem>>, vector<2x16x16x128xbf16>
    tpu.vector_store %arg8[%c0_26, %c0_27, %c0_28, %c128], %10 {strides = array<i32>} : memref<2x16x16x1152xbf16, #tpu.memory_space<vmem>>, vector<2x16x16x128xbf16>,
    %c0_29 = arith.constant 0 : index
    %c0_30 = arith.constant 0 : index
    %c2 = arith.constant 2 : index
    %c0_31 = arith.constant 0 : index
    %12 = vector.load %arg7[%c0_29, %c0_30, %c2, %c0_31] : memref<2x18x18x128xf32, #tpu.memory_space<vmem>>, vector<2x16x16x128xf32>
    %13 = arith.truncf %12 : vector<2x16x16x128xf32> to vector<2x16x16x128xbf16>
    %c0_32 = arith.constant 0 : index
    %c0_33 = arith.constant 0 : index
    %c0_34 = arith.constant 0 : index
    %c256 = arith.constant 256 : index
    %14 = vector.load %arg8[%c0_32, %c0_33, %c0_34, %c256] : memref<2x16x16x1152xbf16, #tpu.memory_space<vmem>>, vector<2x16x16x128xbf16>
    tpu.vector_store %arg8[%c0_32, %c0_33, %c0_34, %c256], %13 {strides = array<i32>} : memref<2x16x16x1152xbf16, #tpu.memory_space<vmem>>, vector<2x16x16x128xbf16>,
    %c0_35 = arith.constant 0 : index
    %c1_36 = arith.constant 1 : index
    %c0_37 = arith.constant 0 : index
    %c0_38 = arith.constant 0 : index
    %15 = vector.load %arg7[%c0_35, %c1_36, %c0_37, %c0_38] : memref<2x18x18x128xf32, #tpu.memory_space<vmem>>, vector<2x16x16x128xf32>
    %16 = arith.truncf %15 : vector<2x16x16x128xf32> to vector<2x16x16x128xbf16>
    %c0_39 = arith.constant 0 : index
    %c0_40 = arith.constant 0 : index
    %c0_41 = arith.constant 0 : index
    %c384 = arith.constant 384 : index
    %17 = vector.load %arg8[%c0_39, %c0_40, %c0_41, %c384] : memref<2x16x16x1152xbf16, #tpu.memory_space<vmem>>, vector<2x16x16x128xbf16>
    tpu.vector_store %arg8[%c0_39, %c0_40, %c0_41, %c384], %16 {strides = array<i32>} : memref<2x16x16x1152xbf16, #tpu.memory_space<vmem>>, vector<2x16x16x128xbf16>,
    %c0_42 = arith.constant 0 : index
    %c1_43 = arith.constant 1 : index
    %c1_44 = arith.constant 1 : index
    %c0_45 = arith.constant 0 : index
    %18 = vector.load %arg7[%c0_42, %c1_43, %c1_44, %c0_45] : memref<2x18x18x128xf32, #tpu.memory_space<vmem>>, vector<2x16x16x128xf32>
    %19 = arith.truncf %18 : vector<2x16x16x128xf32> to vector<2x16x16x128xbf16>
    %c0_46 = arith.constant 0 : index
    %c0_47 = arith.constant 0 : index
    %c0_48 = arith.constant 0 : index
    %c512 = arith.constant 512 : index
    %20 = vector.load %arg8[%c0_46, %c0_47, %c0_48, %c512] : memref<2x16x16x1152xbf16, #tpu.memory_space<vmem>>, vector<2x16x16x128xbf16>
    tpu.vector_store %arg8[%c0_46, %c0_47, %c0_48, %c512], %19 {strides = array<i32>} : memref<2x16x16x1152xbf16, #tpu.memory_space<vmem>>, vector<2x16x16x128xbf16>,
    %c0_49 = arith.constant 0 : index
    %c1_50 = arith.constant 1 : index
    %c2_51 = arith.constant 2 : index
    %c0_52 = arith.constant 0 : index
    %21 = vector.load %arg7[%c0_49, %c1_50, %c2_51, %c0_52] : memref<2x18x18x128xf32, #tpu.memory_space<vmem>>, vector<2x16x16x128xf32>
    %22 = arith.truncf %21 : vector<2x16x16x128xf32> to vector<2x16x16x128xbf16>
    %c0_53 = arith.constant 0 : index
    %c0_54 = arith.constant 0 : index
    %c0_55 = arith.constant 0 : index
    %c640 = arith.constant 640 : index
    %23 = vector.load %arg8[%c0_53, %c0_54, %c0_55, %c640] : memref<2x16x16x1152xbf16, #tpu.memory_space<vmem>>, vector<2x16x16x128xbf16>
    tpu.vector_store %arg8[%c0_53, %c0_54, %c0_55, %c640], %22 {strides = array<i32>} : memref<2x16x16x1152xbf16, #tpu.memory_space<vmem>>, vector<2x16x16x128xbf16>,
    %c0_56 = arith.constant 0 : index
    %c2_57 = arith.constant 2 : index
    %c0_58 = arith.constant 0 : index
    %c0_59 = arith.constant 0 : index
    %24 = vector.load %arg7[%c0_56, %c2_57, %c0_58, %c0_59] : memref<2x18x18x128xf32, #tpu.memory_space<vmem>>, vector<2x16x16x128xf32>
    %25 = arith.truncf %24 : vector<2x16x16x128xf32> to vector<2x16x16x128xbf16>
    %c0_60 = arith.constant 0 : index
    %c0_61 = arith.constant 0 : index
    %c0_62 = arith.constant 0 : index
    %c768 = arith.constant 768 : index
    %26 = vector.load %arg8[%c0_60, %c0_61, %c0_62, %c768] : memref<2x16x16x1152xbf16, #tpu.memory_space<vmem>>, vector<2x16x16x128xbf16>
    tpu.vector_store %arg8[%c0_60, %c0_61, %c0_62, %c768], %25 {strides = array<i32>} : memref<2x16x16x1152xbf16, #tpu.memory_space<vmem>>, vector<2x16x16x128xbf16>,
    %c0_63 = arith.constant 0 : index
    %c2_64 = arith.constant 2 : index
    %c1_65 = arith.constant 1 : index
    %c0_66 = arith.constant 0 : index
    %27 = vector.load %arg7[%c0_63, %c2_64, %c1_65, %c0_66] : memref<2x18x18x128xf32, #tpu.memory_space<vmem>>, vector<2x16x16x128xf32>
    %28 = arith.truncf %27 : vector<2x16x16x128xf32> to vector<2x16x16x128xbf16>
    %c0_67 = arith.constant 0 : index
    %c0_68 = arith.constant 0 : index
    %c0_69 = arith.constant 0 : index
    %c896 = arith.constant 896 : index
    %29 = vector.load %arg8[%c0_67, %c0_68, %c0_69, %c896] : memref<2x16x16x1152xbf16, #tpu.memory_space<vmem>>, vector<2x16x16x128xbf16>
    tpu.vector_store %arg8[%c0_67, %c0_68, %c0_69, %c896], %28 {strides = array<i32>} : memref<2x16x16x1152xbf16, #tpu.memory_space<vmem>>, vector<2x16x16x128xbf16>,
    %c0_70 = arith.constant 0 : index
    %c2_71 = arith.constant 2 : index
    %c2_72 = arith.constant 2 : index
    %c0_73 = arith.constant 0 : index
    %30 = vector.load %arg7[%c0_70, %c2_71, %c2_72, %c0_73] : memref<2x18x18x128xf32, #tpu.memory_space<vmem>>, vector<2x16x16x128xf32>
    %31 = arith.truncf %30 : vector<2x16x16x128xf32> to vector<2x16x16x128xbf16>
    %c0_74 = arith.constant 0 : index
    %c0_75 = arith.constant 0 : index
    %c0_76 = arith.constant 0 : index
    %c1024 = arith.constant 1024 : index
    %32 = vector.load %arg8[%c0_74, %c0_75, %c0_76, %c1024] : memref<2x16x16x1152xbf16, #tpu.memory_space<vmem>>, vector<2x16x16x128xbf16>
    tpu.vector_store %arg8[%c0_74, %c0_75, %c0_76, %c1024], %31 {strides = array<i32>} : memref<2x16x16x1152xbf16, #tpu.memory_space<vmem>>, vector<2x16x16x128xbf16>,
    %c0_77 = arith.constant 0 : index
    %c0_78 = arith.constant 0 : index
    %c0_79 = arith.constant 0 : index
    %c0_80 = arith.constant 0 : index
    %33 = vector.load %arg8[%c0_77, %c0_78, %c0_79, %c0_80] : memref<2x16x16x1152xbf16, #tpu.memory_space<vmem>>, vector<2x16x16x1152xbf16>
    %34 = vector.shape_cast %33 : vector<2x16x16x1152xbf16> to vector<512x1152xbf16>
    %c0_81 = arith.constant 0 : index
    %c0_82 = arith.constant 0 : index
    %35 = vector.load %arg2[%c0_81, %c0_82] : memref<1152x4xbf16, #tpu.memory_space<vmem>>, vector<1152x4xbf16>
    %cst_83 = arith.constant dense<0.000000e+00> : vector<512x4xf32>
    %36 = tpu.matmul %34, %35, %cst_83 {dimension_numbers = #tpu.dot_dimension_numbers<[1], [0], [0], [1], [0, 0, 1, 1], [], []>} : vector<512x1152xbf16>, vector<1152x4xbf16>, vector<512x4xf32> -> vector<512x4xf32>
    %c0_84 = arith.constant 0 : index
    %c0_85 = arith.constant 0 : index
    %37 = vector.load %arg3[%c0_84, %c0_85] : memref<1x4xf32, #tpu.memory_space<vmem>>, vector<1x4xf32>
    %38 = vector.broadcast %37 : vector<1x4xf32> to vector<512x4xf32>
    %39 = arith.addf %36, %38 : vector<512x4xf32>
    %cst_86 = arith.constant 0.000000e+00 : f32
    %40 = vector.broadcast %cst_86 : f32 to vector<512x4xf32>
    %41 = arith.maximumf %39, %40 : vector<512x4xf32>
    %42 = vector.shape_cast %41 : vector<512x4xf32> to vector<2x16x16x4xf32>
    %c0_87 = arith.constant 0 : index
    %c1_88 = arith.constant 1 : index
    %c1_89 = arith.constant 1 : index
    %c0_90 = arith.constant 0 : index
    %43 = vector.load %arg7[%c0_87, %c1_88, %c1_89, %c0_90] : memref<2x18x18x128xf32, #tpu.memory_space<vmem>>, vector<2x16x16x4xf32>
    tpu.vector_store %arg7[%c0_87, %c1_88, %c1_89, %c0_90], %42 {strides = array<i32>} : memref<2x18x18x128xf32, #tpu.memory_space<vmem>>, vector<2x16x16x4xf32>,
    %c0_91 = arith.constant 0 : index
    %c0_92 = arith.constant 0 : index
    %c0_93 = arith.constant 0 : index
    %c0_94 = arith.constant 0 : index
    %44 = vector.load %arg7[%c0_91, %c0_92, %c0_93, %c0_94] : memref<2x18x18x128xf32, #tpu.memory_space<vmem>>, vector<2x16x16x128xf32>
    %45 = arith.truncf %44 : vector<2x16x16x128xf32> to vector<2x16x16x128xbf16>
    %c0_95 = arith.constant 0 : index
    %c0_96 = arith.constant 0 : index
    %c0_97 = arith.constant 0 : index
    %c0_98 = arith.constant 0 : index
    %46 = vector.load %arg8[%c0_95, %c0_96, %c0_97, %c0_98] : memref<2x16x16x1152xbf16, #tpu.memory_space<vmem>>, vector<2x16x16x128xbf16>
    tpu.vector_store %arg8[%c0_95, %c0_96, %c0_97, %c0_98], %45 {strides = array<i32>} : memref<2x16x16x1152xbf16, #tpu.memory_space<vmem>>, vector<2x16x16x128xbf16>,
    %c0_99 = arith.constant 0 : index
    %c0_100 = arith.constant 0 : index
    %c1_101 = arith.constant 1 : index
    %c0_102 = arith.constant 0 : index
    %47 = vector.load %arg7[%c0_99, %c0_100, %c1_101, %c0_102] : memref<2x18x18x128xf32, #tpu.memory_space<vmem>>, vector<2x16x16x128xf32>
    %48 = arith.truncf %47 : vector<2x16x16x128xf32> to vector<2x16x16x128xbf16>
    %c0_103 = arith.constant 0 : index
    %c0_104 = arith.constant 0 : index
    %c0_105 = arith.constant 0 : index
    %c128_106 = arith.constant 128 : index
    %49 = vector.load %arg8[%c0_103, %c0_104, %c0_105, %c128_106] : memref<2x16x16x1152xbf16, #tpu.memory_space<vmem>>, vector<2x16x16x128xbf16>
    tpu.vector_store %arg8[%c0_103, %c0_104, %c0_105, %c128_106], %48 {strides = array<i32>} : memref<2x16x16x1152xbf16, #tpu.memory_space<vmem>>, vector<2x16x16x128xbf16>,
    %c0_107 = arith.constant 0 : index
    %c0_108 = arith.constant 0 : index
    %c2_109 = arith.constant 2 : index
    %c0_110 = arith.constant 0 : index
    %50 = vector.load %arg7[%c0_107, %c0_108, %c2_109, %c0_110] : memref<2x18x18x128xf32, #tpu.memory_space<vmem>>, vector<2x16x16x128xf32>
    %51 = arith.truncf %50 : vector<2x16x16x128xf32> to vector<2x16x16x128xbf16>
    %c0_111 = arith.constant 0 : index
    %c0_112 = arith.constant 0 : index
    %c0_113 = arith.constant 0 : index
    %c256_114 = arith.constant 256 : index
    %52 = vector.load %arg8[%c0_111, %c0_112, %c0_113, %c256_114] : memref<2x16x16x1152xbf16, #tpu.memory_space<vmem>>, vector<2x16x16x128xbf16>
    tpu.vector_store %arg8[%c0_111, %c0_112, %c0_113, %c256_114], %51 {strides = array<i32>} : memref<2x16x16x1152xbf16, #tpu.memory_space<vmem>>, vector<2x16x16x128xbf16>,
    %c0_115 = arith.constant 0 : index
    %c1_116 = arith.constant 1 : index
    %c0_117 = arith.constant 0 : index
    %c0_118 = arith.constant 0 : index
    %53 = vector.load %arg7[%c0_115, %c1_116, %c0_117, %c0_118] : memref<2x18x18x128xf32, #tpu.memory_space<vmem>>, vector<2x16x16x128xf32>
    %54 = arith.truncf %53 : vector<2x16x16x128xf32> to vector<2x16x16x128xbf16>
    %c0_119 = arith.constant 0 : index
    %c0_120 = arith.constant 0 : index
    %c0_121 = arith.constant 0 : index
    %c384_122 = arith.constant 384 : index
    %55 = vector.load %arg8[%c0_119, %c0_120, %c0_121, %c384_122] : memref<2x16x16x1152xbf16, #tpu.memory_space<vmem>>, vector<2x16x16x128xbf16>
    tpu.vector_store %arg8[%c0_119, %c0_120, %c0_121, %c384_122], %54 {strides = array<i32>} : memref<2x16x16x1152xbf16, #tpu.memory_space<vmem>>, vector<2x16x16x128xbf16>,
    %c0_123 = arith.constant 0 : index
    %c1_124 = arith.constant 1 : index
    %c1_125 = arith.constant 1 : index
    %c0_126 = arith.constant 0 : index
    %56 = vector.load %arg7[%c0_123, %c1_124, %c1_125, %c0_126] : memref<2x18x18x128xf32, #tpu.memory_space<vmem>>, vector<2x16x16x128xf32>
    %57 = arith.truncf %56 : vector<2x16x16x128xf32> to vector<2x16x16x128xbf16>
    %c0_127 = arith.constant 0 : index
    %c0_128 = arith.constant 0 : index
    %c0_129 = arith.constant 0 : index
    %c512_130 = arith.constant 512 : index
    %58 = vector.load %arg8[%c0_127, %c0_128, %c0_129, %c512_130] : memref<2x16x16x1152xbf16, #tpu.memory_space<vmem>>, vector<2x16x16x128xbf16>
    tpu.vector_store %arg8[%c0_127, %c0_128, %c0_129, %c512_130], %57 {strides = array<i32>} : memref<2x16x16x1152xbf16, #tpu.memory_space<vmem>>, vector<2x16x16x128xbf16>,
    %c0_131 = arith.constant 0 : index
    %c1_132 = arith.constant 1 : index
    %c2_133 = arith.constant 2 : index
    %c0_134 = arith.constant 0 : index
    %59 = vector.load %arg7[%c0_131, %c1_132, %c2_133, %c0_134] : memref<2x18x18x128xf32, #tpu.memory_space<vmem>>, vector<2x16x16x128xf32>
    %60 = arith.truncf %59 : vector<2x16x16x128xf32> to vector<2x16x16x128xbf16>
    %c0_135 = arith.constant 0 : index
    %c0_136 = arith.constant 0 : index
    %c0_137 = arith.constant 0 : index
    %c640_138 = arith.constant 640 : index
    %61 = vector.load %arg8[%c0_135, %c0_136, %c0_137, %c640_138] : memref<2x16x16x1152xbf16, #tpu.memory_space<vmem>>, vector<2x16x16x128xbf16>
    tpu.vector_store %arg8[%c0_135, %c0_136, %c0_137, %c640_138], %60 {strides = array<i32>} : memref<2x16x16x1152xbf16, #tpu.memory_space<vmem>>, vector<2x16x16x128xbf16>,
    %c0_139 = arith.constant 0 : index
    %c2_140 = arith.constant 2 : index
    %c0_141 = arith.constant 0 : index
    %c0_142 = arith.constant 0 : index
    %62 = vector.load %arg7[%c0_139, %c2_140, %c0_141, %c0_142] : memref<2x18x18x128xf32, #tpu.memory_space<vmem>>, vector<2x16x16x128xf32>
    %63 = arith.truncf %62 : vector<2x16x16x128xf32> to vector<2x16x16x128xbf16>
    %c0_143 = arith.constant 0 : index
    %c0_144 = arith.constant 0 : index
    %c0_145 = arith.constant 0 : index
    %c768_146 = arith.constant 768 : index
    %64 = vector.load %arg8[%c0_143, %c0_144, %c0_145, %c768_146] : memref<2x16x16x1152xbf16, #tpu.memory_space<vmem>>, vector<2x16x16x128xbf16>
    tpu.vector_store %arg8[%c0_143, %c0_144, %c0_145, %c768_146], %63 {strides = array<i32>} : memref<2x16x16x1152xbf16, #tpu.memory_space<vmem>>, vector<2x16x16x128xbf16>,
    %c0_147 = arith.constant 0 : index
    %c2_148 = arith.constant 2 : index
    %c1_149 = arith.constant 1 : index
    %c0_150 = arith.constant 0 : index
    %65 = vector.load %arg7[%c0_147, %c2_148, %c1_149, %c0_150] : memref<2x18x18x128xf32, #tpu.memory_space<vmem>>, vector<2x16x16x128xf32>
    %66 = arith.truncf %65 : vector<2x16x16x128xf32> to vector<2x16x16x128xbf16>
    %c0_151 = arith.constant 0 : index
    %c0_152 = arith.constant 0 : index
    %c0_153 = arith.constant 0 : index
    %c896_154 = arith.constant 896 : index
    %67 = vector.load %arg8[%c0_151, %c0_152, %c0_153, %c896_154] : memref<2x16x16x1152xbf16, #tpu.memory_space<vmem>>, vector<2x16x16x128xbf16>
    tpu.vector_store %arg8[%c0_151, %c0_152, %c0_153, %c896_154], %66 {strides = array<i32>} : memref<2x16x16x1152xbf16, #tpu.memory_space<vmem>>, vector<2x16x16x128xbf16>,
    %c0_155 = arith.constant 0 : index
    %c2_156 = arith.constant 2 : index
    %c2_157 = arith.constant 2 : index
    %c0_158 = arith.constant 0 : index
    %68 = vector.load %arg7[%c0_155, %c2_156, %c2_157, %c0_158] : memref<2x18x18x128xf32, #tpu.memory_space<vmem>>, vector<2x16x16x128xf32>
    %69 = arith.truncf %68 : vector<2x16x16x128xf32> to vector<2x16x16x128xbf16>
    %c0_159 = arith.constant 0 : index
    %c0_160 = arith.constant 0 : index
    %c0_161 = arith.constant 0 : index
    %c1024_162 = arith.constant 1024 : index
    %70 = vector.load %arg8[%c0_159, %c0_160, %c0_161, %c1024_162] : memref<2x16x16x1152xbf16, #tpu.memory_space<vmem>>, vector<2x16x16x128xbf16>
    tpu.vector_store %arg8[%c0_159, %c0_160, %c0_161, %c1024_162], %69 {strides = array<i32>} : memref<2x16x16x1152xbf16, #tpu.memory_space<vmem>>, vector<2x16x16x128xbf16>,
    %c0_163 = arith.constant 0 : index
    %c0_164 = arith.constant 0 : index
    %c0_165 = arith.constant 0 : index
    %c0_166 = arith.constant 0 : index
    %71 = vector.load %arg8[%c0_163, %c0_164, %c0_165, %c0_166] : memref<2x16x16x1152xbf16, #tpu.memory_space<vmem>>, vector<2x16x16x1152xbf16>
    %72 = vector.shape_cast %71 : vector<2x16x16x1152xbf16> to vector<512x1152xbf16>
    %c0_167 = arith.constant 0 : index
    %c0_168 = arith.constant 0 : index
    %73 = vector.load %arg4[%c0_167, %c0_168] : memref<1152x4xbf16, #tpu.memory_space<vmem>>, vector<1152x4xbf16>
    %cst_169 = arith.constant dense<0.000000e+00> : vector<512x4xf32>
    %74 = tpu.matmul %72, %73, %cst_169 {dimension_numbers = #tpu.dot_dimension_numbers<[1], [0], [0], [1], [0, 0, 1, 1], [], []>} : vector<512x1152xbf16>, vector<1152x4xbf16>, vector<512x4xf32> -> vector<512x4xf32>
    %c0_170 = arith.constant 0 : index
    %c0_171 = arith.constant 0 : index
    %75 = vector.load %arg5[%c0_170, %c0_171] : memref<1x4xf32, #tpu.memory_space<vmem>>, vector<1x4xf32>
    %76 = vector.broadcast %75 : vector<1x4xf32> to vector<512x4xf32>
    %77 = arith.addf %74, %76 : vector<512x4xf32>
    %78 = arith.addf %77, %3 : vector<512x4xf32>
    %cst_172 = arith.constant 0.000000e+00 : f32
    %79 = vector.broadcast %cst_172 : f32 to vector<512x4xf32>
    %80 = arith.maximumf %78, %79 : vector<512x4xf32>
    %81 = vector.shape_cast %80 : vector<512x4xf32> to vector<2x256x4xf32>
    %82 = vector.extract_strided_slice %81 {offsets = [0, 0, 0], sizes = [1, 256, 4], strides = [1, 1, 1]} : vector<2x256x4xf32> to vector<1x256x4xf32>
    %83 = vector.shape_cast %82 : vector<1x256x4xf32> to vector<256x4xf32>
    %84 = tpu.transpose %83, [1, 0] : vector<256x4xf32> -> vector<4x256xf32>
    %c0_173 = arith.constant 0 : index
    %c0_174 = arith.constant 0 : index
    %c0_175 = arith.constant 0 : index
    %85 = vector.load %arg6[%c0_173, %c0_174, %c0_175] : memref<2x4x256xf32, #tpu.memory_space<vmem>>, vector<1x4x256xf32>
    %86 = vector.shape_cast %85 : vector<1x4x256xf32> to vector<4x256xf32>
    %87 = vector.shape_cast %84 : vector<4x256xf32> to vector<1x4x256xf32>
    tpu.vector_store %arg6[%c0_173, %c0_174, %c0_175], %87 {strides = array<i32>} : memref<2x4x256xf32, #tpu.memory_space<vmem>>, vector<1x4x256xf32>,
    %88 = vector.extract_strided_slice %81 {offsets = [1, 0, 0], sizes = [1, 256, 4], strides = [1, 1, 1]} : vector<2x256x4xf32> to vector<1x256x4xf32>
    %89 = vector.shape_cast %88 : vector<1x256x4xf32> to vector<256x4xf32>
    %90 = tpu.transpose %89, [1, 0] : vector<256x4xf32> -> vector<4x256xf32>
    %c1_176 = arith.constant 1 : index
    %c0_177 = arith.constant 0 : index
    %c0_178 = arith.constant 0 : index
    %91 = vector.load %arg6[%c1_176, %c0_177, %c0_178] : memref<2x4x256xf32, #tpu.memory_space<vmem>>, vector<1x4x256xf32>
    %92 = vector.shape_cast %91 : vector<1x4x256xf32> to vector<4x256xf32>
    %93 = vector.shape_cast %90 : vector<4x256xf32> to vector<1x4x256xf32>
    tpu.vector_store %arg6[%c1_176, %c0_177, %c0_178], %93 {strides = array<i32>} : memref<2x4x256xf32, #tpu.memory_space<vmem>>, vector<1x4x256xf32>,
    return
  }
  func.func @transform_0(%arg0: i32) -> (i32, i32, i32, i32) {
    %c0_i32 = arith.constant 0 : i32
    %c0_i32_0 = arith.constant 0 : i32
    %c0_i32_1 = arith.constant 0 : i32
    %c0_i32_2 = arith.constant 0 : i32
    return %arg0, %c0_i32, %c0_i32_0, %c0_i32_1 : i32, i32, i32, i32
  }
  func.func @transform_1(%arg0: i32) -> (i32, i32) {
    %c0_i32 = arith.constant 0 : i32
    %c0_i32_0 = arith.constant 0 : i32
    %c0_i32_1 = arith.constant 0 : i32
    return %c0_i32, %c0_i32_0 : i32, i32
  }
  func.func @transform_2(%arg0: i32) -> (i32, i32) {
    %c0_i32 = arith.constant 0 : i32
    %c0_i32_0 = arith.constant 0 : i32
    %c0_i32_1 = arith.constant 0 : i32
    return %c0_i32, %c0_i32_0 : i32, i32
  }
  func.func @transform_3(%arg0: i32) -> (i32, i32) {
    %c0_i32 = arith.constant 0 : i32
    %c0_i32_0 = arith.constant 0 : i32
    %c0_i32_1 = arith.constant 0 : i32
    return %c0_i32, %c0_i32_0 : i32, i32
  }
  func.func @transform_4(%arg0: i32) -> (i32, i32) {
    %c0_i32 = arith.constant 0 : i32
    %c0_i32_0 = arith.constant 0 : i32
    %c0_i32_1 = arith.constant 0 : i32
    return %c0_i32, %c0_i32_0 : i32, i32
  }
  func.func @transform_5(%arg0: i32) -> (i32, i32, i32) {
    %c0_i32 = arith.constant 0 : i32
    %c0_i32_0 = arith.constant 0 : i32
    %c0_i32_1 = arith.constant 0 : i32
    return %arg0, %c0_i32, %c0_i32_0 : i32, i32, i32
  }
}

</mosaic_0001>

<llo_original>
// kernel: tpu_custom_call.1
$region0: #{tpu_custom_call.1}
  #allocation0 [shape = 'u32[]', space=smem, size = 0x4, offset = 0x4, fixed_abs, tag = 'smem constant byte address 0x4 - core index']
  #allocation1 [shape = 'u32[144,128]{1,0:T(1,128)}', space=vmem, size = 0x12000, scoped, tag = 'internal scratch']
  #allocation2 [shape = 'f32[2,18,18,128]{3,2,1,0:T(8,128)}', space=vmem, size = 0x6c000, scoped, tag = 'scratch operand']
  #allocation3 [shape = 'bf16[2,16,16,1152]{3,2,1,0:T(16,128)(2,1)}', space=vmem, size = 0x120000, scoped, tag = 'scratch operand']
  %s0 = inlined_call_operand.vmem [shape: f32[2,16,16,4], index: 0, kind: input, shape index: {}]
  %s1 = inlined_call_operand.vmem [shape: bf16[1152,4], index: 1, kind: input, shape index: {}]
  %s2 = inlined_call_operand.vmem [shape: f32[1,4], index: 2, kind: input, shape index: {}]
  %s3 = inlined_call_operand.vmem [shape: bf16[1152,4], index: 3, kind: input, shape index: {}]
  %s4 = inlined_call_operand.vmem [shape: f32[1,4], index: 4, kind: input, shape index: {}]
  %s5 = inlined_call_operand.hbm [shape: f32[2,4,256], index: 5, kind: output, shape index: {}]
  %s6 = sld [smem:[#allocation0]]
  $region30: #{tpu_custom_call.1} parent=0
    _
  %s8 = ssub.s32 1, %s6
  %s9 = scalar_select 0, %s8, %s6
  $region1: #{tpu_custom_call.1} parent=0
    #allocation4 [shape = 'u8[8192]{0}', space=vmem, size = 0x2000, scoped, tag = 'output window, operand 0, single buffered']
    #allocation5 [shape = 's32[1]{0}', space=sflag, size = 0x4, scoped, tag = 'scoped memory for tpu_custom_call.1']
    %10 = vsyncpa [#allocation5], 0
    // Predicated region
    $region2: #{tpu_custom_call.1} parent=1 // pred_check
      _
    $region3: #{tpu_custom_call.1} parent=1 // pred_check_branch
      %12 = sbr.rel (0) target = $region5
    $region4: #{tpu_custom_call.1} parent=1 // pred_region
      _
    $region5: #{tpu_custom_call.1} parent=1 // pred_fallthru
      _
    // Predicated region
    $region6: #{tpu_custom_call.1} parent=1 // pred_check
      _
    $region7: #{tpu_custom_call.1} parent=1 // pred_check_branch
      %14 = sbr.rel (0) target = $region9
    $region8: #{tpu_custom_call.1} parent=1 // pred_region
      _
    $region9: #{tpu_custom_call.1} parent=1 // pred_fallthru
      _
    // Predicated region
    $region10: #{tpu_custom_call.1} parent=1 // pred_check
      _
    $region11: #{tpu_custom_call.1} parent=1 // pred_check_branch
      %16 = sbr.rel (0) target = $region13
    $region12: #{tpu_custom_call.1} parent=1 // pred_region
      _
    $region13: #{tpu_custom_call.1} parent=1 // pred_fallthru
      _
    // Predicated region
    $region14: #{tpu_custom_call.1} parent=1 // pred_check
      _
    $region15: #{tpu_custom_call.1} parent=1 // pred_check_branch
      %18 = sbr.rel (0) target = $region17
    $region16: #{tpu_custom_call.1} parent=1 // pred_region
      _
    $region17: #{tpu_custom_call.1} parent=1 // pred_fallthru
      _
    // Predicated region
    $region18: #{tpu_custom_call.1} parent=1 // pred_check
      _
    $region19: #{tpu_custom_call.1} parent=1 // pred_check_branch
      %20 = sbr.rel (0) target = $region21
    $region20: #{tpu_custom_call.1} parent=1 // pred_region
      _
    $region21: #{tpu_custom_call.1} parent=1 // pred_fallthru
      _
    %22 = vst [vmem:[#allocation2] sm:$0xff] 0.0
    %23 = vst [vmem:[#allocation2 + $0x8] sm:$0xff] 0.0
    %24 = vst [vmem:[#allocation2 + $0x10] sm:$0x3] 0.0
    %25 = vst [vmem:[#allocation2 + $0x18] sm:$0xff] 0.0
    %26 = vst [vmem:[#allocation2 + $0x20] sm:$0xff] 0.0
    %27 = vst [vmem:[#allocation2 + $0x28] sm:$0x3] 0.0
    %28 = vst [vmem:[#allocation2 + $0x30] sm:$0xff] 0.0
    %29 = vst [vmem:[#allocation2 + $0x38] sm:$0xff] 0.0
    %30 = vst [vmem:[#allocation2 + $0x40] sm:$0x3] 0.0
    %31 = vst [vmem:[#allocation2 + $0x48] sm:$0xff] 0.0
    %32 = vst [vmem:[#allocation2 + $0x50] sm:$0xff] 0.0
    %33 = vst [vmem:[#allocation2 + $0x58] sm:$0x3] 0.0
    %34 = vst [vmem:[#allocation2 + $0x60] sm:$0xff] 0.0
    %35 = vst [vmem:[#allocation2 + $0x68] sm:$0xff] 0.0
    %36 = vst [vmem:[#allocation2 + $0x70] sm:$0x3] 0.0
    %37 = vst [vmem:[#allocation2 + $0x78] sm:$0xff] 0.0
    %38 = vst [vmem:[#allocation2 + $0x80] sm:$0xff] 0.0
    %39 = vst [vmem:[#allocation2 + $0x88] sm:$0x3] 0.0
    %40 = vst [vmem:[#allocation2 + $0x90] sm:$0xff] 0.0
    %41 = vst [vmem:[#allocation2 + $0x98] sm:$0xff] 0.0
    %42 = vst [vmem:[#allocation2 + $0xa0] sm:$0x3] 0.0
    %43 = vst [vmem:[#allocation2 + $0xa8] sm:$0xff] 0.0
    %44 = vst [vmem:[#allocation2 + $0xb0] sm:$0xff] 0.0
    %45 = vst [vmem:[#allocation2 + $0xb8] sm:$0x3] 0.0
    %46 = vst [vmem:[#allocation2 + $0xc0] sm:$0xff] 0.0
    %47 = vst [vmem:[#allocation2 + $0xc8] sm:$0xff] 0.0
    %48 = vst [vmem:[#allocation2 + $0xd0] sm:$0x3] 0.0
    %49 = vst [vmem:[#allocation2 + $0xd8] sm:$0xff] 0.0
    %50 = vst [vmem:[#allocation2 + $0xe0] sm:$0xff] 0.0
    %51 = vst [vmem:[#allocation2 + $0xe8] sm:$0x3] 0.0
    %52 = vst [vmem:[#allocation2 + $0xf0] sm:$0xff] 0.0
    %53 = vst [vmem:[#allocation2 + $0xf8] sm:$0xff] 0.0
    %54 = vst [vmem:[#allocation2 + $0x100] sm:$0x3] 0.0
    %55 = vst [vmem:[#allocation2 + $0x108] sm:$0xff] 0.0
    %56 = vst [vmem:[#allocation2 + $0x110] sm:$0xff] 0.0
    %57 = vst [vmem:[#allocation2 + $0x118] sm:$0x3] 0.0
    %58 = vst [vmem:[#allocation2 + $0x120] sm:$0xff] 0.0
    %59 = vst [vmem:[#allocation2 + $0x128] sm:$0xff] 0.0
    %60 = vst [vmem:[#allocation2 + $0x130] sm:$0x3] 0.0
    %61 = vst [vmem:[#allocation2 + $0x138] sm:$0xff] 0.0
    %62 = vst [vmem:[#allocation2 + $0x140] sm:$0xff] 0.0
    %63 = vst [vmem:[#allocation2 + $0x148] sm:$0x3] 0.0
    %64 = vst [vmem:[#allocation2 + $0x150] sm:$0xff] 0.0
    %65 = vst [vmem:[#allocation2 + $0x158] sm:$0xff] 0.0
    %66 = vst [vmem:[#allocation2 + $0x160] sm:$0x3] 0.0
    %67 = vst [vmem:[#allocation2 + $0x168] sm:$0xff] 0.0
    %68 = vst [vmem:[#allocation2 + $0x170] sm:$0xff] 0.0
    %69 = vst [vmem:[#allocation2 + $0x178] sm:$0x3] 0.0
    %70 = vst [vmem:[#allocation2 + $0x180] sm:$0xff] 0.0
    %71 = vst [vmem:[#allocation2 + $0x188] sm:$0xff] 0.0
    %72 = vst [vmem:[#allocation2 + $0x190] sm:$0x3] 0.0
    %73 = vst [vmem:[#allocation2 + $0x198] sm:$0xff] 0.0
    %74 = vst [vmem:[#allocation2 + $0x1a0] sm:$0xff] 0.0
    %75 = vst [vmem:[#allocation2 + $0x1a8] sm:$0x3] 0.0
    %76 = vst [vmem:[#allocation2 + $0x1b0] sm:$0xff] 0.0
    %77 = vst [vmem:[#allocation2 + $0x1b8] sm:$0xff] 0.0
    %78 = vst [vmem:[#allocation2 + $0x1c0] sm:$0x3] 0.0
    %79 = vst [vmem:[#allocation2 + $0x1c8] sm:$0xff] 0.0
    %80 = vst [vmem:[#allocation2 + $0x1d0] sm:$0xff] 0.0
    %81 = vst [vmem:[#allocation2 + $0x1d8] sm:$0x3] 0.0
    %82 = vst [vmem:[#allocation2 + $0x1e0] sm:$0xff] 0.0
    %83 = vst [vmem:[#allocation2 + $0x1e8] sm:$0xff] 0.0
    %84 = vst [vmem:[#allocation2 + $0x1f0] sm:$0x3] 0.0
    %85 = vst [vmem:[#allocation2 + $0x1f8] sm:$0xff] 0.0
    %86 = vst [vmem:[#allocation2 + $0x200] sm:$0xff] 0.0
    %87 = vst [vmem:[#allocation2 + $0x208] sm:$0x3] 0.0
    %88 = vst [vmem:[#allocation2 + $0x210] sm:$0xff] 0.0
    %89 = vst [vmem:[#allocation2 + $0x218] sm:$0xff] 0.0
    %90 = vst [vmem:[#allocation2 + $0x220] sm:$0x3] 0.0
    %91 = vst [vmem:[#allocation2 + $0x228] sm:$0xff] 0.0
    %92 = vst [vmem:[#allocation2 + $0x230] sm:$0xff] 0.0
    %93 = vst [vmem:[#allocation2 + $0x238] sm:$0x3] 0.0
    %94 = vst [vmem:[#allocation2 + $0x240] sm:$0xff] 0.0
    %95 = vst [vmem:[#allocation2 + $0x248] sm:$0xff] 0.0
    %96 = vst [vmem:[#allocation2 + $0x250] sm:$0x3] 0.0
    %97 = vst [vmem:[#allocation2 + $0x258] sm:$0xff] 0.0
    %98 = vst [vmem:[#allocation2 + $0x260] sm:$0xff] 0.0
    %99 = vst [vmem:[#allocation2 + $0x268] sm:$0x3] 0.0
    %100 = vst [vmem:[#allocation2 + $0x270] sm:$0xff] 0.0
    %101 = vst [vmem:[#allocation2 + $0x278] sm:$0xff] 0.0
    %102 = vst [vmem:[#allocation2 + $0x280] sm:$0x3] 0.0
    %103 = vst [vmem:[#allocation2 + $0x288] sm:$0xff] 0.0
    %104 = vst [vmem:[#allocation2 + $0x290] sm:$0xff] 0.0
    %105 = vst [vmem:[#allocation2 + $0x298] sm:$0x3] 0.0
    %106 = vst [vmem:[#allocation2 + $0x2a0] sm:$0xff] 0.0
    %107 = vst [vmem:[#allocation2 + $0x2a8] sm:$0xff] 0.0
    %108 = vst [vmem:[#allocation2 + $0x2b0] sm:$0x3] 0.0
    %109 = vst [vmem:[#allocation2 + $0x2b8] sm:$0xff] 0.0
    %110 = vst [vmem:[#allocation2 + $0x2c0] sm:$0xff] 0.0
    %111 = vst [vmem:[#allocation2 + $0x2c8] sm:$0x3] 0.0
    %112 = vst [vmem:[#allocation2 + $0x2d0] sm:$0xff] 0.0
    %113 = vst [vmem:[#allocation2 + $0x2d8] sm:$0xff] 0.0
    %114 = vst [vmem:[#allocation2 + $0x2e0] sm:$0x3] 0.0
    %115 = vst [vmem:[#allocation2 + $0x2e8] sm:$0xff] 0.0
    %116 = vst [vmem:[#allocation2 + $0x2f0] sm:$0xff] 0.0
    %117 = vst [vmem:[#allocation2 + $0x2f8] sm:$0x3] 0.0
    %118 = vst [vmem:[#allocation2 + $0x300] sm:$0xff] 0.0
    %119 = vst [vmem:[#allocation2 + $0x308] sm:$0xff] 0.0
    %120 = vst [vmem:[#allocation2 + $0x310] sm:$0x3] 0.0
    %121 = vst [vmem:[#allocation2 + $0x318] sm:$0xff] 0.0
    %122 = vst [vmem:[#allocation2 + $0x320] sm:$0xff] 0.0
    %123 = vst [vmem:[#allocation2 + $0x328] sm:$0x3] 0.0
    %124 = vst [vmem:[#allocation2 + $0x330] sm:$0xff] 0.0
    %125 = vst [vmem:[#allocation2 + $0x338] sm:$0xff] 0.0
    %126 = vst [vmem:[#allocation2 + $0x340] sm:$0x3] 0.0
    %127 = vst [vmem:[#allocation2 + $0x348] sm:$0xff] 0.0
    %128 = vst [vmem:[#allocation2 + $0x350] sm:$0xff] 0.0
    %129 = vst [vmem:[#allocation2 + $0x358] sm:$0x3] 0.0
    %v130 = vld [vmem:[%s0] sm:$0xff]
    %v131 = vld [vmem:[%s0 + $0x8] sm:$0xff]
    %v132 = vld [vmem:[%s0 + $0x10] sm:$0xff]
    %v133 = vld [vmem:[%s0 + $0x18] sm:$0xff]
    %v134 = vld [vmem:[%s0 + $0x20] sm:$0xff]
    %v135 = vld [vmem:[%s0 + $0x28] sm:$0xff]
    %v136 = vld [vmem:[%s0 + $0x30] sm:$0xff]
    %v137 = vld [vmem:[%s0 + $0x38] sm:$0xff]
    %v138 = vld [vmem:[%s0 + $0x40] sm:$0xff]
    %v139 = vld [vmem:[%s0 + $0x48] sm:$0xff]
    %v140 = vld [vmem:[%s0 + $0x50] sm:$0xff]
    %v141 = vld [vmem:[%s0 + $0x58] sm:$0xff]
    %v142 = vld [vmem:[%s0 + $0x60] sm:$0xff]
    %v143 = vld [vmem:[%s0 + $0x68] sm:$0xff]
    %v144 = vld [vmem:[%s0 + $0x70] sm:$0xff]
    %v145 = vld [vmem:[%s0 + $0x78] sm:$0xff]
    %v146 = vld [vmem:[%s0 + $0x80] sm:$0xff]
    %v147 = vld [vmem:[%s0 + $0x88] sm:$0xff]
    %v148 = vld [vmem:[%s0 + $0x90] sm:$0xff]
    %v149 = vld [vmem:[%s0 + $0x98] sm:$0xff]
    %v150 = vld [vmem:[%s0 + $0xa0] sm:$0xff]
    %v151 = vld [vmem:[%s0 + $0xa8] sm:$0xff]
    %v152 = vld [vmem:[%s0 + $0xb0] sm:$0xff]
    %v153 = vld [vmem:[%s0 + $0xb8] sm:$0xff]
    %v154 = vld [vmem:[%s0 + $0xc0] sm:$0xff]
    %v155 = vld [vmem:[%s0 + $0xc8] sm:$0xff]
    %v156 = vld [vmem:[%s0 + $0xd0] sm:$0xff]
    %v157 = vld [vmem:[%s0 + $0xd8] sm:$0xff]
    %v158 = vld [vmem:[%s0 + $0xe0] sm:$0xff]
    %v159 = vld [vmem:[%s0 + $0xe8] sm:$0xff]
    %v160 = vld [vmem:[%s0 + $0xf0] sm:$0xff]
    %v161 = vld [vmem:[%s0 + $0xf8] sm:$0xff]
    %v162 = vld [vmem:[%s0 + $0x100] sm:$0xff]
    %v163 = vld [vmem:[%s0 + $0x108] sm:$0xff]
    %v164 = vld [vmem:[%s0 + $0x110] sm:$0xff]
    %v165 = vld [vmem:[%s0 + $0x118] sm:$0xff]
    %v166 = vld [vmem:[%s0 + $0x120] sm:$0xff]
    %v167 = vld [vmem:[%s0 + $0x128] sm:$0xff]
    %v168 = vld [vmem:[%s0 + $0x130] sm:$0xff]
    %v169 = vld [vmem:[%s0 + $0x138] sm:$0xff]
    %v170 = vld [vmem:[%s0 + $0x140] sm:$0xff]
    %v171 = vld [vmem:[%s0 + $0x148] sm:$0xff]
    %v172 = vld [vmem:[%s0 + $0x150] sm:$0xff]
    %v173 = vld [vmem:[%s0 + $0x158] sm:$0xff]
    %v174 = vld [vmem:[%s0 + $0x160] sm:$0xff]
    %v175 = vld [vmem:[%s0 + $0x168] sm:$0xff]
    %v176 = vld [vmem:[%s0 + $0x170] sm:$0xff]
    %v177 = vld [vmem:[%s0 + $0x178] sm:$0xff]
    %v178 = vld [vmem:[%s0 + $0x180] sm:$0xff]
    %v179 = vld [vmem:[%s0 + $0x188] sm:$0xff]
    %v180 = vld [vmem:[%s0 + $0x190] sm:$0xff]
    %v181 = vld [vmem:[%s0 + $0x198] sm:$0xff]
    %v182 = vld [vmem:[%s0 + $0x1a0] sm:$0xff]
    %v183 = vld [vmem:[%s0 + $0x1a8] sm:$0xff]
    %v184 = vld [vmem:[%s0 + $0x1b0] sm:$0xff]
    %v185 = vld [vmem:[%s0 + $0x1b8] sm:$0xff]
    %v186 = vld [vmem:[%s0 + $0x1c0] sm:$0xff]
    %v187 = vld [vmem:[%s0 + $0x1c8] sm:$0xff]
    %v188 = vld [vmem:[%s0 + $0x1d0] sm:$0xff]
    %v189 = vld [vmem:[%s0 + $0x1d8] sm:$0xff]
    %v190 = vld [vmem:[%s0 + $0x1e0] sm:$0xff]
    %v191 = vld [vmem:[%s0 + $0x1e8] sm:$0xff]
    %v192 = vld [vmem:[%s0 + $0x1f0] sm:$0xff]
    %v193 = vld [vmem:[%s0 + $0x1f8] sm:$0xff]
    %s194 = scalar_lea.vmem [#allocation2], 24
    %vm195 = vcmask 31744
    %196 = vst.msk [vmem:[%s194 + $0x1] sm:$0xff] %vm195, %v130
    %197 = vst.msk [vmem:[%s194 + $0x9] sm:$0xff] %vm195, %v131
    %198 = vst.msk [vmem:[%s194 + $0x19] sm:$0xff] %vm195, %v132
    %199 = vst.msk [vmem:[%s194 + $0x21] sm:$0xff] %vm195, %v133
    %200 = vst.msk [vmem:[%s194 + $0x31] sm:$0xff] %vm195, %v134
    %201 = vst.msk [vmem:[%s194 + $0x39] sm:$0xff] %vm195, %v135
    %202 = vst.msk [vmem:[%s194 + $0x49] sm:$0xff] %vm195, %v136
    %203 = vst.msk [vmem:[%s194 + $0x51] sm:$0xff] %vm195, %v137
    %204 = vst.msk [vmem:[%s194 + $0x61] sm:$0xff] %vm195, %v138
    %205 = vst.msk [vmem:[%s194 + $0x69] sm:$0xff] %vm195, %v139
    %206 = vst.msk [vmem:[%s194 + $0x79] sm:$0xff] %vm195, %v140
    %207 = vst.msk [vmem:[%s194 + $0x81] sm:$0xff] %vm195, %v141
    %208 = vst.msk [vmem:[%s194 + $0x91] sm:$0xff] %vm195, %v142
    %209 = vst.msk [vmem:[%s194 + $0x99] sm:$0xff] %vm195, %v143
    %210 = vst.msk [vmem:[%s194 + $0xa9] sm:$0xff] %vm195, %v144
    %211 = vst.msk [vmem:[%s194 + $0xb1] sm:$0xff] %vm195, %v145
    %212 = vst.msk [vmem:[%s194 + $0xc1] sm:$0xff] %vm195, %v146
    %213 = vst.msk [vmem:[%s194 + $0xc9] sm:$0xff] %vm195, %v147
    %214 = vst.msk [vmem:[%s194 + $0xd9] sm:$0xff] %vm195, %v148
    %215 = vst.msk [vmem:[%s194 + $0xe1] sm:$0xff] %vm195, %v149
    %216 = vst.msk [vmem:[%s194 + $0xf1] sm:$0xff] %vm195, %v150
    %217 = vst.msk [vmem:[%s194 + $0xf9] sm:$0xff] %vm195, %v151
    %218 = vst.msk [vmem:[%s194 + $0x109] sm:$0xff] %vm195, %v152
    %219 = vst.msk [vmem:[%s194 + $0x111] sm:$0xff] %vm195, %v153
    %220 = vst.msk [vmem:[%s194 + $0x121] sm:$0xff] %vm195, %v154
    %221 = vst.msk [vmem:[%s194 + $0x129] sm:$0xff] %vm195, %v155
    %222 = vst.msk [vmem:[%s194 + $0x139] sm:$0xff] %vm195, %v156
    %223 = vst.msk [vmem:[%s194 + $0x141] sm:$0xff] %vm195, %v157
    %224 = vst.msk [vmem:[%s194 + $0x151] sm:$0xff] %vm195, %v158
    %225 = vst.msk [vmem:[%s194 + $0x159] sm:$0xff] %vm195, %v159
    %226 = vst.msk [vmem:[%s194 + $0x169] sm:$0xff] %vm195, %v160
    %227 = vst.msk [vmem:[%s194 + $0x171] sm:$0xff] %vm195, %v161
    %228 = vst.msk [vmem:[%s194 + $0x1b1] sm:$0xff] %vm195, %v162
    %229 = vst.msk [vmem:[%s194 + $0x1b9] sm:$0xff] %vm195, %v163
    %230 = vst.msk [vmem:[%s194 + $0x1c9] sm:$0xff] %vm195, %v164
    %231 = vst.msk [vmem:[%s194 + $0x1d1] sm:$0xff] %vm195, %v165
    %232 = vst.msk [vmem:[%s194 + $0x1e1] sm:$0xff] %vm195, %v166
    %233 = vst.msk [vmem:[%s194 + $0x1e9] sm:$0xff] %vm195, %v167
    %234 = vst.msk [vmem:[%s194 + $0x1f9] sm:$0xff] %vm195, %v168
    %235 = vst.msk [vmem:[%s194 + $0x201] sm:$0xff] %vm195, %v169
    %236 = vst.msk [vmem:[%s194 + $0x211] sm:$0xff] %vm195, %v170
    %237 = vst.msk [vmem:[%s194 + $0x219] sm:$0xff] %vm195, %v171
    %238 = vst.msk [vmem:[%s194 + $0x229] sm:$0xff] %vm195, %v172
    %239 = vst.msk [vmem:[%s194 + $0x231] sm:$0xff] %vm195, %v173
    %240 = vst.msk [vmem:[%s194 + $0x241] sm:$0xff] %vm195, %v174
    %241 = vst.msk [vmem:[%s194 + $0x249] sm:$0xff] %vm195, %v175
    %242 = vst.msk [vmem:[%s194 + $0x259] sm:$0xff] %vm195, %v176
    %243 = vst.msk [vmem:[%s194 + $0x261] sm:$0xff] %vm195, %v177
    %244 = vst.msk [vmem:[%s194 + $0x271] sm:$0xff] %vm195, %v178
    %245 = vst.msk [vmem:[%s194 + $0x279] sm:$0xff] %vm195, %v179
    %246 = vst.msk [vmem:[%s194 + $0x289] sm:$0xff] %vm195, %v180
    %247 = vst.msk [vmem:[%s194 + $0x291] sm:$0xff] %vm195, %v181
    %248 = vst.msk [vmem:[%s194 + $0x2a1] sm:$0xff] %vm195, %v182
    %249 = vst.msk [vmem:[%s194 + $0x2a9] sm:$0xff] %vm195, %v183
    %250 = vst.msk [vmem:[%s194 + $0x2b9] sm:$0xff] %vm195, %v184
    %251 = vst.msk [vmem:[%s194 + $0x2c1] sm:$0xff] %vm195, %v185
    %252 = vst.msk [vmem:[%s194 + $0x2d1] sm:$0xff] %vm195, %v186
    %253 = vst.msk [vmem:[%s194 + $0x2d9] sm:$0xff] %vm195, %v187
    %254 = vst.msk [vmem:[%s194 + $0x2e9] sm:$0xff] %vm195, %v188
    %255 = vst.msk [vmem:[%s194 + $0x2f1] sm:$0xff] %vm195, %v189
    %256 = vst.msk [vmem:[%s194 + $0x301] sm:$0xff] %vm195, %v190
    %257 = vst.msk [vmem:[%s194 + $0x309] sm:$0xff] %vm195, %v191
    %258 = vst.msk [vmem:[%s194 + $0x319] sm:$0xff] %vm195, %v192
    %259 = vst.msk [vmem:[%s194 + $0x321] sm:$0xff] %vm195, %v193
    %v260 = vld [vmem:[#allocation2] sm:$0xff]
    %v261 = vld [vmem:[#allocation2 + $0x8] sm:$0xff]
    %v262 = vld [vmem:[#allocation2 + $0x18] sm:$0xff]
    %v263 = vld [vmem:[#allocation2 + $0x20] sm:$0xff]
    %v264 = vld [vmem:[#allocation2 + $0x30] sm:$0xff]
    %v265 = vld [vmem:[#allocation2 + $0x38] sm:$0xff]
    %v266 = vld [vmem:[#allocation2 + $0x48] sm:$0xff]
    %v267 = vld [vmem:[#allocation2 + $0x50] sm:$0xff]
    %v268 = vld [vmem:[#allocation2 + $0x60] sm:$0xff]
    %v269 = vld [vmem:[#allocation2 + $0x68] sm:$0xff]
    %v270 = vld [vmem:[#allocation2 + $0x78] sm:$0xff]
    %v271 = vld [vmem:[#allocation2 + $0x80] sm:$0xff]
    %v272 = vld [vmem:[#allocation2 + $0x90] sm:$0xff]
    %v273 = vld [vmem:[#allocation2 + $0x98] sm:$0xff]
    %v274 = vld [vmem:[#allocation2 + $0xa8] sm:$0xff]
    %v275 = vld [vmem:[#allocation2 + $0xb0] sm:$0xff]
    %v276 = vld [vmem:[#allocation2 + $0xc0] sm:$0xff]
    %v277 = vld [vmem:[#allocation2 + $0xc8] sm:$0xff]
    %v278 = vld [vmem:[#allocation2 + $0xd8] sm:$0xff]
    %v279 = vld [vmem:[#allocation2 + $0xe0] sm:$0xff]
    %v280 = vld [vmem:[#allocation2 + $0xf0] sm:$0xff]
    %v281 = vld [vmem:[#allocation2 + $0xf8] sm:$0xff]
    %v282 = vld [vmem:[#allocation2 + $0x108] sm:$0xff]
    %v283 = vld [vmem:[#allocation2 + $0x110] sm:$0xff]
    %v284 = vld [vmem:[#allocation2 + $0x120] sm:$0xff]
    %v285 = vld [vmem:[#allocation2 + $0x128] sm:$0xff]
    %v286 = vld [vmem:[#allocation2 + $0x138] sm:$0xff]
    %v287 = vld [vmem:[#allocation2 + $0x140] sm:$0xff]
    %v288 = vld [vmem:[#allocation2 + $0x150] sm:$0xff]
    %v289 = vld [vmem:[#allocation2 + $0x158] sm:$0xff]
    %v290 = vld [vmem:[#allocation2 + $0x168] sm:$0xff]
    %v291 = vld [vmem:[#allocation2 + $0x170] sm:$0xff]
    %v292 = vld [vmem:[#allocation2 + $0x1b0] sm:$0xff]
    %v293 = vld [vmem:[#allocation2 + $0x1b8] sm:$0xff]
    %v294 = vld [vmem:[#allocation2 + $0x1c8] sm:$0xff]
    %v295 = vld [vmem:[#allocation2 + $0x1d0] sm:$0xff]
    %v296 = vld [vmem:[#allocation2 + $0x1e0] sm:$0xff]
    %v297 = vld [vmem:[#allocation2 + $0x1e8] sm:$0xff]
    %v298 = vld [vmem:[#allocation2 + $0x1f8] sm:$0xff]
    %v299 = vld [vmem:[#allocation2 + $0x200] sm:$0xff]
    %v300 = vld [vmem:[#allocation2 + $0x210] sm:$0xff]
    %v301 = vld [vmem:[#allocation2 + $0x218] sm:$0xff]
    %v302 = vld [vmem:[#allocation2 + $0x228] sm:$0xff]
    %v303 = vld [vmem:[#allocation2 + $0x230] sm:$0xff]
    %v304 = vld [vmem:[#allocation2 + $0x240] sm:$0xff]
    %v305 = vld [vmem:[#allocation2 + $0x248] sm:$0xff]
    %v306 = vld [vmem:[#allocation2 + $0x258] sm:$0xff]
    %v307 = vld [vmem:[#allocation2 + $0x260] sm:$0xff]
    %v308 = vld [vmem:[#allocation2 + $0x270] sm:$0xff]
    %v309 = vld [vmem:[#allocation2 + $0x278] sm:$0xff]
    %v310 = vld [vmem:[#allocation2 + $0x288] sm:$0xff]
    %v311 = vld [vmem:[#allocation2 + $0x290] sm:$0xff]
    %v312 = vld [vmem:[#allocation2 + $0x2a0] sm:$0xff]
    %v313 = vld [vmem:[#allocation2 + $0x2a8] sm:$0xff]
    %v314 = vld [vmem:[#allocation2 + $0x2b8] sm:$0xff]
    %v315 = vld [vmem:[#allocation2 + $0x2c0] sm:$0xff]
    %v316 = vld [vmem:[#allocation2 + $0x2d0] sm:$0xff]
    %v317 = vld [vmem:[#allocation2 + $0x2d8] sm:$0xff]
    %v318 = vld [vmem:[#allocation2 + $0x2e8] sm:$0xff]
    %v319 = vld [vmem:[#allocation2 + $0x2f0] sm:$0xff]
    %v320 = vld [vmem:[#allocation2 + $0x300] sm:$0xff]
    %v321 = vld [vmem:[#allocation2 + $0x308] sm:$0xff]
    %v322 = vld [vmem:[#allocation2 + $0x318] sm:$0xff]
    %v323 = vld [vmem:[#allocation2 + $0x320] sm:$0xff]
    %v324 = vpack.c.bf16 %v261, %v260
    %v325 = vpack.c.bf16 %v263, %v262
    %v326 = vpack.c.bf16 %v265, %v264
    %v327 = vpack.c.bf16 %v267, %v266
    %v328 = vpack.c.bf16 %v269, %v268
    %v329 = vpack.c.bf16 %v271, %v270
    %v330 = vpack.c.bf16 %v273, %v272
    %v331 = vpack.c.bf16 %v275, %v274
    %v332 = vpack.c.bf16 %v277, %v276
    %v333 = vpack.c.bf16 %v279, %v278
    %v334 = vpack.c.bf16 %v281, %v280
    %v335 = vpack.c.bf16 %v283, %v282
    %v336 = vpack.c.bf16 %v285, %v284
    %v337 = vpack.c.bf16 %v287, %v286
    %v338 = vpack.c.bf16 %v289, %v288
    %v339 = vpack.c.bf16 %v291, %v290
    %v340 = vpack.c.bf16 %v293, %v292
    %v341 = vpack.c.bf16 %v295, %v294
    %v342 = vpack.c.bf16 %v297, %v296
    %v343 = vpack.c.bf16 %v299, %v298
    %v344 = vpack.c.bf16 %v301, %v300
    %v345 = vpack.c.bf16 %v303, %v302
    %v346 = vpack.c.bf16 %v305, %v304
    %v347 = vpack.c.bf16 %v307, %v306
    %v348 = vpack.c.bf16 %v309, %v308
    %v349 = vpack.c.bf16 %v311, %v310
    %v350 = vpack.c.bf16 %v313, %v312
    %v351 = vpack.c.bf16 %v315, %v314
    %v352 = vpack.c.bf16 %v317, %v316
    %v353 = vpack.c.bf16 %v319, %v318
    %v354 = vpack.c.bf16 %v321, %v320
    %v355 = vpack.c.bf16 %v323, %v322
    %356 = vst [vmem:[#allocation3] sm:$0xff] %v324
    %357 = vst [vmem:[#allocation3 + $0x48] sm:$0xff] %v325
    %358 = vst [vmem:[#allocation3 + $0x90] sm:$0xff] %v326
    %359 = vst [vmem:[#allocation3 + $0xd8] sm:$0xff] %v327
    %360 = vst [vmem:[#allocation3 + $0x120] sm:$0xff] %v328
    %361 = vst [vmem:[#allocation3 + $0x168] sm:$0xff] %v329
    %362 = vst [vmem:[#allocation3 + $0x1b0] sm:$0xff] %v330
    %363 = vst [vmem:[#allocation3 + $0x1f8] sm:$0xff] %v331
    %364 = vst [vmem:[#allocation3 + $0x240] sm:$0xff] %v332
    %365 = vst [vmem:[#allocation3 + $0x288] sm:$0xff] %v333
    %366 = vst [vmem:[#allocation3 + $0x2d0] sm:$0xff] %v334
    %367 = vst [vmem:[#allocation3 + $0x318] sm:$0xff] %v335
    %368 = vst [vmem:[#allocation3 + $0x360] sm:$0xff] %v336
    %369 = vst [vmem:[#allocation3 + $0x3a8] sm:$0xff] %v337
    %370 = vst [vmem:[#allocation3 + $0x3f0] sm:$0xff] %v338
    %371 = vst [vmem:[#allocation3 + $0x438] sm:$0xff] %v339
    %372 = vst [vmem:[#allocation3 + $0x480] sm:$0xff] %v340
    %373 = vst [vmem:[#allocation3 + $0x4c8] sm:$0xff] %v341
    %374 = vst [vmem:[#allocation3 + $0x510] sm:$0xff] %v342
    %375 = vst [vmem:[#allocation3 + $0x558] sm:$0xff] %v343
    %376 = vst [vmem:[#allocation3 + $0x5a0] sm:$0xff] %v344
    %377 = vst [vmem:[#allocation3 + $0x5e8] sm:$0xff] %v345
    %378 = vst [vmem:[#allocation3 + $0x630] sm:$0xff] %v346
    %379 = vst [vmem:[#allocation3 + $0x678] sm:$0xff] %v347
    %380 = vst [vmem:[#allocation3 + $0x6c0] sm:$0xff] %v348
    %381 = vst [vmem:[#allocation3 + $0x708] sm:$0xff] %v349
    %382 = vst [vmem:[#allocation3 + $0x750] sm:$0xff] %v350
    %383 = vst [vmem:[#allocation3 + $0x798] sm:$0xff] %v351
    %384 = vst [vmem:[#allocation3 + $0x7e0] sm:$0xff] %v352
    %385 = vst [vmem:[#allocation3 + $0x828] sm:$0xff] %v353
    %386 = vst [vmem:[#allocation3 + $0x870] sm:$0xff] %v354
    %387 = vst [vmem:[#allocation3 + $0x8b8] sm:$0xff] %v355
    %v388 = vld [vmem:[#allocation2 + $0x1] sm:$0xff]
    %v389 = vld [vmem:[#allocation2 + $0x9] sm:$0xff]
    %v390 = vld [vmem:[#allocation2 + $0x19] sm:$0xff]
    %v391 = vld [vmem:[#allocation2 + $0x21] sm:$0xff]
    %v392 = vld [vmem:[#allocation2 + $0x31] sm:$0xff]
    %v393 = vld [vmem:[#allocation2 + $0x39] sm:$0xff]
    %v394 = vld [vmem:[#allocation2 + $0x49] sm:$0xff]
    %v395 = vld [vmem:[#allocation2 + $0x51] sm:$0xff]
    %v396 = vld [vmem:[#allocation2 + $0x61] sm:$0xff]
    %v397 = vld [vmem:[#allocation2 + $0x69] sm:$0xff]
    %v398 = vld [vmem:[#allocation2 + $0x79] sm:$0xff]
    %v399 = vld [vmem:[#allocation2 + $0x81] sm:$0xff]
    %v400 = vld [vmem:[#allocation2 + $0x91] sm:$0xff]
    %v401 = vld [vmem:[#allocation2 + $0x99] sm:$0xff]
    %v402 = vld [vmem:[#allocation2 + $0xa9] sm:$0xff]
    %v403 = vld [vmem:[#allocation2 + $0xb1] sm:$0xff]
    %v404 = vld [vmem:[#allocation2 + $0xc1] sm:$0xff]
    %v405 = vld [vmem:[#allocation2 + $0xc9] sm:$0xff]
    %v406 = vld [vmem:[#allocation2 + $0xd9] sm:$0xff]
    %v407 = vld [vmem:[#allocation2 + $0xe1] sm:$0xff]
    %v408 = vld [vmem:[#allocation2 + $0xf1] sm:$0xff]
    %v409 = vld [vmem:[#allocation2 + $0xf9] sm:$0xff]
    %v410 = vld [vmem:[#allocation2 + $0x109] sm:$0xff]
    %v411 = vld [vmem:[#allocation2 + $0x111] sm:$0xff]
    %v412 = vld [vmem:[#allocation2 + $0x121] sm:$0xff]
    %v413 = vld [vmem:[#allocation2 + $0x129] sm:$0xff]
    %v414 = vld [vmem:[#allocation2 + $0x139] sm:$0xff]
    %v415 = vld [vmem:[#allocation2 + $0x141] sm:$0xff]
    %v416 = vld [vmem:[#allocation2 + $0x151] sm:$0xff]
    %v417 = vld [vmem:[#allocation2 + $0x159] sm:$0xff]
    %v418 = vld [vmem:[#allocation2 + $0x169] sm:$0xff]
    %v419 = vld [vmem:[#allocation2 + $0x171] sm:$0xff]
    %v420 = vld [vmem:[#allocation2 + $0x1b1] sm:$0xff]
    %v421 = vld [vmem:[#allocation2 + $0x1b9] sm:$0xff]
    %v422 = vld [vmem:[#allocation2 + $0x1c9] sm:$0xff]
    %v423 = vld [vmem:[#allocation2 + $0x1d1] sm:$0xff]
    %v424 = vld [vmem:[#allocation2 + $0x1e1] sm:$0xff]
    %v425 = vld [vmem:[#allocation2 + $0x1e9] sm:$0xff]
    %v426 = vld [vmem:[#allocation2 + $0x1f9] sm:$0xff]
    %v427 = vld [vmem:[#allocation2 + $0x201] sm:$0xff]
    %v428 = vld [vmem:[#allocation2 + $0x211] sm:$0xff]
    %v429 = vld [vmem:[#allocation2 + $0x219] sm:$0xff]
    %v430 = vld [vmem:[#allocation2 + $0x229] sm:$0xff]
    %v431 = vld [vmem:[#allocation2 + $0x231] sm:$0xff]
    %v432 = vld [vmem:[#allocation2 + $0x241] sm:$0xff]
    %v433 = vld [vmem:[#allocation2 + $0x249] sm:$0xff]
    %v434 = vld [vmem:[#allocation2 + $0x259] sm:$0xff]
    %v435 = vld [vmem:[#allocation2 + $0x261] sm:$0xff]
    %v436 = vld [vmem:[#allocation2 + $0x271] sm:$0xff]
    %v437 = vld [vmem:[#allocation2 + $0x279] sm:$0xff]
    %v438 = vld [vmem:[#allocation2 + $0x289] sm:$0xff]
    %v439 = vld [vmem:[#allocation2 + $0x291] sm:$0xff]
    %v440 = vld [vmem:[#allocation2 + $0x2a1] sm:$0xff]
    %v441 = vld [vmem:[#allocation2 + $0x2a9] sm:$0xff]
    %v442 = vld [vmem:[#allocation2 + $0x2b9] sm:$0xff]
    %v443 = vld [vmem:[#allocation2 + $0x2c1] sm:$0xff]
    %v444 = vld [vmem:[#allocation2 + $0x2d1] sm:$0xff]
    %v445 = vld [vmem:[#allocation2 + $0x2d9] sm:$0xff]
    %v446 = vld [vmem:[#allocation2 + $0x2e9] sm:$0xff]
    %v447 = vld [vmem:[#allocation2 + $0x2f1] sm:$0xff]
    %v448 = vld [vmem:[#allocation2 + $0x301] sm:$0xff]
    %v449 = vld [vmem:[#allocation2 + $0x309] sm:$0xff]
    %v450 = vld [vmem:[#allocation2 + $0x319] sm:$0xff]
    %v451 = vld [vmem:[#allocation2 + $0x321] sm:$0xff]
    %v452 = vpack.c.bf16 %v389, %v388
    %v453 = vpack.c.bf16 %v391, %v390
    %v454 = vpack.c.bf16 %v393, %v392
    %v455 = vpack.c.bf16 %v395, %v394
    %v456 = vpack.c.bf16 %v397, %v396
    %v457 = vpack.c.bf16 %v399, %v398
    %v458 = vpack.c.bf16 %v401, %v400
    %v459 = vpack.c.bf16 %v403, %v402
    %v460 = vpack.c.bf16 %v405, %v404
    %v461 = vpack.c.bf16 %v407, %v406
    %v462 = vpack.c.bf16 %v409, %v408
    %v463 = vpack.c.bf16 %v411, %v410
    %v464 = vpack.c.bf16 %v413, %v412
    %v465 = vpack.c.bf16 %v415, %v414
    %v466 = vpack.c.bf16 %v417, %v416
    %v467 = vpack.c.bf16 %v419, %v418
    %v468 = vpack.c.bf16 %v421, %v420
    %v469 = vpack.c.bf16 %v423, %v422
    %v470 = vpack.c.bf16 %v425, %v424
    %v471 = vpack.c.bf16 %v427, %v426
    %v472 = vpack.c.bf16 %v429, %v428
    %v473 = vpack.c.bf16 %v431, %v430
    %v474 = vpack.c.bf16 %v433, %v432
    %v475 = vpack.c.bf16 %v435, %v434
    %v476 = vpack.c.bf16 %v437, %v436
    %v477 = vpack.c.bf16 %v439, %v438
    %v478 = vpack.c.bf16 %v441, %v440
    %v479 = vpack.c.bf16 %v443, %v442
    %v480 = vpack.c.bf16 %v445, %v444
    %v481 = vpack.c.bf16 %v447, %v446
    %v482 = vpack.c.bf16 %v449, %v448
    %v483 = vpack.c.bf16 %v451, %v450
    %484 = vst [vmem:[#allocation3 + $0x8] sm:$0xff] %v452
    %485 = vst [vmem:[#allocation3 + $0x50] sm:$0xff] %v453
    %486 = vst [vmem:[#allocation3 + $0x98] sm:$0xff] %v454
    %487 = vst [vmem:[#allocation3 + $0xe0] sm:$0xff] %v455
    %488 = vst [vmem:[#allocation3 + $0x128] sm:$0xff] %v456
    %489 = vst [vmem:[#allocation3 + $0x170] sm:$0xff] %v457
    %490 = vst [vmem:[#allocation3 + $0x1b8] sm:$0xff] %v458
    %491 = vst [vmem:[#allocation3 + $0x200] sm:$0xff] %v459
    %492 = vst [vmem:[#allocation3 + $0x248] sm:$0xff] %v460
    %493 = vst [vmem:[#allocation3 + $0x290] sm:$0xff] %v461
    %494 = vst [vmem:[#allocation3 + $0x2d8] sm:$0xff] %v462
    %495 = vst [vmem:[#allocation3 + $0x320] sm:$0xff] %v463
    %496 = vst [vmem:[#allocation3 + $0x368] sm:$0xff] %v464
    %497 = vst [vmem:[#allocation3 + $0x3b0] sm:$0xff] %v465
    %498 = vst [vmem:[#allocation3 + $0x3f8] sm:$0xff] %v466
    %499 = vst [vmem:[#allocation3 + $0x440] sm:$0xff] %v467
    %500 = vst [vmem:[#allocation3 + $0x488] sm:$0xff] %v468
    %501 = vst [vmem:[#allocation3 + $0x4d0] sm:$0xff] %v469
    %502 = vst [vmem:[#allocation3 + $0x518] sm:$0xff] %v470
    %503 = vst [vmem:[#allocation3 + $0x560] sm:$0xff] %v471
    %504 = vst [vmem:[#allocation3 + $0x5a8] sm:$0xff] %v472
    %505 = vst [vmem:[#allocation3 + $0x5f0] sm:$0xff] %v473
    %506 = vst [vmem:[#allocation3 + $0x638] sm:$0xff] %v474
    %507 = vst [vmem:[#allocation3 + $0x680] sm:$0xff] %v475
    %508 = vst [vmem:[#allocation3 + $0x6c8] sm:$0xff] %v476
    %509 = vst [vmem:[#allocation3 + $0x710] sm:$0xff] %v477
    %510 = vst [vmem:[#allocation3 + $0x758] sm:$0xff] %v478
    %511 = vst [vmem:[#allocation3 + $0x7a0] sm:$0xff] %v479
    %512 = vst [vmem:[#allocation3 + $0x7e8] sm:$0xff] %v480
    %513 = vst [vmem:[#allocation3 + $0x830] sm:$0xff] %v481
    %514 = vst [vmem:[#allocation3 + $0x878] sm:$0xff] %v482
    %515 = vst [vmem:[#allocation3 + $0x8c0] sm:$0xff] %v483
    %v516 = vld [vmem:[#allocation2 + $0x2] sm:$0xff]
    %v517 = vld [vmem:[#allocation2 + $0xa] sm:$0xff]
    %v518 = vld [vmem:[#allocation2 + $0x1a] sm:$0xff]
    %v519 = vld [vmem:[#allocation2 + $0x22] sm:$0xff]
    %v520 = vld [vmem:[#allocation2 + $0x32] sm:$0xff]
    %v521 = vld [vmem:[#allocation2 + $0x3a] sm:$0xff]
    %v522 = vld [vmem:[#allocation2 + $0x4a] sm:$0xff]
    %v523 = vld [vmem:[#allocation2 + $0x52] sm:$0xff]
    %v524 = vld [vmem:[#allocation2 + $0x62] sm:$0xff]
    %v525 = vld [vmem:[#allocation2 + $0x6a] sm:$0xff]
    %v526 = vld [vmem:[#allocation2 + $0x7a] sm:$0xff]
    %v527 = vld [vmem:[#allocation2 + $0x82] sm:$0xff]
    %v528 = vld [vmem:[#allocation2 + $0x92] sm:$0xff]
    %v529 = vld [vmem:[#allocation2 + $0x9a] sm:$0xff]
    %v530 = vld [vmem:[#allocation2 + $0xaa] sm:$0xff]
    %v531 = vld [vmem:[#allocation2 + $0xb2] sm:$0xff]
    %v532 = vld [vmem:[#allocation2 + $0xc2] sm:$0xff]
    %v533 = vld [vmem:[#allocation2 + $0xca] sm:$0xff]
    %v534 = vld [vmem:[#allocation2 + $0xda] sm:$0xff]
    %v535 = vld [vmem:[#allocation2 + $0xe2] sm:$0xff]
    %v536 = vld [vmem:[#allocation2 + $0xf2] sm:$0xff]
    %v537 = vld [vmem:[#allocation2 + $0xfa] sm:$0xff]
    %v538 = vld [vmem:[#allocation2 + $0x10a] sm:$0xff]
    %v539 = vld [vmem:[#allocation2 + $0x112] sm:$0xff]
    %v540 = vld [vmem:[#allocation2 + $0x122] sm:$0xff]
    %v541 = vld [vmem:[#allocation2 + $0x12a] sm:$0xff]
    %v542 = vld [vmem:[#allocation2 + $0x13a] sm:$0xff]
    %v543 = vld [vmem:[#allocation2 + $0x142] sm:$0xff]
    %v544 = vld [vmem:[#allocation2 + $0x152] sm:$0xff]
    %v545 = vld [vmem:[#allocation2 + $0x15a] sm:$0xff]
    %v546 = vld [vmem:[#allocation2 + $0x16a] sm:$0xff]
    %v547 = vld [vmem:[#allocation2 + $0x172] sm:$0xff]
    %v548 = vld [vmem:[#allocation2 + $0x1b2] sm:$0xff]
    %v549 = vld [vmem:[#allocation2 + $0x1ba] sm:$0xff]
    %v550 = vld [vmem:[#allocation2 + $0x1ca] sm:$0xff]
    %v551 = vld [vmem:[#allocation2 + $0x1d2] sm:$0xff]
    %v552 = vld [vmem:[#allocation2 + $0x1e2] sm:$0xff]
    %v553 = vld [vmem:[#allocation2 + $0x1ea] sm:$0xff]
    %v554 = vld [vmem:[#allocation2 + $0x1fa] sm:$0xff]
    %v555 = vld [vmem:[#allocation2 + $0x202] sm:$0xff]
    %v556 = vld [vmem:[#allocation2 + $0x212] sm:$0xff]
    %v557 = vld [vmem:[#allocation2 + $0x21a] sm:$0xff]
    %v558 = vld [vmem:[#allocation2 + $0x22a] sm:$0xff]
    %v559 = vld [vmem:[#allocation2 + $0x232] sm:$0xff]
    %v560 = vld [vmem:[#allocation2 + $0x242] sm:$0xff]
    %v561 = vld [vmem:[#allocation2 + $0x24a] sm:$0xff]
    %v562 = vld [vmem:[#allocation2 + $0x25a] sm:$0xff]
    %v563 = vld [vmem:[#allocation2 + $0x262] sm:$0xff]
    %v564 = vld [vmem:[#allocation2 + $0x272] sm:$0xff]
    %v565 = vld [vmem:[#allocation2 + $0x27a] sm:$0xff]
    %v566 = vld [vmem:[#allocation2 + $0x28a] sm:$0xff]
    %v567 = vld [vmem:[#allocation2 + $0x292] sm:$0xff]
    %v568 = vld [vmem:[#allocation2 + $0x2a2] sm:$0xff]
    %v569 = vld [vmem:[#allocation2 + $0x2aa] sm:$0xff]
    %v570 = vld [vmem:[#allocation2 + $0x2ba] sm:$0xff]
    %v571 = vld [vmem:[#allocation2 + $0x2c2] sm:$0xff]
    %v572 = vld [vmem:[#allocation2 + $0x2d2] sm:$0xff]
    %v573 = vld [vmem:[#allocation2 + $0x2da] sm:$0xff]
    %v574 = vld [vmem:[#allocation2 + $0x2ea] sm:$0xff]
    %v575 = vld [vmem:[#allocation2 + $0x2f2] sm:$0xff]
    %v576 = vld [vmem:[#allocation2 + $0x302] sm:$0xff]
    %v577 = vld [vmem:[#allocation2 + $0x30a] sm:$0xff]
    %v578 = vld [vmem:[#allocation2 + $0x31a] sm:$0xff]
    %v579 = vld [vmem:[#allocation2 + $0x322] sm:$0xff]
    %v580 = vpack.c.bf16 %v517, %v516
    %v581 = vpack.c.bf16 %v519, %v518
    %v582 = vpack.c.bf16 %v521, %v520
    %v583 = vpack.c.bf16 %v523, %v522
    %v584 = vpack.c.bf16 %v525, %v524
    %v585 = vpack.c.bf16 %v527, %v526
    %v586 = vpack.c.bf16 %v529, %v528
    %v587 = vpack.c.bf16 %v531, %v530
    %v588 = vpack.c.bf16 %v533, %v532
    %v589 = vpack.c.bf16 %v535, %v534
    %v590 = vpack.c.bf16 %v537, %v536
    %v591 = vpack.c.bf16 %v539, %v538
    %v592 = vpack.c.bf16 %v541, %v540
    %v593 = vpack.c.bf16 %v543, %v542
    %v594 = vpack.c.bf16 %v545, %v544
    %v595 = vpack.c.bf16 %v547, %v546
    %v596 = vpack.c.bf16 %v549, %v548
    %v597 = vpack.c.bf16 %v551, %v550
    %v598 = vpack.c.bf16 %v553, %v552
    %v599 = vpack.c.bf16 %v555, %v554
    %v600 = vpack.c.bf16 %v557, %v556
    %v601 = vpack.c.bf16 %v559, %v558
    %v602 = vpack.c.bf16 %v561, %v560
    %v603 = vpack.c.bf16 %v563, %v562
    %v604 = vpack.c.bf16 %v565, %v564
    %v605 = vpack.c.bf16 %v567, %v566
    %v606 = vpack.c.bf16 %v569, %v568
    %v607 = vpack.c.bf16 %v571, %v570
    %v608 = vpack.c.bf16 %v573, %v572
    %v609 = vpack.c.bf16 %v575, %v574
    %v610 = vpack.c.bf16 %v577, %v576
    %v611 = vpack.c.bf16 %v579, %v578
    %612 = vst [vmem:[#allocation3 + $0x10] sm:$0xff] %v580
    %613 = vst [vmem:[#allocation3 + $0x58] sm:$0xff] %v581
    %614 = vst [vmem:[#allocation3 + $0xa0] sm:$0xff] %v582
    %615 = vst [vmem:[#allocation3 + $0xe8] sm:$0xff] %v583
    %616 = vst [vmem:[#allocation3 + $0x130] sm:$0xff] %v584
    %617 = vst [vmem:[#allocation3 + $0x178] sm:$0xff] %v585
    %618 = vst [vmem:[#allocation3 + $0x1c0] sm:$0xff] %v586
    %619 = vst [vmem:[#allocation3 + $0x208] sm:$0xff] %v587
    %620 = vst [vmem:[#allocation3 + $0x250] sm:$0xff] %v588
    %621 = vst [vmem:[#allocation3 + $0x298] sm:$0xff] %v589
    %622 = vst [vmem:[#allocation3 + $0x2e0] sm:$0xff] %v590
    %623 = vst [vmem:[#allocation3 + $0x328] sm:$0xff] %v591
    %624 = vst [vmem:[#allocation3 + $0x370] sm:$0xff] %v592
    %625 = vst [vmem:[#allocation3 + $0x3b8] sm:$0xff] %v593
    %626 = vst [vmem:[#allocation3 + $0x400] sm:$0xff] %v594
    %627 = vst [vmem:[#allocation3 + $0x448] sm:$0xff] %v595
    %628 = vst [vmem:[#allocation3 + $0x490] sm:$0xff] %v596
    %629 = vst [vmem:[#allocation3 + $0x4d8] sm:$0xff] %v597
    %630 = vst [vmem:[#allocation3 + $0x520] sm:$0xff] %v598
    %631 = vst [vmem:[#allocation3 + $0x568] sm:$0xff] %v599
    %632 = vst [vmem:[#allocation3 + $0x5b0] sm:$0xff] %v600
    %633 = vst [vmem:[#allocation3 + $0x5f8] sm:$0xff] %v601
    %634 = vst [vmem:[#allocation3 + $0x640] sm:$0xff] %v602
    %635 = vst [vmem:[#allocation3 + $0x688] sm:$0xff] %v603
    %636 = vst [vmem:[#allocation3 + $0x6d0] sm:$0xff] %v604
    %637 = vst [vmem:[#allocation3 + $0x718] sm:$0xff] %v605
    %638 = vst [vmem:[#allocation3 + $0x760] sm:$0xff] %v606
    %639 = vst [vmem:[#allocation3 + $0x7a8] sm:$0xff] %v607
    %640 = vst [vmem:[#allocation3 + $0x7f0] sm:$0xff] %v608
    %641 = vst [vmem:[#allocation3 + $0x838] sm:$0xff] %v609
    %642 = vst [vmem:[#allocation3 + $0x880] sm:$0xff] %v610
    %643 = vst [vmem:[#allocation3 + $0x8c8] sm:$0xff] %v611
    %v644 = vld [vmem:[%s194] sm:$0xff]
    %v645 = vld [vmem:[%s194 + $0x8] sm:$0xff]
    %v646 = vld [vmem:[%s194 + $0x18] sm:$0xff]
    %v647 = vld [vmem:[%s194 + $0x20] sm:$0xff]
    %v648 = vld [vmem:[%s194 + $0x30] sm:$0xff]
    %v649 = vld [vmem:[%s194 + $0x38] sm:$0xff]
    %v650 = vld [vmem:[%s194 + $0x48] sm:$0xff]
    %v651 = vld [vmem:[%s194 + $0x50] sm:$0xff]
    %v652 = vld [vmem:[%s194 + $0x60] sm:$0xff]
    %v653 = vld [vmem:[%s194 + $0x68] sm:$0xff]
    %v654 = vld [vmem:[%s194 + $0x78] sm:$0xff]
    %v655 = vld [vmem:[%s194 + $0x80] sm:$0xff]
    %v656 = vld [vmem:[%s194 + $0x90] sm:$0xff]
    %v657 = vld [vmem:[%s194 + $0x98] sm:$0xff]
    %v658 = vld [vmem:[%s194 + $0xa8] sm:$0xff]
    %v659 = vld [vmem:[%s194 + $0xb0] sm:$0xff]
    %v660 = vld [vmem:[%s194 + $0xc0] sm:$0xff]
    %v661 = vld [vmem:[%s194 + $0xc8] sm:$0xff]
    %v662 = vld [vmem:[%s194 + $0xd8] sm:$0xff]
    %v663 = vld [vmem:[%s194 + $0xe0] sm:$0xff]
    %v664 = vld [vmem:[%s194 + $0xf0] sm:$0xff]
    %v665 = vld [vmem:[%s194 + $0xf8] sm:$0xff]
    %v666 = vld [vmem:[%s194 + $0x108] sm:$0xff]
    %v667 = vld [vmem:[%s194 + $0x110] sm:$0xff]
    %v668 = vld [vmem:[%s194 + $0x120] sm:$0xff]
    %v669 = vld [vmem:[%s194 + $0x128] sm:$0xff]
    %v670 = vld [vmem:[%s194 + $0x138] sm:$0xff]
    %v671 = vld [vmem:[%s194 + $0x140] sm:$0xff]
    %v672 = vld [vmem:[%s194 + $0x150] sm:$0xff]
    %v673 = vld [vmem:[%s194 + $0x158] sm:$0xff]
    %v674 = vld [vmem:[%s194 + $0x168] sm:$0xff]
    %v675 = vld [vmem:[%s194 + $0x170] sm:$0xff]
    %v676 = vld [vmem:[%s194 + $0x1b0] sm:$0xff]
    %v677 = vld [vmem:[%s194 + $0x1b8] sm:$0xff]
    %v678 = vld [vmem:[%s194 + $0x1c8] sm:$0xff]
    %v679 = vld [vmem:[%s194 + $0x1d0] sm:$0xff]
    %v680 = vld [vmem:[%s194 + $0x1e0] sm:$0xff]
    %v681 = vld [vmem:[%s194 + $0x1e8] sm:$0xff]
    %v682 = vld [vmem:[%s194 + $0x1f8] sm:$0xff]
    %v683 = vld [vmem:[%s194 + $0x200] sm:$0xff]
    %v684 = vld [vmem:[%s194 + $0x210] sm:$0xff]
    %v685 = vld [vmem:[%s194 + $0x218] sm:$0xff]
    %v686 = vld [vmem:[%s194 + $0x228] sm:$0xff]
    %v687 = vld [vmem:[%s194 + $0x230] sm:$0xff]
    %v688 = vld [vmem:[%s194 + $0x240] sm:$0xff]
    %v689 = vld [vmem:[%s194 + $0x248] sm:$0xff]
    %v690 = vld [vmem:[%s194 + $0x258] sm:$0xff]
    %v691 = vld [vmem:[%s194 + $0x260] sm:$0xff]
    %v692 = vld [vmem:[%s194 + $0x270] sm:$0xff]
    %v693 = vld [vmem:[%s194 + $0x278] sm:$0xff]
    %v694 = vld [vmem:[%s194 + $0x288] sm:$0xff]
    %v695 = vld [vmem:[%s194 + $0x290] sm:$0xff]
    %v696 = vld [vmem:[%s194 + $0x2a0] sm:$0xff]
    %v697 = vld [vmem:[%s194 + $0x2a8] sm:$0xff]
    %v698 = vld [vmem:[%s194 + $0x2b8] sm:$0xff]
    %v699 = vld [vmem:[%s194 + $0x2c0] sm:$0xff]
    %v700 = vld [vmem:[%s194 + $0x2d0] sm:$0xff]
    %v701 = vld [vmem:[%s194 + $0x2d8] sm:$0xff]
    %v702 = vld [vmem:[%s194 + $0x2e8] sm:$0xff]
    %v703 = vld [vmem:[%s194 + $0x2f0] sm:$0xff]
    %v704 = vld [vmem:[%s194 + $0x300] sm:$0xff]
    %v705 = vld [vmem:[%s194 + $0x308] sm:$0xff]
    %v706 = vld [vmem:[%s194 + $0x318] sm:$0xff]
    %v707 = vld [vmem:[%s194 + $0x320] sm:$0xff]
    %v708 = vpack.c.bf16 %v645, %v644
    %v709 = vpack.c.bf16 %v647, %v646
    %v710 = vpack.c.bf16 %v649, %v648
    %v711 = vpack.c.bf16 %v651, %v650
    %v712 = vpack.c.bf16 %v653, %v652
    %v713 = vpack.c.bf16 %v655, %v654
    %v714 = vpack.c.bf16 %v657, %v656
    %v715 = vpack.c.bf16 %v659, %v658
    %v716 = vpack.c.bf16 %v661, %v660
    %v717 = vpack.c.bf16 %v663, %v662
    %v718 = vpack.c.bf16 %v665, %v664
    %v719 = vpack.c.bf16 %v667, %v666
    %v720 = vpack.c.bf16 %v669, %v668
    %v721 = vpack.c.bf16 %v671, %v670
    %v722 = vpack.c.bf16 %v673, %v672
    %v723 = vpack.c.bf16 %v675, %v674
    %v724 = vpack.c.bf16 %v677, %v676
    %v725 = vpack.c.bf16 %v679, %v678
    %v726 = vpack.c.bf16 %v681, %v680
    %v727 = vpack.c.bf16 %v683, %v682
    %v728 = vpack.c.bf16 %v685, %v684
    %v729 = vpack.c.bf16 %v687, %v686
    %v730 = vpack.c.bf16 %v689, %v688
    %v731 = vpack.c.bf16 %v691, %v690
    %v732 = vpack.c.bf16 %v693, %v692
    %v733 = vpack.c.bf16 %v695, %v694
    %v734 = vpack.c.bf16 %v697, %v696
    %v735 = vpack.c.bf16 %v699, %v698
    %v736 = vpack.c.bf16 %v701, %v700
    %v737 = vpack.c.bf16 %v703, %v702
    %v738 = vpack.c.bf16 %v705, %v704
    %v739 = vpack.c.bf16 %v707, %v706
    %740 = vst [vmem:[#allocation3 + $0x18] sm:$0xff] %v708
    %741 = vst [vmem:[#allocation3 + $0x60] sm:$0xff] %v709
    %742 = vst [vmem:[#allocation3 + $0xa8] sm:$0xff] %v710
    %743 = vst [vmem:[#allocation3 + $0xf0] sm:$0xff] %v711
    %744 = vst [vmem:[#allocation3 + $0x138] sm:$0xff] %v712
    %745 = vst [vmem:[#allocation3 + $0x180] sm:$0xff] %v713
    %746 = vst [vmem:[#allocation3 + $0x1c8] sm:$0xff] %v714
    %747 = vst [vmem:[#allocation3 + $0x210] sm:$0xff] %v715
    %748 = vst [vmem:[#allocation3 + $0x258] sm:$0xff] %v716
    %749 = vst [vmem:[#allocation3 + $0x2a0] sm:$0xff] %v717
    %750 = vst [vmem:[#allocation3 + $0x2e8] sm:$0xff] %v718
    %751 = vst [vmem:[#allocation3 + $0x330] sm:$0xff] %v719
    %752 = vst [vmem:[#allocation3 + $0x378] sm:$0xff] %v720
    %753 = vst [vmem:[#allocation3 + $0x3c0] sm:$0xff] %v721
    %754 = vst [vmem:[#allocation3 + $0x408] sm:$0xff] %v722
    %755 = vst [vmem:[#allocation3 + $0x450] sm:$0xff] %v723
    %756 = vst [vmem:[#allocation3 + $0x498] sm:$0xff] %v724
    %757 = vst [vmem:[#allocation3 + $0x4e0] sm:$0xff] %v725
    %758 = vst [vmem:[#allocation3 + $0x528] sm:$0xff] %v726
    %759 = vst [vmem:[#allocation3 + $0x570] sm:$0xff] %v727
    %760 = vst [vmem:[#allocation3 + $0x5b8] sm:$0xff] %v728
    %761 = vst [vmem:[#allocation3 + $0x600] sm:$0xff] %v729
    %762 = vst [vmem:[#allocation3 + $0x648] sm:$0xff] %v730
    %763 = vst [vmem:[#allocation3 + $0x690] sm:$0xff] %v731
    %764 = vst [vmem:[#allocation3 + $0x6d8] sm:$0xff] %v732
    %765 = vst [vmem:[#allocation3 + $0x720] sm:$0xff] %v733
    %766 = vst [vmem:[#allocation3 + $0x768] sm:$0xff] %v734
    %767 = vst [vmem:[#allocation3 + $0x7b0] sm:$0xff] %v735
    %768 = vst [vmem:[#allocation3 + $0x7f8] sm:$0xff] %v736
    %769 = vst [vmem:[#allocation3 + $0x840] sm:$0xff] %v737
    %770 = vst [vmem:[#allocation3 + $0x888] sm:$0xff] %v738
    %771 = vst [vmem:[#allocation3 + $0x8d0] sm:$0xff] %v739
    %v772 = vld [vmem:[%s194 + $0x1] sm:$0xff]
    %v773 = vld [vmem:[%s194 + $0x9] sm:$0xff]
    %v774 = vld [vmem:[%s194 + $0x19] sm:$0xff]
    %v775 = vld [vmem:[%s194 + $0x21] sm:$0xff]
    %v776 = vld [vmem:[%s194 + $0x31] sm:$0xff]
    %v777 = vld [vmem:[%s194 + $0x39] sm:$0xff]
    %v778 = vld [vmem:[%s194 + $0x49] sm:$0xff]
    %v779 = vld [vmem:[%s194 + $0x51] sm:$0xff]
    %v780 = vld [vmem:[%s194 + $0x61] sm:$0xff]
    %v781 = vld [vmem:[%s194 + $0x69] sm:$0xff]
    %v782 = vld [vmem:[%s194 + $0x79] sm:$0xff]
    %v783 = vld [vmem:[%s194 + $0x81] sm:$0xff]
    %v784 = vld [vmem:[%s194 + $0x91] sm:$0xff]
    %v785 = vld [vmem:[%s194 + $0x99] sm:$0xff]
    %v786 = vld [vmem:[%s194 + $0xa9] sm:$0xff]
    %v787 = vld [vmem:[%s194 + $0xb1] sm:$0xff]
    %v788 = vld [vmem:[%s194 + $0xc1] sm:$0xff]
    %v789 = vld [vmem:[%s194 + $0xc9] sm:$0xff]
    %v790 = vld [vmem:[%s194 + $0xd9] sm:$0xff]
    %v791 = vld [vmem:[%s194 + $0xe1] sm:$0xff]
    %v792 = vld [vmem:[%s194 + $0xf1] sm:$0xff]
    %v793 = vld [vmem:[%s194 + $0xf9] sm:$0xff]
    %v794 = vld [vmem:[%s194 + $0x109] sm:$0xff]
    %v795 = vld [vmem:[%s194 + $0x111] sm:$0xff]
    %v796 = vld [vmem:[%s194 + $0x121] sm:$0xff]
    %v797 = vld [vmem:[%s194 + $0x129] sm:$0xff]
    %v798 = vld [vmem:[%s194 + $0x139] sm:$0xff]
    %v799 = vld [vmem:[%s194 + $0x141] sm:$0xff]
    %v800 = vld [vmem:[%s194 + $0x151] sm:$0xff]
    %v801 = vld [vmem:[%s194 + $0x159] sm:$0xff]
    %v802 = vld [vmem:[%s194 + $0x169] sm:$0xff]
    %v803 = vld [vmem:[%s194 + $0x171] sm:$0xff]
    %v804 = vld [vmem:[%s194 + $0x1b1] sm:$0xff]
    %v805 = vld [vmem:[%s194 + $0x1b9] sm:$0xff]
    %v806 = vld [vmem:[%s194 + $0x1c9] sm:$0xff]
    %v807 = vld [vmem:[%s194 + $0x1d1] sm:$0xff]
    %v808 = vld [vmem:[%s194 + $0x1e1] sm:$0xff]
    %v809 = vld [vmem:[%s194 + $0x1e9] sm:$0xff]
    %v810 = vld [vmem:[%s194 + $0x1f9] sm:$0xff]
    %v811 = vld [vmem:[%s194 + $0x201] sm:$0xff]
    %v812 = vld [vmem:[%s194 + $0x211] sm:$0xff]
    %v813 = vld [vmem:[%s194 + $0x219] sm:$0xff]
    %v814 = vld [vmem:[%s194 + $0x229] sm:$0xff]
    %v815 = vld [vmem:[%s194 + $0x231] sm:$0xff]
    %v816 = vld [vmem:[%s194 + $0x241] sm:$0xff]
    %v817 = vld [vmem:[%s194 + $0x249] sm:$0xff]
    %v818 = vld [vmem:[%s194 + $0x259] sm:$0xff]
    %v819 = vld [vmem:[%s194 + $0x261] sm:$0xff]
    %v820 = vld [vmem:[%s194 + $0x271] sm:$0xff]
    %v821 = vld [vmem:[%s194 + $0x279] sm:$0xff]
    %v822 = vld [vmem:[%s194 + $0x289] sm:$0xff]
    %v823 = vld [vmem:[%s194 + $0x291] sm:$0xff]
    %v824 = vld [vmem:[%s194 + $0x2a1] sm:$0xff]
    %v825 = vld [vmem:[%s194 + $0x2a9] sm:$0xff]
    %v826 = vld [vmem:[%s194 + $0x2b9] sm:$0xff]
    %v827 = vld [vmem:[%s194 + $0x2c1] sm:$0xff]
    %v828 = vld [vmem:[%s194 + $0x2d1] sm:$0xff]
    %v829 = vld [vmem:[%s194 + $0x2d9] sm:$0xff]
    %v830 = vld [vmem:[%s194 + $0x2e9] sm:$0xff]
    %v831 = vld [vmem:[%s194 + $0x2f1] sm:$0xff]
    %v832 = vld [vmem:[%s194 + $0x301] sm:$0xff]
    %v833 = vld [vmem:[%s194 + $0x309] sm:$0xff]
    %v834 = vld [vmem:[%s194 + $0x319] sm:$0xff]
    %v835 = vld [vmem:[%s194 + $0x321] sm:$0xff]
    %v836 = vpack.c.bf16 %v773, %v772
    %v837 = vpack.c.bf16 %v775, %v774
    %v838 = vpack.c.bf16 %v777, %v776
    %v839 = vpack.c.bf16 %v779, %v778
    %v840 = vpack.c.bf16 %v781, %v780
    %v841 = vpack.c.bf16 %v783, %v782
    %v842 = vpack.c.bf16 %v785, %v784
    %v843 = vpack.c.bf16 %v787, %v786
    %v844 = vpack.c.bf16 %v789, %v788
    %v845 = vpack.c.bf16 %v791, %v790
    %v846 = vpack.c.bf16 %v793, %v792
    %v847 = vpack.c.bf16 %v795, %v794
    %v848 = vpack.c.bf16 %v797, %v796
    %v849 = vpack.c.bf16 %v799, %v798
    %v850 = vpack.c.bf16 %v801, %v800
    %v851 = vpack.c.bf16 %v803, %v802
    %v852 = vpack.c.bf16 %v805, %v804
    %v853 = vpack.c.bf16 %v807, %v806
    %v854 = vpack.c.bf16 %v809, %v808
    %v855 = vpack.c.bf16 %v811, %v810
    %v856 = vpack.c.bf16 %v813, %v812
    %v857 = vpack.c.bf16 %v815, %v814
    %v858 = vpack.c.bf16 %v817, %v816
    %v859 = vpack.c.bf16 %v819, %v818
    %v860 = vpack.c.bf16 %v821, %v820
    %v861 = vpack.c.bf16 %v823, %v822
    %v862 = vpack.c.bf16 %v825, %v824
    %v863 = vpack.c.bf16 %v827, %v826
    %v864 = vpack.c.bf16 %v829, %v828
    %v865 = vpack.c.bf16 %v831, %v830
    %v866 = vpack.c.bf16 %v833, %v832
    %v867 = vpack.c.bf16 %v835, %v834
    %868 = vst [vmem:[#allocation3 + $0x20] sm:$0xff] %v836
    %869 = vst [vmem:[#allocation3 + $0x68] sm:$0xff] %v837
    %870 = vst [vmem:[#allocation3 + $0xb0] sm:$0xff] %v838
    %871 = vst [vmem:[#allocation3 + $0xf8] sm:$0xff] %v839
    %872 = vst [vmem:[#allocation3 + $0x140] sm:$0xff] %v840
    %873 = vst [vmem:[#allocation3 + $0x188] sm:$0xff] %v841
    %874 = vst [vmem:[#allocation3 + $0x1d0] sm:$0xff] %v842
    %875 = vst [vmem:[#allocation3 + $0x218] sm:$0xff] %v843
    %876 = vst [vmem:[#allocation3 + $0x260] sm:$0xff] %v844
    %877 = vst [vmem:[#allocation3 + $0x2a8] sm:$0xff] %v845
    %878 = vst [vmem:[#allocation3 + $0x2f0] sm:$0xff] %v846
    %879 = vst [vmem:[#allocation3 + $0x338] sm:$0xff] %v847
    %880 = vst [vmem:[#allocation3 + $0x380] sm:$0xff] %v848
    %881 = vst [vmem:[#allocation3 + $0x3c8] sm:$0xff] %v849
    %882 = vst [vmem:[#allocation3 + $0x410] sm:$0xff] %v850
    %883 = vst [vmem:[#allocation3 + $0x458] sm:$0xff] %v851
    %884 = vst [vmem:[#allocation3 + $0x4a0] sm:$0xff] %v852
    %885 = vst [vmem:[#allocation3 + $0x4e8] sm:$0xff] %v853
    %886 = vst [vmem:[#allocation3 + $0x530] sm:$0xff] %v854
    %887 = vst [vmem:[#allocation3 + $0x578] sm:$0xff] %v855
    %888 = vst [vmem:[#allocation3 + $0x5c0] sm:$0xff] %v856
    %889 = vst [vmem:[#allocation3 + $0x608] sm:$0xff] %v857
    %890 = vst [vmem:[#allocation3 + $0x650] sm:$0xff] %v858
    %891 = vst [vmem:[#allocation3 + $0x698] sm:$0xff] %v859
    %892 = vst [vmem:[#allocation3 + $0x6e0] sm:$0xff] %v860
    %893 = vst [vmem:[#allocation3 + $0x728] sm:$0xff] %v861
    %894 = vst [vmem:[#allocation3 + $0x770] sm:$0xff] %v862
    %895 = vst [vmem:[#allocation3 + $0x7b8] sm:$0xff] %v863
    %896 = vst [vmem:[#allocation3 + $0x800] sm:$0xff] %v864
    %897 = vst [vmem:[#allocation3 + $0x848] sm:$0xff] %v865
    %898 = vst [vmem:[#allocation3 + $0x890] sm:$0xff] %v866
    %899 = vst [vmem:[#allocation3 + $0x8d8] sm:$0xff] %v867
    %v900 = vld [vmem:[%s194 + $0x2] sm:$0xff]
    %v901 = vld [vmem:[%s194 + $0xa] sm:$0xff]
    %v902 = vld [vmem:[%s194 + $0x1a] sm:$0xff]
    %v903 = vld [vmem:[%s194 + $0x22] sm:$0xff]
    %v904 = vld [vmem:[%s194 + $0x32] sm:$0xff]
    %v905 = vld [vmem:[%s194 + $0x3a] sm:$0xff]
    %v906 = vld [vmem:[%s194 + $0x4a] sm:$0xff]
    %v907 = vld [vmem:[%s194 + $0x52] sm:$0xff]
    %v908 = vld [vmem:[%s194 + $0x62] sm:$0xff]
    %v909 = vld [vmem:[%s194 + $0x6a] sm:$0xff]
    %v910 = vld [vmem:[%s194 + $0x7a] sm:$0xff]
    %v911 = vld [vmem:[%s194 + $0x82] sm:$0xff]
    %v912 = vld [vmem:[%s194 + $0x92] sm:$0xff]
    %v913 = vld [vmem:[%s194 + $0x9a] sm:$0xff]
    %v914 = vld [vmem:[%s194 + $0xaa] sm:$0xff]
    %v915 = vld [vmem:[%s194 + $0xb2] sm:$0xff]
    %v916 = vld [vmem:[%s194 + $0xc2] sm:$0xff]
    %v917 = vld [vmem:[%s194 + $0xca] sm:$0xff]
    %v918 = vld [vmem:[%s194 + $0xda] sm:$0xff]
    %v919 = vld [vmem:[%s194 + $0xe2] sm:$0xff]
    %v920 = vld [vmem:[%s194 + $0xf2] sm:$0xff]
    %v921 = vld [vmem:[%s194 + $0xfa] sm:$0xff]
    %v922 = vld [vmem:[%s194 + $0x10a] sm:$0xff]
    %v923 = vld [vmem:[%s194 + $0x112] sm:$0xff]
    %v924 = vld [vmem:[%s194 + $0x122] sm:$0xff]
    %v925 = vld [vmem:[%s194 + $0x12a] sm:$0xff]
    %v926 = vld [vmem:[%s194 + $0x13a] sm:$0xff]
    %v927 = vld [vmem:[%s194 + $0x142] sm:$0xff]
    %v928 = vld [vmem:[%s194 + $0x152] sm:$0xff]
    %v929 = vld [vmem:[%s194 + $0x15a] sm:$0xff]
    %v930 = vld [vmem:[%s194 + $0x16a] sm:$0xff]
    %v931 = vld [vmem:[%s194 + $0x172] sm:$0xff]
    %v932 = vld [vmem:[%s194 + $0x1b2] sm:$0xff]
    %v933 = vld [vmem:[%s194 + $0x1ba] sm:$0xff]
    %v934 = vld [vmem:[%s194 + $0x1ca] sm:$0xff]
    %v935 = vld [vmem:[%s194 + $0x1d2] sm:$0xff]
    %v936 = vld [vmem:[%s194 + $0x1e2] sm:$0xff]
    %v937 = vld [vmem:[%s194 + $0x1ea] sm:$0xff]
    %v938 = vld [vmem:[%s194 + $0x1fa] sm:$0xff]
    %v939 = vld [vmem:[%s194 + $0x202] sm:$0xff]
    %v940 = vld [vmem:[%s194 + $0x212] sm:$0xff]
    %v941 = vld [vmem:[%s194 + $0x21a] sm:$0xff]
    %v942 = vld [vmem:[%s194 + $0x22a] sm:$0xff]
    %v943 = vld [vmem:[%s194 + $0x232] sm:$0xff]
    %v944 = vld [vmem:[%s194 + $0x242] sm:$0xff]
    %v945 = vld [vmem:[%s194 + $0x24a] sm:$0xff]
    %v946 = vld [vmem:[%s194 + $0x25a] sm:$0xff]
    %v947 = vld [vmem:[%s194 + $0x262] sm:$0xff]
    %v948 = vld [vmem:[%s194 + $0x272] sm:$0xff]
    %v949 = vld [vmem:[%s194 + $0x27a] sm:$0xff]
    %v950 = vld [vmem:[%s194 + $0x28a] sm:$0xff]
    %v951 = vld [vmem:[%s194 + $0x292] sm:$0xff]
    %v952 = vld [vmem:[%s194 + $0x2a2] sm:$0xff]
    %v953 = vld [vmem:[%s194 + $0x2aa] sm:$0xff]
    %v954 = vld [vmem:[%s194 + $0x2ba] sm:$0xff]
    %v955 = vld [vmem:[%s194 + $0x2c2] sm:$0xff]
    %v956 = vld [vmem:[%s194 + $0x2d2] sm:$0xff]
    %v957 = vld [vmem:[%s194 + $0x2da] sm:$0xff]
    %v958 = vld [vmem:[%s194 + $0x2ea] sm:$0xff]
    %v959 = vld [vmem:[%s194 + $0x2f2] sm:$0xff]
    %v960 = vld [vmem:[%s194 + $0x302] sm:$0xff]
    %v961 = vld [vmem:[%s194 + $0x30a] sm:$0xff]
    %v962 = vld [vmem:[%s194 + $0x31a] sm:$0xff]
    %v963 = vld [vmem:[%s194 + $0x322] sm:$0xff]
    %v964 = vpack.c.bf16 %v901, %v900
    %v965 = vpack.c.bf16 %v903, %v902
    %v966 = vpack.c.bf16 %v905, %v904
    %v967 = vpack.c.bf16 %v907, %v906
    %v968 = vpack.c.bf16 %v909, %v908
    %v969 = vpack.c.bf16 %v911, %v910
    %v970 = vpack.c.bf16 %v913, %v912
    %v971 = vpack.c.bf16 %v915, %v914
    %v972 = vpack.c.bf16 %v917, %v916
    %v973 = vpack.c.bf16 %v919, %v918
    %v974 = vpack.c.bf16 %v921, %v920
    %v975 = vpack.c.bf16 %v923, %v922
    %v976 = vpack.c.bf16 %v925, %v924
    %v977 = vpack.c.bf16 %v927, %v926
    %v978 = vpack.c.bf16 %v929, %v928
    %v979 = vpack.c.bf16 %v931, %v930
    %v980 = vpack.c.bf16 %v933, %v932
    %v981 = vpack.c.bf16 %v935, %v934
    %v982 = vpack.c.bf16 %v937, %v936
    %v983 = vpack.c.bf16 %v939, %v938
    %v984 = vpack.c.bf16 %v941, %v940
    %v985 = vpack.c.bf16 %v943, %v942
    %v986 = vpack.c.bf16 %v945, %v944
    %v987 = vpack.c.bf16 %v947, %v946
    %v988 = vpack.c.bf16 %v949, %v948
    %v989 = vpack.c.bf16 %v951, %v950
    %v990 = vpack.c.bf16 %v953, %v952
    %v991 = vpack.c.bf16 %v955, %v954
    %v992 = vpack.c.bf16 %v957, %v956
    %v993 = vpack.c.bf16 %v959, %v958
    %v994 = vpack.c.bf16 %v961, %v960
    %v995 = vpack.c.bf16 %v963, %v962
    %996 = vst [vmem:[#allocation3 + $0x28] sm:$0xff] %v964
    %997 = vst [vmem:[#allocation3 + $0x70] sm:$0xff] %v965
    %998 = vst [vmem:[#allocation3 + $0xb8] sm:$0xff] %v966
    %999 = vst [vmem:[#allocation3 + $0x100] sm:$0xff] %v967
    %1000 = vst [vmem:[#allocation3 + $0x148] sm:$0xff] %v968
    %1001 = vst [vmem:[#allocation3 + $0x190] sm:$0xff] %v969
    %1002 = vst [vmem:[#allocation3 + $0x1d8] sm:$0xff] %v970
    %1003 = vst [vmem:[#allocation3 + $0x220] sm:$0xff] %v971
    %1004 = vst [vmem:[#allocation3 + $0x268] sm:$0xff] %v972
    %1005 = vst [vmem:[#allocation3 + $0x2b0] sm:$0xff] %v973
    %1006 = vst [vmem:[#allocation3 + $0x2f8] sm:$0xff] %v974
    %1007 = vst [vmem:[#allocation3 + $0x340] sm:$0xff] %v975
    %1008 = vst [vmem:[#allocation3 + $0x388] sm:$0xff] %v976
    %1009 = vst [vmem:[#allocation3 + $0x3d0] sm:$0xff] %v977
    %1010 = vst [vmem:[#allocation3 + $0x418] sm:$0xff] %v978
    %1011 = vst [vmem:[#allocation3 + $0x460] sm:$0xff] %v979
    %1012 = vst [vmem:[#allocation3 + $0x4a8] sm:$0xff] %v980
    %1013 = vst [vmem:[#allocation3 + $0x4f0] sm:$0xff] %v981
    %1014 = vst [vmem:[#allocation3 + $0x538] sm:$0xff] %v982
    %1015 = vst [vmem:[#allocation3 + $0x580] sm:$0xff] %v983
    %1016 = vst [vmem:[#allocation3 + $0x5c8] sm:$0xff] %v984
    %1017 = vst [vmem:[#allocation3 + $0x610] sm:$0xff] %v985
    %1018 = vst [vmem:[#allocation3 + $0x658] sm:$0xff] %v986
    %1019 = vst [vmem:[#allocation3 + $0x6a0] sm:$0xff] %v987
    %1020 = vst [vmem:[#allocation3 + $0x6e8] sm:$0xff] %v988
    %1021 = vst [vmem:[#allocation3 + $0x730] sm:$0xff] %v989
    %1022 = vst [vmem:[#allocation3 + $0x778] sm:$0xff] %v990
    %1023 = vst [vmem:[#allocation3 + $0x7c0] sm:$0xff] %v991
    %1024 = vst [vmem:[#allocation3 + $0x808] sm:$0xff] %v992
    %1025 = vst [vmem:[#allocation3 + $0x850] sm:$0xff] %v993
    %1026 = vst [vmem:[#allocation3 + $0x898] sm:$0xff] %v994
    %1027 = vst [vmem:[#allocation3 + $0x8e0] sm:$0xff] %v995
    %s1028 = scalar_lea.vmem [#allocation2], 48
    %v1029 = vld [vmem:[%s1028] sm:$0xff]
    %v1030 = vld [vmem:[%s1028 + $0x8] sm:$0xff]
    %v1031 = vld [vmem:[%s1028 + $0x18] sm:$0xff]
    %v1032 = vld [vmem:[%s1028 + $0x20] sm:$0xff]
    %v1033 = vld [vmem:[%s1028 + $0x30] sm:$0xff]
    %v1034 = vld [vmem:[%s1028 + $0x38] sm:$0xff]
    %v1035 = vld [vmem:[%s1028 + $0x48] sm:$0xff]
    %v1036 = vld [vmem:[%s1028 + $0x50] sm:$0xff]
    %v1037 = vld [vmem:[%s1028 + $0x60] sm:$0xff]
    %v1038 = vld [vmem:[%s1028 + $0x68] sm:$0xff]
    %v1039 = vld [vmem:[%s1028 + $0x78] sm:$0xff]
    %v1040 = vld [vmem:[%s1028 + $0x80] sm:$0xff]
    %v1041 = vld [vmem:[%s1028 + $0x90] sm:$0xff]
    %v1042 = vld [vmem:[%s1028 + $0x98] sm:$0xff]
    %v1043 = vld [vmem:[%s1028 + $0xa8] sm:$0xff]
    %v1044 = vld [vmem:[%s1028 + $0xb0] sm:$0xff]
    %v1045 = vld [vmem:[%s1028 + $0xc0] sm:$0xff]
    %v1046 = vld [vmem:[%s1028 + $0xc8] sm:$0xff]
    %v1047 = vld [vmem:[%s1028 + $0xd8] sm:$0xff]
    %v1048 = vld [vmem:[%s1028 + $0xe0] sm:$0xff]
    %v1049 = vld [vmem:[%s1028 + $0xf0] sm:$0xff]
    %v1050 = vld [vmem:[%s1028 + $0xf8] sm:$0xff]
    %v1051 = vld [vmem:[%s1028 + $0x108] sm:$0xff]
    %v1052 = vld [vmem:[%s1028 + $0x110] sm:$0xff]
    %v1053 = vld [vmem:[%s1028 + $0x120] sm:$0xff]
    %v1054 = vld [vmem:[%s1028 + $0x128] sm:$0xff]
    %v1055 = vld [vmem:[%s1028 + $0x138] sm:$0xff]
    %v1056 = vld [vmem:[%s1028 + $0x140] sm:$0xff]
    %v1057 = vld [vmem:[%s1028 + $0x150] sm:$0xff]
    %v1058 = vld [vmem:[%s1028 + $0x158] sm:$0xff]
    %v1059 = vld [vmem:[%s1028 + $0x168] sm:$0xff]
    %v1060 = vld [vmem:[%s1028 + $0x170] sm:$0xff]
    %v1061 = vld [vmem:[%s1028 + $0x1b0] sm:$0xff]
    %v1062 = vld [vmem:[%s1028 + $0x1b8] sm:$0xff]
    %v1063 = vld [vmem:[%s1028 + $0x1c8] sm:$0xff]
    %v1064 = vld [vmem:[%s1028 + $0x1d0] sm:$0xff]
    %v1065 = vld [vmem:[%s1028 + $0x1e0] sm:$0xff]
    %v1066 = vld [vmem:[%s1028 + $0x1e8] sm:$0xff]
    %v1067 = vld [vmem:[%s1028 + $0x1f8] sm:$0xff]
    %v1068 = vld [vmem:[%s1028 + $0x200] sm:$0xff]
    %v1069 = vld [vmem:[%s1028 + $0x210] sm:$0xff]
    %v1070 = vld [vmem:[%s1028 + $0x218] sm:$0xff]
    %v1071 = vld [vmem:[%s1028 + $0x228] sm:$0xff]
    %v1072 = vld [vmem:[%s1028 + $0x230] sm:$0xff]
    %v1073 = vld [vmem:[%s1028 + $0x240] sm:$0xff]
    %v1074 = vld [vmem:[%s1028 + $0x248] sm:$0xff]
    %v1075 = vld [vmem:[%s1028 + $0x258] sm:$0xff]
    %v1076 = vld [vmem:[%s1028 + $0x260] sm:$0xff]
    %v1077 = vld [vmem:[%s1028 + $0x270] sm:$0xff]
    %v1078 = vld [vmem:[%s1028 + $0x278] sm:$0xff]
    %v1079 = vld [vmem:[%s1028 + $0x288] sm:$0xff]
    %v1080 = vld [vmem:[%s1028 + $0x290] sm:$0xff]
    %v1081 = vld [vmem:[%s1028 + $0x2a0] sm:$0xff]
    %v1082 = vld [vmem:[%s1028 + $0x2a8] sm:$0xff]
    %v1083 = vld [vmem:[%s1028 + $0x2b8] sm:$0xff]
    %v1084 = vld [vmem:[%s1028 + $0x2c0] sm:$0xff]
    %v1085 = vld [vmem:[%s1028 + $0x2d0] sm:$0xff]
    %v1086 = vld [vmem:[%s1028 + $0x2d8] sm:$0xff]
    %v1087 = vld [vmem:[%s1028 + $0x2e8] sm:$0xff]
    %v1088 = vld [vmem:[%s1028 + $0x2f0] sm:$0xff]
    %v1089 = vld [vmem:[%s1028 + $0x300] sm:$0xff]
    %v1090 = vld [vmem:[%s1028 + $0x308] sm:$0xff]
    %v1091 = vld [vmem:[%s1028 + $0x318] sm:$0xff]
    %v1092 = vld [vmem:[%s1028 + $0x320] sm:$0xff]
    %v1093 = vpack.c.bf16 %v1030, %v1029
    %v1094 = vpack.c.bf16 %v1032, %v1031
    %v1095 = vpack.c.bf16 %v1034, %v1033
    %v1096 = vpack.c.bf16 %v1036, %v1035
    %v1097 = vpack.c.bf16 %v1038, %v1037
    %v1098 = vpack.c.bf16 %v1040, %v1039
    %v1099 = vpack.c.bf16 %v1042, %v1041
    %v1100 = vpack.c.bf16 %v1044, %v1043
    %v1101 = vpack.c.bf16 %v1046, %v1045
    %v1102 = vpack.c.bf16 %v1048, %v1047
    %v1103 = vpack.c.bf16 %v1050, %v1049
    %v1104 = vpack.c.bf16 %v1052, %v1051
    %v1105 = vpack.c.bf16 %v1054, %v1053
    %v1106 = vpack.c.bf16 %v1056, %v1055
    %v1107 = vpack.c.bf16 %v1058, %v1057
    %v1108 = vpack.c.bf16 %v1060, %v1059
    %v1109 = vpack.c.bf16 %v1062, %v1061
    %v1110 = vpack.c.bf16 %v1064, %v1063
    %v1111 = vpack.c.bf16 %v1066, %v1065
    %v1112 = vpack.c.bf16 %v1068, %v1067
    %v1113 = vpack.c.bf16 %v1070, %v1069
    %v1114 = vpack.c.bf16 %v1072, %v1071
    %v1115 = vpack.c.bf16 %v1074, %v1073
    %v1116 = vpack.c.bf16 %v1076, %v1075
    %v1117 = vpack.c.bf16 %v1078, %v1077
    %v1118 = vpack.c.bf16 %v1080, %v1079
    %v1119 = vpack.c.bf16 %v1082, %v1081
    %v1120 = vpack.c.bf16 %v1084, %v1083
    %v1121 = vpack.c.bf16 %v1086, %v1085
    %v1122 = vpack.c.bf16 %v1088, %v1087
    %v1123 = vpack.c.bf16 %v1090, %v1089
    %v1124 = vpack.c.bf16 %v1092, %v1091
    %1125 = vst [vmem:[#allocation3 + $0x30] sm:$0xff] %v1093
    %1126 = vst [vmem:[#allocation3 + $0x78] sm:$0xff] %v1094
    %1127 = vst [vmem:[#allocation3 + $0xc0] sm:$0xff] %v1095
    %1128 = vst [vmem:[#allocation3 + $0x108] sm:$0xff] %v1096
    %1129 = vst [vmem:[#allocation3 + $0x150] sm:$0xff] %v1097
    %1130 = vst [vmem:[#allocation3 + $0x198] sm:$0xff] %v1098
    %1131 = vst [vmem:[#allocation3 + $0x1e0] sm:$0xff] %v1099
    %1132 = vst [vmem:[#allocation3 + $0x228] sm:$0xff] %v1100
    %1133 = vst [vmem:[#allocation3 + $0x270] sm:$0xff] %v1101
    %1134 = vst [vmem:[#allocation3 + $0x2b8] sm:$0xff] %v1102
    %1135 = vst [vmem:[#allocation3 + $0x300] sm:$0xff] %v1103
    %1136 = vst [vmem:[#allocation3 + $0x348] sm:$0xff] %v1104
    %1137 = vst [vmem:[#allocation3 + $0x390] sm:$0xff] %v1105
    %1138 = vst [vmem:[#allocation3 + $0x3d8] sm:$0xff] %v1106
    %1139 = vst [vmem:[#allocation3 + $0x420] sm:$0xff] %v1107
    %1140 = vst [vmem:[#allocation3 + $0x468] sm:$0xff] %v1108
    %1141 = vst [vmem:[#allocation3 + $0x4b0] sm:$0xff] %v1109
    %1142 = vst [vmem:[#allocation3 + $0x4f8] sm:$0xff] %v1110
    %1143 = vst [vmem:[#allocation3 + $0x540] sm:$0xff] %v1111
    %1144 = vst [vmem:[#allocation3 + $0x588] sm:$0xff] %v1112
    %1145 = vst [vmem:[#allocation3 + $0x5d0] sm:$0xff] %v1113
    %1146 = vst [vmem:[#allocation3 + $0x618] sm:$0xff] %v1114
    %1147 = vst [vmem:[#allocation3 + $0x660] sm:$0xff] %v1115
    %1148 = vst [vmem:[#allocation3 + $0x6a8] sm:$0xff] %v1116
    %1149 = vst [vmem:[#allocation3 + $0x6f0] sm:$0xff] %v1117
    %1150 = vst [vmem:[#allocation3 + $0x738] sm:$0xff] %v1118
    %1151 = vst [vmem:[#allocation3 + $0x780] sm:$0xff] %v1119
    %1152 = vst [vmem:[#allocation3 + $0x7c8] sm:$0xff] %v1120
    %1153 = vst [vmem:[#allocation3 + $0x810] sm:$0xff] %v1121
    %1154 = vst [vmem:[#allocation3 + $0x858] sm:$0xff] %v1122
    %1155 = vst [vmem:[#allocation3 + $0x8a0] sm:$0xff] %v1123
    %1156 = vst [vmem:[#allocation3 + $0x8e8] sm:$0xff] %v1124
    %v1157 = vld [vmem:[%s1028 + $0x1] sm:$0xff]
    %v1158 = vld [vmem:[%s1028 + $0x9] sm:$0xff]
    %v1159 = vld [vmem:[%s1028 + $0x19] sm:$0xff]
    %v1160 = vld [vmem:[%s1028 + $0x21] sm:$0xff]
    %v1161 = vld [vmem:[%s1028 + $0x31] sm:$0xff]
    %v1162 = vld [vmem:[%s1028 + $0x39] sm:$0xff]
    %v1163 = vld [vmem:[%s1028 + $0x49] sm:$0xff]
    %v1164 = vld [vmem:[%s1028 + $0x51] sm:$0xff]
    %v1165 = vld [vmem:[%s1028 + $0x61] sm:$0xff]
    %v1166 = vld [vmem:[%s1028 + $0x69] sm:$0xff]
    %v1167 = vld [vmem:[%s1028 + $0x79] sm:$0xff]
    %v1168 = vld [vmem:[%s1028 + $0x81] sm:$0xff]
    %v1169 = vld [vmem:[%s1028 + $0x91] sm:$0xff]
    %v1170 = vld [vmem:[%s1028 + $0x99] sm:$0xff]
    %v1171 = vld [vmem:[%s1028 + $0xa9] sm:$0xff]
    %v1172 = vld [vmem:[%s1028 + $0xb1] sm:$0xff]
    %v1173 = vld [vmem:[%s1028 + $0xc1] sm:$0xff]
    %v1174 = vld [vmem:[%s1028 + $0xc9] sm:$0xff]
    %v1175 = vld [vmem:[%s1028 + $0xd9] sm:$0xff]
    %v1176 = vld [vmem:[%s1028 + $0xe1] sm:$0xff]
    %v1177 = vld [vmem:[%s1028 + $0xf1] sm:$0xff]
    %v1178 = vld [vmem:[%s1028 + $0xf9] sm:$0xff]
    %v1179 = vld [vmem:[%s1028 + $0x109] sm:$0xff]
    %v1180 = vld [vmem:[%s1028 + $0x111] sm:$0xff]
    %v1181 = vld [vmem:[%s1028 + $0x121] sm:$0xff]
    %v1182 = vld [vmem:[%s1028 + $0x129] sm:$0xff]
    %v1183 = vld [vmem:[%s1028 + $0x139] sm:$0xff]
    %v1184 = vld [vmem:[%s1028 + $0x141] sm:$0xff]
    %v1185 = vld [vmem:[%s1028 + $0x151] sm:$0xff]
    %v1186 = vld [vmem:[%s1028 + $0x159] sm:$0xff]
    %v1187 = vld [vmem:[%s1028 + $0x169] sm:$0xff]
    %v1188 = vld [vmem:[%s1028 + $0x171] sm:$0xff]
    %v1189 = vld [vmem:[%s1028 + $0x1b1] sm:$0xff]
    %v1190 = vld [vmem:[%s1028 + $0x1b9] sm:$0xff]
    %v1191 = vld [vmem:[%s1028 + $0x1c9] sm:$0xff]
    %v1192 = vld [vmem:[%s1028 + $0x1d1] sm:$0xff]
    %v1193 = vld [vmem:[%s1028 + $0x1e1] sm:$0xff]
    %v1194 = vld [vmem:[%s1028 + $0x1e9] sm:$0xff]
    %v1195 = vld [vmem:[%s1028 + $0x1f9] sm:$0xff]
    %v1196 = vld [vmem:[%s1028 + $0x201] sm:$0xff]
    %v1197 = vld [vmem:[%s1028 + $0x211] sm:$0xff]
    %v1198 = vld [vmem:[%s1028 + $0x219] sm:$0xff]
    %v1199 = vld [vmem:[%s1028 + $0x229] sm:$0xff]
    %v1200 = vld [vmem:[%s1028 + $0x231] sm:$0xff]
    %v1201 = vld [vmem:[%s1028 + $0x241] sm:$0xff]
    %v1202 = vld [vmem:[%s1028 + $0x249] sm:$0xff]
    %v1203 = vld [vmem:[%s1028 + $0x259] sm:$0xff]
    %v1204 = vld [vmem:[%s1028 + $0x261] sm:$0xff]
    %v1205 = vld [vmem:[%s1028 + $0x271] sm:$0xff]
    %v1206 = vld [vmem:[%s1028 + $0x279] sm:$0xff]
    %v1207 = vld [vmem:[%s1028 + $0x289] sm:$0xff]
    %v1208 = vld [vmem:[%s1028 + $0x291] sm:$0xff]
    %v1209 = vld [vmem:[%s1028 + $0x2a1] sm:$0xff]
    %v1210 = vld [vmem:[%s1028 + $0x2a9] sm:$0xff]
    %v1211 = vld [vmem:[%s1028 + $0x2b9] sm:$0xff]
    %v1212 = vld [vmem:[%s1028 + $0x2c1] sm:$0xff]
    %v1213 = vld [vmem:[%s1028 + $0x2d1] sm:$0xff]
    %v1214 = vld [vmem:[%s1028 + $0x2d9] sm:$0xff]
    %v1215 = vld [vmem:[%s1028 + $0x2e9] sm:$0xff]
    %v1216 = vld [vmem:[%s1028 + $0x2f1] sm:$0xff]
    %v1217 = vld [vmem:[%s1028 + $0x301] sm:$0xff]
    %v1218 = vld [vmem:[%s1028 + $0x309] sm:$0xff]
    %v1219 = vld [vmem:[%s1028 + $0x319] sm:$0xff]
    %v1220 = vld [vmem:[%s1028 + $0x321] sm:$0xff]
    %v1221 = vpack.c.bf16 %v1158, %v1157
    %v1222 = vpack.c.bf16 %v1160, %v1159
    %v1223 = vpack.c.bf16 %v1162, %v1161
    %v1224 = vpack.c.bf16 %v1164, %v1163
    %v1225 = vpack.c.bf16 %v1166, %v1165
    %v1226 = vpack.c.bf16 %v1168, %v1167
    %v1227 = vpack.c.bf16 %v1170, %v1169
    %v1228 = vpack.c.bf16 %v1172, %v1171
    %v1229 = vpack.c.bf16 %v1174, %v1173
    %v1230 = vpack.c.bf16 %v1176, %v1175
    %v1231 = vpack.c.bf16 %v1178, %v1177
    %v1232 = vpack.c.bf16 %v1180, %v1179
    %v1233 = vpack.c.bf16 %v1182, %v1181
    %v1234 = vpack.c.bf16 %v1184, %v1183
    %v1235 = vpack.c.bf16 %v1186, %v1185
    %v1236 = vpack.c.bf16 %v1188, %v1187
    %v1237 = vpack.c.bf16 %v1190, %v1189
    %v1238 = vpack.c.bf16 %v1192, %v1191
    %v1239 = vpack.c.bf16 %v1194, %v1193
    %v1240 = vpack.c.bf16 %v1196, %v1195
    %v1241 = vpack.c.bf16 %v1198, %v1197
    %v1242 = vpack.c.bf16 %v1200, %v1199
    %v1243 = vpack.c.bf16 %v1202, %v1201
    %v1244 = vpack.c.bf16 %v1204, %v1203
    %v1245 = vpack.c.bf16 %v1206, %v1205
    %v1246 = vpack.c.bf16 %v1208, %v1207
    %v1247 = vpack.c.bf16 %v1210, %v1209
    %v1248 = vpack.c.bf16 %v1212, %v1211
    %v1249 = vpack.c.bf16 %v1214, %v1213
    %v1250 = vpack.c.bf16 %v1216, %v1215
    %v1251 = vpack.c.bf16 %v1218, %v1217
    %v1252 = vpack.c.bf16 %v1220, %v1219
    %1253 = vst [vmem:[#allocation3 + $0x38] sm:$0xff] %v1221
    %1254 = vst [vmem:[#allocation3 + $0x80] sm:$0xff] %v1222
    %1255 = vst [vmem:[#allocation3 + $0xc8] sm:$0xff] %v1223
    %1256 = vst [vmem:[#allocation3 + $0x110] sm:$0xff] %v1224
    %1257 = vst [vmem:[#allocation3 + $0x158] sm:$0xff] %v1225
    %1258 = vst [vmem:[#allocation3 + $0x1a0] sm:$0xff] %v1226
    %1259 = vst [vmem:[#allocation3 + $0x1e8] sm:$0xff] %v1227
    %1260 = vst [vmem:[#allocation3 + $0x230] sm:$0xff] %v1228
    %1261 = vst [vmem:[#allocation3 + $0x278] sm:$0xff] %v1229
    %1262 = vst [vmem:[#allocation3 + $0x2c0] sm:$0xff] %v1230
    %1263 = vst [vmem:[#allocation3 + $0x308] sm:$0xff] %v1231
    %1264 = vst [vmem:[#allocation3 + $0x350] sm:$0xff] %v1232
    %1265 = vst [vmem:[#allocation3 + $0x398] sm:$0xff] %v1233
    %1266 = vst [vmem:[#allocation3 + $0x3e0] sm:$0xff] %v1234
    %1267 = vst [vmem:[#allocation3 + $0x428] sm:$0xff] %v1235
    %1268 = vst [vmem:[#allocation3 + $0x470] sm:$0xff] %v1236
    %1269 = vst [vmem:[#allocation3 + $0x4b8] sm:$0xff] %v1237
    %1270 = vst [vmem:[#allocation3 + $0x500] sm:$0xff] %v1238
    %1271 = vst [vmem:[#allocation3 + $0x548] sm:$0xff] %v1239
    %1272 = vst [vmem:[#allocation3 + $0x590] sm:$0xff] %v1240
    %1273 = vst [vmem:[#allocation3 + $0x5d8] sm:$0xff] %v1241
    %1274 = vst [vmem:[#allocation3 + $0x620] sm:$0xff] %v1242
    %1275 = vst [vmem:[#allocation3 + $0x668] sm:$0xff] %v1243
    %1276 = vst [vmem:[#allocation3 + $0x6b0] sm:$0xff] %v1244
    %1277 = vst [vmem:[#allocation3 + $0x6f8] sm:$0xff] %v1245
    %1278 = vst [vmem:[#allocation3 + $0x740] sm:$0xff] %v1246
    %1279 = vst [vmem:[#allocation3 + $0x788] sm:$0xff] %v1247
    %1280 = vst [vmem:[#allocation3 + $0x7d0] sm:$0xff] %v1248
    %1281 = vst [vmem:[#allocation3 + $0x818] sm:$0xff] %v1249
    %1282 = vst [vmem:[#allocation3 + $0x860] sm:$0xff] %v1250
    %1283 = vst [vmem:[#allocation3 + $0x8a8] sm:$0xff] %v1251
    %1284 = vst [vmem:[#allocation3 + $0x8f0] sm:$0xff] %v1252
    %v1285 = vld [vmem:[%s1028 + $0x2] sm:$0xff]
    %v1286 = vld [vmem:[%s1028 + $0xa] sm:$0xff]
    %v1287 = vld [vmem:[%s1028 + $0x1a] sm:$0xff]
    %v1288 = vld [vmem:[%s1028 + $0x22] sm:$0xff]
    %v1289 = vld [vmem:[%s1028 + $0x32] sm:$0xff]
    %v1290 = vld [vmem:[%s1028 + $0x3a] sm:$0xff]
    %v1291 = vld [vmem:[%s1028 + $0x4a] sm:$0xff]
    %v1292 = vld [vmem:[%s1028 + $0x52] sm:$0xff]
    %v1293 = vld [vmem:[%s1028 + $0x62] sm:$0xff]
    %v1294 = vld [vmem:[%s1028 + $0x6a] sm:$0xff]
    %v1295 = vld [vmem:[%s1028 + $0x7a] sm:$0xff]
    %v1296 = vld [vmem:[%s1028 + $0x82] sm:$0xff]
    %v1297 = vld [vmem:[%s1028 + $0x92] sm:$0xff]
    %v1298 = vld [vmem:[%s1028 + $0x9a] sm:$0xff]
    %v1299 = vld [vmem:[%s1028 + $0xaa] sm:$0xff]
    %v1300 = vld [vmem:[%s1028 + $0xb2] sm:$0xff]
    %v1301 = vld [vmem:[%s1028 + $0xc2] sm:$0xff]
    %v1302 = vld [vmem:[%s1028 + $0xca] sm:$0xff]
    %v1303 = vld [vmem:[%s1028 + $0xda] sm:$0xff]
    %v1304 = vld [vmem:[%s1028 + $0xe2] sm:$0xff]
    %v1305 = vld [vmem:[%s1028 + $0xf2] sm:$0xff]
    %v1306 = vld [vmem:[%s1028 + $0xfa] sm:$0xff]
    %v1307 = vld [vmem:[%s1028 + $0x10a] sm:$0xff]
    %v1308 = vld [vmem:[%s1028 + $0x112] sm:$0xff]
    %v1309 = vld [vmem:[%s1028 + $0x122] sm:$0xff]
    %v1310 = vld [vmem:[%s1028 + $0x12a] sm:$0xff]
    %v1311 = vld [vmem:[%s1028 + $0x13a] sm:$0xff]
    %v1312 = vld [vmem:[%s1028 + $0x142] sm:$0xff]
    %v1313 = vld [vmem:[%s1028 + $0x152] sm:$0xff]
    %v1314 = vld [vmem:[%s1028 + $0x15a] sm:$0xff]
    %v1315 = vld [vmem:[%s1028 + $0x16a] sm:$0xff]
    %v1316 = vld [vmem:[%s1028 + $0x172] sm:$0xff]
    %v1317 = vld [vmem:[%s1028 + $0x1b2] sm:$0xff]
    %v1318 = vld [vmem:[%s1028 + $0x1ba] sm:$0xff]
    %v1319 = vld [vmem:[%s1028 + $0x1ca] sm:$0xff]
    %v1320 = vld [vmem:[%s1028 + $0x1d2] sm:$0xff]
    %v1321 = vld [vmem:[%s1028 + $0x1e2] sm:$0xff]
    %v1322 = vld [vmem:[%s1028 + $0x1ea] sm:$0xff]
    %v1323 = vld [vmem:[%s1028 + $0x1fa] sm:$0xff]
    %v1324 = vld [vmem:[%s1028 + $0x202] sm:$0xff]
    %v1325 = vld [vmem:[%s1028 + $0x212] sm:$0xff]
    %v1326 = vld [vmem:[%s1028 + $0x21a] sm:$0xff]
    %v1327 = vld [vmem:[%s1028 + $0x22a] sm:$0xff]
    %v1328 = vld [vmem:[%s1028 + $0x232] sm:$0xff]
    %v1329 = vld [vmem:[%s1028 + $0x242] sm:$0xff]
    %v1330 = vld [vmem:[%s1028 + $0x24a] sm:$0xff]
    %v1331 = vld [vmem:[%s1028 + $0x25a] sm:$0xff]
    %v1332 = vld [vmem:[%s1028 + $0x262] sm:$0xff]
    %v1333 = vld [vmem:[%s1028 + $0x272] sm:$0xff]
    %v1334 = vld [vmem:[%s1028 + $0x27a] sm:$0xff]
    %v1335 = vld [vmem:[%s1028 + $0x28a] sm:$0xff]
    %v1336 = vld [vmem:[%s1028 + $0x292] sm:$0xff]
    %v1337 = vld [vmem:[%s1028 + $0x2a2] sm:$0xff]
    %v1338 = vld [vmem:[%s1028 + $0x2aa] sm:$0xff]
    %v1339 = vld [vmem:[%s1028 + $0x2ba] sm:$0xff]
    %v1340 = vld [vmem:[%s1028 + $0x2c2] sm:$0xff]
    %v1341 = vld [vmem:[%s1028 + $0x2d2] sm:$0xff]
    %v1342 = vld [vmem:[%s1028 + $0x2da] sm:$0xff]
    %v1343 = vld [vmem:[%s1028 + $0x2ea] sm:$0xff]
    %v1344 = vld [vmem:[%s1028 + $0x2f2] sm:$0xff]
    %v1345 = vld [vmem:[%s1028 + $0x302] sm:$0xff]
    %v1346 = vld [vmem:[%s1028 + $0x30a] sm:$0xff]
    %v1347 = vld [vmem:[%s1028 + $0x31a] sm:$0xff]
    %v1348 = vld [vmem:[%s1028 + $0x322] sm:$0xff]
    %v1349 = vpack.c.bf16 %v1286, %v1285
    %v1350 = vpack.c.bf16 %v1288, %v1287
    %v1351 = vpack.c.bf16 %v1290, %v1289
    %v1352 = vpack.c.bf16 %v1292, %v1291
    %v1353 = vpack.c.bf16 %v1294, %v1293
    %v1354 = vpack.c.bf16 %v1296, %v1295
    %v1355 = vpack.c.bf16 %v1298, %v1297
    %v1356 = vpack.c.bf16 %v1300, %v1299
    %v1357 = vpack.c.bf16 %v1302, %v1301
    %v1358 = vpack.c.bf16 %v1304, %v1303
    %v1359 = vpack.c.bf16 %v1306, %v1305
    %v1360 = vpack.c.bf16 %v1308, %v1307
    %v1361 = vpack.c.bf16 %v1310, %v1309
    %v1362 = vpack.c.bf16 %v1312, %v1311
    %v1363 = vpack.c.bf16 %v1314, %v1313
    %v1364 = vpack.c.bf16 %v1316, %v1315
    %v1365 = vpack.c.bf16 %v1318, %v1317
    %v1366 = vpack.c.bf16 %v1320, %v1319
    %v1367 = vpack.c.bf16 %v1322, %v1321
    %v1368 = vpack.c.bf16 %v1324, %v1323
    %v1369 = vpack.c.bf16 %v1326, %v1325
    %v1370 = vpack.c.bf16 %v1328, %v1327
    %v1371 = vpack.c.bf16 %v1330, %v1329
    %v1372 = vpack.c.bf16 %v1332, %v1331
    %v1373 = vpack.c.bf16 %v1334, %v1333
    %v1374 = vpack.c.bf16 %v1336, %v1335
    %v1375 = vpack.c.bf16 %v1338, %v1337
    %v1376 = vpack.c.bf16 %v1340, %v1339
    %v1377 = vpack.c.bf16 %v1342, %v1341
    %v1378 = vpack.c.bf16 %v1344, %v1343
    %v1379 = vpack.c.bf16 %v1346, %v1345
    %v1380 = vpack.c.bf16 %v1348, %v1347
    %1381 = vst [vmem:[#allocation3 + $0x40] sm:$0xff] %v1349
    %1382 = vst [vmem:[#allocation3 + $0x88] sm:$0xff] %v1350
    %1383 = vst [vmem:[#allocation3 + $0xd0] sm:$0xff] %v1351
    %1384 = vst [vmem:[#allocation3 + $0x118] sm:$0xff] %v1352
    %1385 = vst [vmem:[#allocation3 + $0x160] sm:$0xff] %v1353
    %1386 = vst [vmem:[#allocation3 + $0x1a8] sm:$0xff] %v1354
    %1387 = vst [vmem:[#allocation3 + $0x1f0] sm:$0xff] %v1355
    %1388 = vst [vmem:[#allocation3 + $0x238] sm:$0xff] %v1356
    %1389 = vst [vmem:[#allocation3 + $0x280] sm:$0xff] %v1357
    %1390 = vst [vmem:[#allocation3 + $0x2c8] sm:$0xff] %v1358
    %1391 = vst [vmem:[#allocation3 + $0x310] sm:$0xff] %v1359
    %1392 = vst [vmem:[#allocation3 + $0x358] sm:$0xff] %v1360
    %1393 = vst [vmem:[#allocation3 + $0x3a0] sm:$0xff] %v1361
    %1394 = vst [vmem:[#allocation3 + $0x3e8] sm:$0xff] %v1362
    %1395 = vst [vmem:[#allocation3 + $0x430] sm:$0xff] %v1363
    %1396 = vst [vmem:[#allocation3 + $0x478] sm:$0xff] %v1364
    %1397 = vst [vmem:[#allocation3 + $0x4c0] sm:$0xff] %v1365
    %1398 = vst [vmem:[#allocation3 + $0x508] sm:$0xff] %v1366
    %1399 = vst [vmem:[#allocation3 + $0x550] sm:$0xff] %v1367
    %1400 = vst [vmem:[#allocation3 + $0x598] sm:$0xff] %v1368
    %1401 = vst [vmem:[#allocation3 + $0x5e0] sm:$0xff] %v1369
    %1402 = vst [vmem:[#allocation3 + $0x628] sm:$0xff] %v1370
    %1403 = vst [vmem:[#allocation3 + $0x670] sm:$0xff] %v1371
    %1404 = vst [vmem:[#allocation3 + $0x6b8] sm:$0xff] %v1372
    %1405 = vst [vmem:[#allocation3 + $0x700] sm:$0xff] %v1373
    %1406 = vst [vmem:[#allocation3 + $0x748] sm:$0xff] %v1374
    %1407 = vst [vmem:[#allocation3 + $0x790] sm:$0xff] %v1375
    %1408 = vst [vmem:[#allocation3 + $0x7d8] sm:$0xff] %v1376
    %1409 = vst [vmem:[#allocation3 + $0x820] sm:$0xff] %v1377
    %1410 = vst [vmem:[#allocation3 + $0x868] sm:$0xff] %v1378
    %1411 = vst [vmem:[#allocation3 + $0x8b0] sm:$0xff] %v1379
    %1412 = vst [vmem:[#allocation3 + $0x8f8] sm:$0xff] %v1380
    %v1413 = vld [vmem:[#allocation3] sm:$0xff]
    %v1414 = vld [vmem:[#allocation3 + $0x8] sm:$0xff]
    %v1415 = vld [vmem:[#allocation3 + $0x10] sm:$0xff]
    %v1416 = vld [vmem:[#allocation3 + $0x18] sm:$0xff]
    %v1417 = vld [vmem:[#allocation3 + $0x20] sm:$0xff]
    %v1418 = vld [vmem:[#allocation3 + $0x28] sm:$0xff]
    %v1419 = vld [vmem:[#allocation3 + $0x30] sm:$0xff]
    %v1420 = vld [vmem:[#allocation3 + $0x38] sm:$0xff]
    %v1421 = vld [vmem:[#allocation3 + $0x40] sm:$0xff]
    %v1422 = vld [vmem:[#allocation3 + $0x48] sm:$0xff]
    %v1423 = vld [vmem:[#allocation3 + $0x50] sm:$0xff]
    %v1424 = vld [vmem:[#allocation3 + $0x58] sm:$0xff]
    %v1425 = vld [vmem:[#allocation3 + $0x60] sm:$0xff]
    %v1426 = vld [vmem:[#allocation3 + $0x68] sm:$0xff]
    %v1427 = vld [vmem:[#allocation3 + $0x70] sm:$0xff]
    %v1428 = vld [vmem:[#allocation3 + $0x78] sm:$0xff]
    %v1429 = vld [vmem:[#allocation3 + $0x80] sm:$0xff]
    %v1430 = vld [vmem:[#allocation3 + $0x88] sm:$0xff]
    %v1431 = vld [vmem:[#allocation3 + $0x90] sm:$0xff]
    %v1432 = vld [vmem:[#allocation3 + $0x98] sm:$0xff]
    %v1433 = vld [vmem:[#allocation3 + $0xa0] sm:$0xff]
    %v1434 = vld [vmem:[#allocation3 + $0xa8] sm:$0xff]
    %v1435 = vld [vmem:[#allocation3 + $0xb0] sm:$0xff]
    %v1436 = vld [vmem:[#allocation3 + $0xb8] sm:$0xff]
    %v1437 = vld [vmem:[#allocation3 + $0xc0] sm:$0xff]
    %v1438 = vld [vmem:[#allocation3 + $0xc8] sm:$0xff]
    %v1439 = vld [vmem:[#allocation3 + $0xd0] sm:$0xff]
    %v1440 = vld [vmem:[#allocation3 + $0xd8] sm:$0xff]
    %v1441 = vld [vmem:[#allocation3 + $0xe0] sm:$0xff]
    %v1442 = vld [vmem:[#allocation3 + $0xe8] sm:$0xff]
    %v1443 = vld [vmem:[#allocation3 + $0xf0] sm:$0xff]
    %v1444 = vld [vmem:[#allocation3 + $0xf8] sm:$0xff]
    %v1445 = vld [vmem:[#allocation3 + $0x100] sm:$0xff]
    %v1446 = vld [vmem:[#allocation3 + $0x108] sm:$0xff]
    %v1447 = vld [vmem:[#allocation3 + $0x110] sm:$0xff]
    %v1448 = vld [vmem:[#allocation3 + $0x118] sm:$0xff]
    %v1449 = vld [vmem:[#allocation3 + $0x120] sm:$0xff]
    %v1450 = vld [vmem:[#allocation3 + $0x128] sm:$0xff]
    %v1451 = vld [vmem:[#allocation3 + $0x130] sm:$0xff]
    %v1452 = vld [vmem:[#allocation3 + $0x138] sm:$0xff]
    %v1453 = vld [vmem:[#allocation3 + $0x140] sm:$0xff]
    %v1454 = vld [vmem:[#allocation3 + $0x148] sm:$0xff]
    %v1455 = vld [vmem:[#allocation3 + $0x150] sm:$0xff]
    %v1456 = vld [vmem:[#allocation3 + $0x158] sm:$0xff]
    %v1457 = vld [vmem:[#allocation3 + $0x160] sm:$0xff]
    %v1458 = vld [vmem:[#allocation3 + $0x168] sm:$0xff]
    %v1459 = vld [vmem:[#allocation3 + $0x170] sm:$0xff]
    %v1460 = vld [vmem:[#allocation3 + $0x178] sm:$0xff]
    %v1461 = vld [vmem:[#allocation3 + $0x180] sm:$0xff]
    %v1462 = vld [vmem:[#allocation3 + $0x188] sm:$0xff]
    %v1463 = vld [vmem:[#allocation3 + $0x190] sm:$0xff]
    %v1464 = vld [vmem:[#allocation3 + $0x198] sm:$0xff]
    %v1465 = vld [vmem:[#allocation3 + $0x1a0] sm:$0xff]
    %v1466 = vld [vmem:[#allocation3 + $0x1a8] sm:$0xff]
    %v1467 = vld [vmem:[#allocation3 + $0x1b0] sm:$0xff]
    %v1468 = vld [vmem:[#allocation3 + $0x1b8] sm:$0xff]
    %v1469 = vld [vmem:[#allocation3 + $0x1c0] sm:$0xff]
    %v1470 = vld [vmem:[#allocation3 + $0x1c8] sm:$0xff]
    %v1471 = vld [vmem:[#allocation3 + $0x1d0] sm:$0xff]
    %v1472 = vld [vmem:[#allocation3 + $0x1d8] sm:$0xff]
    %v1473 = vld [vmem:[#allocation3 + $0x1e0] sm:$0xff]
    %v1474 = vld [vmem:[#allocation3 + $0x1e8] sm:$0xff]
    %v1475 = vld [vmem:[#allocation3 + $0x1f0] sm:$0xff]
    %v1476 = vld [vmem:[#allocation3 + $0x1f8] sm:$0xff]
    %v1477 = vld [vmem:[#allocation3 + $0x200] sm:$0xff]
    %v1478 = vld [vmem:[#allocation3 + $0x208] sm:$0xff]
    %v1479 = vld [vmem:[#allocation3 + $0x210] sm:$0xff]
    %v1480 = vld [vmem:[#allocation3 + $0x218] sm:$0xff]
    %v1481 = vld [vmem:[#allocation3 + $0x220] sm:$0xff]
    %v1482 = vld [vmem:[#allocation3 + $0x228] sm:$0xff]
    %v1483 = vld [vmem:[#allocation3 + $0x230] sm:$0xff]
    %v1484 = vld [vmem:[#allocation3 + $0x238] sm:$0xff]
    %v1485 = vld [vmem:[#allocation3 + $0x240] sm:$0xff]
    %v1486 = vld [vmem:[#allocation3 + $0x248] sm:$0xff]
    %v1487 = vld [vmem:[#allocation3 + $0x250] sm:$0xff]
    %v1488 = vld [vmem:[#allocation3 + $0x258] sm:$0xff]
    %v1489 = vld [vmem:[#allocation3 + $0x260] sm:$0xff]
    %v1490 = vld [vmem:[#allocation3 + $0x268] sm:$0xff]
    %v1491 = vld [vmem:[#allocation3 + $0x270] sm:$0xff]
    %v1492 = vld [vmem:[#allocation3 + $0x278] sm:$0xff]
    %v1493 = vld [vmem:[#allocation3 + $0x280] sm:$0xff]
    %v1494 = vld [vmem:[#allocation3 + $0x288] sm:$0xff]
    %v1495 = vld [vmem:[#allocation3 + $0x290] sm:$0xff]
    %v1496 = vld [vmem:[#allocation3 + $0x298] sm:$0xff]
    %v1497 = vld [vmem:[#allocation3 + $0x2a0] sm:$0xff]
    %v1498 = vld [vmem:[#allocation3 + $0x2a8] sm:$0xff]
    %v1499 = vld [vmem:[#allocation3 + $0x2b0] sm:$0xff]
    %v1500 = vld [vmem:[#allocation3 + $0x2b8] sm:$0xff]
    %v1501 = vld [vmem:[#allocation3 + $0x2c0] sm:$0xff]
    %v1502 = vld [vmem:[#allocation3 + $0x2c8] sm:$0xff]
    %v1503 = vld [vmem:[#allocation3 + $0x2d0] sm:$0xff]
    %v1504 = vld [vmem:[#allocation3 + $0x2d8] sm:$0xff]
    %v1505 = vld [vmem:[#allocation3 + $0x2e0] sm:$0xff]
    %v1506 = vld [vmem:[#allocation3 + $0x2e8] sm:$0xff]
    %v1507 = vld [vmem:[#allocation3 + $0x2f0] sm:$0xff]
    %v1508 = vld [vmem:[#allocation3 + $0x2f8] sm:$0xff]
    %v1509 = vld [vmem:[#allocation3 + $0x300] sm:$0xff]
    %v1510 = vld [vmem:[#allocation3 + $0x308] sm:$0xff]
    %v1511 = vld [vmem:[#allocation3 + $0x310] sm:$0xff]
    %v1512 = vld [vmem:[#allocation3 + $0x318] sm:$0xff]
    %v1513 = vld [vmem:[#allocation3 + $0x320] sm:$0xff]
    %v1514 = vld [vmem:[#allocation3 + $0x328] sm:$0xff]
    %v1515 = vld [vmem:[#allocation3 + $0x330] sm:$0xff]
    %v1516 = vld [vmem:[#allocation3 + $0x338] sm:$0xff]
    %v1517 = vld [vmem:[#allocation3 + $0x340] sm:$0xff]
    %v1518 = vld [vmem:[#allocation3 + $0x348] sm:$0xff]
    %v1519 = vld [vmem:[#allocation3 + $0x350] sm:$0xff]
    %v1520 = vld [vmem:[#allocation3 + $0x358] sm:$0xff]
    %v1521 = vld [vmem:[#allocation3 + $0x360] sm:$0xff]
    %v1522 = vld [vmem:[#allocation3 + $0x368] sm:$0xff]
    %v1523 = vld [vmem:[#allocation3 + $0x370] sm:$0xff]
    %v1524 = vld [vmem:[#allocation3 + $0x378] sm:$0xff]
    %v1525 = vld [vmem:[#allocation3 + $0x380] sm:$0xff]
    %v1526 = vld [vmem:[#allocation3 + $0x388] sm:$0xff]
    %v1527 = vld [vmem:[#allocation3 + $0x390] sm:$0xff]
    %v1528 = vld [vmem:[#allocation3 + $0x398] sm:$0xff]
    %v1529 = vld [vmem:[#allocation3 + $0x3a0] sm:$0xff]
    %v1530 = vld [vmem:[#allocation3 + $0x3a8] sm:$0xff]
    %v1531 = vld [vmem:[#allocation3 + $0x3b0] sm:$0xff]
    %v1532 = vld [vmem:[#allocation3 + $0x3b8] sm:$0xff]
    %v1533 = vld [vmem:[#allocation3 + $0x3c0] sm:$0xff]
    %v1534 = vld [vmem:[#allocation3 + $0x3c8] sm:$0xff]
    %v1535 = vld [vmem:[#allocation3 + $0x3d0] sm:$0xff]
    %v1536 = vld [vmem:[#allocation3 + $0x3d8] sm:$0xff]
    %v1537 = vld [vmem:[#allocation3 + $0x3e0] sm:$0xff]
    %v1538 = vld [vmem:[#allocation3 + $0x3e8] sm:$0xff]
    %v1539 = vld [vmem:[#allocation3 + $0x3f0] sm:$0xff]
    %v1540 = vld [vmem:[#allocation3 + $0x3f8] sm:$0xff]
    %v1541 = vld [vmem:[#allocation3 + $0x400] sm:$0xff]
    %v1542 = vld [vmem:[#allocation3 + $0x408] sm:$0xff]
    %v1543 = vld [vmem:[#allocation3 + $0x410] sm:$0xff]
    %v1544 = vld [vmem:[#allocation3 + $0x418] sm:$0xff]
    %v1545 = vld [vmem:[#allocation3 + $0x420] sm:$0xff]
    %v1546 = vld [vmem:[#allocation3 + $0x428] sm:$0xff]
    %v1547 = vld [vmem:[#allocation3 + $0x430] sm:$0xff]
    %v1548 = vld [vmem:[#allocation3 + $0x438] sm:$0xff]
    %v1549 = vld [vmem:[#allocation3 + $0x440] sm:$0xff]
    %v1550 = vld [vmem:[#allocation3 + $0x448] sm:$0xff]
    %v1551 = vld [vmem:[#allocation3 + $0x450] sm:$0xff]
    %v1552 = vld [vmem:[#allocation3 + $0x458] sm:$0xff]
    %v1553 = vld [vmem:[#allocation3 + $0x460] sm:$0xff]
    %v1554 = vld [vmem:[#allocation3 + $0x468] sm:$0xff]
    %v1555 = vld [vmem:[#allocation3 + $0x470] sm:$0xff]
    %v1556 = vld [vmem:[#allocation3 + $0x478] sm:$0xff]
    %v1557 = vld [vmem:[#allocation3 + $0x480] sm:$0xff]
    %v1558 = vld [vmem:[#allocation3 + $0x488] sm:$0xff]
    %v1559 = vld [vmem:[#allocation3 + $0x490] sm:$0xff]
    %v1560 = vld [vmem:[#allocation3 + $0x498] sm:$0xff]
    %v1561 = vld [vmem:[#allocation3 + $0x4a0] sm:$0xff]
    %v1562 = vld [vmem:[#allocation3 + $0x4a8] sm:$0xff]
    %v1563 = vld [vmem:[#allocation3 + $0x4b0] sm:$0xff]
    %v1564 = vld [vmem:[#allocation3 + $0x4b8] sm:$0xff]
    %v1565 = vld [vmem:[#allocation3 + $0x4c0] sm:$0xff]
    %v1566 = vld [vmem:[#allocation3 + $0x4c8] sm:$0xff]
    %v1567 = vld [vmem:[#allocation3 + $0x4d0] sm:$0xff]
    %v1568 = vld [vmem:[#allocation3 + $0x4d8] sm:$0xff]
    %v1569 = vld [vmem:[#allocation3 + $0x4e0] sm:$0xff]
    %v1570 = vld [vmem:[#allocation3 + $0x4e8] sm:$0xff]
    %v1571 = vld [vmem:[#allocation3 + $0x4f0] sm:$0xff]
    %v1572 = vld [vmem:[#allocation3 + $0x4f8] sm:$0xff]
    %v1573 = vld [vmem:[#allocation3 + $0x500] sm:$0xff]
    %v1574 = vld [vmem:[#allocation3 + $0x508] sm:$0xff]
    %v1575 = vld [vmem:[#allocation3 + $0x510] sm:$0xff]
    %v1576 = vld [vmem:[#allocation3 + $0x518] sm:$0xff]
    %v1577 = vld [vmem:[#allocation3 + $0x520] sm:$0xff]
    %v1578 = vld [vmem:[#allocation3 + $0x528] sm:$0xff]
    %v1579 = vld [vmem:[#allocation3 + $0x530] sm:$0xff]
    %v1580 = vld [vmem:[#allocation3 + $0x538] sm:$0xff]
    %v1581 = vld [vmem:[#allocation3 + $0x540] sm:$0xff]
    %v1582 = vld [vmem:[#allocation3 + $0x548] sm:$0xff]
    %v1583 = vld [vmem:[#allocation3 + $0x550] sm:$0xff]
    %v1584 = vld [vmem:[#allocation3 + $0x558] sm:$0xff]
    %v1585 = vld [vmem:[#allocation3 + $0x560] sm:$0xff]
    %v1586 = vld [vmem:[#allocation3 + $0x568] sm:$0xff]
    %v1587 = vld [vmem:[#allocation3 + $0x570] sm:$0xff]
    %v1588 = vld [vmem:[#allocation3 + $0x578] sm:$0xff]
    %v1589 = vld [vmem:[#allocation3 + $0x580] sm:$0xff]
    %v1590 = vld [vmem:[#allocation3 + $0x588] sm:$0xff]
    %v1591 = vld [vmem:[#allocation3 + $0x590] sm:$0xff]
    %v1592 = vld [vmem:[#allocation3 + $0x598] sm:$0xff]
    %v1593 = vld [vmem:[#allocation3 + $0x5a0] sm:$0xff]
    %v1594 = vld [vmem:[#allocation3 + $0x5a8] sm:$0xff]
    %v1595 = vld [vmem:[#allocation3 + $0x5b0] sm:$0xff]
    %v1596 = vld [vmem:[#allocation3 + $0x5b8] sm:$0xff]
    %v1597 = vld [vmem:[#allocation3 + $0x5c0] sm:$0xff]
    %v1598 = vld [vmem:[#allocation3 + $0x5c8] sm:$0xff]
    %v1599 = vld [vmem:[#allocation3 + $0x5d0] sm:$0xff]
    %v1600 = vld [vmem:[#allocation3 + $0x5d8] sm:$0xff]
    %v1601 = vld [vmem:[#allocation3 + $0x5e0] sm:$0xff]
    %v1602 = vld [vmem:[#allocation3 + $0x5e8] sm:$0xff]
    %v1603 = vld [vmem:[#allocation3 + $0x5f0] sm:$0xff]
    %v1604 = vld [vmem:[#allocation3 + $0x5f8] sm:$0xff]
    %v1605 = vld [vmem:[#allocation3 + $0x600] sm:$0xff]
    %v1606 = vld [vmem:[#allocation3 + $0x608] sm:$0xff]
    %v1607 = vld [vmem:[#allocation3 + $0x610] sm:$0xff]
    %v1608 = vld [vmem:[#allocation3 + $0x618] sm:$0xff]
    %v1609 = vld [vmem:[#allocation3 + $0x620] sm:$0xff]
    %v1610 = vld [vmem:[#allocation3 + $0x628] sm:$0xff]
    %v1611 = vld [vmem:[#allocation3 + $0x630] sm:$0xff]
    %v1612 = vld [vmem:[#allocation3 + $0x638] sm:$0xff]
    %v1613 = vld [vmem:[#allocation3 + $0x640] sm:$0xff]
    %v1614 = vld [vmem:[#allocation3 + $0x648] sm:$0xff]
    %v1615 = vld [vmem:[#allocation3 + $0x650] sm:$0xff]
    %v1616 = vld [vmem:[#allocation3 + $0x658] sm:$0xff]
    %v1617 = vld [vmem:[#allocation3 + $0x660] sm:$0xff]
    %v1618 = vld [vmem:[#allocation3 + $0x668] sm:$0xff]
    %v1619 = vld [vmem:[#allocation3 + $0x670] sm:$0xff]
    %v1620 = vld [vmem:[#allocation3 + $0x678] sm:$0xff]
    %v1621 = vld [vmem:[#allocation3 + $0x680] sm:$0xff]
    %v1622 = vld [vmem:[#allocation3 + $0x688] sm:$0xff]
    %v1623 = vld [vmem:[#allocation3 + $0x690] sm:$0xff]
    %v1624 = vld [vmem:[#allocation3 + $0x698] sm:$0xff]
    %v1625 = vld [vmem:[#allocation3 + $0x6a0] sm:$0xff]
    %v1626 = vld [vmem:[#allocation3 + $0x6a8] sm:$0xff]
    %v1627 = vld [vmem:[#allocation3 + $0x6b0] sm:$0xff]
    %v1628 = vld [vmem:[#allocation3 + $0x6b8] sm:$0xff]
    %v1629 = vld [vmem:[#allocation3 + $0x6c0] sm:$0xff]
    %v1630 = vld [vmem:[#allocation3 + $0x6c8] sm:$0xff]
    %v1631 = vld [vmem:[#allocation3 + $0x6d0] sm:$0xff]
    %v1632 = vld [vmem:[#allocation3 + $0x6d8] sm:$0xff]
    %v1633 = vld [vmem:[#allocation3 + $0x6e0] sm:$0xff]
    %v1634 = vld [vmem:[#allocation3 + $0x6e8] sm:$0xff]
    %v1635 = vld [vmem:[#allocation3 + $0x6f0] sm:$0xff]
    %v1636 = vld [vmem:[#allocation3 + $0x6f8] sm:$0xff]
    %v1637 = vld [vmem:[#allocation3 + $0x700] sm:$0xff]
    %v1638 = vld [vmem:[#allocation3 + $0x708] sm:$0xff]
    %v1639 = vld [vmem:[#allocation3 + $0x710] sm:$0xff]
    %v1640 = vld [vmem:[#allocation3 + $0x718] sm:$0xff]
    %v1641 = vld [vmem:[#allocation3 + $0x720] sm:$0xff]
    %v1642 = vld [vmem:[#allocation3 + $0x728] sm:$0xff]
    %v1643 = vld [vmem:[#allocation3 + $0x730] sm:$0xff]
    %v1644 = vld [vmem:[#allocation3 + $0x738] sm:$0xff]
    %v1645 = vld [vmem:[#allocation3 + $0x740] sm:$0xff]
    %v1646 = vld [vmem:[#allocation3 + $0x748] sm:$0xff]
    %v1647 = vld [vmem:[#allocation3 + $0x750] sm:$0xff]
    %v1648 = vld [vmem:[#allocation3 + $0x758] sm:$0xff]
    %v1649 = vld [vmem:[#allocation3 + $0x760] sm:$0xff]
    %v1650 = vld [vmem:[#allocation3 + $0x768] sm:$0xff]
    %v1651 = vld [vmem:[#allocation3 + $0x770] sm:$0xff]
    %v1652 = vld [vmem:[#allocation3 + $0x778] sm:$0xff]
    %v1653 = vld [vmem:[#allocation3 + $0x780] sm:$0xff]
    %v1654 = vld [vmem:[#allocation3 + $0x788] sm:$0xff]
    %v1655 = vld [vmem:[#allocation3 + $0x790] sm:$0xff]
    %v1656 = vld [vmem:[#allocation3 + $0x798] sm:$0xff]
    %v1657 = vld [vmem:[#allocation3 + $0x7a0] sm:$0xff]
    %v1658 = vld [vmem:[#allocation3 + $0x7a8] sm:$0xff]
    %v1659 = vld [vmem:[#allocation3 + $0x7b0] sm:$0xff]
    %v1660 = vld [vmem:[#allocation3 + $0x7b8] sm:$0xff]
    %v1661 = vld [vmem:[#allocation3 + $0x7c0] sm:$0xff]
    %v1662 = vld [vmem:[#allocation3 + $0x7c8] sm:$0xff]
    %v1663 = vld [vmem:[#allocation3 + $0x7d0] sm:$0xff]
    %v1664 = vld [vmem:[#allocation3 + $0x7d8] sm:$0xff]
    %v1665 = vld [vmem:[#allocation3 + $0x7e0] sm:$0xff]
    %v1666 = vld [vmem:[#allocation3 + $0x7e8] sm:$0xff]
    %v1667 = vld [vmem:[#allocation3 + $0x7f0] sm:$0xff]
    %v1668 = vld [vmem:[#allocation3 + $0x7f8] sm:$0xff]
    %v1669 = vld [vmem:[#allocation3 + $0x800] sm:$0xff]
    %v1670 = vld [vmem:[#allocation3 + $0x808] sm:$0xff]
    %v1671 = vld [vmem:[#allocation3 + $0x810] sm:$0xff]
    %v1672 = vld [vmem:[#allocation3 + $0x818] sm:$0xff]
    %v1673 = vld [vmem:[#allocation3 + $0x820] sm:$0xff]
    %v1674 = vld [vmem:[#allocation3 + $0x828] sm:$0xff]
    %v1675 = vld [vmem:[#allocation3 + $0x830] sm:$0xff]
    %v1676 = vld [vmem:[#allocation3 + $0x838] sm:$0xff]
    %v1677 = vld [vmem:[#allocation3 + $0x840] sm:$0xff]
    %v1678 = vld [vmem:[#allocation3 + $0x848] sm:$0xff]
    %v1679 = vld [vmem:[#allocation3 + $0x850] sm:$0xff]
    %v1680 = vld [vmem:[#allocation3 + $0x858] sm:$0xff]
    %v1681 = vld [vmem:[#allocation3 + $0x860] sm:$0xff]
    %v1682 = vld [vmem:[#allocation3 + $0x868] sm:$0xff]
    %v1683 = vld [vmem:[#allocation3 + $0x870] sm:$0xff]
    %v1684 = vld [vmem:[#allocation3 + $0x878] sm:$0xff]
    %v1685 = vld [vmem:[#allocation3 + $0x880] sm:$0xff]
    %v1686 = vld [vmem:[#allocation3 + $0x888] sm:$0xff]
    %v1687 = vld [vmem:[#allocation3 + $0x890] sm:$0xff]
    %v1688 = vld [vmem:[#allocation3 + $0x898] sm:$0xff]
    %v1689 = vld [vmem:[#allocation3 + $0x8a0] sm:$0xff]
    %v1690 = vld [vmem:[#allocation3 + $0x8a8] sm:$0xff]
    %v1691 = vld [vmem:[#allocation3 + $0x8b0] sm:$0xff]
    %v1692 = vld [vmem:[#allocation3 + $0x8b8] sm:$0xff]
    %v1693 = vld [vmem:[#allocation3 + $0x8c0] sm:$0xff]
    %v1694 = vld [vmem:[#allocation3 + $0x8c8] sm:$0xff]
    %v1695 = vld [vmem:[#allocation3 + $0x8d0] sm:$0xff]
    %v1696 = vld [vmem:[#allocation3 + $0x8d8] sm:$0xff]
    %v1697 = vld [vmem:[#allocation3 + $0x8e0] sm:$0xff]
    %v1698 = vld [vmem:[#allocation3 + $0x8e8] sm:$0xff]
    %v1699 = vld [vmem:[#allocation3 + $0x8f0] sm:$0xff]
    %v1700 = vld [vmem:[#allocation3 + $0x8f8] sm:$0xff]
    %v1701 = vld [vmem:[%s1] sm:$0xf]
    %v1702 = vld [vmem:[%s1 + $0x4] sm:$0xf]
    %v1703 = vld [vmem:[%s1 + $0x8] sm:$0xf]
    %v1704 = vld [vmem:[%s1 + $0xc] sm:$0xf]
    %v1705 = vld [vmem:[%s1 + $0x10] sm:$0xf]
    %v1706 = vld [vmem:[%s1 + $0x14] sm:$0xf]
    %v1707 = vld [vmem:[%s1 + $0x18] sm:$0xf]
    %v1708 = vld [vmem:[%s1 + $0x1c] sm:$0xf]
    %v1709 = vld [vmem:[%s1 + $0x20] sm:$0xf]
    %v1710 = vld [vmem:[%s1 + $0x24] sm:$0xf]
    %v1711 = vld [vmem:[%s1 + $0x28] sm:$0xf]
    %v1712 = vld [vmem:[%s1 + $0x2c] sm:$0xf]
    %v1713 = vld [vmem:[%s1 + $0x30] sm:$0xf]
    %v1714 = vld [vmem:[%s1 + $0x34] sm:$0xf]
    %v1715 = vld [vmem:[%s1 + $0x38] sm:$0xf]
    %v1716 = vld [vmem:[%s1 + $0x3c] sm:$0xf]
    %v1717 = vld [vmem:[%s1 + $0x40] sm:$0xf]
    %v1718 = vld [vmem:[%s1 + $0x44] sm:$0xf]
    %v1719 = vld [vmem:[%s1 + $0x48] sm:$0xf]
    %v1720 = vld [vmem:[%s1 + $0x4c] sm:$0xf]
    %v1721 = vld [vmem:[%s1 + $0x50] sm:$0xf]
    %v1722 = vld [vmem:[%s1 + $0x54] sm:$0xf]
    %v1723 = vld [vmem:[%s1 + $0x58] sm:$0xf]
    %v1724 = vld [vmem:[%s1 + $0x5c] sm:$0xf]
    %v1725 = vld [vmem:[%s1 + $0x60] sm:$0xf]
    %v1726 = vld [vmem:[%s1 + $0x64] sm:$0xf]
    %v1727 = vld [vmem:[%s1 + $0x68] sm:$0xf]
    %v1728 = vld [vmem:[%s1 + $0x6c] sm:$0xf]
    %v1729 = vld [vmem:[%s1 + $0x70] sm:$0xf]
    %v1730 = vld [vmem:[%s1 + $0x74] sm:$0xf]
    %v1731 = vld [vmem:[%s1 + $0x78] sm:$0xf]
    %v1732 = vld [vmem:[%s1 + $0x7c] sm:$0xf]
    %v1733 = vld [vmem:[%s1 + $0x80] sm:$0xf]
    %v1734 = vld [vmem:[%s1 + $0x84] sm:$0xf]
    %v1735 = vld [vmem:[%s1 + $0x88] sm:$0xf]
    %v1736 = vld [vmem:[%s1 + $0x8c] sm:$0xf]
    %v1737 = vld [vmem:[%s1 + $0x90] sm:$0xf]
    %v1738 = vld [vmem:[%s1 + $0x94] sm:$0xf]
    %v1739 = vld [vmem:[%s1 + $0x98] sm:$0xf]
    %v1740 = vld [vmem:[%s1 + $0x9c] sm:$0xf]
    %v1741 = vld [vmem:[%s1 + $0xa0] sm:$0xf]
    %v1742 = vld [vmem:[%s1 + $0xa4] sm:$0xf]
    %v1743 = vld [vmem:[%s1 + $0xa8] sm:$0xf]
    %v1744 = vld [vmem:[%s1 + $0xac] sm:$0xf]
    %v1745 = vld [vmem:[%s1 + $0xb0] sm:$0xf]
    %v1746 = vld [vmem:[%s1 + $0xb4] sm:$0xf]
    %v1747 = vld [vmem:[%s1 + $0xb8] sm:$0xf]
    %v1748 = vld [vmem:[%s1 + $0xbc] sm:$0xf]
    %v1749 = vld [vmem:[%s1 + $0xc0] sm:$0xf]
    %v1750 = vld [vmem:[%s1 + $0xc4] sm:$0xf]
    %v1751 = vld [vmem:[%s1 + $0xc8] sm:$0xf]
    %v1752 = vld [vmem:[%s1 + $0xcc] sm:$0xf]
    %v1753 = vld [vmem:[%s1 + $0xd0] sm:$0xf]
    %v1754 = vld [vmem:[%s1 + $0xd4] sm:$0xf]
    %v1755 = vld [vmem:[%s1 + $0xd8] sm:$0xf]
    %v1756 = vld [vmem:[%s1 + $0xdc] sm:$0xf]
    %v1757 = vld [vmem:[%s1 + $0xe0] sm:$0xf]
    %v1758 = vld [vmem:[%s1 + $0xe4] sm:$0xf]
    %v1759 = vld [vmem:[%s1 + $0xe8] sm:$0xf]
    %v1760 = vld [vmem:[%s1 + $0xec] sm:$0xf]
    %v1761 = vld [vmem:[%s1 + $0xf0] sm:$0xf]
    %v1762 = vld [vmem:[%s1 + $0xf4] sm:$0xf]
    %v1763 = vld [vmem:[%s1 + $0xf8] sm:$0xf]
    %v1764 = vld [vmem:[%s1 + $0xfc] sm:$0xf]
    %v1765 = vld [vmem:[%s1 + $0x100] sm:$0xf]
    %v1766 = vld [vmem:[%s1 + $0x104] sm:$0xf]
    %v1767 = vld [vmem:[%s1 + $0x108] sm:$0xf]
    %v1768 = vld [vmem:[%s1 + $0x10c] sm:$0xf]
    %v1769 = vld [vmem:[%s1 + $0x110] sm:$0xf]
    %v1770 = vld [vmem:[%s1 + $0x114] sm:$0xf]
    %v1771 = vld [vmem:[%s1 + $0x118] sm:$0xf]
    %v1772 = vld [vmem:[%s1 + $0x11c] sm:$0xf]
    %v1773 = vld [vmem:[%s1 + $0x120] sm:$0xf]
    %v1774 = vld [vmem:[%s1 + $0x124] sm:$0xf]
    %v1775 = vld [vmem:[%s1 + $0x128] sm:$0xf]
    %v1776 = vld [vmem:[%s1 + $0x12c] sm:$0xf]
    %v1777 = vld [vmem:[%s1 + $0x130] sm:$0xf]
    %v1778 = vld [vmem:[%s1 + $0x134] sm:$0xf]
    %v1779 = vld [vmem:[%s1 + $0x138] sm:$0xf]
    %v1780 = vld [vmem:[%s1 + $0x13c] sm:$0xf]
    %v1781 = vld [vmem:[%s1 + $0x140] sm:$0xf]
    %v1782 = vld [vmem:[%s1 + $0x144] sm:$0xf]
    %v1783 = vld [vmem:[%s1 + $0x148] sm:$0xf]
    %v1784 = vld [vmem:[%s1 + $0x14c] sm:$0xf]
    %v1785 = vld [vmem:[%s1 + $0x150] sm:$0xf]
    %v1786 = vld [vmem:[%s1 + $0x154] sm:$0xf]
    %v1787 = vld [vmem:[%s1 + $0x158] sm:$0xf]
    %v1788 = vld [vmem:[%s1 + $0x15c] sm:$0xf]
    %v1789 = vld [vmem:[%s1 + $0x160] sm:$0xf]
    %v1790 = vld [vmem:[%s1 + $0x164] sm:$0xf]
    %v1791 = vld [vmem:[%s1 + $0x168] sm:$0xf]
    %v1792 = vld [vmem:[%s1 + $0x16c] sm:$0xf]
    %v1793 = vld [vmem:[%s1 + $0x170] sm:$0xf]
    %v1794 = vld [vmem:[%s1 + $0x174] sm:$0xf]
    %v1795 = vld [vmem:[%s1 + $0x178] sm:$0xf]
    %v1796 = vld [vmem:[%s1 + $0x17c] sm:$0xf]
    %v1797 = vld [vmem:[%s1 + $0x180] sm:$0xf]
    %v1798 = vld [vmem:[%s1 + $0x184] sm:$0xf]
    %v1799 = vld [vmem:[%s1 + $0x188] sm:$0xf]
    %v1800 = vld [vmem:[%s1 + $0x18c] sm:$0xf]
    %v1801 = vld [vmem:[%s1 + $0x190] sm:$0xf]
    %v1802 = vld [vmem:[%s1 + $0x194] sm:$0xf]
    %v1803 = vld [vmem:[%s1 + $0x198] sm:$0xf]
    %v1804 = vld [vmem:[%s1 + $0x19c] sm:$0xf]
    %v1805 = vld [vmem:[%s1 + $0x1a0] sm:$0xf]
    %v1806 = vld [vmem:[%s1 + $0x1a4] sm:$0xf]
    %v1807 = vld [vmem:[%s1 + $0x1a8] sm:$0xf]
    %v1808 = vld [vmem:[%s1 + $0x1ac] sm:$0xf]
    %v1809 = vld [vmem:[%s1 + $0x1b0] sm:$0xf]
    %v1810 = vld [vmem:[%s1 + $0x1b4] sm:$0xf]
    %v1811 = vld [vmem:[%s1 + $0x1b8] sm:$0xf]
    %v1812 = vld [vmem:[%s1 + $0x1bc] sm:$0xf]
    %v1813 = vld [vmem:[%s1 + $0x1c0] sm:$0xf]
    %v1814 = vld [vmem:[%s1 + $0x1c4] sm:$0xf]
    %v1815 = vld [vmem:[%s1 + $0x1c8] sm:$0xf]
    %v1816 = vld [vmem:[%s1 + $0x1cc] sm:$0xf]
    %v1817 = vld [vmem:[%s1 + $0x1d0] sm:$0xf]
    %v1818 = vld [vmem:[%s1 + $0x1d4] sm:$0xf]
    %v1819 = vld [vmem:[%s1 + $0x1d8] sm:$0xf]
    %v1820 = vld [vmem:[%s1 + $0x1dc] sm:$0xf]
    %v1821 = vld [vmem:[%s1 + $0x1e0] sm:$0xf]
    %v1822 = vld [vmem:[%s1 + $0x1e4] sm:$0xf]
    %v1823 = vld [vmem:[%s1 + $0x1e8] sm:$0xf]
    %v1824 = vld [vmem:[%s1 + $0x1ec] sm:$0xf]
    %v1825 = vld [vmem:[%s1 + $0x1f0] sm:$0xf]
    %v1826 = vld [vmem:[%s1 + $0x1f4] sm:$0xf]
    %v1827 = vld [vmem:[%s1 + $0x1f8] sm:$0xf]
    %v1828 = vld [vmem:[%s1 + $0x1fc] sm:$0xf]
    %v1829 = vld [vmem:[%s1 + $0x200] sm:$0xf]
    %v1830 = vld [vmem:[%s1 + $0x204] sm:$0xf]
    %v1831 = vld [vmem:[%s1 + $0x208] sm:$0xf]
    %v1832 = vld [vmem:[%s1 + $0x20c] sm:$0xf]
    %v1833 = vld [vmem:[%s1 + $0x210] sm:$0xf]
    %v1834 = vld [vmem:[%s1 + $0x214] sm:$0xf]
    %v1835 = vld [vmem:[%s1 + $0x218] sm:$0xf]
    %v1836 = vld [vmem:[%s1 + $0x21c] sm:$0xf]
    %v1837 = vld [vmem:[%s1 + $0x220] sm:$0xf]
    %v1838 = vld [vmem:[%s1 + $0x224] sm:$0xf]
    %v1839 = vld [vmem:[%s1 + $0x228] sm:$0xf]
    %v1840 = vld [vmem:[%s1 + $0x22c] sm:$0xf]
    %v1841 = vld [vmem:[%s1 + $0x230] sm:$0xf]
    %v1842 = vld [vmem:[%s1 + $0x234] sm:$0xf]
    %v1843 = vld [vmem:[%s1 + $0x238] sm:$0xf]
    %v1844 = vld [vmem:[%s1 + $0x23c] sm:$0xf]
    %v1845 = vld [vmem:[%s2] sm:$0x1]
    %v1847 = vlaneseq
    %v1848 = vshrl.u32 %v1847, 7
    %v1849 = vsub.s32 0, %v1848
    %v1850 = vrot.slane %v1845, %v1849
    %v1996 = vunpack.c.l.b16 %v1701
    %v1997 = vunpack.c.l.b16 %v1702
    %v1998 = vunpack.c.l.b16 %v1703
    %v1999 = vunpack.c.l.b16 %v1704
    %v2000 = vunpack.c.l.b16 %v1705
    %v2001 = vunpack.c.l.b16 %v1706
    %v2002 = vunpack.c.l.b16 %v1707
    %v2003 = vunpack.c.l.b16 %v1708
    %v2004 = vunpack.c.l.b16 %v1709
    %v2005 = vunpack.c.l.b16 %v1710
    %v2006 = vunpack.c.l.b16 %v1711
    %v2007 = vunpack.c.l.b16 %v1712
    %v2008 = vunpack.c.l.b16 %v1713
    %v2009 = vunpack.c.l.b16 %v1714
    %v2010 = vunpack.c.l.b16 %v1715
    %v2011 = vunpack.c.l.b16 %v1716
    %v2012 = vunpack.c.l.b16 %v1717
    %v2013 = vunpack.c.l.b16 %v1718
    %v2014 = vunpack.c.l.b16 %v1719
    %v2015 = vunpack.c.l.b16 %v1720
    %v2016 = vunpack.c.l.b16 %v1721
    %v2017 = vunpack.c.l.b16 %v1722
    %v2018 = vunpack.c.l.b16 %v1723
    %v2019 = vunpack.c.l.b16 %v1724
    %v2020 = vunpack.c.l.b16 %v1725
    %v2021 = vunpack.c.l.b16 %v1726
    %v2022 = vunpack.c.l.b16 %v1727
    %v2023 = vunpack.c.l.b16 %v1728
    %v2024 = vunpack.c.l.b16 %v1729
    %v2025 = vunpack.c.l.b16 %v1730
    %v2026 = vunpack.c.l.b16 %v1731
    %v2027 = vunpack.c.l.b16 %v1732
    %v2028 = vunpack.c.l.b16 %v1733
    %v2029 = vunpack.c.l.b16 %v1734
    %v2030 = vunpack.c.l.b16 %v1735
    %v2031 = vunpack.c.l.b16 %v1736
    %v2032 = vunpack.c.l.b16 %v1737
    %v2033 = vunpack.c.l.b16 %v1738
    %v2034 = vunpack.c.l.b16 %v1739
    %v2035 = vunpack.c.l.b16 %v1740
    %v2036 = vunpack.c.l.b16 %v1741
    %v2037 = vunpack.c.l.b16 %v1742
    %v2038 = vunpack.c.l.b16 %v1743
    %v2039 = vunpack.c.l.b16 %v1744
    %v2040 = vunpack.c.l.b16 %v1745
    %v2041 = vunpack.c.l.b16 %v1746
    %v2042 = vunpack.c.l.b16 %v1747
    %v2043 = vunpack.c.l.b16 %v1748
    %v2044 = vunpack.c.l.b16 %v1749
    %v2045 = vunpack.c.l.b16 %v1750
    %v2046 = vunpack.c.l.b16 %v1751
    %v2047 = vunpack.c.l.b16 %v1752
    %v2048 = vunpack.c.l.b16 %v1753
    %v2049 = vunpack.c.l.b16 %v1754
    %v2050 = vunpack.c.l.b16 %v1755
    %v2051 = vunpack.c.l.b16 %v1756
    %v2052 = vunpack.c.l.b16 %v1757
    %v2053 = vunpack.c.l.b16 %v1758
    %v2054 = vunpack.c.l.b16 %v1759
    %v2055 = vunpack.c.l.b16 %v1760
    %v2056 = vunpack.c.l.b16 %v1761
    %v2057 = vunpack.c.l.b16 %v1762
    %v2058 = vunpack.c.l.b16 %v1763
    %v2059 = vunpack.c.l.b16 %v1764
    %v2060 = vunpack.c.l.b16 %v1765
    %v2061 = vunpack.c.l.b16 %v1766
    %v2062 = vunpack.c.l.b16 %v1767
    %v2063 = vunpack.c.l.b16 %v1768
    %v2064 = vunpack.c.l.b16 %v1769
    %v2065 = vunpack.c.l.b16 %v1770
    %v2066 = vunpack.c.l.b16 %v1771
    %v2067 = vunpack.c.l.b16 %v1772
    %v2068 = vunpack.c.l.b16 %v1773
    %v2069 = vunpack.c.l.b16 %v1774
    %v2070 = vunpack.c.l.b16 %v1775
    %v2071 = vunpack.c.l.b16 %v1776
    %v2072 = vunpack.c.l.b16 %v1777
    %v2073 = vunpack.c.l.b16 %v1778
    %v2074 = vunpack.c.l.b16 %v1779
    %v2075 = vunpack.c.l.b16 %v1780
    %v2076 = vunpack.c.l.b16 %v1781
    %v2077 = vunpack.c.l.b16 %v1782
    %v2078 = vunpack.c.l.b16 %v1783
    %v2079 = vunpack.c.l.b16 %v1784
    %v2080 = vunpack.c.l.b16 %v1785
    %v2081 = vunpack.c.l.b16 %v1786
    %v2082 = vunpack.c.l.b16 %v1787
    %v2083 = vunpack.c.l.b16 %v1788
    %v2084 = vunpack.c.l.b16 %v1789
    %v2085 = vunpack.c.l.b16 %v1790
    %v2086 = vunpack.c.l.b16 %v1791
    %v2087 = vunpack.c.l.b16 %v1792
    %v2088 = vunpack.c.l.b16 %v1793
    %v2089 = vunpack.c.l.b16 %v1794
    %v2090 = vunpack.c.l.b16 %v1795
    %v2091 = vunpack.c.l.b16 %v1796
    %v2092 = vunpack.c.l.b16 %v1797
    %v2093 = vunpack.c.l.b16 %v1798
    %v2094 = vunpack.c.l.b16 %v1799
    %v2095 = vunpack.c.l.b16 %v1800
    %v2096 = vunpack.c.l.b16 %v1801
    %v2097 = vunpack.c.l.b16 %v1802
    %v2098 = vunpack.c.l.b16 %v1803
    %v2099 = vunpack.c.l.b16 %v1804
    %v2100 = vunpack.c.l.b16 %v1805
    %v2101 = vunpack.c.l.b16 %v1806
    %v2102 = vunpack.c.l.b16 %v1807
    %v2103 = vunpack.c.l.b16 %v1808
    %v2104 = vunpack.c.l.b16 %v1809
    %v2105 = vunpack.c.l.b16 %v1810
    %v2106 = vunpack.c.l.b16 %v1811
    %v2107 = vunpack.c.l.b16 %v1812
    %v2108 = vunpack.c.l.b16 %v1813
    %v2109 = vunpack.c.l.b16 %v1814
    %v2110 = vunpack.c.l.b16 %v1815
    %v2111 = vunpack.c.l.b16 %v1816
    %v2112 = vunpack.c.l.b16 %v1817
    %v2113 = vunpack.c.l.b16 %v1818
    %v2114 = vunpack.c.l.b16 %v1819
    %v2115 = vunpack.c.l.b16 %v1820
    %v2116 = vunpack.c.l.b16 %v1821
    %v2117 = vunpack.c.l.b16 %v1822
    %v2118 = vunpack.c.l.b16 %v1823
    %v2119 = vunpack.c.l.b16 %v1824
    %v2120 = vunpack.c.l.b16 %v1825
    %v2121 = vunpack.c.l.b16 %v1826
    %v2122 = vunpack.c.l.b16 %v1827
    %v2123 = vunpack.c.l.b16 %v1828
    %v2124 = vunpack.c.l.b16 %v1829
    %v2125 = vunpack.c.l.b16 %v1830
    %v2126 = vunpack.c.l.b16 %v1831
    %v2127 = vunpack.c.l.b16 %v1832
    %v2128 = vunpack.c.l.b16 %v1833
    %v2129 = vunpack.c.l.b16 %v1834
    %v2130 = vunpack.c.l.b16 %v1835
    %v2131 = vunpack.c.l.b16 %v1836
    %v2132 = vunpack.c.l.b16 %v1837
    %v2133 = vunpack.c.l.b16 %v1838
    %v2134 = vunpack.c.l.b16 %v1839
    %v2135 = vunpack.c.l.b16 %v1840
    %v2136 = vunpack.c.l.b16 %v1841
    %v2137 = vunpack.c.l.b16 %v1842
    %v2138 = vunpack.c.l.b16 %v1843
    %v2139 = vunpack.c.l.b16 %v1844
    %v2140 = vpack.c.b16 %v1997, %v1996
    %v2141 = vpack.c.b16 %v1999, %v1998
    %v2142 = vpack.c.b16 %v2001, %v2000
    %v2143 = vpack.c.b16 %v2003, %v2002
    %v2144 = vpack.c.b16 %v2005, %v2004
    %v2145 = vpack.c.b16 %v2007, %v2006
    %v2146 = vpack.c.b16 %v2009, %v2008
    %v2147 = vpack.c.b16 %v2011, %v2010
    %v2148 = vpack.c.b16 %v2013, %v2012
    %v2149 = vpack.c.b16 %v2015, %v2014
    %v2150 = vpack.c.b16 %v2017, %v2016
    %v2151 = vpack.c.b16 %v2019, %v2018
    %v2152 = vpack.c.b16 %v2021, %v2020
    %v2153 = vpack.c.b16 %v2023, %v2022
    %v2154 = vpack.c.b16 %v2025, %v2024
    %v2155 = vpack.c.b16 %v2027, %v2026
    %v2156 = vpack.c.b16 %v2029, %v2028
    %v2157 = vpack.c.b16 %v2031, %v2030
    %v2158 = vpack.c.b16 %v2033, %v2032
    %v2159 = vpack.c.b16 %v2035, %v2034
    %v2160 = vpack.c.b16 %v2037, %v2036
    %v2161 = vpack.c.b16 %v2039, %v2038
    %v2162 = vpack.c.b16 %v2041, %v2040
    %v2163 = vpack.c.b16 %v2043, %v2042
    %v2164 = vpack.c.b16 %v2045, %v2044
    %v2165 = vpack.c.b16 %v2047, %v2046
    %v2166 = vpack.c.b16 %v2049, %v2048
    %v2167 = vpack.c.b16 %v2051, %v2050
    %v2168 = vpack.c.b16 %v2053, %v2052
    %v2169 = vpack.c.b16 %v2055, %v2054
    %v2170 = vpack.c.b16 %v2057, %v2056
    %v2171 = vpack.c.b16 %v2059, %v2058
    %v2172 = vpack.c.b16 %v2061, %v2060
    %v2173 = vpack.c.b16 %v2063, %v2062
    %v2174 = vpack.c.b16 %v2065, %v2064
    %v2175 = vpack.c.b16 %v2067, %v2066
    %v2176 = vpack.c.b16 %v2069, %v2068
    %v2177 = vpack.c.b16 %v2071, %v2070
    %v2178 = vpack.c.b16 %v2073, %v2072
    %v2179 = vpack.c.b16 %v2075, %v2074
    %v2180 = vpack.c.b16 %v2077, %v2076
    %v2181 = vpack.c.b16 %v2079, %v2078
    %v2182 = vpack.c.b16 %v2081, %v2080
    %v2183 = vpack.c.b16 %v2083, %v2082
    %v2184 = vpack.c.b16 %v2085, %v2084
    %v2185 = vpack.c.b16 %v2087, %v2086
    %v2186 = vpack.c.b16 %v2089, %v2088
    %v2187 = vpack.c.b16 %v2091, %v2090
    %v2188 = vpack.c.b16 %v2093, %v2092
    %v2189 = vpack.c.b16 %v2095, %v2094
    %v2190 = vpack.c.b16 %v2097, %v2096
    %v2191 = vpack.c.b16 %v2099, %v2098
    %v2192 = vpack.c.b16 %v2101, %v2100
    %v2193 = vpack.c.b16 %v2103, %v2102
    %v2194 = vpack.c.b16 %v2105, %v2104
    %v2195 = vpack.c.b16 %v2107, %v2106
    %v2196 = vpack.c.b16 %v2109, %v2108
    %v2197 = vpack.c.b16 %v2111, %v2110
    %v2198 = vpack.c.b16 %v2113, %v2112
    %v2199 = vpack.c.b16 %v2115, %v2114
    %v2200 = vpack.c.b16 %v2117, %v2116
    %v2201 = vpack.c.b16 %v2119, %v2118
    %v2202 = vpack.c.b16 %v2121, %v2120
    %v2203 = vpack.c.b16 %v2123, %v2122
    %v2204 = vpack.c.b16 %v2125, %v2124
    %v2205 = vpack.c.b16 %v2127, %v2126
    %v2206 = vpack.c.b16 %v2129, %v2128
    %v2207 = vpack.c.b16 %v2131, %v2130
    %v2208 = vpack.c.b16 %v2133, %v2132
    %v2209 = vpack.c.b16 %v2135, %v2134
    %v2210 = vpack.c.b16 %v2137, %v2136
    %v2211 = vpack.c.b16 %v2139, %v2138
    %2284 = vmatprep.subr.bf16.mxu0 0
    %2285 = vmatpush1.bf16.msra.mxu0 %v2140
    %2286 = vmatprep.subr.bf16.mxu0 0
    %2287 = vmatpush1.bf16.msra.mxu0 %v2141
    %2288 = vmatprep.subr.bf16.mxu0 0
    %2289 = vmatpush1.bf16.msra.mxu0 %v2142
    %2290 = vmatprep.subr.bf16.mxu0 0
    %2291 = vmatpush1.bf16.msra.mxu0 %v2143
    %2292 = vmatprep.subr.bf16.mxu0 0
    %2293 = vmatpush1.bf16.msra.mxu0 %v2144
    %2294 = vmatprep.subr.bf16.mxu0 0
    %2295 = vmatpush1.bf16.msra.mxu0 %v2145
    %2296 = vmatprep.subr.bf16.mxu0 0
    %2297 = vmatpush1.bf16.msra.mxu0 %v2146
    %2298 = vmatprep.subr.bf16.mxu0 0
    %2299 = vmatpush1.bf16.msra.mxu0 %v2147
    %2300 = vmatprep.subr.bf16.mxu0 0
    %2301 = vmatpush1.bf16.msra.mxu0 %v2148
    %2302 = vmatprep.subr.bf16.mxu0 0
    %2303 = vmatpush1.bf16.msra.mxu0 %v2149
    %2304 = vmatprep.subr.bf16.mxu0 0
    %2305 = vmatpush1.bf16.msra.mxu0 %v2150
    %2306 = vmatprep.subr.bf16.mxu0 0
    %2307 = vmatpush1.bf16.msra.mxu0 %v2151
    %2308 = vmatprep.subr.bf16.mxu0 0
    %2309 = vmatpush1.bf16.msra.mxu0 %v2152
    %2310 = vmatprep.subr.bf16.mxu0 0
    %2311 = vmatpush1.bf16.msra.mxu0 %v2153
    %2312 = vmatprep.subr.bf16.mxu0 0
    %2313 = vmatpush1.bf16.msra.mxu0 %v2154
    %2314 = vmatprep.subr.bf16.mxu0 0
    %2315 = vmatpush1.bf16.msra.mxu0 %v2155
    %2316 = vmatprep.mubr.bf16.mxu0 %v1414
    %2317 = vmatmul.mubr.bf16.gmra.mrb[0].mxu0 %v1413
    %v2318 = vpop.f32.mrb[0].mxu0
    %v2319 = vadd.f32 %v1850, %v2318
    %v2320 = vpop.f32.mrb[0].mxu0
    %v2321 = vpop.f32.mrb[0].mxu0
    %v2322 = vadd.f32 %v1850, %v2321
    %v2323 = vpop.f32.mrb[0].mxu0
    %2324 = vmatprep.mubr.bf16.mxu0 %v1423
    %2325 = vmatmul.mubr.bf16.gmra.mrb[0].mxu0 %v1422
    %v2326 = vpop.f32.mrb[0].mxu0
    %v2327 = vadd.f32 %v1850, %v2326
    %v2328 = vpop.f32.mrb[0].mxu0
    %v2329 = vpop.f32.mrb[0].mxu0
    %v2330 = vadd.f32 %v1850, %v2329
    %v2331 = vpop.f32.mrb[0].mxu0
    %2332 = vmatprep.mubr.bf16.mxu0 %v1432
    %2333 = vmatmul.mubr.bf16.gmra.mrb[0].mxu0 %v1431
    %v2334 = vpop.f32.mrb[0].mxu0
    %v2335 = vadd.f32 %v1850, %v2334
    %v2336 = vpop.f32.mrb[0].mxu0
    %v2337 = vpop.f32.mrb[0].mxu0
    %v2338 = vadd.f32 %v1850, %v2337
    %v2339 = vpop.f32.mrb[0].mxu0
    %2340 = vmatprep.mubr.bf16.mxu0 %v1441
    %2341 = vmatmul.mubr.bf16.gmra.mrb[0].mxu0 %v1440
    %v2342 = vpop.f32.mrb[0].mxu0
    %v2343 = vadd.f32 %v1850, %v2342
    %v2344 = vpop.f32.mrb[0].mxu0
    %v2345 = vpop.f32.mrb[0].mxu0
    %v2346 = vadd.f32 %v1850, %v2345
    %v2347 = vpop.f32.mrb[0].mxu0
    %2348 = vmatprep.mubr.bf16.mxu0 %v1450
    %2349 = vmatmul.mubr.bf16.gmra.mrb[0].mxu0 %v1449
    %v2350 = vpop.f32.mrb[0].mxu0
    %v2351 = vadd.f32 %v1850, %v2350
    %v2352 = vpop.f32.mrb[0].mxu0
    %v2353 = vpop.f32.mrb[0].mxu0
    %v2354 = vadd.f32 %v1850, %v2353
    %v2355 = vpop.f32.mrb[0].mxu0
    %2356 = vmatprep.mubr.bf16.mxu0 %v1459
    %2357 = vmatmul.mubr.bf16.gmra.mrb[0].mxu0 %v1458
    %v2358 = vpop.f32.mrb[0].mxu0
    %v2359 = vadd.f32 %v1850, %v2358
    %v2360 = vpop.f32.mrb[0].mxu0
    %v2361 = vpop.f32.mrb[0].mxu0
    %v2362 = vadd.f32 %v1850, %v2361
    %v2363 = vpop.f32.mrb[0].mxu0
    %2364 = vmatprep.mubr.bf16.mxu0 %v1468
    %2365 = vmatmul.mubr.bf16.gmra.mrb[0].mxu0 %v1467
    %v2366 = vpop.f32.mrb[0].mxu0
    %v2367 = vadd.f32 %v1850, %v2366
    %v2368 = vpop.f32.mrb[0].mxu0
    %v2369 = vpop.f32.mrb[0].mxu0
    %v2370 = vadd.f32 %v1850, %v2369
    %v2371 = vpop.f32.mrb[0].mxu0
    %2372 = vmatprep.mubr.bf16.mxu0 %v1477
    %2373 = vmatmul.mubr.bf16.gmra.mrb[0].mxu0 %v1476
    %v2374 = vpop.f32.mrb[0].mxu0
    %v2375 = vadd.f32 %v1850, %v2374
    %v2376 = vpop.f32.mrb[0].mxu0
    %v2377 = vpop.f32.mrb[0].mxu0
    %v2378 = vadd.f32 %v1850, %v2377
    %v2379 = vpop.f32.mrb[0].mxu0
    %2380 = vmatprep.mubr.bf16.mxu0 %v1486
    %2381 = vmatmul.mubr.bf16.gmra.mrb[0].mxu0 %v1485
    %v2382 = vpop.f32.mrb[0].mxu0
    %v2383 = vadd.f32 %v1850, %v2382
    %v2384 = vpop.f32.mrb[0].mxu0
    %v2385 = vpop.f32.mrb[0].mxu0
    %v2386 = vadd.f32 %v1850, %v2385
    %v2387 = vpop.f32.mrb[0].mxu0
    %2388 = vmatprep.mubr.bf16.mxu0 %v1495
    %2389 = vmatmul.mubr.bf16.gmra.mrb[0].mxu0 %v1494
    %v2390 = vpop.f32.mrb[0].mxu0
    %v2391 = vadd.f32 %v1850, %v2390
    %v2392 = vpop.f32.mrb[0].mxu0
    %v2393 = vpop.f32.mrb[0].mxu0
    %v2394 = vadd.f32 %v1850, %v2393
    %v2395 = vpop.f32.mrb[0].mxu0
    %2396 = vmatprep.mubr.bf16.mxu0 %v1504
    %2397 = vmatmul.mubr.bf16.gmra.mrb[0].mxu0 %v1503
    %v2398 = vpop.f32.mrb[0].mxu0
    %v2399 = vadd.f32 %v1850, %v2398
    %v2400 = vpop.f32.mrb[0].mxu0
    %v2401 = vpop.f32.mrb[0].mxu0
    %v2402 = vadd.f32 %v1850, %v2401
    %v2403 = vpop.f32.mrb[0].mxu0
    %2404 = vmatprep.mubr.bf16.mxu0 %v1513
    %2405 = vmatmul.mubr.bf16.gmra.mrb[0].mxu0 %v1512
    %v2406 = vpop.f32.mrb[0].mxu0
    %v2407 = vadd.f32 %v1850, %v2406
    %v2408 = vpop.f32.mrb[0].mxu0
    %v2409 = vpop.f32.mrb[0].mxu0
    %v2410 = vadd.f32 %v1850, %v2409
    %v2411 = vpop.f32.mrb[0].mxu0
    %2412 = vmatprep.mubr.bf16.mxu0 %v1522
    %2413 = vmatmul.mubr.bf16.gmra.mrb[0].mxu0 %v1521
    %v2414 = vpop.f32.mrb[0].mxu0
    %v2415 = vadd.f32 %v1850, %v2414
    %v2416 = vpop.f32.mrb[0].mxu0
    %v2417 = vpop.f32.mrb[0].mxu0
    %v2418 = vadd.f32 %v1850, %v2417
    %v2419 = vpop.f32.mrb[0].mxu0
    %2420 = vmatprep.mubr.bf16.mxu0 %v1531
    %2421 = vmatmul.mubr.bf16.gmra.mrb[0].mxu0 %v1530
    %v2422 = vpop.f32.mrb[0].mxu0
    %v2423 = vadd.f32 %v1850, %v2422
    %v2424 = vpop.f32.mrb[0].mxu0
    %v2425 = vpop.f32.mrb[0].mxu0
    %v2426 = vadd.f32 %v1850, %v2425
    %v2427 = vpop.f32.mrb[0].mxu0
    %2428 = vmatprep.mubr.bf16.mxu0 %v1540
    %2429 = vmatmul.mubr.bf16.gmra.mrb[0].mxu0 %v1539
    %v2430 = vpop.f32.mrb[0].mxu0
    %v2431 = vadd.f32 %v1850, %v2430
    %v2432 = vpop.f32.mrb[0].mxu0
    %v2433 = vpop.f32.mrb[0].mxu0
    %v2434 = vadd.f32 %v1850, %v2433
    %v2435 = vpop.f32.mrb[0].mxu0
    %2436 = vmatprep.mubr.bf16.mxu0 %v1549
    %2437 = vmatmul.mubr.bf16.gmra.mrb[0].mxu0 %v1548
    %v2438 = vpop.f32.mrb[0].mxu0
    %v2439 = vadd.f32 %v1850, %v2438
    %v2440 = vpop.f32.mrb[0].mxu0
    %v2441 = vpop.f32.mrb[0].mxu0
    %v2442 = vadd.f32 %v1850, %v2441
    %v2443 = vpop.f32.mrb[0].mxu0
    %2444 = vmatprep.mubr.bf16.mxu0 %v1558
    %2445 = vmatmul.mubr.bf16.gmra.mrb[0].mxu0 %v1557
    %v2446 = vpop.f32.mrb[0].mxu0
    %v2447 = vadd.f32 %v1850, %v2446
    %v2448 = vpop.f32.mrb[0].mxu0
    %v2449 = vpop.f32.mrb[0].mxu0
    %v2450 = vadd.f32 %v1850, %v2449
    %v2451 = vpop.f32.mrb[0].mxu0
    %2452 = vmatprep.mubr.bf16.mxu0 %v1567
    %2453 = vmatmul.mubr.bf16.gmra.mrb[0].mxu0 %v1566
    %v2454 = vpop.f32.mrb[0].mxu0
    %v2455 = vadd.f32 %v1850, %v2454
    %v2456 = vpop.f32.mrb[0].mxu0
    %v2457 = vpop.f32.mrb[0].mxu0
    %v2458 = vadd.f32 %v1850, %v2457
    %v2459 = vpop.f32.mrb[0].mxu0
    %2460 = vmatprep.mubr.bf16.mxu0 %v1576
    %2461 = vmatmul.mubr.bf16.gmra.mrb[0].mxu0 %v1575
    %v2462 = vpop.f32.mrb[0].mxu0
    %v2463 = vadd.f32 %v1850, %v2462
    %v2464 = vpop.f32.mrb[0].mxu0
    %v2465 = vpop.f32.mrb[0].mxu0
    %v2466 = vadd.f32 %v1850, %v2465
    %v2467 = vpop.f32.mrb[0].mxu0
    %2468 = vmatprep.mubr.bf16.mxu0 %v1585
    %2469 = vmatmul.mubr.bf16.gmra.mrb[0].mxu0 %v1584
    %v2470 = vpop.f32.mrb[0].mxu0
    %v2471 = vadd.f32 %v1850, %v2470
    %v2472 = vpop.f32.mrb[0].mxu0
    %v2473 = vpop.f32.mrb[0].mxu0
    %v2474 = vadd.f32 %v1850, %v2473
    %v2475 = vpop.f32.mrb[0].mxu0
    %2476 = vmatprep.mubr.bf16.mxu0 %v1594
    %2477 = vmatmul.mubr.bf16.gmra.mrb[0].mxu0 %v1593
    %v2478 = vpop.f32.mrb[0].mxu0
    %v2479 = vadd.f32 %v1850, %v2478
    %v2480 = vpop.f32.mrb[0].mxu0
    %v2481 = vpop.f32.mrb[0].mxu0
    %v2482 = vadd.f32 %v1850, %v2481
    %v2483 = vpop.f32.mrb[0].mxu0
    %2484 = vmatprep.mubr.bf16.mxu0 %v1603
    %2485 = vmatmul.mubr.bf16.gmra.mrb[0].mxu0 %v1602
    %v2486 = vpop.f32.mrb[0].mxu0
    %v2487 = vadd.f32 %v1850, %v2486
    %v2488 = vpop.f32.mrb[0].mxu0
    %v2489 = vpop.f32.mrb[0].mxu0
    %v2490 = vadd.f32 %v1850, %v2489
    %v2491 = vpop.f32.mrb[0].mxu0
    %2492 = vmatprep.mubr.bf16.mxu0 %v1612
    %2493 = vmatmul.mubr.bf16.gmra.mrb[0].mxu0 %v1611
    %v2494 = vpop.f32.mrb[0].mxu0
    %v2495 = vadd.f32 %v1850, %v2494
    %v2496 = vpop.f32.mrb[0].mxu0
    %v2497 = vpop.f32.mrb[0].mxu0
    %v2498 = vadd.f32 %v1850, %v2497
    %v2499 = vpop.f32.mrb[0].mxu0
    %2500 = vmatprep.mubr.bf16.mxu0 %v1621
    %2501 = vmatmul.mubr.bf16.gmra.mrb[0].mxu0 %v1620
    %v2502 = vpop.f32.mrb[0].mxu0
    %v2503 = vadd.f32 %v1850, %v2502
    %v2504 = vpop.f32.mrb[0].mxu0
    %v2505 = vpop.f32.mrb[0].mxu0
    %v2506 = vadd.f32 %v1850, %v2505
    %v2507 = vpop.f32.mrb[0].mxu0
    %2508 = vmatprep.mubr.bf16.mxu0 %v1630
    %2509 = vmatmul.mubr.bf16.gmra.mrb[0].mxu0 %v1629
    %v2510 = vpop.f32.mrb[0].mxu0
    %v2511 = vadd.f32 %v1850, %v2510
    %v2512 = vpop.f32.mrb[0].mxu0
    %v2513 = vpop.f32.mrb[0].mxu0
    %v2514 = vadd.f32 %v1850, %v2513
    %v2515 = vpop.f32.mrb[0].mxu0
    %2516 = vmatprep.mubr.bf16.mxu0 %v1639
    %2517 = vmatmul.mubr.bf16.gmra.mrb[0].mxu0 %v1638
    %v2518 = vpop.f32.mrb[0].mxu0
    %v2519 = vadd.f32 %v1850, %v2518
    %v2520 = vpop.f32.mrb[0].mxu0
    %v2521 = vpop.f32.mrb[0].mxu0
    %v2522 = vadd.f32 %v1850, %v2521
    %v2523 = vpop.f32.mrb[0].mxu0
    %2524 = vmatprep.mubr.bf16.mxu0 %v1648
    %2525 = vmatmul.mubr.bf16.gmra.mrb[0].mxu0 %v1647
    %v2526 = vpop.f32.mrb[0].mxu0
    %v2527 = vadd.f32 %v1850, %v2526
    %v2528 = vpop.f32.mrb[0].mxu0
    %v2529 = vpop.f32.mrb[0].mxu0
    %v2530 = vadd.f32 %v1850, %v2529
    %v2531 = vpop.f32.mrb[0].mxu0
    %2532 = vmatprep.mubr.bf16.mxu0 %v1657
    %2533 = vmatmul.mubr.bf16.gmra.mrb[0].mxu0 %v1656
    %v2534 = vpop.f32.mrb[0].mxu0
    %v2535 = vadd.f32 %v1850, %v2534
    %v2536 = vpop.f32.mrb[0].mxu0
    %v2537 = vpop.f32.mrb[0].mxu0
    %v2538 = vadd.f32 %v1850, %v2537
    %v2539 = vpop.f32.mrb[0].mxu0
    %2540 = vmatprep.mubr.bf16.mxu0 %v1666
    %2541 = vmatmul.mubr.bf16.gmra.mrb[0].mxu0 %v1665
    %v2542 = vpop.f32.mrb[0].mxu0
    %v2543 = vadd.f32 %v1850, %v2542
    %v2544 = vpop.f32.mrb[0].mxu0
    %v2545 = vpop.f32.mrb[0].mxu0
    %v2546 = vadd.f32 %v1850, %v2545
    %v2547 = vpop.f32.mrb[0].mxu0
    %2548 = vmatprep.mubr.bf16.mxu0 %v1675
    %2549 = vmatmul.mubr.bf16.gmra.mrb[0].mxu0 %v1674
    %v2550 = vpop.f32.mrb[0].mxu0
    %v2551 = vadd.f32 %v1850, %v2550
    %v2552 = vpop.f32.mrb[0].mxu0
    %v2553 = vpop.f32.mrb[0].mxu0
    %v2554 = vadd.f32 %v1850, %v2553
    %v2555 = vpop.f32.mrb[0].mxu0
    %2556 = vmatprep.mubr.bf16.mxu0 %v1684
    %2557 = vmatmul.mubr.bf16.gmra.mrb[0].mxu0 %v1683
    %v2558 = vpop.f32.mrb[0].mxu0
    %v2559 = vadd.f32 %v1850, %v2558
    %v2560 = vpop.f32.mrb[0].mxu0
    %v2561 = vpop.f32.mrb[0].mxu0
    %v2562 = vadd.f32 %v1850, %v2561
    %v2563 = vpop.f32.mrb[0].mxu0
    %2564 = vmatprep.mubr.bf16.mxu0 %v1693
    %2565 = vmatmul.mubr.bf16.gmra.mrb[0].mxu0 %v1692
    %v2566 = vpop.f32.mrb[0].mxu0
    %v2567 = vadd.f32 %v1850, %v2566
    %v2568 = vpop.f32.mrb[0].mxu0
    %v2569 = vpop.f32.mrb[0].mxu0
    %v2570 = vadd.f32 %v1850, %v2569
    %v2571 = vpop.f32.mrb[0].mxu0
    %2572 = vdwg.mxu0
    %2573 = vmatprep.subr.bf16.mxu0 0
    %2574 = vmatpush1.bf16.msra.mxu0 %v2156
    %2575 = vmatprep.subr.bf16.mxu0 0
    %2576 = vmatpush1.bf16.msra.mxu0 %v2157
    %2577 = vmatprep.subr.bf16.mxu0 0
    %2578 = vmatpush1.bf16.msra.mxu0 %v2158
    %2579 = vmatprep.subr.bf16.mxu0 0
    %2580 = vmatpush1.bf16.msra.mxu0 %v2159
    %2581 = vmatprep.subr.bf16.mxu0 0
    %2582 = vmatpush1.bf16.msra.mxu0 %v2160
    %2583 = vmatprep.subr.bf16.mxu0 0
    %2584 = vmatpush1.bf16.msra.mxu0 %v2161
    %2585 = vmatprep.subr.bf16.mxu0 0
    %2586 = vmatpush1.bf16.msra.mxu0 %v2162
    %2587 = vmatprep.subr.bf16.mxu0 0
    %2588 = vmatpush1.bf16.msra.mxu0 %v2163
    %2589 = vmatprep.subr.bf16.mxu0 0
    %2590 = vmatpush1.bf16.msra.mxu0 %v2164
    %2591 = vmatprep.subr.bf16.mxu0 0
    %2592 = vmatpush1.bf16.msra.mxu0 %v2165
    %2593 = vmatprep.subr.bf16.mxu0 0
    %2594 = vmatpush1.bf16.msra.mxu0 %v2166
    %2595 = vmatprep.subr.bf16.mxu0 0
    %2596 = vmatpush1.bf16.msra.mxu0 %v2167
    %2597 = vmatprep.subr.bf16.mxu0 0
    %2598 = vmatpush1.bf16.msra.mxu0 %v2168
    %2599 = vmatprep.subr.bf16.mxu0 0
    %2600 = vmatpush1.bf16.msra.mxu0 %v2169
    %2601 = vmatprep.subr.bf16.mxu0 0
    %2602 = vmatpush1.bf16.msra.mxu0 %v2170
    %2603 = vmatprep.subr.bf16.mxu0 0
    %2604 = vmatpush1.bf16.msra.mxu0 %v2171
    %2605 = vmatprep.mubr.bf16.mxu0 %v1416
    %2606 = vmatmul.mubr.bf16.gmra.mrb[0].mxu0 %v1415
    %v2607 = vpop.f32.mrb[0].mxu0
    %v2608 = vadd.f32 %v2319, %v2607
    %v2609 = vpop.f32.mrb[0].mxu0
    %v2610 = vpop.f32.mrb[0].mxu0
    %v2611 = vadd.f32 %v2322, %v2610
    %v2612 = vpop.f32.mrb[0].mxu0
    %2613 = vmatprep.mubr.bf16.mxu0 %v1425
    %2614 = vmatmul.mubr.bf16.gmra.mrb[0].mxu0 %v1424
    %v2615 = vpop.f32.mrb[0].mxu0
    %v2616 = vadd.f32 %v2327, %v2615
    %v2617 = vpop.f32.mrb[0].mxu0
    %v2618 = vpop.f32.mrb[0].mxu0
    %v2619 = vadd.f32 %v2330, %v2618
    %v2620 = vpop.f32.mrb[0].mxu0
    %2621 = vmatprep.mubr.bf16.mxu0 %v1434
    %2622 = vmatmul.mubr.bf16.gmra.mrb[0].mxu0 %v1433
    %v2623 = vpop.f32.mrb[0].mxu0
    %v2624 = vadd.f32 %v2335, %v2623
    %v2625 = vpop.f32.mrb[0].mxu0
    %v2626 = vpop.f32.mrb[0].mxu0
    %v2627 = vadd.f32 %v2338, %v2626
    %v2628 = vpop.f32.mrb[0].mxu0
    %2629 = vmatprep.mubr.bf16.mxu0 %v1443
    %2630 = vmatmul.mubr.bf16.gmra.mrb[0].mxu0 %v1442
    %v2631 = vpop.f32.mrb[0].mxu0
    %v2632 = vadd.f32 %v2343, %v2631
    %v2633 = vpop.f32.mrb[0].mxu0
    %v2634 = vpop.f32.mrb[0].mxu0
    %v2635 = vadd.f32 %v2346, %v2634
    %v2636 = vpop.f32.mrb[0].mxu0
    %2637 = vmatprep.mubr.bf16.mxu0 %v1452
    %2638 = vmatmul.mubr.bf16.gmra.mrb[0].mxu0 %v1451
    %v2639 = vpop.f32.mrb[0].mxu0
    %v2640 = vadd.f32 %v2351, %v2639
    %v2641 = vpop.f32.mrb[0].mxu0
    %v2642 = vpop.f32.mrb[0].mxu0
    %v2643 = vadd.f32 %v2354, %v2642
    %v2644 = vpop.f32.mrb[0].mxu0
    %2645 = vmatprep.mubr.bf16.mxu0 %v1461
    %2646 = vmatmul.mubr.bf16.gmra.mrb[0].mxu0 %v1460
    %v2647 = vpop.f32.mrb[0].mxu0
    %v2648 = vadd.f32 %v2359, %v2647
    %v2649 = vpop.f32.mrb[0].mxu0
    %v2650 = vpop.f32.mrb[0].mxu0
    %v2651 = vadd.f32 %v2362, %v2650
    %v2652 = vpop.f32.mrb[0].mxu0
    %2653 = vmatprep.mubr.bf16.mxu0 %v1470
    %2654 = vmatmul.mubr.bf16.gmra.mrb[0].mxu0 %v1469
    %v2655 = vpop.f32.mrb[0].mxu0
    %v2656 = vadd.f32 %v2367, %v2655
    %v2657 = vpop.f32.mrb[0].mxu0
    %v2658 = vpop.f32.mrb[0].mxu0
    %v2659 = vadd.f32 %v2370, %v2658
    %v2660 = vpop.f32.mrb[0].mxu0
    %2661 = vmatprep.mubr.bf16.mxu0 %v1479
    %2662 = vmatmul.mubr.bf16.gmra.mrb[0].mxu0 %v1478
    %v2663 = vpop.f32.mrb[0].mxu0
    %v2664 = vadd.f32 %v2375, %v2663
    %v2665 = vpop.f32.mrb[0].mxu0
    %v2666 = vpop.f32.mrb[0].mxu0
    %v2667 = vadd.f32 %v2378, %v2666
    %v2668 = vpop.f32.mrb[0].mxu0
    %2669 = vmatprep.mubr.bf16.mxu0 %v1488
    %2670 = vmatmul.mubr.bf16.gmra.mrb[0].mxu0 %v1487
    %v2671 = vpop.f32.mrb[0].mxu0
    %v2672 = vadd.f32 %v2383, %v2671
    %v2673 = vpop.f32.mrb[0].mxu0
    %v2674 = vpop.f32.mrb[0].mxu0
    %v2675 = vadd.f32 %v2386, %v2674
    %v2676 = vpop.f32.mrb[0].mxu0
    %2677 = vmatprep.mubr.bf16.mxu0 %v1497
    %2678 = vmatmul.mubr.bf16.gmra.mrb[0].mxu0 %v1496
    %v2679 = vpop.f32.mrb[0].mxu0
    %v2680 = vadd.f32 %v2391, %v2679
    %v2681 = vpop.f32.mrb[0].mxu0
    %v2682 = vpop.f32.mrb[0].mxu0
    %v2683 = vadd.f32 %v2394, %v2682
    %v2684 = vpop.f32.mrb[0].mxu0
    %2685 = vmatprep.mubr.bf16.mxu0 %v1506
    %2686 = vmatmul.mubr.bf16.gmra.mrb[0].mxu0 %v1505
    %v2687 = vpop.f32.mrb[0].mxu0
    %v2688 = vadd.f32 %v2399, %v2687
    %v2689 = vpop.f32.mrb[0].mxu0
    %v2690 = vpop.f32.mrb[0].mxu0
    %v2691 = vadd.f32 %v2402, %v2690
    %v2692 = vpop.f32.mrb[0].mxu0
    %2693 = vmatprep.mubr.bf16.mxu0 %v1515
    %2694 = vmatmul.mubr.bf16.gmra.mrb[0].mxu0 %v1514
    %v2695 = vpop.f32.mrb[0].mxu0
    %v2696 = vadd.f32 %v2407, %v2695
    %v2697 = vpop.f32.mrb[0].mxu0
    %v2698 = vpop.f32.mrb[0].mxu0
    %v2699 = vadd.f32 %v2410, %v2698
    %v2700 = vpop.f32.mrb[0].mxu0
    %2701 = vmatprep.mubr.bf16.mxu0 %v1524
    %2702 = vmatmul.mubr.bf16.gmra.mrb[0].mxu0 %v1523
    %v2703 = vpop.f32.mrb[0].mxu0
    %v2704 = vadd.f32 %v2415, %v2703
    %v2705 = vpop.f32.mrb[0].mxu0
    %v2706 = vpop.f32.mrb[0].mxu0
    %v2707 = vadd.f32 %v2418, %v2706
    %v2708 = vpop.f32.mrb[0].mxu0
    %2709 = vmatprep.mubr.bf16.mxu0 %v1533
    %2710 = vmatmul.mubr.bf16.gmra.mrb[0].mxu0 %v1532
    %v2711 = vpop.f32.mrb[0].mxu0
    %v2712 = vadd.f32 %v2423, %v2711
    %v2713 = vpop.f32.mrb[0].mxu0
    %v2714 = vpop.f32.mrb[0].mxu0
    %v2715 = vadd.f32 %v2426, %v2714
    %v2716 = vpop.f32.mrb[0].mxu0
    %2717 = vmatprep.mubr.bf16.mxu0 %v1542
    %2718 = vmatmul.mubr.bf16.gmra.mrb[0].mxu0 %v1541
    %v2719 = vpop.f32.mrb[0].mxu0
    %v2720 = vadd.f32 %v2431, %v2719
    %v2721 = vpop.f32.mrb[0].mxu0
    %v2722 = vpop.f32.mrb[0].mxu0
    %v2723 = vadd.f32 %v2434, %v2722
    %v2724 = vpop.f32.mrb[0].mxu0
    %2725 = vmatprep.mubr.bf16.mxu0 %v1551
    %2726 = vmatmul.mubr.bf16.gmra.mrb[0].mxu0 %v1550
    %v2727 = vpop.f32.mrb[0].mxu0
    %v2728 = vadd.f32 %v2439, %v2727
    %v2729 = vpop.f32.mrb[0].mxu0
    %v2730 = vpop.f32.mrb[0].mxu0
    %v2731 = vadd.f32 %v2442, %v2730
    %v2732 = vpop.f32.mrb[0].mxu0
    %2733 = vmatprep.mubr.bf16.mxu0 %v1560
    %2734 = vmatmul.mubr.bf16.gmra.mrb[0].mxu0 %v1559
    %v2735 = vpop.f32.mrb[0].mxu0
    %v2736 = vadd.f32 %v2447, %v2735
    %v2737 = vpop.f32.mrb[0].mxu0
    %v2738 = vpop.f32.mrb[0].mxu0
    %v2739 = vadd.f32 %v2450, %v2738
    %v2740 = vpop.f32.mrb[0].mxu0
    %2741 = vmatprep.mubr.bf16.mxu0 %v1569
    %2742 = vmatmul.mubr.bf16.gmra.mrb[0].mxu0 %v1568
    %v2743 = vpop.f32.mrb[0].mxu0
    %v2744 = vadd.f32 %v2455, %v2743
    %v2745 = vpop.f32.mrb[0].mxu0
    %v2746 = vpop.f32.mrb[0].mxu0
    %v2747 = vadd.f32 %v2458, %v2746
    %v2748 = vpop.f32.mrb[0].mxu0
    %2749 = vmatprep.mubr.bf16.mxu0 %v1578
    %2750 = vmatmul.mubr.bf16.gmra.mrb[0].mxu0 %v1577
    %v2751 = vpop.f32.mrb[0].mxu0
    %v2752 = vadd.f32 %v2463, %v2751
    %v2753 = vpop.f32.mrb[0].mxu0
    %v2754 = vpop.f32.mrb[0].mxu0
    %v2755 = vadd.f32 %v2466, %v2754
    %v2756 = vpop.f32.mrb[0].mxu0
    %2757 = vmatprep.mubr.bf16.mxu0 %v1587
    %2758 = vmatmul.mubr.bf16.gmra.mrb[0].mxu0 %v1586
    %v2759 = vpop.f32.mrb[0].mxu0
    %v2760 = vadd.f32 %v2471, %v2759
    %v2761 = vpop.f32.mrb[0].mxu0
    %v2762 = vpop.f32.mrb[0].mxu0
    %v2763 = vadd.f32 %v2474, %v2762
    %v2764 = vpop.f32.mrb[0].mxu0
    %2765 = vmatprep.mubr.bf16.mxu0 %v1596
    %2766 = vmatmul.mubr.bf16.gmra.mrb[0].mxu0 %v1595
    %v2767 = vpop.f32.mrb[0].mxu0
    %v2768 = vadd.f32 %v2479, %v2767
    %v2769 = vpop.f32.mrb[0].mxu0
    %v2770 = vpop.f32.mrb[0].mxu0
    %v2771 = vadd.f32 %v2482, %v2770
    %v2772 = vpop.f32.mrb[0].mxu0
    %2773 = vmatprep.mubr.bf16.mxu0 %v1605
    %2774 = vmatmul.mubr.bf16.gmra.mrb[0].mxu0 %v1604
    %v2775 = vpop.f32.mrb[0].mxu0
    %v2776 = vadd.f32 %v2487, %v2775
    %v2777 = vpop.f32.mrb[0].mxu0
    %v2778 = vpop.f32.mrb[0].mxu0
    %v2779 = vadd.f32 %v2490, %v2778
    %v2780 = vpop.f32.mrb[0].mxu0
    %2781 = vmatprep.mubr.bf16.mxu0 %v1614
    %2782 = vmatmul.mubr.bf16.gmra.mrb[0].mxu0 %v1613
    %v2783 = vpop.f32.mrb[0].mxu0
    %v2784 = vadd.f32 %v2495, %v2783
    %v2785 = vpop.f32.mrb[0].mxu0
    %v2786 = vpop.f32.mrb[0].mxu0
    %v2787 = vadd.f32 %v2498, %v2786
    %v2788 = vpop.f32.mrb[0].mxu0
    %2789 = vmatprep.mubr.bf16.mxu0 %v1623
    %2790 = vmatmul.mubr.bf16.gmra.mrb[0].mxu0 %v1622
    %v2791 = vpop.f32.mrb[0].mxu0
    %v2792 = vadd.f32 %v2503, %v2791
    %v2793 = vpop.f32.mrb[0].mxu0
    %v2794 = vpop.f32.mrb[0].mxu0
    %v2795 = vadd.f32 %v2506, %v2794
    %v2796 = vpop.f32.mrb[0].mxu0
    %2797 = vmatprep.mubr.bf16.mxu0 %v1632
    %2798 = vmatmul.mubr.bf16.gmra.mrb[0].mxu0 %v1631
    %v2799 = vpop.f32.mrb[0].mxu0
    %v2800 = vadd.f32 %v2511, %v2799
    %v2801 = vpop.f32.mrb[0].mxu0
    %v2802 = vpop.f32.mrb[0].mxu0
    %v2803 = vadd.f32 %v2514, %v2802
    %v2804 = vpop.f32.mrb[0].mxu0
    %2805 = vmatprep.mubr.bf16.mxu0 %v1641
    %2806 = vmatmul.mubr.bf16.gmra.mrb[0].mxu0 %v1640
    %v2807 = vpop.f32.mrb[0].mxu0
    %v2808 = vadd.f32 %v2519, %v2807
    %v2809 = vpop.f32.mrb[0].mxu0
    %v2810 = vpop.f32.mrb[0].mxu0
    %v2811 = vadd.f32 %v2522, %v2810
    %v2812 = vpop.f32.mrb[0].mxu0
    %2813 = vmatprep.mubr.bf16.mxu0 %v1650
    %2814 = vmatmul.mubr.bf16.gmra.mrb[0].mxu0 %v1649
    %v2815 = vpop.f32.mrb[0].mxu0
    %v2816 = vadd.f32 %v2527, %v2815
    %v2817 = vpop.f32.mrb[0].mxu0
    %v2818 = vpop.f32.mrb[0].mxu0
    %v2819 = vadd.f32 %v2530, %v2818
    %v2820 = vpop.f32.mrb[0].mxu0
    %2821 = vmatprep.mubr.bf16.mxu0 %v1659
    %2822 = vmatmul.mubr.bf16.gmra.mrb[0].mxu0 %v1658
    %v2823 = vpop.f32.mrb[0].mxu0
    %v2824 = vadd.f32 %v2535, %v2823
    %v2825 = vpop.f32.mrb[0].mxu0
    %v2826 = vpop.f32.mrb[0].mxu0
    %v2827 = vadd.f32 %v2538, %v2826
    %v2828 = vpop.f32.mrb[0].mxu0
    %2829 = vmatprep.mubr.bf16.mxu0 %v1668
    %2830 = vmatmul.mubr.bf16.gmra.mrb[0].mxu0 %v1667
    %v2831 = vpop.f32.mrb[0].mxu0
    %v2832 = vadd.f32 %v2543, %v2831
    %v2833 = vpop.f32.mrb[0].mxu0
    %v2834 = vpop.f32.mrb[0].mxu0
    %v2835 = vadd.f32 %v2546, %v2834
    %v2836 = vpop.f32.mrb[0].mxu0
    %2837 = vmatprep.mubr.bf16.mxu0 %v1677
    %2838 = vmatmul.mubr.bf16.gmra.mrb[0].mxu0 %v1676
    %v2839 = vpop.f32.mrb[0].mxu0
    %v2840 = vadd.f32 %v2551, %v2839
    %v2841 = vpop.f32.mrb[0].mxu0
    %v2842 = vpop.f32.mrb[0].mxu0
    %v2843 = vadd.f32 %v2554, %v2842
    %v2844 = vpop.f32.mrb[0].mxu0
    %2845 = vmatprep.mubr.bf16.mxu0 %v1686
    %2846 = vmatmul.mubr.bf16.gmra.mrb[0].mxu0 %v1685
    %v2847 = vpop.f32.mrb[0].mxu0
    %v2848 = vadd.f32 %v2559, %v2847
    %v2849 = vpop.f32.mrb[0].mxu0
    %v2850 = vpop.f32.mrb[0].mxu0
    %v2851 = vadd.f32 %v2562, %v2850
    %v2852 = vpop.f32.mrb[0].mxu0
    %2853 = vmatprep.mubr.bf16.mxu0 %v1695
    %2854 = vmatmul.mubr.bf16.gmra.mrb[0].mxu0 %v1694
    %v2855 = vpop.f32.mrb[0].mxu0
    %v2856 = vadd.f32 %v2567, %v2855
    %v2857 = vpop.f32.mrb[0].mxu0
    %v2858 = vpop.f32.mrb[0].mxu0
    %v2859 = vadd.f32 %v2570, %v2858
    %v2860 = vpop.f32.mrb[0].mxu0
    %2861 = vdwg.mxu0
    %2862 = vmatprep.subr.bf16.mxu0 0
    %2863 = vmatpush1.bf16.msra.mxu0 %v2172
    %2864 = vmatprep.subr.bf16.mxu0 0
    %2865 = vmatpush1.bf16.msra.mxu0 %v2173
    %2866 = vmatprep.subr.bf16.mxu0 0
    %2867 = vmatpush1.bf16.msra.mxu0 %v2174
    %2868 = vmatprep.subr.bf16.mxu0 0
    %2869 = vmatpush1.bf16.msra.mxu0 %v2175
    %2870 = vmatprep.subr.bf16.mxu0 0
    %2871 = vmatpush1.bf16.msra.mxu0 %v2176
    %2872 = vmatprep.subr.bf16.mxu0 0
    %2873 = vmatpush1.bf16.msra.mxu0 %v2177
    %2874 = vmatprep.subr.bf16.mxu0 0
    %2875 = vmatpush1.bf16.msra.mxu0 %v2178
    %2876 = vmatprep.subr.bf16.mxu0 0
    %2877 = vmatpush1.bf16.msra.mxu0 %v2179
    %2878 = vmatprep.subr.bf16.mxu0 0
    %2879 = vmatpush1.bf16.msra.mxu0 %v2180
    %2880 = vmatprep.subr.bf16.mxu0 0
    %2881 = vmatpush1.bf16.msra.mxu0 %v2181
    %2882 = vmatprep.subr.bf16.mxu0 0
    %2883 = vmatpush1.bf16.msra.mxu0 %v2182
    %2884 = vmatprep.subr.bf16.mxu0 0
    %2885 = vmatpush1.bf16.msra.mxu0 %v2183
    %2886 = vmatprep.subr.bf16.mxu0 0
    %2887 = vmatpush1.bf16.msra.mxu0 %v2184
    %2888 = vmatprep.subr.bf16.mxu0 0
    %2889 = vmatpush1.bf16.msra.mxu0 %v2185
    %2890 = vmatprep.subr.bf16.mxu0 0
    %2891 = vmatpush1.bf16.msra.mxu0 %v2186
    %2892 = vmatprep.subr.bf16.mxu0 0
    %2893 = vmatpush1.bf16.msra.mxu0 %v2187
    %2894 = vmatprep.mubr.bf16.mxu0 %v1418
    %2895 = vmatmul.mubr.bf16.gmra.mrb[0].mxu0 %v1417
    %v2896 = vpop.f32.mrb[0].mxu0
    %v2897 = vadd.f32 %v2608, %v2896
    %v2898 = vpop.f32.mrb[0].mxu0
    %v2899 = vpop.f32.mrb[0].mxu0
    %v2900 = vadd.f32 %v2611, %v2899
    %v2901 = vpop.f32.mrb[0].mxu0
    %2902 = vmatprep.mubr.bf16.mxu0 %v1427
    %2903 = vmatmul.mubr.bf16.gmra.mrb[0].mxu0 %v1426
    %v2904 = vpop.f32.mrb[0].mxu0
    %v2905 = vadd.f32 %v2616, %v2904
    %v2906 = vpop.f32.mrb[0].mxu0
    %v2907 = vpop.f32.mrb[0].mxu0
    %v2908 = vadd.f32 %v2619, %v2907
    %v2909 = vpop.f32.mrb[0].mxu0
    %2910 = vmatprep.mubr.bf16.mxu0 %v1436
    %2911 = vmatmul.mubr.bf16.gmra.mrb[0].mxu0 %v1435
    %v2912 = vpop.f32.mrb[0].mxu0
    %v2913 = vadd.f32 %v2624, %v2912
    %v2914 = vpop.f32.mrb[0].mxu0
    %v2915 = vpop.f32.mrb[0].mxu0
    %v2916 = vadd.f32 %v2627, %v2915
    %v2917 = vpop.f32.mrb[0].mxu0
    %2918 = vmatprep.mubr.bf16.mxu0 %v1445
    %2919 = vmatmul.mubr.bf16.gmra.mrb[0].mxu0 %v1444
    %v2920 = vpop.f32.mrb[0].mxu0
    %v2921 = vadd.f32 %v2632, %v2920
    %v2922 = vpop.f32.mrb[0].mxu0
    %v2923 = vpop.f32.mrb[0].mxu0
    %v2924 = vadd.f32 %v2635, %v2923
    %v2925 = vpop.f32.mrb[0].mxu0
    %2926 = vmatprep.mubr.bf16.mxu0 %v1454
    %2927 = vmatmul.mubr.bf16.gmra.mrb[0].mxu0 %v1453
    %v2928 = vpop.f32.mrb[0].mxu0
    %v2929 = vadd.f32 %v2640, %v2928
    %v2930 = vpop.f32.mrb[0].mxu0
    %v2931 = vpop.f32.mrb[0].mxu0
    %v2932 = vadd.f32 %v2643, %v2931
    %v2933 = vpop.f32.mrb[0].mxu0
    %2934 = vmatprep.mubr.bf16.mxu0 %v1463
    %2935 = vmatmul.mubr.bf16.gmra.mrb[0].mxu0 %v1462
    %v2936 = vpop.f32.mrb[0].mxu0
    %v2937 = vadd.f32 %v2648, %v2936
    %v2938 = vpop.f32.mrb[0].mxu0
    %v2939 = vpop.f32.mrb[0].mxu0
    %v2940 = vadd.f32 %v2651, %v2939
    %v2941 = vpop.f32.mrb[0].mxu0
    %2942 = vmatprep.mubr.bf16.mxu0 %v1472
    %2943 = vmatmul.mubr.bf16.gmra.mrb[0].mxu0 %v1471
    %v2944 = vpop.f32.mrb[0].mxu0
    %v2945 = vadd.f32 %v2656, %v2944
    %v2946 = vpop.f32.mrb[0].mxu0
    %v2947 = vpop.f32.mrb[0].mxu0
    %v2948 = vadd.f32 %v2659, %v2947
    %v2949 = vpop.f32.mrb[0].mxu0
    %2950 = vmatprep.mubr.bf16.mxu0 %v1481
    %2951 = vmatmul.mubr.bf16.gmra.mrb[0].mxu0 %v1480
    %v2952 = vpop.f32.mrb[0].mxu0
    %v2953 = vadd.f32 %v2664, %v2952
    %v2954 = vpop.f32.mrb[0].mxu0
    %v2955 = vpop.f32.mrb[0].mxu0
    %v2956 = vadd.f32 %v2667, %v2955
    %v2957 = vpop.f32.mrb[0].mxu0
    %2958 = vmatprep.mubr.bf16.mxu0 %v1490
    %2959 = vmatmul.mubr.bf16.gmra.mrb[0].mxu0 %v1489
    %v2960 = vpop.f32.mrb[0].mxu0
    %v2961 = vadd.f32 %v2672, %v2960
    %v2962 = vpop.f32.mrb[0].mxu0
    %v2963 = vpop.f32.mrb[0].mxu0
    %v2964 = vadd.f32 %v2675, %v2963
    %v2965 = vpop.f32.mrb[0].mxu0
    %2966 = vmatprep.mubr.bf16.mxu0 %v1499
    %2967 = vmatmul.mubr.bf16.gmra.mrb[0].mxu0 %v1498
    %v2968 = vpop.f32.mrb[0].mxu0
    %v2969 = vadd.f32 %v2680, %v2968
    %v2970 = vpop.f32.mrb[0].mxu0
    %v2971 = vpop.f32.mrb[0].mxu0
    %v2972 = vadd.f32 %v2683, %v2971
    %v2973 = vpop.f32.mrb[0].mxu0
    %2974 = vmatprep.mubr.bf16.mxu0 %v1508
    %2975 = vmatmul.mubr.bf16.gmra.mrb[0].mxu0 %v1507
    %v2976 = vpop.f32.mrb[0].mxu0
    %v2977 = vadd.f32 %v2688, %v2976
    %v2978 = vpop.f32.mrb[0].mxu0
    %v2979 = vpop.f32.mrb[0].mxu0
    %v2980 = vadd.f32 %v2691, %v2979
    %v2981 = vpop.f32.mrb[0].mxu0
    %2982 = vmatprep.mubr.bf16.mxu0 %v1517
    %2983 = vmatmul.mubr.bf16.gmra.mrb[0].mxu0 %v1516
    %v2984 = vpop.f32.mrb[0].mxu0
    %v2985 = vadd.f32 %v2696, %v2984
    %v2986 = vpop.f32.mrb[0].mxu0
    %v2987 = vpop.f32.mrb[0].mxu0
    %v2988 = vadd.f32 %v2699, %v2987
    %v2989 = vpop.f32.mrb[0].mxu0
    %2990 = vmatprep.mubr.bf16.mxu0 %v1526
    %2991 = vmatmul.mubr.bf16.gmra.mrb[0].mxu0 %v1525
    %v2992 = vpop.f32.mrb[0].mxu0
    %v2993 = vadd.f32 %v2704, %v2992
    %v2994 = vpop.f32.mrb[0].mxu0
    %v2995 = vpop.f32.mrb[0].mxu0
    %v2996 = vadd.f32 %v2707, %v2995
    %v2997 = vpop.f32.mrb[0].mxu0
    %2998 = vmatprep.mubr.bf16.mxu0 %v1535
    %2999 = vmatmul.mubr.bf16.gmra.mrb[0].mxu0 %v1534
    %v3000 = vpop.f32.mrb[0].mxu0
    %v3001 = vadd.f32 %v2712, %v3000
    %v3002 = vpop.f32.mrb[0].mxu0
    %v3003 = vpop.f32.mrb[0].mxu0
    %v3004 = vadd.f32 %v2715, %v3003
    %v3005 = vpop.f32.mrb[0].mxu0
    %3006 = vmatprep.mubr.bf16.mxu0 %v1544
    %3007 = vmatmul.mubr.bf16.gmra.mrb[0].mxu0 %v1543
    %v3008 = vpop.f32.mrb[0].mxu0
    %v3009 = vadd.f32 %v2720, %v3008
    %v3010 = vpop.f32.mrb[0].mxu0
    %v3011 = vpop.f32.mrb[0].mxu0
    %v3012 = vadd.f32 %v2723, %v3011
    %v3013 = vpop.f32.mrb[0].mxu0
    %3014 = vmatprep.mubr.bf16.mxu0 %v1553
    %3015 = vmatmul.mubr.bf16.gmra.mrb[0].mxu0 %v1552
    %v3016 = vpop.f32.mrb[0].mxu0
    %v3017 = vadd.f32 %v2728, %v3016
    %v3018 = vpop.f32.mrb[0].mxu0
    %v3019 = vpop.f32.mrb[0].mxu0
    %v3020 = vadd.f32 %v2731, %v3019
    %v3021 = vpop.f32.mrb[0].mxu0
    %3022 = vmatprep.mubr.bf16.mxu0 %v1562
    %3023 = vmatmul.mubr.bf16.gmra.mrb[0].mxu0 %v1561
    %v3024 = vpop.f32.mrb[0].mxu0
    %v3025 = vadd.f32 %v2736, %v3024
    %v3026 = vpop.f32.mrb[0].mxu0
    %v3027 = vpop.f32.mrb[0].mxu0
    %v3028 = vadd.f32 %v2739, %v3027
    %v3029 = vpop.f32.mrb[0].mxu0
    %3030 = vmatprep.mubr.bf16.mxu0 %v1571
    %3031 = vmatmul.mubr.bf16.gmra.mrb[0].mxu0 %v1570
    %v3032 = vpop.f32.mrb[0].mxu0
    %v3033 = vadd.f32 %v2744, %v3032
    %v3034 = vpop.f32.mrb[0].mxu0
    %v3035 = vpop.f32.mrb[0].mxu0
    %v3036 = vadd.f32 %v2747, %v3035
    %v3037 = vpop.f32.mrb[0].mxu0
    %3038 = vmatprep.mubr.bf16.mxu0 %v1580
    %3039 = vmatmul.mubr.bf16.gmra.mrb[0].mxu0 %v1579
    %v3040 = vpop.f32.mrb[0].mxu0
    %v3041 = vadd.f32 %v2752, %v3040
    %v3042 = vpop.f32.mrb[0].mxu0
    %v3043 = vpop.f32.mrb[0].mxu0
    %v3044 = vadd.f32 %v2755, %v3043
    %v3045 = vpop.f32.mrb[0].mxu0
    %3046 = vmatprep.mubr.bf16.mxu0 %v1589
    %3047 = vmatmul.mubr.bf16.gmra.mrb[0].mxu0 %v1588
    %v3048 = vpop.f32.mrb[0].mxu0
    %v3049 = vadd.f32 %v2760, %v3048
    %v3050 = vpop.f32.mrb[0].mxu0
    %v3051 = vpop.f32.mrb[0].mxu0
    %v3052 = vadd.f32 %v2763, %v3051
    %v3053 = vpop.f32.mrb[0].mxu0
    %3054 = vmatprep.mubr.bf16.mxu0 %v1598
    %3055 = vmatmul.mubr.bf16.gmra.mrb[0].mxu0 %v1597
    %v3056 = vpop.f32.mrb[0].mxu0
    %v3057 = vadd.f32 %v2768, %v3056
    %v3058 = vpop.f32.mrb[0].mxu0
    %v3059 = vpop.f32.mrb[0].mxu0
    %v3060 = vadd.f32 %v2771, %v3059
    %v3061 = vpop.f32.mrb[0].mxu0
    %3062 = vmatprep.mubr.bf16.mxu0 %v1607
    %3063 = vmatmul.mubr.bf16.gmra.mrb[0].mxu0 %v1606
    %v3064 = vpop.f32.mrb[0].mxu0
    %v3065 = vadd.f32 %v2776, %v3064
    %v3066 = vpop.f32.mrb[0].mxu0
    %v3067 = vpop.f32.mrb[0].mxu0
    %v3068 = vadd.f32 %v2779, %v3067
    %v3069 = vpop.f32.mrb[0].mxu0
    %3070 = vmatprep.mubr.bf16.mxu0 %v1616
    %3071 = vmatmul.mubr.bf16.gmra.mrb[0].mxu0 %v1615
    %v3072 = vpop.f32.mrb[0].mxu0
    %v3073 = vadd.f32 %v2784, %v3072
    %v3074 = vpop.f32.mrb[0].mxu0
    %v3075 = vpop.f32.mrb[0].mxu0
    %v3076 = vadd.f32 %v2787, %v3075
    %v3077 = vpop.f32.mrb[0].mxu0
    %3078 = vmatprep.mubr.bf16.mxu0 %v1625
    %3079 = vmatmul.mubr.bf16.gmra.mrb[0].mxu0 %v1624
    %v3080 = vpop.f32.mrb[0].mxu0
    %v3081 = vadd.f32 %v2792, %v3080
    %v3082 = vpop.f32.mrb[0].mxu0
    %v3083 = vpop.f32.mrb[0].mxu0
    %v3084 = vadd.f32 %v2795, %v3083
    %v3085 = vpop.f32.mrb[0].mxu0
    %3086 = vmatprep.mubr.bf16.mxu0 %v1634
    %3087 = vmatmul.mubr.bf16.gmra.mrb[0].mxu0 %v1633
    %v3088 = vpop.f32.mrb[0].mxu0
    %v3089 = vadd.f32 %v2800, %v3088
    %v3090 = vpop.f32.mrb[0].mxu0
    %v3091 = vpop.f32.mrb[0].mxu0
    %v3092 = vadd.f32 %v2803, %v3091
    %v3093 = vpop.f32.mrb[0].mxu0
    %3094 = vmatprep.mubr.bf16.mxu0 %v1643
    %3095 = vmatmul.mubr.bf16.gmra.mrb[0].mxu0 %v1642
    %v3096 = vpop.f32.mrb[0].mxu0
    %v3097 = vadd.f32 %v2808, %v3096
    %v3098 = vpop.f32.mrb[0].mxu0
    %v3099 = vpop.f32.mrb[0].mxu0
    %v3100 = vadd.f32 %v2811, %v3099
    %v3101 = vpop.f32.mrb[0].mxu0
    %3102 = vmatprep.mubr.bf16.mxu0 %v1652
    %3103 = vmatmul.mubr.bf16.gmra.mrb[0].mxu0 %v1651
    %v3104 = vpop.f32.mrb[0].mxu0
    %v3105 = vadd.f32 %v2816, %v3104
    %v3106 = vpop.f32.mrb[0].mxu0
    %v3107 = vpop.f32.mrb[0].mxu0
    %v3108 = vadd.f32 %v2819, %v3107
    %v3109 = vpop.f32.mrb[0].mxu0
    %3110 = vmatprep.mubr.bf16.mxu0 %v1661
    %3111 = vmatmul.mubr.bf16.gmra.mrb[0].mxu0 %v1660
    %v3112 = vpop.f32.mrb[0].mxu0
    %v3113 = vadd.f32 %v2824, %v3112
    %v3114 = vpop.f32.mrb[0].mxu0
    %v3115 = vpop.f32.mrb[0].mxu0
    %v3116 = vadd.f32 %v2827, %v3115
    %v3117 = vpop.f32.mrb[0].mxu0
    %3118 = vmatprep.mubr.bf16.mxu0 %v1670
    %3119 = vmatmul.mubr.bf16.gmra.mrb[0].mxu0 %v1669
    %v3120 = vpop.f32.mrb[0].mxu0
    %v3121 = vadd.f32 %v2832, %v3120
    %v3122 = vpop.f32.mrb[0].mxu0
    %v3123 = vpop.f32.mrb[0].mxu0
    %v3124 = vadd.f32 %v2835, %v3123
    %v3125 = vpop.f32.mrb[0].mxu0
    %3126 = vmatprep.mubr.bf16.mxu0 %v1679
    %3127 = vmatmul.mubr.bf16.gmra.mrb[0].mxu0 %v1678
    %v3128 = vpop.f32.mrb[0].mxu0
    %v3129 = vadd.f32 %v2840, %v3128
    %v3130 = vpop.f32.mrb[0].mxu0
    %v3131 = vpop.f32.mrb[0].mxu0
    %v3132 = vadd.f32 %v2843, %v3131
    %v3133 = vpop.f32.mrb[0].mxu0
    %3134 = vmatprep.mubr.bf16.mxu0 %v1688
    %3135 = vmatmul.mubr.bf16.gmra.mrb[0].mxu0 %v1687
    %v3136 = vpop.f32.mrb[0].mxu0
    %v3137 = vadd.f32 %v2848, %v3136
    %v3138 = vpop.f32.mrb[0].mxu0
    %v3139 = vpop.f32.mrb[0].mxu0
    %v3140 = vadd.f32 %v2851, %v3139
    %v3141 = vpop.f32.mrb[0].mxu0
    %3142 = vmatprep.mubr.bf16.mxu0 %v1697
    %3143 = vmatmul.mubr.bf16.gmra.mrb[0].mxu0 %v1696
    %v3144 = vpop.f32.mrb[0].mxu0
    %v3145 = vadd.f32 %v2856, %v3144
    %v3146 = vpop.f32.mrb[0].mxu0
    %v3147 = vpop.f32.mrb[0].mxu0
    %v3148 = vadd.f32 %v2859, %v3147
    %v3149 = vpop.f32.mrb[0].mxu0
    %3150 = vdwg.mxu0
    %3151 = vmatprep.subr.bf16.mxu0 0
    %3152 = vmatpush1.bf16.msra.mxu0 %v2188
    %3153 = vmatprep.subr.bf16.mxu0 0
    %3154 = vmatpush1.bf16.msra.mxu0 %v2189
    %3155 = vmatprep.subr.bf16.mxu0 0
    %3156 = vmatpush1.bf16.msra.mxu0 %v2190
    %3157 = vmatprep.subr.bf16.mxu0 0
    %3158 = vmatpush1.bf16.msra.mxu0 %v2191
    %3159 = vmatprep.subr.bf16.mxu0 0
    %3160 = vmatpush1.bf16.msra.mxu0 %v2192
    %3161 = vmatprep.subr.bf16.mxu0 0
    %3162 = vmatpush1.bf16.msra.mxu0 %v2193
    %3163 = vmatprep.subr.bf16.mxu0 0
    %3164 = vmatpush1.bf16.msra.mxu0 %v2194
    %3165 = vmatprep.subr.bf16.mxu0 0
    %3166 = vmatpush1.bf16.msra.mxu0 %v2195
    %3167 = vmatprep.subr.bf16.mxu0 0
    %3168 = vmatpush1.bf16.msra.mxu0 %v2196
    %3169 = vmatprep.subr.bf16.mxu0 0
    %3170 = vmatpush1.bf16.msra.mxu0 %v2197
    %3171 = vmatprep.subr.bf16.mxu0 0
    %3172 = vmatpush1.bf16.msra.mxu0 %v2198
    %3173 = vmatprep.subr.bf16.mxu0 0
    %3174 = vmatpush1.bf16.msra.mxu0 %v2199
    %3175 = vmatprep.subr.bf16.mxu0 0
    %3176 = vmatpush1.bf16.msra.mxu0 %v2200
    %3177 = vmatprep.subr.bf16.mxu0 0
    %3178 = vmatpush1.bf16.msra.mxu0 %v2201
    %3179 = vmatprep.subr.bf16.mxu0 0
    %3180 = vmatpush1.bf16.msra.mxu0 %v2202
    %3181 = vmatprep.subr.bf16.mxu0 0
    %3182 = vmatpush1.bf16.msra.mxu0 %v2203
    %3183 = vmatprep.mubr.bf16.mxu0 %v1420
    %3184 = vmatmul.mubr.bf16.gmra.mrb[0].mxu0 %v1419
    %v3185 = vpop.f32.mrb[0].mxu0
    %v3186 = vadd.f32 %v2897, %v3185
    %v3187 = vpop.f32.mrb[0].mxu0
    %v3188 = vpop.f32.mrb[0].mxu0
    %v3189 = vadd.f32 %v2900, %v3188
    %v3190 = vpop.f32.mrb[0].mxu0
    %3191 = vmatprep.mubr.bf16.mxu0 %v1429
    %3192 = vmatmul.mubr.bf16.gmra.mrb[0].mxu0 %v1428
    %v3193 = vpop.f32.mrb[0].mxu0
    %v3194 = vadd.f32 %v2905, %v3193
    %v3195 = vpop.f32.mrb[0].mxu0
    %v3196 = vpop.f32.mrb[0].mxu0
    %v3197 = vadd.f32 %v2908, %v3196
    %v3198 = vpop.f32.mrb[0].mxu0
    %3199 = vmatprep.mubr.bf16.mxu0 %v1438
    %3200 = vmatmul.mubr.bf16.gmra.mrb[0].mxu0 %v1437
    %v3201 = vpop.f32.mrb[0].mxu0
    %v3202 = vadd.f32 %v2913, %v3201
    %v3203 = vpop.f32.mrb[0].mxu0
    %v3204 = vpop.f32.mrb[0].mxu0
    %v3205 = vadd.f32 %v2916, %v3204
    %v3206 = vpop.f32.mrb[0].mxu0
    %3207 = vmatprep.mubr.bf16.mxu0 %v1447
    %3208 = vmatmul.mubr.bf16.gmra.mrb[0].mxu0 %v1446
    %v3209 = vpop.f32.mrb[0].mxu0
    %v3210 = vadd.f32 %v2921, %v3209
    %v3211 = vpop.f32.mrb[0].mxu0
    %v3212 = vpop.f32.mrb[0].mxu0
    %v3213 = vadd.f32 %v2924, %v3212
    %v3214 = vpop.f32.mrb[0].mxu0
    %3215 = vmatprep.mubr.bf16.mxu0 %v1456
    %3216 = vmatmul.mubr.bf16.gmra.mrb[0].mxu0 %v1455
    %v3217 = vpop.f32.mrb[0].mxu0
    %v3218 = vadd.f32 %v2929, %v3217
    %v3219 = vpop.f32.mrb[0].mxu0
    %v3220 = vpop.f32.mrb[0].mxu0
    %v3221 = vadd.f32 %v2932, %v3220
    %v3222 = vpop.f32.mrb[0].mxu0
    %3223 = vmatprep.mubr.bf16.mxu0 %v1465
    %3224 = vmatmul.mubr.bf16.gmra.mrb[0].mxu0 %v1464
    %v3225 = vpop.f32.mrb[0].mxu0
    %v3226 = vadd.f32 %v2937, %v3225
    %v3227 = vpop.f32.mrb[0].mxu0
    %v3228 = vpop.f32.mrb[0].mxu0
    %v3229 = vadd.f32 %v2940, %v3228
    %v3230 = vpop.f32.mrb[0].mxu0
    %3231 = vmatprep.mubr.bf16.mxu0 %v1474
    %3232 = vmatmul.mubr.bf16.gmra.mrb[0].mxu0 %v1473
    %v3233 = vpop.f32.mrb[0].mxu0
    %v3234 = vadd.f32 %v2945, %v3233
    %v3235 = vpop.f32.mrb[0].mxu0
    %v3236 = vpop.f32.mrb[0].mxu0
    %v3237 = vadd.f32 %v2948, %v3236
    %v3238 = vpop.f32.mrb[0].mxu0
    %3239 = vmatprep.mubr.bf16.mxu0 %v1483
    %3240 = vmatmul.mubr.bf16.gmra.mrb[0].mxu0 %v1482
    %v3241 = vpop.f32.mrb[0].mxu0
    %v3242 = vadd.f32 %v2953, %v3241
    %v3243 = vpop.f32.mrb[0].mxu0
    %v3244 = vpop.f32.mrb[0].mxu0
    %v3245 = vadd.f32 %v2956, %v3244
    %v3246 = vpop.f32.mrb[0].mxu0
    %3247 = vmatprep.mubr.bf16.mxu0 %v1492
    %3248 = vmatmul.mubr.bf16.gmra.mrb[0].mxu0 %v1491
    %v3249 = vpop.f32.mrb[0].mxu0
    %v3250 = vadd.f32 %v2961, %v3249
    %v3251 = vpop.f32.mrb[0].mxu0
    %v3252 = vpop.f32.mrb[0].mxu0
    %v3253 = vadd.f32 %v2964, %v3252
    %v3254 = vpop.f32.mrb[0].mxu0
    %3255 = vmatprep.mubr.bf16.mxu0 %v1501
    %3256 = vmatmul.mubr.bf16.gmra.mrb[0].mxu0 %v1500
    %v3257 = vpop.f32.mrb[0].mxu0
    %v3258 = vadd.f32 %v2969, %v3257
    %v3259 = vpop.f32.mrb[0].mxu0
    %v3260 = vpop.f32.mrb[0].mxu0
    %v3261 = vadd.f32 %v2972, %v3260
    %v3262 = vpop.f32.mrb[0].mxu0
    %3263 = vmatprep.mubr.bf16.mxu0 %v1510
    %3264 = vmatmul.mubr.bf16.gmra.mrb[0].mxu0 %v1509
    %v3265 = vpop.f32.mrb[0].mxu0
    %v3266 = vadd.f32 %v2977, %v3265
    %v3267 = vpop.f32.mrb[0].mxu0
    %v3268 = vpop.f32.mrb[0].mxu0
    %v3269 = vadd.f32 %v2980, %v3268
    %v3270 = vpop.f32.mrb[0].mxu0
    %3271 = vmatprep.mubr.bf16.mxu0 %v1519
    %3272 = vmatmul.mubr.bf16.gmra.mrb[0].mxu0 %v1518
    %v3273 = vpop.f32.mrb[0].mxu0
    %v3274 = vadd.f32 %v2985, %v3273
    %v3275 = vpop.f32.mrb[0].mxu0
    %v3276 = vpop.f32.mrb[0].mxu0
    %v3277 = vadd.f32 %v2988, %v3276
    %v3278 = vpop.f32.mrb[0].mxu0
    %3279 = vmatprep.mubr.bf16.mxu0 %v1528
    %3280 = vmatmul.mubr.bf16.gmra.mrb[0].mxu0 %v1527
    %v3281 = vpop.f32.mrb[0].mxu0
    %v3282 = vadd.f32 %v2993, %v3281
    %v3283 = vpop.f32.mrb[0].mxu0
    %v3284 = vpop.f32.mrb[0].mxu0
    %v3285 = vadd.f32 %v2996, %v3284
    %v3286 = vpop.f32.mrb[0].mxu0
    %3287 = vmatprep.mubr.bf16.mxu0 %v1537
    %3288 = vmatmul.mubr.bf16.gmra.mrb[0].mxu0 %v1536
    %v3289 = vpop.f32.mrb[0].mxu0
    %v3290 = vadd.f32 %v3001, %v3289
    %v3291 = vpop.f32.mrb[0].mxu0
    %v3292 = vpop.f32.mrb[0].mxu0
    %v3293 = vadd.f32 %v3004, %v3292
    %v3294 = vpop.f32.mrb[0].mxu0
    %3295 = vmatprep.mubr.bf16.mxu0 %v1546
    %3296 = vmatmul.mubr.bf16.gmra.mrb[0].mxu0 %v1545
    %v3297 = vpop.f32.mrb[0].mxu0
    %v3298 = vadd.f32 %v3009, %v3297
    %v3299 = vpop.f32.mrb[0].mxu0
    %v3300 = vpop.f32.mrb[0].mxu0
    %v3301 = vadd.f32 %v3012, %v3300
    %v3302 = vpop.f32.mrb[0].mxu0
    %3303 = vmatprep.mubr.bf16.mxu0 %v1555
    %3304 = vmatmul.mubr.bf16.gmra.mrb[0].mxu0 %v1554
    %v3305 = vpop.f32.mrb[0].mxu0
    %v3306 = vadd.f32 %v3017, %v3305
    %v3307 = vpop.f32.mrb[0].mxu0
    %v3308 = vpop.f32.mrb[0].mxu0
    %v3309 = vadd.f32 %v3020, %v3308
    %v3310 = vpop.f32.mrb[0].mxu0
    %3311 = vmatprep.mubr.bf16.mxu0 %v1564
    %3312 = vmatmul.mubr.bf16.gmra.mrb[0].mxu0 %v1563
    %v3313 = vpop.f32.mrb[0].mxu0
    %v3314 = vadd.f32 %v3025, %v3313
    %v3315 = vpop.f32.mrb[0].mxu0
    %v3316 = vpop.f32.mrb[0].mxu0
    %v3317 = vadd.f32 %v3028, %v3316
    %v3318 = vpop.f32.mrb[0].mxu0
    %3319 = vmatprep.mubr.bf16.mxu0 %v1573
    %3320 = vmatmul.mubr.bf16.gmra.mrb[0].mxu0 %v1572
    %v3321 = vpop.f32.mrb[0].mxu0
    %v3322 = vadd.f32 %v3033, %v3321
    %v3323 = vpop.f32.mrb[0].mxu0
    %v3324 = vpop.f32.mrb[0].mxu0
    %v3325 = vadd.f32 %v3036, %v3324
    %v3326 = vpop.f32.mrb[0].mxu0
    %3327 = vmatprep.mubr.bf16.mxu0 %v1582
    %3328 = vmatmul.mubr.bf16.gmra.mrb[0].mxu0 %v1581
    %v3329 = vpop.f32.mrb[0].mxu0
    %v3330 = vadd.f32 %v3041, %v3329
    %v3331 = vpop.f32.mrb[0].mxu0
    %v3332 = vpop.f32.mrb[0].mxu0
    %v3333 = vadd.f32 %v3044, %v3332
    %v3334 = vpop.f32.mrb[0].mxu0
    %3335 = vmatprep.mubr.bf16.mxu0 %v1591
    %3336 = vmatmul.mubr.bf16.gmra.mrb[0].mxu0 %v1590
    %v3337 = vpop.f32.mrb[0].mxu0
    %v3338 = vadd.f32 %v3049, %v3337
    %v3339 = vpop.f32.mrb[0].mxu0
    %v3340 = vpop.f32.mrb[0].mxu0
    %v3341 = vadd.f32 %v3052, %v3340
    %v3342 = vpop.f32.mrb[0].mxu0
    %3343 = vmatprep.mubr.bf16.mxu0 %v1600
    %3344 = vmatmul.mubr.bf16.gmra.mrb[0].mxu0 %v1599
    %v3345 = vpop.f32.mrb[0].mxu0
    %v3346 = vadd.f32 %v3057, %v3345
    %v3347 = vpop.f32.mrb[0].mxu0
    %v3348 = vpop.f32.mrb[0].mxu0
    %v3349 = vadd.f32 %v3060, %v3348
    %v3350 = vpop.f32.mrb[0].mxu0
    %3351 = vmatprep.mubr.bf16.mxu0 %v1609
    %3352 = vmatmul.mubr.bf16.gmra.mrb[0].mxu0 %v1608
    %v3353 = vpop.f32.mrb[0].mxu0
    %v3354 = vadd.f32 %v3065, %v3353
    %v3355 = vpop.f32.mrb[0].mxu0
    %v3356 = vpop.f32.mrb[0].mxu0
    %v3357 = vadd.f32 %v3068, %v3356
    %v3358 = vpop.f32.mrb[0].mxu0
    %3359 = vmatprep.mubr.bf16.mxu0 %v1618
    %3360 = vmatmul.mubr.bf16.gmra.mrb[0].mxu0 %v1617
    %v3361 = vpop.f32.mrb[0].mxu0
    %v3362 = vadd.f32 %v3073, %v3361
    %v3363 = vpop.f32.mrb[0].mxu0
    %v3364 = vpop.f32.mrb[0].mxu0
    %v3365 = vadd.f32 %v3076, %v3364
    %v3366 = vpop.f32.mrb[0].mxu0
    %3367 = vmatprep.mubr.bf16.mxu0 %v1627
    %3368 = vmatmul.mubr.bf16.gmra.mrb[0].mxu0 %v1626
    %v3369 = vpop.f32.mrb[0].mxu0
    %v3370 = vadd.f32 %v3081, %v3369
    %v3371 = vpop.f32.mrb[0].mxu0
    %v3372 = vpop.f32.mrb[0].mxu0
    %v3373 = vadd.f32 %v3084, %v3372
    %v3374 = vpop.f32.mrb[0].mxu0
    %3375 = vmatprep.mubr.bf16.mxu0 %v1636
    %3376 = vmatmul.mubr.bf16.gmra.mrb[0].mxu0 %v1635
    %v3377 = vpop.f32.mrb[0].mxu0
    %v3378 = vadd.f32 %v3089, %v3377
    %v3379 = vpop.f32.mrb[0].mxu0
    %v3380 = vpop.f32.mrb[0].mxu0
    %v3381 = vadd.f32 %v3092, %v3380
    %v3382 = vpop.f32.mrb[0].mxu0
    %3383 = vmatprep.mubr.bf16.mxu0 %v1645
    %3384 = vmatmul.mubr.bf16.gmra.mrb[0].mxu0 %v1644
    %v3385 = vpop.f32.mrb[0].mxu0
    %v3386 = vadd.f32 %v3097, %v3385
    %v3387 = vpop.f32.mrb[0].mxu0
    %v3388 = vpop.f32.mrb[0].mxu0
    %v3389 = vadd.f32 %v3100, %v3388
    %v3390 = vpop.f32.mrb[0].mxu0
    %3391 = vmatprep.mubr.bf16.mxu0 %v1654
    %3392 = vmatmul.mubr.bf16.gmra.mrb[0].mxu0 %v1653
    %v3393 = vpop.f32.mrb[0].mxu0
    %v3394 = vadd.f32 %v3105, %v3393
    %v3395 = vpop.f32.mrb[0].mxu0
    %v3396 = vpop.f32.mrb[0].mxu0
    %v3397 = vadd.f32 %v3108, %v3396
    %v3398 = vpop.f32.mrb[0].mxu0
    %3399 = vmatprep.mubr.bf16.mxu0 %v1663
    %3400 = vmatmul.mubr.bf16.gmra.mrb[0].mxu0 %v1662
    %v3401 = vpop.f32.mrb[0].mxu0
    %v3402 = vadd.f32 %v3113, %v3401
    %v3403 = vpop.f32.mrb[0].mxu0
    %v3404 = vpop.f32.mrb[0].mxu0
    %v3405 = vadd.f32 %v3116, %v3404
    %v3406 = vpop.f32.mrb[0].mxu0
    %3407 = vmatprep.mubr.bf16.mxu0 %v1672
    %3408 = vmatmul.mubr.bf16.gmra.mrb[0].mxu0 %v1671
    %v3409 = vpop.f32.mrb[0].mxu0
    %v3410 = vadd.f32 %v3121, %v3409
    %v3411 = vpop.f32.mrb[0].mxu0
    %v3412 = vpop.f32.mrb[0].mxu0
    %v3413 = vadd.f32 %v3124, %v3412
    %v3414 = vpop.f32.mrb[0].mxu0
    %3415 = vmatprep.mubr.bf16.mxu0 %v1681
    %3416 = vmatmul.mubr.bf16.gmra.mrb[0].mxu0 %v1680
    %v3417 = vpop.f32.mrb[0].mxu0
    %v3418 = vadd.f32 %v3129, %v3417
    %v3419 = vpop.f32.mrb[0].mxu0
    %v3420 = vpop.f32.mrb[0].mxu0
    %v3421 = vadd.f32 %v3132, %v3420
    %v3422 = vpop.f32.mrb[0].mxu0
    %3423 = vmatprep.mubr.bf16.mxu0 %v1690
    %3424 = vmatmul.mubr.bf16.gmra.mrb[0].mxu0 %v1689
    %v3425 = vpop.f32.mrb[0].mxu0
    %v3426 = vadd.f32 %v3137, %v3425
    %v3427 = vpop.f32.mrb[0].mxu0
    %v3428 = vpop.f32.mrb[0].mxu0
    %v3429 = vadd.f32 %v3140, %v3428
    %v3430 = vpop.f32.mrb[0].mxu0
    %3431 = vmatprep.mubr.bf16.mxu0 %v1699
    %3432 = vmatmul.mubr.bf16.gmra.mrb[0].mxu0 %v1698
    %v3433 = vpop.f32.mrb[0].mxu0
    %v3434 = vadd.f32 %v3145, %v3433
    %v3435 = vpop.f32.mrb[0].mxu0
    %v3436 = vpop.f32.mrb[0].mxu0
    %v3437 = vadd.f32 %v3148, %v3436
    %v3438 = vpop.f32.mrb[0].mxu0
    %3439 = vdwg.mxu0
    %3440 = vmatprep.subr.bf16.mxu0 0
    %3441 = vmatpush1.bf16.msra.mxu0 %v2204
    %3442 = vmatprep.subr.bf16.mxu0 0
    %3443 = vmatpush1.bf16.msra.mxu0 %v2205
    %3444 = vmatprep.subr.bf16.mxu0 0
    %3445 = vmatpush1.bf16.msra.mxu0 %v2206
    %3446 = vmatprep.subr.bf16.mxu0 0
    %3447 = vmatpush1.bf16.msra.mxu0 %v2207
    %3448 = vmatprep.subr.bf16.mxu0 0
    %3449 = vmatpush1.bf16.msra.mxu0 %v2208
    %3450 = vmatprep.subr.bf16.mxu0 0
    %3451 = vmatpush1.bf16.msra.mxu0 %v2209
    %3452 = vmatprep.subr.bf16.mxu0 0
    %3453 = vmatpush1.bf16.msra.mxu0 %v2210
    %3454 = vmatprep.subr.bf16.mxu0 0
    %3455 = vmatpush1.bf16.msra.mxu0 %v2211
    %3456 = vmatprep.subr.bf16.mxu0 0
    %3457 = vmatpush1.bf16.msra.mxu0 0
    %3458 = vmatprep.subr.bf16.mxu0 0
    %3459 = vmatpush1.bf16.msra.mxu0 0
    %3460 = vmatprep.subr.bf16.mxu0 0
    %3461 = vmatpush1.bf16.msra.mxu0 0
    %3462 = vmatprep.subr.bf16.mxu0 0
    %3463 = vmatpush1.bf16.msra.mxu0 0
    %3464 = vmatprep.subr.bf16.mxu0 0
    %3465 = vmatpush1.bf16.msra.mxu0 0
    %3466 = vmatprep.subr.bf16.mxu0 0
    %3467 = vmatpush1.bf16.msra.mxu0 0
    %3468 = vmatprep.subr.bf16.mxu0 0
    %3469 = vmatpush1.bf16.msra.mxu0 0
    %3470 = vmatprep.subr.bf16.mxu0 0
    %3471 = vmatpush1.bf16.msra.mxu0 0
    %3472 = vmatprep.mubr.bf16.mxu0 0
    %3473 = vmatmul.mubr.bf16.gmra.mrb[0].mxu0 %v1421
    %v3474 = vpop.f32.mrb[0].mxu0
    %v3475 = vadd.f32 %v3186, %v3474
    %v3476 = vpop.f32.mrb[0].mxu0
    %v3477 = vpop.f32.mrb[0].mxu0
    %v3478 = vadd.f32 %v3189, %v3477
    %v3479 = vpop.f32.mrb[0].mxu0
    %3480 = vmatprep.mubr.bf16.mxu0 0
    %3481 = vmatmul.mubr.bf16.gmra.mrb[0].mxu0 %v1430
    %v3482 = vpop.f32.mrb[0].mxu0
    %v3483 = vadd.f32 %v3194, %v3482
    %v3484 = vpop.f32.mrb[0].mxu0
    %v3485 = vpop.f32.mrb[0].mxu0
    %v3486 = vadd.f32 %v3197, %v3485
    %v3487 = vpop.f32.mrb[0].mxu0
    %3488 = vmatprep.mubr.bf16.mxu0 0
    %3489 = vmatmul.mubr.bf16.gmra.mrb[0].mxu0 %v1439
    %v3490 = vpop.f32.mrb[0].mxu0
    %v3491 = vadd.f32 %v3202, %v3490
    %v3492 = vpop.f32.mrb[0].mxu0
    %v3493 = vpop.f32.mrb[0].mxu0
    %v3494 = vadd.f32 %v3205, %v3493
    %v3495 = vpop.f32.mrb[0].mxu0
    %3496 = vmatprep.mubr.bf16.mxu0 0
    %3497 = vmatmul.mubr.bf16.gmra.mrb[0].mxu0 %v1448
    %v3498 = vpop.f32.mrb[0].mxu0
    %v3499 = vadd.f32 %v3210, %v3498
    %v3500 = vpop.f32.mrb[0].mxu0
    %v3501 = vpop.f32.mrb[0].mxu0
    %v3502 = vadd.f32 %v3213, %v3501
    %v3503 = vpop.f32.mrb[0].mxu0
    %3504 = vmatprep.mubr.bf16.mxu0 0
    %3505 = vmatmul.mubr.bf16.gmra.mrb[0].mxu0 %v1457
    %v3506 = vpop.f32.mrb[0].mxu0
    %v3507 = vadd.f32 %v3218, %v3506
    %v3508 = vpop.f32.mrb[0].mxu0
    %v3509 = vpop.f32.mrb[0].mxu0
    %v3510 = vadd.f32 %v3221, %v3509
    %v3511 = vpop.f32.mrb[0].mxu0
    %3512 = vmatprep.mubr.bf16.mxu0 0
    %3513 = vmatmul.mubr.bf16.gmra.mrb[0].mxu0 %v1466
    %v3514 = vpop.f32.mrb[0].mxu0
    %v3515 = vadd.f32 %v3226, %v3514
    %v3516 = vpop.f32.mrb[0].mxu0
    %v3517 = vpop.f32.mrb[0].mxu0
    %v3518 = vadd.f32 %v3229, %v3517
    %v3519 = vpop.f32.mrb[0].mxu0
    %3520 = vmatprep.mubr.bf16.mxu0 0
    %3521 = vmatmul.mubr.bf16.gmra.mrb[0].mxu0 %v1475
    %v3522 = vpop.f32.mrb[0].mxu0
    %v3523 = vadd.f32 %v3234, %v3522
    %v3524 = vpop.f32.mrb[0].mxu0
    %v3525 = vpop.f32.mrb[0].mxu0
    %v3526 = vadd.f32 %v3237, %v3525
    %v3527 = vpop.f32.mrb[0].mxu0
    %3528 = vmatprep.mubr.bf16.mxu0 0
    %3529 = vmatmul.mubr.bf16.gmra.mrb[0].mxu0 %v1484
    %v3530 = vpop.f32.mrb[0].mxu0
    %v3531 = vadd.f32 %v3242, %v3530
    %v3532 = vpop.f32.mrb[0].mxu0
    %v3533 = vpop.f32.mrb[0].mxu0
    %v3534 = vadd.f32 %v3245, %v3533
    %v3535 = vpop.f32.mrb[0].mxu0
    %3536 = vmatprep.mubr.bf16.mxu0 0
    %3537 = vmatmul.mubr.bf16.gmra.mrb[0].mxu0 %v1493
    %v3538 = vpop.f32.mrb[0].mxu0
    %v3539 = vadd.f32 %v3250, %v3538
    %v3540 = vpop.f32.mrb[0].mxu0
    %v3541 = vpop.f32.mrb[0].mxu0
    %v3542 = vadd.f32 %v3253, %v3541
    %v3543 = vpop.f32.mrb[0].mxu0
    %3544 = vmatprep.mubr.bf16.mxu0 0
    %3545 = vmatmul.mubr.bf16.gmra.mrb[0].mxu0 %v1502
    %v3546 = vpop.f32.mrb[0].mxu0
    %v3547 = vadd.f32 %v3258, %v3546
    %v3548 = vpop.f32.mrb[0].mxu0
    %v3549 = vpop.f32.mrb[0].mxu0
    %v3550 = vadd.f32 %v3261, %v3549
    %v3551 = vpop.f32.mrb[0].mxu0
    %3552 = vmatprep.mubr.bf16.mxu0 0
    %3553 = vmatmul.mubr.bf16.gmra.mrb[0].mxu0 %v1511
    %v3554 = vpop.f32.mrb[0].mxu0
    %v3555 = vadd.f32 %v3266, %v3554
    %v3556 = vpop.f32.mrb[0].mxu0
    %v3557 = vpop.f32.mrb[0].mxu0
    %v3558 = vadd.f32 %v3269, %v3557
    %v3559 = vpop.f32.mrb[0].mxu0
    %3560 = vmatprep.mubr.bf16.mxu0 0
    %3561 = vmatmul.mubr.bf16.gmra.mrb[0].mxu0 %v1520
    %v3562 = vpop.f32.mrb[0].mxu0
    %v3563 = vadd.f32 %v3274, %v3562
    %v3564 = vpop.f32.mrb[0].mxu0
    %v3565 = vpop.f32.mrb[0].mxu0
    %v3566 = vadd.f32 %v3277, %v3565
    %v3567 = vpop.f32.mrb[0].mxu0
    %3568 = vmatprep.mubr.bf16.mxu0 0
    %3569 = vmatmul.mubr.bf16.gmra.mrb[0].mxu0 %v1529
    %v3570 = vpop.f32.mrb[0].mxu0
    %v3571 = vadd.f32 %v3282, %v3570
    %v3572 = vpop.f32.mrb[0].mxu0
    %v3573 = vpop.f32.mrb[0].mxu0
    %v3574 = vadd.f32 %v3285, %v3573
    %v3575 = vpop.f32.mrb[0].mxu0
    %3576 = vmatprep.mubr.bf16.mxu0 0
    %3577 = vmatmul.mubr.bf16.gmra.mrb[0].mxu0 %v1538
    %v3578 = vpop.f32.mrb[0].mxu0
    %v3579 = vadd.f32 %v3290, %v3578
    %v3580 = vpop.f32.mrb[0].mxu0
    %v3581 = vpop.f32.mrb[0].mxu0
    %v3582 = vadd.f32 %v3293, %v3581
    %v3583 = vpop.f32.mrb[0].mxu0
    %3584 = vmatprep.mubr.bf16.mxu0 0
    %3585 = vmatmul.mubr.bf16.gmra.mrb[0].mxu0 %v1547
    %v3586 = vpop.f32.mrb[0].mxu0
    %v3587 = vadd.f32 %v3298, %v3586
    %v3588 = vpop.f32.mrb[0].mxu0
    %v3589 = vpop.f32.mrb[0].mxu0
    %v3590 = vadd.f32 %v3301, %v3589
    %v3591 = vpop.f32.mrb[0].mxu0
    %3592 = vmatprep.mubr.bf16.mxu0 0
    %3593 = vmatmul.mubr.bf16.gmra.mrb[0].mxu0 %v1556
    %v3594 = vpop.f32.mrb[0].mxu0
    %v3595 = vadd.f32 %v3306, %v3594
    %v3596 = vpop.f32.mrb[0].mxu0
    %v3597 = vpop.f32.mrb[0].mxu0
    %v3598 = vadd.f32 %v3309, %v3597
    %v3599 = vpop.f32.mrb[0].mxu0
    %3600 = vmatprep.mubr.bf16.mxu0 0
    %3601 = vmatmul.mubr.bf16.gmra.mrb[0].mxu0 %v1565
    %v3602 = vpop.f32.mrb[0].mxu0
    %v3603 = vadd.f32 %v3314, %v3602
    %v3604 = vpop.f32.mrb[0].mxu0
    %v3605 = vpop.f32.mrb[0].mxu0
    %v3606 = vadd.f32 %v3317, %v3605
    %v3607 = vpop.f32.mrb[0].mxu0
    %3608 = vmatprep.mubr.bf16.mxu0 0
    %3609 = vmatmul.mubr.bf16.gmra.mrb[0].mxu0 %v1574
    %v3610 = vpop.f32.mrb[0].mxu0
    %v3611 = vadd.f32 %v3322, %v3610
    %v3612 = vpop.f32.mrb[0].mxu0
    %v3613 = vpop.f32.mrb[0].mxu0
    %v3614 = vadd.f32 %v3325, %v3613
    %v3615 = vpop.f32.mrb[0].mxu0
    %3616 = vmatprep.mubr.bf16.mxu0 0
    %3617 = vmatmul.mubr.bf16.gmra.mrb[0].mxu0 %v1583
    %v3618 = vpop.f32.mrb[0].mxu0
    %v3619 = vadd.f32 %v3330, %v3618
    %v3620 = vpop.f32.mrb[0].mxu0
    %v3621 = vpop.f32.mrb[0].mxu0
    %v3622 = vadd.f32 %v3333, %v3621
    %v3623 = vpop.f32.mrb[0].mxu0
    %3624 = vmatprep.mubr.bf16.mxu0 0
    %3625 = vmatmul.mubr.bf16.gmra.mrb[0].mxu0 %v1592
    %v3626 = vpop.f32.mrb[0].mxu0
    %v3627 = vadd.f32 %v3338, %v3626
    %v3628 = vpop.f32.mrb[0].mxu0
    %v3629 = vpop.f32.mrb[0].mxu0
    %v3630 = vadd.f32 %v3341, %v3629
    %v3631 = vpop.f32.mrb[0].mxu0
    %3632 = vmatprep.mubr.bf16.mxu0 0
    %3633 = vmatmul.mubr.bf16.gmra.mrb[0].mxu0 %v1601
    %v3634 = vpop.f32.mrb[0].mxu0
    %v3635 = vadd.f32 %v3346, %v3634
    %v3636 = vpop.f32.mrb[0].mxu0
    %v3637 = vpop.f32.mrb[0].mxu0
    %v3638 = vadd.f32 %v3349, %v3637
    %v3639 = vpop.f32.mrb[0].mxu0
    %3640 = vmatprep.mubr.bf16.mxu0 0
    %3641 = vmatmul.mubr.bf16.gmra.mrb[0].mxu0 %v1610
    %v3642 = vpop.f32.mrb[0].mxu0
    %v3643 = vadd.f32 %v3354, %v3642
    %v3644 = vpop.f32.mrb[0].mxu0
    %v3645 = vpop.f32.mrb[0].mxu0
    %v3646 = vadd.f32 %v3357, %v3645
    %v3647 = vpop.f32.mrb[0].mxu0
    %3648 = vmatprep.mubr.bf16.mxu0 0
    %3649 = vmatmul.mubr.bf16.gmra.mrb[0].mxu0 %v1619
    %v3650 = vpop.f32.mrb[0].mxu0
    %v3651 = vadd.f32 %v3362, %v3650
    %v3652 = vpop.f32.mrb[0].mxu0
    %v3653 = vpop.f32.mrb[0].mxu0
    %v3654 = vadd.f32 %v3365, %v3653
    %v3655 = vpop.f32.mrb[0].mxu0
    %3656 = vmatprep.mubr.bf16.mxu0 0
    %3657 = vmatmul.mubr.bf16.gmra.mrb[0].mxu0 %v1628
    %v3658 = vpop.f32.mrb[0].mxu0
    %v3659 = vadd.f32 %v3370, %v3658
    %v3660 = vpop.f32.mrb[0].mxu0
    %v3661 = vpop.f32.mrb[0].mxu0
    %v3662 = vadd.f32 %v3373, %v3661
    %v3663 = vpop.f32.mrb[0].mxu0
    %3664 = vmatprep.mubr.bf16.mxu0 0
    %3665 = vmatmul.mubr.bf16.gmra.mrb[0].mxu0 %v1637
    %v3666 = vpop.f32.mrb[0].mxu0
    %v3667 = vadd.f32 %v3378, %v3666
    %v3668 = vpop.f32.mrb[0].mxu0
    %v3669 = vpop.f32.mrb[0].mxu0
    %v3670 = vadd.f32 %v3381, %v3669
    %v3671 = vpop.f32.mrb[0].mxu0
    %3672 = vmatprep.mubr.bf16.mxu0 0
    %3673 = vmatmul.mubr.bf16.gmra.mrb[0].mxu0 %v1646
    %v3674 = vpop.f32.mrb[0].mxu0
    %v3675 = vadd.f32 %v3386, %v3674
    %v3676 = vpop.f32.mrb[0].mxu0
    %v3677 = vpop.f32.mrb[0].mxu0
    %v3678 = vadd.f32 %v3389, %v3677
    %v3679 = vpop.f32.mrb[0].mxu0
    %3680 = vmatprep.mubr.bf16.mxu0 0
    %3681 = vmatmul.mubr.bf16.gmra.mrb[0].mxu0 %v1655
    %v3682 = vpop.f32.mrb[0].mxu0
    %v3683 = vadd.f32 %v3394, %v3682
    %v3684 = vpop.f32.mrb[0].mxu0
    %v3685 = vpop.f32.mrb[0].mxu0
    %v3686 = vadd.f32 %v3397, %v3685
    %v3687 = vpop.f32.mrb[0].mxu0
    %3688 = vmatprep.mubr.bf16.mxu0 0
    %3689 = vmatmul.mubr.bf16.gmra.mrb[0].mxu0 %v1664
    %v3690 = vpop.f32.mrb[0].mxu0
    %v3691 = vadd.f32 %v3402, %v3690
    %v3692 = vpop.f32.mrb[0].mxu0
    %v3693 = vpop.f32.mrb[0].mxu0
    %v3694 = vadd.f32 %v3405, %v3693
    %v3695 = vpop.f32.mrb[0].mxu0
    %3696 = vmatprep.mubr.bf16.mxu0 0
    %3697 = vmatmul.mubr.bf16.gmra.mrb[0].mxu0 %v1673
    %v3698 = vpop.f32.mrb[0].mxu0
    %v3699 = vadd.f32 %v3410, %v3698
    %v3700 = vpop.f32.mrb[0].mxu0
    %v3701 = vpop.f32.mrb[0].mxu0
    %v3702 = vadd.f32 %v3413, %v3701
    %v3703 = vpop.f32.mrb[0].mxu0
    %3704 = vmatprep.mubr.bf16.mxu0 0
    %3705 = vmatmul.mubr.bf16.gmra.mrb[0].mxu0 %v1682
    %v3706 = vpop.f32.mrb[0].mxu0
    %v3707 = vadd.f32 %v3418, %v3706
    %v3708 = vpop.f32.mrb[0].mxu0
    %v3709 = vpop.f32.mrb[0].mxu0
    %v3710 = vadd.f32 %v3421, %v3709
    %v3711 = vpop.f32.mrb[0].mxu0
    %3712 = vmatprep.mubr.bf16.mxu0 0
    %3713 = vmatmul.mubr.bf16.gmra.mrb[0].mxu0 %v1691
    %v3714 = vpop.f32.mrb[0].mxu0
    %v3715 = vadd.f32 %v3426, %v3714
    %v3716 = vpop.f32.mrb[0].mxu0
    %v3717 = vpop.f32.mrb[0].mxu0
    %v3718 = vadd.f32 %v3429, %v3717
    %v3719 = vpop.f32.mrb[0].mxu0
    %3720 = vmatprep.mubr.bf16.mxu0 0
    %3721 = vmatmul.mubr.bf16.gmra.mrb[0].mxu0 %v1700
    %v3722 = vpop.f32.mrb[0].mxu0
    %v3723 = vadd.f32 %v3434, %v3722
    %v3724 = vpop.f32.mrb[0].mxu0
    %v3725 = vpop.f32.mrb[0].mxu0
    %v3726 = vadd.f32 %v3437, %v3725
    %v3727 = vpop.f32.mrb[0].mxu0
    %3728 = vdwg.mxu0
    %v3729 = vmax.f32 %v3475, 0.0
    %v3730 = vmax.f32 %v3478, 0.0
    %v3731 = vmax.f32 %v3483, 0.0
    %v3732 = vmax.f32 %v3486, 0.0
    %v3733 = vmax.f32 %v3491, 0.0
    %v3734 = vmax.f32 %v3494, 0.0
    %v3735 = vmax.f32 %v3499, 0.0
    %v3736 = vmax.f32 %v3502, 0.0
    %v3737 = vmax.f32 %v3507, 0.0
    %v3738 = vmax.f32 %v3510, 0.0
    %v3739 = vmax.f32 %v3515, 0.0
    %v3740 = vmax.f32 %v3518, 0.0
    %v3741 = vmax.f32 %v3523, 0.0
    %v3742 = vmax.f32 %v3526, 0.0
    %v3743 = vmax.f32 %v3531, 0.0
    %v3744 = vmax.f32 %v3534, 0.0
    %v3745 = vmax.f32 %v3539, 0.0
    %v3746 = vmax.f32 %v3542, 0.0
    %v3747 = vmax.f32 %v3547, 0.0
    %v3748 = vmax.f32 %v3550, 0.0
    %v3749 = vmax.f32 %v3555, 0.0
    %v3750 = vmax.f32 %v3558, 0.0
    %v3751 = vmax.f32 %v3563, 0.0
    %v3752 = vmax.f32 %v3566, 0.0
    %v3753 = vmax.f32 %v3571, 0.0
    %v3754 = vmax.f32 %v3574, 0.0
    %v3755 = vmax.f32 %v3579, 0.0
    %v3756 = vmax.f32 %v3582, 0.0
    %v3757 = vmax.f32 %v3587, 0.0
    %v3758 = vmax.f32 %v3590, 0.0
    %v3759 = vmax.f32 %v3595, 0.0
    %v3760 = vmax.f32 %v3598, 0.0
    %v3761 = vmax.f32 %v3603, 0.0
    %v3762 = vmax.f32 %v3606, 0.0
    %v3763 = vmax.f32 %v3611, 0.0
    %v3764 = vmax.f32 %v3614, 0.0
    %v3765 = vmax.f32 %v3619, 0.0
    %v3766 = vmax.f32 %v3622, 0.0
    %v3767 = vmax.f32 %v3627, 0.0
    %v3768 = vmax.f32 %v3630, 0.0
    %v3769 = vmax.f32 %v3635, 0.0
    %v3770 = vmax.f32 %v3638, 0.0
    %v3771 = vmax.f32 %v3643, 0.0
    %v3772 = vmax.f32 %v3646, 0.0
    %v3773 = vmax.f32 %v3651, 0.0
    %v3774 = vmax.f32 %v3654, 0.0
    %v3775 = vmax.f32 %v3659, 0.0
    %v3776 = vmax.f32 %v3662, 0.0
    %v3777 = vmax.f32 %v3667, 0.0
    %v3778 = vmax.f32 %v3670, 0.0
    %v3779 = vmax.f32 %v3675, 0.0
    %v3780 = vmax.f32 %v3678, 0.0
    %v3781 = vmax.f32 %v3683, 0.0
    %v3782 = vmax.f32 %v3686, 0.0
    %v3783 = vmax.f32 %v3691, 0.0
    %v3784 = vmax.f32 %v3694, 0.0
    %v3785 = vmax.f32 %v3699, 0.0
    %v3786 = vmax.f32 %v3702, 0.0
    %v3787 = vmax.f32 %v3707, 0.0
    %v3788 = vmax.f32 %v3710, 0.0
    %v3789 = vmax.f32 %v3715, 0.0
    %v3790 = vmax.f32 %v3718, 0.0
    %v3791 = vmax.f32 %v3723, 0.0
    %v3792 = vmax.f32 %v3726, 0.0
    %3793 = vst.msk [vmem:[%s194 + $0x1] sm:$0xff] %vm195, %v3729
    %3794 = vst.msk [vmem:[%s194 + $0x9] sm:$0xff] %vm195, %v3730
    %3795 = vst.msk [vmem:[%s194 + $0x19] sm:$0xff] %vm195, %v3731
    %3796 = vst.msk [vmem:[%s194 + $0x21] sm:$0xff] %vm195, %v3732
    %3797 = vst.msk [vmem:[%s194 + $0x31] sm:$0xff] %vm195, %v3733
    %3798 = vst.msk [vmem:[%s194 + $0x39] sm:$0xff] %vm195, %v3734
    %3799 = vst.msk [vmem:[%s194 + $0x49] sm:$0xff] %vm195, %v3735
    %3800 = vst.msk [vmem:[%s194 + $0x51] sm:$0xff] %vm195, %v3736
    %3801 = vst.msk [vmem:[%s194 + $0x61] sm:$0xff] %vm195, %v3737
    %3802 = vst.msk [vmem:[%s194 + $0x69] sm:$0xff] %vm195, %v3738
    %3803 = vst.msk [vmem:[%s194 + $0x79] sm:$0xff] %vm195, %v3739
    %3804 = vst.msk [vmem:[%s194 + $0x81] sm:$0xff] %vm195, %v3740
    %3805 = vst.msk [vmem:[%s194 + $0x91] sm:$0xff] %vm195, %v3741
    %3806 = vst.msk [vmem:[%s194 + $0x99] sm:$0xff] %vm195, %v3742
    %3807 = vst.msk [vmem:[%s194 + $0xa9] sm:$0xff] %vm195, %v3743
    %3808 = vst.msk [vmem:[%s194 + $0xb1] sm:$0xff] %vm195, %v3744
    %3809 = vst.msk [vmem:[%s194 + $0xc1] sm:$0xff] %vm195, %v3745
    %3810 = vst.msk [vmem:[%s194 + $0xc9] sm:$0xff] %vm195, %v3746
    %3811 = vst.msk [vmem:[%s194 + $0xd9] sm:$0xff] %vm195, %v3747
    %3812 = vst.msk [vmem:[%s194 + $0xe1] sm:$0xff] %vm195, %v3748
    %3813 = vst.msk [vmem:[%s194 + $0xf1] sm:$0xff] %vm195, %v3749
    %3814 = vst.msk [vmem:[%s194 + $0xf9] sm:$0xff] %vm195, %v3750
    %3815 = vst.msk [vmem:[%s194 + $0x109] sm:$0xff] %vm195, %v3751
    %3816 = vst.msk [vmem:[%s194 + $0x111] sm:$0xff] %vm195, %v3752
    %3817 = vst.msk [vmem:[%s194 + $0x121] sm:$0xff] %vm195, %v3753
    %3818 = vst.msk [vmem:[%s194 + $0x129] sm:$0xff] %vm195, %v3754
    %3819 = vst.msk [vmem:[%s194 + $0x139] sm:$0xff] %vm195, %v3755
    %3820 = vst.msk [vmem:[%s194 + $0x141] sm:$0xff] %vm195, %v3756
    %3821 = vst.msk [vmem:[%s194 + $0x151] sm:$0xff] %vm195, %v3757
    %3822 = vst.msk [vmem:[%s194 + $0x159] sm:$0xff] %vm195, %v3758
    %3823 = vst.msk [vmem:[%s194 + $0x169] sm:$0xff] %vm195, %v3759
    %3824 = vst.msk [vmem:[%s194 + $0x171] sm:$0xff] %vm195, %v3760
    %3825 = vst.msk [vmem:[%s194 + $0x1b1] sm:$0xff] %vm195, %v3761
    %3826 = vst.msk [vmem:[%s194 + $0x1b9] sm:$0xff] %vm195, %v3762
    %3827 = vst.msk [vmem:[%s194 + $0x1c9] sm:$0xff] %vm195, %v3763
    %3828 = vst.msk [vmem:[%s194 + $0x1d1] sm:$0xff] %vm195, %v3764
    %3829 = vst.msk [vmem:[%s194 + $0x1e1] sm:$0xff] %vm195, %v3765
    %3830 = vst.msk [vmem:[%s194 + $0x1e9] sm:$0xff] %vm195, %v3766
    %3831 = vst.msk [vmem:[%s194 + $0x1f9] sm:$0xff] %vm195, %v3767
    %3832 = vst.msk [vmem:[%s194 + $0x201] sm:$0xff] %vm195, %v3768
    %3833 = vst.msk [vmem:[%s194 + $0x211] sm:$0xff] %vm195, %v3769
    %3834 = vst.msk [vmem:[%s194 + $0x219] sm:$0xff] %vm195, %v3770
    %3835 = vst.msk [vmem:[%s194 + $0x229] sm:$0xff] %vm195, %v3771
    %3836 = vst.msk [vmem:[%s194 + $0x231] sm:$0xff] %vm195, %v3772
    %3837 = vst.msk [vmem:[%s194 + $0x241] sm:$0xff] %vm195, %v3773
    %3838 = vst.msk [vmem:[%s194 + $0x249] sm:$0xff] %vm195, %v3774
    %3839 = vst.msk [vmem:[%s194 + $0x259] sm:$0xff] %vm195, %v3775
    %3840 = vst.msk [vmem:[%s194 + $0x261] sm:$0xff] %vm195, %v3776
    %3841 = vst.msk [vmem:[%s194 + $0x271] sm:$0xff] %vm195, %v3777
    %3842 = vst.msk [vmem:[%s194 + $0x279] sm:$0xff] %vm195, %v3778
    %3843 = vst.msk [vmem:[%s194 + $0x289] sm:$0xff] %vm195, %v3779
    %3844 = vst.msk [vmem:[%s194 + $0x291] sm:$0xff] %vm195, %v3780
    %3845 = vst.msk [vmem:[%s194 + $0x2a1] sm:$0xff] %vm195, %v3781
    %3846 = vst.msk [vmem:[%s194 + $0x2a9] sm:$0xff] %vm195, %v3782
    %3847 = vst.msk [vmem:[%s194 + $0x2b9] sm:$0xff] %vm195, %v3783
    %3848 = vst.msk [vmem:[%s194 + $0x2c1] sm:$0xff] %vm195, %v3784
    %3849 = vst.msk [vmem:[%s194 + $0x2d1] sm:$0xff] %vm195, %v3785
    %3850 = vst.msk [vmem:[%s194 + $0x2d9] sm:$0xff] %vm195, %v3786
    %3851 = vst.msk [vmem:[%s194 + $0x2e9] sm:$0xff] %vm195, %v3787
    %3852 = vst.msk [vmem:[%s194 + $0x2f1] sm:$0xff] %vm195, %v3788
    %3853 = vst.msk [vmem:[%s194 + $0x301] sm:$0xff] %vm195, %v3789
    %3854 = vst.msk [vmem:[%s194 + $0x309] sm:$0xff] %vm195, %v3790
    %3855 = vst.msk [vmem:[%s194 + $0x319] sm:$0xff] %vm195, %v3791
    %3856 = vst.msk [vmem:[%s194 + $0x321] sm:$0xff] %vm195, %v3792
    %v3857 = vld [vmem:[#allocation2] sm:$0xff]
    %v3858 = vld [vmem:[#allocation2 + $0x8] sm:$0xff]
    %v3859 = vld [vmem:[#allocation2 + $0x18] sm:$0xff]
    %v3860 = vld [vmem:[#allocation2 + $0x20] sm:$0xff]
    %v3861 = vld [vmem:[#allocation2 + $0x30] sm:$0xff]
    %v3862 = vld [vmem:[#allocation2 + $0x38] sm:$0xff]
    %v3863 = vld [vmem:[#allocation2 + $0x48] sm:$0xff]
    %v3864 = vld [vmem:[#allocation2 + $0x50] sm:$0xff]
    %v3865 = vld [vmem:[#allocation2 + $0x60] sm:$0xff]
    %v3866 = vld [vmem:[#allocation2 + $0x68] sm:$0xff]
    %v3867 = vld [vmem:[#allocation2 + $0x78] sm:$0xff]
    %v3868 = vld [vmem:[#allocation2 + $0x80] sm:$0xff]
    %v3869 = vld [vmem:[#allocation2 + $0x90] sm:$0xff]
    %v3870 = vld [vmem:[#allocation2 + $0x98] sm:$0xff]
    %v3871 = vld [vmem:[#allocation2 + $0xa8] sm:$0xff]
    %v3872 = vld [vmem:[#allocation2 + $0xb0] sm:$0xff]
    %v3873 = vld [vmem:[#allocation2 + $0xc0] sm:$0xff]
    %v3874 = vld [vmem:[#allocation2 + $0xc8] sm:$0xff]
    %v3875 = vld [vmem:[#allocation2 + $0xd8] sm:$0xff]
    %v3876 = vld [vmem:[#allocation2 + $0xe0] sm:$0xff]
    %v3877 = vld [vmem:[#allocation2 + $0xf0] sm:$0xff]
    %v3878 = vld [vmem:[#allocation2 + $0xf8] sm:$0xff]
    %v3879 = vld [vmem:[#allocation2 + $0x108] sm:$0xff]
    %v3880 = vld [vmem:[#allocation2 + $0x110] sm:$0xff]
    %v3881 = vld [vmem:[#allocation2 + $0x120] sm:$0xff]
    %v3882 = vld [vmem:[#allocation2 + $0x128] sm:$0xff]
    %v3883 = vld [vmem:[#allocation2 + $0x138] sm:$0xff]
    %v3884 = vld [vmem:[#allocation2 + $0x140] sm:$0xff]
    %v3885 = vld [vmem:[#allocation2 + $0x150] sm:$0xff]
    %v3886 = vld [vmem:[#allocation2 + $0x158] sm:$0xff]
    %v3887 = vld [vmem:[#allocation2 + $0x168] sm:$0xff]
    %v3888 = vld [vmem:[#allocation2 + $0x170] sm:$0xff]
    %v3889 = vld [vmem:[#allocation2 + $0x1b0] sm:$0xff]
    %v3890 = vld [vmem:[#allocation2 + $0x1b8] sm:$0xff]
    %v3891 = vld [vmem:[#allocation2 + $0x1c8] sm:$0xff]
    %v3892 = vld [vmem:[#allocation2 + $0x1d0] sm:$0xff]
    %v3893 = vld [vmem:[#allocation2 + $0x1e0] sm:$0xff]
    %v3894 = vld [vmem:[#allocation2 + $0x1e8] sm:$0xff]
    %v3895 = vld [vmem:[#allocation2 + $0x1f8] sm:$0xff]
    %v3896 = vld [vmem:[#allocation2 + $0x200] sm:$0xff]
    %v3897 = vld [vmem:[#allocation2 + $0x210] sm:$0xff]
    %v3898 = vld [vmem:[#allocation2 + $0x218] sm:$0xff]
    %v3899 = vld [vmem:[#allocation2 + $0x228] sm:$0xff]
    %v3900 = vld [vmem:[#allocation2 + $0x230] sm:$0xff]
    %v3901 = vld [vmem:[#allocation2 + $0x240] sm:$0xff]
    %v3902 = vld [vmem:[#allocation2 + $0x248] sm:$0xff]
    %v3903 = vld [vmem:[#allocation2 + $0x258] sm:$0xff]
    %v3904 = vld [vmem:[#allocation2 + $0x260] sm:$0xff]
    %v3905 = vld [vmem:[#allocation2 + $0x270] sm:$0xff]
    %v3906 = vld [vmem:[#allocation2 + $0x278] sm:$0xff]
    %v3907 = vld [vmem:[#allocation2 + $0x288] sm:$0xff]
    %v3908 = vld [vmem:[#allocation2 + $0x290] sm:$0xff]
    %v3909 = vld [vmem:[#allocation2 + $0x2a0] sm:$0xff]
    %v3910 = vld [vmem:[#allocation2 + $0x2a8] sm:$0xff]
    %v3911 = vld [vmem:[#allocation2 + $0x2b8] sm:$0xff]
    %v3912 = vld [vmem:[#allocation2 + $0x2c0] sm:$0xff]
    %v3913 = vld [vmem:[#allocation2 + $0x2d0] sm:$0xff]
    %v3914 = vld [vmem:[#allocation2 + $0x2d8] sm:$0xff]
    %v3915 = vld [vmem:[#allocation2 + $0x2e8] sm:$0xff]
    %v3916 = vld [vmem:[#allocation2 + $0x2f0] sm:$0xff]
    %v3917 = vld [vmem:[#allocation2 + $0x300] sm:$0xff]
    %v3918 = vld [vmem:[#allocation2 + $0x308] sm:$0xff]
    %v3919 = vld [vmem:[#allocation2 + $0x318] sm:$0xff]
    %v3920 = vld [vmem:[#allocation2 + $0x320] sm:$0xff]
    %v3921 = vpack.c.bf16 %v3858, %v3857
    %v3922 = vpack.c.bf16 %v3860, %v3859
    %v3923 = vpack.c.bf16 %v3862, %v3861
    %v3924 = vpack.c.bf16 %v3864, %v3863
    %v3925 = vpack.c.bf16 %v3866, %v3865
    %v3926 = vpack.c.bf16 %v3868, %v3867
    %v3927 = vpack.c.bf16 %v3870, %v3869
    %v3928 = vpack.c.bf16 %v3872, %v3871
    %v3929 = vpack.c.bf16 %v3874, %v3873
    %v3930 = vpack.c.bf16 %v3876, %v3875
    %v3931 = vpack.c.bf16 %v3878, %v3877
    %v3932 = vpack.c.bf16 %v3880, %v3879
    %v3933 = vpack.c.bf16 %v3882, %v3881
    %v3934 = vpack.c.bf16 %v3884, %v3883
    %v3935 = vpack.c.bf16 %v3886, %v3885
    %v3936 = vpack.c.bf16 %v3888, %v3887
    %v3937 = vpack.c.bf16 %v3890, %v3889
    %v3938 = vpack.c.bf16 %v3892, %v3891
    %v3939 = vpack.c.bf16 %v3894, %v3893
    %v3940 = vpack.c.bf16 %v3896, %v3895
    %v3941 = vpack.c.bf16 %v3898, %v3897
    %v3942 = vpack.c.bf16 %v3900, %v3899
    %v3943 = vpack.c.bf16 %v3902, %v3901
    %v3944 = vpack.c.bf16 %v3904, %v3903
    %v3945 = vpack.c.bf16 %v3906, %v3905
    %v3946 = vpack.c.bf16 %v3908, %v3907
    %v3947 = vpack.c.bf16 %v3910, %v3909
    %v3948 = vpack.c.bf16 %v3912, %v3911
    %v3949 = vpack.c.bf16 %v3914, %v3913
    %v3950 = vpack.c.bf16 %v3916, %v3915
    %v3951 = vpack.c.bf16 %v3918, %v3917
    %v3952 = vpack.c.bf16 %v3920, %v3919
    %3953 = vst [vmem:[#allocation3] sm:$0xff] %v3921
    %3954 = vst [vmem:[#allocation3 + $0x48] sm:$0xff] %v3922
    %3955 = vst [vmem:[#allocation3 + $0x90] sm:$0xff] %v3923
    %3956 = vst [vmem:[#allocation3 + $0xd8] sm:$0xff] %v3924
    %3957 = vst [vmem:[#allocation3 + $0x120] sm:$0xff] %v3925
    %3958 = vst [vmem:[#allocation3 + $0x168] sm:$0xff] %v3926
    %3959 = vst [vmem:[#allocation3 + $0x1b0] sm:$0xff] %v3927
    %3960 = vst [vmem:[#allocation3 + $0x1f8] sm:$0xff] %v3928
    %3961 = vst [vmem:[#allocation3 + $0x240] sm:$0xff] %v3929
    %3962 = vst [vmem:[#allocation3 + $0x288] sm:$0xff] %v3930
    %3963 = vst [vmem:[#allocation3 + $0x2d0] sm:$0xff] %v3931
    %3964 = vst [vmem:[#allocation3 + $0x318] sm:$0xff] %v3932
    %3965 = vst [vmem:[#allocation3 + $0x360] sm:$0xff] %v3933
    %3966 = vst [vmem:[#allocation3 + $0x3a8] sm:$0xff] %v3934
    %3967 = vst [vmem:[#allocation3 + $0x3f0] sm:$0xff] %v3935
    %3968 = vst [vmem:[#allocation3 + $0x438] sm:$0xff] %v3936
    %3969 = vst [vmem:[#allocation3 + $0x480] sm:$0xff] %v3937
    %3970 = vst [vmem:[#allocation3 + $0x4c8] sm:$0xff] %v3938
    %3971 = vst [vmem:[#allocation3 + $0x510] sm:$0xff] %v3939
    %3972 = vst [vmem:[#allocation3 + $0x558] sm:$0xff] %v3940
    %3973 = vst [vmem:[#allocation3 + $0x5a0] sm:$0xff] %v3941
    %3974 = vst [vmem:[#allocation3 + $0x5e8] sm:$0xff] %v3942
    %3975 = vst [vmem:[#allocation3 + $0x630] sm:$0xff] %v3943
    %3976 = vst [vmem:[#allocation3 + $0x678] sm:$0xff] %v3944
    %3977 = vst [vmem:[#allocation3 + $0x6c0] sm:$0xff] %v3945
    %3978 = vst [vmem:[#allocation3 + $0x708] sm:$0xff] %v3946
    %3979 = vst [vmem:[#allocation3 + $0x750] sm:$0xff] %v3947
    %3980 = vst [vmem:[#allocation3 + $0x798] sm:$0xff] %v3948
    %3981 = vst [vmem:[#allocation3 + $0x7e0] sm:$0xff] %v3949
    %3982 = vst [vmem:[#allocation3 + $0x828] sm:$0xff] %v3950
    %3983 = vst [vmem:[#allocation3 + $0x870] sm:$0xff] %v3951
    %3984 = vst [vmem:[#allocation3 + $0x8b8] sm:$0xff] %v3952
    %v3985 = vld [vmem:[#allocation2 + $0x1] sm:$0xff]
    %v3986 = vld [vmem:[#allocation2 + $0x9] sm:$0xff]
    %v3987 = vld [vmem:[#allocation2 + $0x19] sm:$0xff]
    %v3988 = vld [vmem:[#allocation2 + $0x21] sm:$0xff]
    %v3989 = vld [vmem:[#allocation2 + $0x31] sm:$0xff]
    %v3990 = vld [vmem:[#allocation2 + $0x39] sm:$0xff]
    %v3991 = vld [vmem:[#allocation2 + $0x49] sm:$0xff]
    %v3992 = vld [vmem:[#allocation2 + $0x51] sm:$0xff]
    %v3993 = vld [vmem:[#allocation2 + $0x61] sm:$0xff]
    %v3994 = vld [vmem:[#allocation2 + $0x69] sm:$0xff]
    %v3995 = vld [vmem:[#allocation2 + $0x79] sm:$0xff]
    %v3996 = vld [vmem:[#allocation2 + $0x81] sm:$0xff]
    %v3997 = vld [vmem:[#allocation2 + $0x91] sm:$0xff]
    %v3998 = vld [vmem:[#allocation2 + $0x99] sm:$0xff]
    %v3999 = vld [vmem:[#allocation2 + $0xa9] sm:$0xff]
    %v4000 = vld [vmem:[#allocation2 + $0xb1] sm:$0xff]
    %v4001 = vld [vmem:[#allocation2 + $0xc1] sm:$0xff]
    %v4002 = vld [vmem:[#allocation2 + $0xc9] sm:$0xff]
    %v4003 = vld [vmem:[#allocation2 + $0xd9] sm:$0xff]
    %v4004 = vld [vmem:[#allocation2 + $0xe1] sm:$0xff]
    %v4005 = vld [vmem:[#allocation2 + $0xf1] sm:$0xff]
    %v4006 = vld [vmem:[#allocation2 + $0xf9] sm:$0xff]
    %v4007 = vld [vmem:[#allocation2 + $0x109] sm:$0xff]
    %v4008 = vld [vmem:[#allocation2 + $0x111] sm:$0xff]
    %v4009 = vld [vmem:[#allocation2 + $0x121] sm:$0xff]
    %v4010 = vld [vmem:[#allocation2 + $0x129] sm:$0xff]
    %v4011 = vld [vmem:[#allocation2 + $0x139] sm:$0xff]
    %v4012 = vld [vmem:[#allocation2 + $0x141] sm:$0xff]
    %v4013 = vld [vmem:[#allocation2 + $0x151] sm:$0xff]
    %v4014 = vld [vmem:[#allocation2 + $0x159] sm:$0xff]
    %v4015 = vld [vmem:[#allocation2 + $0x169] sm:$0xff]
    %v4016 = vld [vmem:[#allocation2 + $0x171] sm:$0xff]
    %v4017 = vld [vmem:[#allocation2 + $0x1b1] sm:$0xff]
    %v4018 = vld [vmem:[#allocation2 + $0x1b9] sm:$0xff]
    %v4019 = vld [vmem:[#allocation2 + $0x1c9] sm:$0xff]
    %v4020 = vld [vmem:[#allocation2 + $0x1d1] sm:$0xff]
    %v4021 = vld [vmem:[#allocation2 + $0x1e1] sm:$0xff]
    %v4022 = vld [vmem:[#allocation2 + $0x1e9] sm:$0xff]
    %v4023 = vld [vmem:[#allocation2 + $0x1f9] sm:$0xff]
    %v4024 = vld [vmem:[#allocation2 + $0x201] sm:$0xff]
    %v4025 = vld [vmem:[#allocation2 + $0x211] sm:$0xff]
    %v4026 = vld [vmem:[#allocation2 + $0x219] sm:$0xff]
    %v4027 = vld [vmem:[#allocation2 + $0x229] sm:$0xff]
    %v4028 = vld [vmem:[#allocation2 + $0x231] sm:$0xff]
    %v4029 = vld [vmem:[#allocation2 + $0x241] sm:$0xff]
    %v4030 = vld [vmem:[#allocation2 + $0x249] sm:$0xff]
    %v4031 = vld [vmem:[#allocation2 + $0x259] sm:$0xff]
    %v4032 = vld [vmem:[#allocation2 + $0x261] sm:$0xff]
    %v4033 = vld [vmem:[#allocation2 + $0x271] sm:$0xff]
    %v4034 = vld [vmem:[#allocation2 + $0x279] sm:$0xff]
    %v4035 = vld [vmem:[#allocation2 + $0x289] sm:$0xff]
    %v4036 = vld [vmem:[#allocation2 + $0x291] sm:$0xff]
    %v4037 = vld [vmem:[#allocation2 + $0x2a1] sm:$0xff]
    %v4038 = vld [vmem:[#allocation2 + $0x2a9] sm:$0xff]
    %v4039 = vld [vmem:[#allocation2 + $0x2b9] sm:$0xff]
    %v4040 = vld [vmem:[#allocation2 + $0x2c1] sm:$0xff]
    %v4041 = vld [vmem:[#allocation2 + $0x2d1] sm:$0xff]
    %v4042 = vld [vmem:[#allocation2 + $0x2d9] sm:$0xff]
    %v4043 = vld [vmem:[#allocation2 + $0x2e9] sm:$0xff]
    %v4044 = vld [vmem:[#allocation2 + $0x2f1] sm:$0xff]
    %v4045 = vld [vmem:[#allocation2 + $0x301] sm:$0xff]
    %v4046 = vld [vmem:[#allocation2 + $0x309] sm:$0xff]
    %v4047 = vld [vmem:[#allocation2 + $0x319] sm:$0xff]
    %v4048 = vld [vmem:[#allocation2 + $0x321] sm:$0xff]
    %v4049 = vpack.c.bf16 %v3986, %v3985
    %v4050 = vpack.c.bf16 %v3988, %v3987
    %v4051 = vpack.c.bf16 %v3990, %v3989
    %v4052 = vpack.c.bf16 %v3992, %v3991
    %v4053 = vpack.c.bf16 %v3994, %v3993
    %v4054 = vpack.c.bf16 %v3996, %v3995
    %v4055 = vpack.c.bf16 %v3998, %v3997
    %v4056 = vpack.c.bf16 %v4000, %v3999
    %v4057 = vpack.c.bf16 %v4002, %v4001
    %v4058 = vpack.c.bf16 %v4004, %v4003
    %v4059 = vpack.c.bf16 %v4006, %v4005
    %v4060 = vpack.c.bf16 %v4008, %v4007
    %v4061 = vpack.c.bf16 %v4010, %v4009
    %v4062 = vpack.c.bf16 %v4012, %v4011
    %v4063 = vpack.c.bf16 %v4014, %v4013
    %v4064 = vpack.c.bf16 %v4016, %v4015
    %v4065 = vpack.c.bf16 %v4018, %v4017
    %v4066 = vpack.c.bf16 %v4020, %v4019
    %v4067 = vpack.c.bf16 %v4022, %v4021
    %v4068 = vpack.c.bf16 %v4024, %v4023
    %v4069 = vpack.c.bf16 %v4026, %v4025
    %v4070 = vpack.c.bf16 %v4028, %v4027
    %v4071 = vpack.c.bf16 %v4030, %v4029
    %v4072 = vpack.c.bf16 %v4032, %v4031
    %v4073 = vpack.c.bf16 %v4034, %v4033
    %v4074 = vpack.c.bf16 %v4036, %v4035
    %v4075 = vpack.c.bf16 %v4038, %v4037
    %v4076 = vpack.c.bf16 %v4040, %v4039
    %v4077 = vpack.c.bf16 %v4042, %v4041
    %v4078 = vpack.c.bf16 %v4044, %v4043
    %v4079 = vpack.c.bf16 %v4046, %v4045
    %v4080 = vpack.c.bf16 %v4048, %v4047
    %4081 = vst [vmem:[#allocation3 + $0x8] sm:$0xff] %v4049
    %4082 = vst [vmem:[#allocation3 + $0x50] sm:$0xff] %v4050
    %4083 = vst [vmem:[#allocation3 + $0x98] sm:$0xff] %v4051
    %4084 = vst [vmem:[#allocation3 + $0xe0] sm:$0xff] %v4052
    %4085 = vst [vmem:[#allocation3 + $0x128] sm:$0xff] %v4053
    %4086 = vst [vmem:[#allocation3 + $0x170] sm:$0xff] %v4054
    %4087 = vst [vmem:[#allocation3 + $0x1b8] sm:$0xff] %v4055
    %4088 = vst [vmem:[#allocation3 + $0x200] sm:$0xff] %v4056
    %4089 = vst [vmem:[#allocation3 + $0x248] sm:$0xff] %v4057
    %4090 = vst [vmem:[#allocation3 + $0x290] sm:$0xff] %v4058
    %4091 = vst [vmem:[#allocation3 + $0x2d8] sm:$0xff] %v4059
    %4092 = vst [vmem:[#allocation3 + $0x320] sm:$0xff] %v4060
    %4093 = vst [vmem:[#allocation3 + $0x368] sm:$0xff] %v4061
    %4094 = vst [vmem:[#allocation3 + $0x3b0] sm:$0xff] %v4062
    %4095 = vst [vmem:[#allocation3 + $0x3f8] sm:$0xff] %v4063
    %4096 = vst [vmem:[#allocation3 + $0x440] sm:$0xff] %v4064
    %4097 = vst [vmem:[#allocation3 + $0x488] sm:$0xff] %v4065
    %4098 = vst [vmem:[#allocation3 + $0x4d0] sm:$0xff] %v4066
    %4099 = vst [vmem:[#allocation3 + $0x518] sm:$0xff] %v4067
    %4100 = vst [vmem:[#allocation3 + $0x560] sm:$0xff] %v4068
    %4101 = vst [vmem:[#allocation3 + $0x5a8] sm:$0xff] %v4069
    %4102 = vst [vmem:[#allocation3 + $0x5f0] sm:$0xff] %v4070
    %4103 = vst [vmem:[#allocation3 + $0x638] sm:$0xff] %v4071
    %4104 = vst [vmem:[#allocation3 + $0x680] sm:$0xff] %v4072
    %4105 = vst [vmem:[#allocation3 + $0x6c8] sm:$0xff] %v4073
    %4106 = vst [vmem:[#allocation3 + $0x710] sm:$0xff] %v4074
    %4107 = vst [vmem:[#allocation3 + $0x758] sm:$0xff] %v4075
    %4108 = vst [vmem:[#allocation3 + $0x7a0] sm:$0xff] %v4076
    %4109 = vst [vmem:[#allocation3 + $0x7e8] sm:$0xff] %v4077
    %4110 = vst [vmem:[#allocation3 + $0x830] sm:$0xff] %v4078
    %4111 = vst [vmem:[#allocation3 + $0x878] sm:$0xff] %v4079
    %4112 = vst [vmem:[#allocation3 + $0x8c0] sm:$0xff] %v4080
    %v4113 = vld [vmem:[#allocation2 + $0x2] sm:$0xff]
    %v4114 = vld [vmem:[#allocation2 + $0xa] sm:$0xff]
    %v4115 = vld [vmem:[#allocation2 + $0x1a] sm:$0xff]
    %v4116 = vld [vmem:[#allocation2 + $0x22] sm:$0xff]
    %v4117 = vld [vmem:[#allocation2 + $0x32] sm:$0xff]
    %v4118 = vld [vmem:[#allocation2 + $0x3a] sm:$0xff]
    %v4119 = vld [vmem:[#allocation2 + $0x4a] sm:$0xff]
    %v4120 = vld [vmem:[#allocation2 + $0x52] sm:$0xff]
    %v4121 = vld [vmem:[#allocation2 + $0x62] sm:$0xff]
    %v4122 = vld [vmem:[#allocation2 + $0x6a] sm:$0xff]
    %v4123 = vld [vmem:[#allocation2 + $0x7a] sm:$0xff]
    %v4124 = vld [vmem:[#allocation2 + $0x82] sm:$0xff]
    %v4125 = vld [vmem:[#allocation2 + $0x92] sm:$0xff]
    %v4126 = vld [vmem:[#allocation2 + $0x9a] sm:$0xff]
    %v4127 = vld [vmem:[#allocation2 + $0xaa] sm:$0xff]
    %v4128 = vld [vmem:[#allocation2 + $0xb2] sm:$0xff]
    %v4129 = vld [vmem:[#allocation2 + $0xc2] sm:$0xff]
    %v4130 = vld [vmem:[#allocation2 + $0xca] sm:$0xff]
    %v4131 = vld [vmem:[#allocation2 + $0xda] sm:$0xff]
    %v4132 = vld [vmem:[#allocation2 + $0xe2] sm:$0xff]
    %v4133 = vld [vmem:[#allocation2 + $0xf2] sm:$0xff]
    %v4134 = vld [vmem:[#allocation2 + $0xfa] sm:$0xff]
    %v4135 = vld [vmem:[#allocation2 + $0x10a] sm:$0xff]
    %v4136 = vld [vmem:[#allocation2 + $0x112] sm:$0xff]
    %v4137 = vld [vmem:[#allocation2 + $0x122] sm:$0xff]
    %v4138 = vld [vmem:[#allocation2 + $0x12a] sm:$0xff]
    %v4139 = vld [vmem:[#allocation2 + $0x13a] sm:$0xff]
    %v4140 = vld [vmem:[#allocation2 + $0x142] sm:$0xff]
    %v4141 = vld [vmem:[#allocation2 + $0x152] sm:$0xff]
    %v4142 = vld [vmem:[#allocation2 + $0x15a] sm:$0xff]
    %v4143 = vld [vmem:[#allocation2 + $0x16a] sm:$0xff]
    %v4144 = vld [vmem:[#allocation2 + $0x172] sm:$0xff]
    %v4145 = vld [vmem:[#allocation2 + $0x1b2] sm:$0xff]
    %v4146 = vld [vmem:[#allocation2 + $0x1ba] sm:$0xff]
    %v4147 = vld [vmem:[#allocation2 + $0x1ca] sm:$0xff]
    %v4148 = vld [vmem:[#allocation2 + $0x1d2] sm:$0xff]
    %v4149 = vld [vmem:[#allocation2 + $0x1e2] sm:$0xff]
    %v4150 = vld [vmem:[#allocation2 + $0x1ea] sm:$0xff]
    %v4151 = vld [vmem:[#allocation2 + $0x1fa] sm:$0xff]
    %v4152 = vld [vmem:[#allocation2 + $0x202] sm:$0xff]
    %v4153 = vld [vmem:[#allocation2 + $0x212] sm:$0xff]
    %v4154 = vld [vmem:[#allocation2 + $0x21a] sm:$0xff]
    %v4155 = vld [vmem:[#allocation2 + $0x22a] sm:$0xff]
    %v4156 = vld [vmem:[#allocation2 + $0x232] sm:$0xff]
    %v4157 = vld [vmem:[#allocation2 + $0x242] sm:$0xff]
    %v4158 = vld [vmem:[#allocation2 + $0x24a] sm:$0xff]
    %v4159 = vld [vmem:[#allocation2 + $0x25a] sm:$0xff]
    %v4160 = vld [vmem:[#allocation2 + $0x262] sm:$0xff]
    %v4161 = vld [vmem:[#allocation2 + $0x272] sm:$0xff]
    %v4162 = vld [vmem:[#allocation2 + $0x27a] sm:$0xff]
    %v4163 = vld [vmem:[#allocation2 + $0x28a] sm:$0xff]
    %v4164 = vld [vmem:[#allocation2 + $0x292] sm:$0xff]
    %v4165 = vld [vmem:[#allocation2 + $0x2a2] sm:$0xff]
    %v4166 = vld [vmem:[#allocation2 + $0x2aa] sm:$0xff]
    %v4167 = vld [vmem:[#allocation2 + $0x2ba] sm:$0xff]
    %v4168 = vld [vmem:[#allocation2 + $0x2c2] sm:$0xff]
    %v4169 = vld [vmem:[#allocation2 + $0x2d2] sm:$0xff]
    %v4170 = vld [vmem:[#allocation2 + $0x2da] sm:$0xff]
    %v4171 = vld [vmem:[#allocation2 + $0x2ea] sm:$0xff]
    %v4172 = vld [vmem:[#allocation2 + $0x2f2] sm:$0xff]
    %v4173 = vld [vmem:[#allocation2 + $0x302] sm:$0xff]
    %v4174 = vld [vmem:[#allocation2 + $0x30a] sm:$0xff]
    %v4175 = vld [vmem:[#allocation2 + $0x31a] sm:$0xff]
    %v4176 = vld [vmem:[#allocation2 + $0x322] sm:$0xff]
    %v4177 = vpack.c.bf16 %v4114, %v4113
    %v4178 = vpack.c.bf16 %v4116, %v4115
    %v4179 = vpack.c.bf16 %v4118, %v4117
    %v4180 = vpack.c.bf16 %v4120, %v4119
    %v4181 = vpack.c.bf16 %v4122, %v4121
    %v4182 = vpack.c.bf16 %v4124, %v4123
    %v4183 = vpack.c.bf16 %v4126, %v4125
    %v4184 = vpack.c.bf16 %v4128, %v4127
    %v4185 = vpack.c.bf16 %v4130, %v4129
    %v4186 = vpack.c.bf16 %v4132, %v4131
    %v4187 = vpack.c.bf16 %v4134, %v4133
    %v4188 = vpack.c.bf16 %v4136, %v4135
    %v4189 = vpack.c.bf16 %v4138, %v4137
    %v4190 = vpack.c.bf16 %v4140, %v4139
    %v4191 = vpack.c.bf16 %v4142, %v4141
    %v4192 = vpack.c.bf16 %v4144, %v4143
    %v4193 = vpack.c.bf16 %v4146, %v4145
    %v4194 = vpack.c.bf16 %v4148, %v4147
    %v4195 = vpack.c.bf16 %v4150, %v4149
    %v4196 = vpack.c.bf16 %v4152, %v4151
    %v4197 = vpack.c.bf16 %v4154, %v4153
    %v4198 = vpack.c.bf16 %v4156, %v4155
    %v4199 = vpack.c.bf16 %v4158, %v4157
    %v4200 = vpack.c.bf16 %v4160, %v4159
    %v4201 = vpack.c.bf16 %v4162, %v4161
    %v4202 = vpack.c.bf16 %v4164, %v4163
    %v4203 = vpack.c.bf16 %v4166, %v4165
    %v4204 = vpack.c.bf16 %v4168, %v4167
    %v4205 = vpack.c.bf16 %v4170, %v4169
    %v4206 = vpack.c.bf16 %v4172, %v4171
    %v4207 = vpack.c.bf16 %v4174, %v4173
    %v4208 = vpack.c.bf16 %v4176, %v4175
    %4209 = vst [vmem:[#allocation3 + $0x10] sm:$0xff] %v4177
    %4210 = vst [vmem:[#allocation3 + $0x58] sm:$0xff] %v4178
    %4211 = vst [vmem:[#allocation3 + $0xa0] sm:$0xff] %v4179
    %4212 = vst [vmem:[#allocation3 + $0xe8] sm:$0xff] %v4180
    %4213 = vst [vmem:[#allocation3 + $0x130] sm:$0xff] %v4181
    %4214 = vst [vmem:[#allocation3 + $0x178] sm:$0xff] %v4182
    %4215 = vst [vmem:[#allocation3 + $0x1c0] sm:$0xff] %v4183
    %4216 = vst [vmem:[#allocation3 + $0x208] sm:$0xff] %v4184
    %4217 = vst [vmem:[#allocation3 + $0x250] sm:$0xff] %v4185
    %4218 = vst [vmem:[#allocation3 + $0x298] sm:$0xff] %v4186
    %4219 = vst [vmem:[#allocation3 + $0x2e0] sm:$0xff] %v4187
    %4220 = vst [vmem:[#allocation3 + $0x328] sm:$0xff] %v4188
    %4221 = vst [vmem:[#allocation3 + $0x370] sm:$0xff] %v4189
    %4222 = vst [vmem:[#allocation3 + $0x3b8] sm:$0xff] %v4190
    %4223 = vst [vmem:[#allocation3 + $0x400] sm:$0xff] %v4191
    %4224 = vst [vmem:[#allocation3 + $0x448] sm:$0xff] %v4192
    %4225 = vst [vmem:[#allocation3 + $0x490] sm:$0xff] %v4193
    %4226 = vst [vmem:[#allocation3 + $0x4d8] sm:$0xff] %v4194
    %4227 = vst [vmem:[#allocation3 + $0x520] sm:$0xff] %v4195
    %4228 = vst [vmem:[#allocation3 + $0x568] sm:$0xff] %v4196
    %4229 = vst [vmem:[#allocation3 + $0x5b0] sm:$0xff] %v4197
    %4230 = vst [vmem:[#allocation3 + $0x5f8] sm:$0xff] %v4198
    %4231 = vst [vmem:[#allocation3 + $0x640] sm:$0xff] %v4199
    %4232 = vst [vmem:[#allocation3 + $0x688] sm:$0xff] %v4200
    %4233 = vst [vmem:[#allocation3 + $0x6d0] sm:$0xff] %v4201
    %4234 = vst [vmem:[#allocation3 + $0x718] sm:$0xff] %v4202
    %4235 = vst [vmem:[#allocation3 + $0x760] sm:$0xff] %v4203
    %4236 = vst [vmem:[#allocation3 + $0x7a8] sm:$0xff] %v4204
    %4237 = vst [vmem:[#allocation3 + $0x7f0] sm:$0xff] %v4205
    %4238 = vst [vmem:[#allocation3 + $0x838] sm:$0xff] %v4206
    %4239 = vst [vmem:[#allocation3 + $0x880] sm:$0xff] %v4207
    %4240 = vst [vmem:[#allocation3 + $0x8c8] sm:$0xff] %v4208
    %v4241 = vld [vmem:[%s194] sm:$0xff]
    %v4242 = vld [vmem:[%s194 + $0x8] sm:$0xff]
    %v4243 = vld [vmem:[%s194 + $0x18] sm:$0xff]
    %v4244 = vld [vmem:[%s194 + $0x20] sm:$0xff]
    %v4245 = vld [vmem:[%s194 + $0x30] sm:$0xff]
    %v4246 = vld [vmem:[%s194 + $0x38] sm:$0xff]
    %v4247 = vld [vmem:[%s194 + $0x48] sm:$0xff]
    %v4248 = vld [vmem:[%s194 + $0x50] sm:$0xff]
    %v4249 = vld [vmem:[%s194 + $0x60] sm:$0xff]
    %v4250 = vld [vmem:[%s194 + $0x68] sm:$0xff]
    %v4251 = vld [vmem:[%s194 + $0x78] sm:$0xff]
    %v4252 = vld [vmem:[%s194 + $0x80] sm:$0xff]
    %v4253 = vld [vmem:[%s194 + $0x90] sm:$0xff]
    %v4254 = vld [vmem:[%s194 + $0x98] sm:$0xff]
    %v4255 = vld [vmem:[%s194 + $0xa8] sm:$0xff]
    %v4256 = vld [vmem:[%s194 + $0xb0] sm:$0xff]
    %v4257 = vld [vmem:[%s194 + $0xc0] sm:$0xff]
    %v4258 = vld [vmem:[%s194 + $0xc8] sm:$0xff]
    %v4259 = vld [vmem:[%s194 + $0xd8] sm:$0xff]
    %v4260 = vld [vmem:[%s194 + $0xe0] sm:$0xff]
    %v4261 = vld [vmem:[%s194 + $0xf0] sm:$0xff]
    %v4262 = vld [vmem:[%s194 + $0xf8] sm:$0xff]
    %v4263 = vld [vmem:[%s194 + $0x108] sm:$0xff]
    %v4264 = vld [vmem:[%s194 + $0x110] sm:$0xff]
    %v4265 = vld [vmem:[%s194 + $0x120] sm:$0xff]
    %v4266 = vld [vmem:[%s194 + $0x128] sm:$0xff]
    %v4267 = vld [vmem:[%s194 + $0x138] sm:$0xff]
    %v4268 = vld [vmem:[%s194 + $0x140] sm:$0xff]
    %v4269 = vld [vmem:[%s194 + $0x150] sm:$0xff]
    %v4270 = vld [vmem:[%s194 + $0x158] sm:$0xff]
    %v4271 = vld [vmem:[%s194 + $0x168] sm:$0xff]
    %v4272 = vld [vmem:[%s194 + $0x170] sm:$0xff]
    %v4273 = vld [vmem:[%s194 + $0x1b0] sm:$0xff]
    %v4274 = vld [vmem:[%s194 + $0x1b8] sm:$0xff]
    %v4275 = vld [vmem:[%s194 + $0x1c8] sm:$0xff]
    %v4276 = vld [vmem:[%s194 + $0x1d0] sm:$0xff]
    %v4277 = vld [vmem:[%s194 + $0x1e0] sm:$0xff]
    %v4278 = vld [vmem:[%s194 + $0x1e8] sm:$0xff]
    %v4279 = vld [vmem:[%s194 + $0x1f8] sm:$0xff]
    %v4280 = vld [vmem:[%s194 + $0x200] sm:$0xff]
    %v4281 = vld [vmem:[%s194 + $0x210] sm:$0xff]
    %v4282 = vld [vmem:[%s194 + $0x218] sm:$0xff]
    %v4283 = vld [vmem:[%s194 + $0x228] sm:$0xff]
    %v4284 = vld [vmem:[%s194 + $0x230] sm:$0xff]
    %v4285 = vld [vmem:[%s194 + $0x240] sm:$0xff]
    %v4286 = vld [vmem:[%s194 + $0x248] sm:$0xff]
    %v4287 = vld [vmem:[%s194 + $0x258] sm:$0xff]
    %v4288 = vld [vmem:[%s194 + $0x260] sm:$0xff]
    %v4289 = vld [vmem:[%s194 + $0x270] sm:$0xff]
    %v4290 = vld [vmem:[%s194 + $0x278] sm:$0xff]
    %v4291 = vld [vmem:[%s194 + $0x288] sm:$0xff]
    %v4292 = vld [vmem:[%s194 + $0x290] sm:$0xff]
    %v4293 = vld [vmem:[%s194 + $0x2a0] sm:$0xff]
    %v4294 = vld [vmem:[%s194 + $0x2a8] sm:$0xff]
    %v4295 = vld [vmem:[%s194 + $0x2b8] sm:$0xff]
    %v4296 = vld [vmem:[%s194 + $0x2c0] sm:$0xff]
    %v4297 = vld [vmem:[%s194 + $0x2d0] sm:$0xff]
    %v4298 = vld [vmem:[%s194 + $0x2d8] sm:$0xff]
    %v4299 = vld [vmem:[%s194 + $0x2e8] sm:$0xff]
    %v4300 = vld [vmem:[%s194 + $0x2f0] sm:$0xff]
    %v4301 = vld [vmem:[%s194 + $0x300] sm:$0xff]
    %v4302 = vld [vmem:[%s194 + $0x308] sm:$0xff]
    %v4303 = vld [vmem:[%s194 + $0x318] sm:$0xff]
    %v4304 = vld [vmem:[%s194 + $0x320] sm:$0xff]
    %v4305 = vpack.c.bf16 %v4242, %v4241
    %v4306 = vpack.c.bf16 %v4244, %v4243
    %v4307 = vpack.c.bf16 %v4246, %v4245
    %v4308 = vpack.c.bf16 %v4248, %v4247
    %v4309 = vpack.c.bf16 %v4250, %v4249
    %v4310 = vpack.c.bf16 %v4252, %v4251
    %v4311 = vpack.c.bf16 %v4254, %v4253
    %v4312 = vpack.c.bf16 %v4256, %v4255
    %v4313 = vpack.c.bf16 %v4258, %v4257
    %v4314 = vpack.c.bf16 %v4260, %v4259
    %v4315 = vpack.c.bf16 %v4262, %v4261
    %v4316 = vpack.c.bf16 %v4264, %v4263
    %v4317 = vpack.c.bf16 %v4266, %v4265
    %v4318 = vpack.c.bf16 %v4268, %v4267
    %v4319 = vpack.c.bf16 %v4270, %v4269
    %v4320 = vpack.c.bf16 %v4272, %v4271
    %v4321 = vpack.c.bf16 %v4274, %v4273
    %v4322 = vpack.c.bf16 %v4276, %v4275
    %v4323 = vpack.c.bf16 %v4278, %v4277
    %v4324 = vpack.c.bf16 %v4280, %v4279
    %v4325 = vpack.c.bf16 %v4282, %v4281
    %v4326 = vpack.c.bf16 %v4284, %v4283
    %v4327 = vpack.c.bf16 %v4286, %v4285
    %v4328 = vpack.c.bf16 %v4288, %v4287
    %v4329 = vpack.c.bf16 %v4290, %v4289
    %v4330 = vpack.c.bf16 %v4292, %v4291
    %v4331 = vpack.c.bf16 %v4294, %v4293
    %v4332 = vpack.c.bf16 %v4296, %v4295
    %v4333 = vpack.c.bf16 %v4298, %v4297
    %v4334 = vpack.c.bf16 %v4300, %v4299
    %v4335 = vpack.c.bf16 %v4302, %v4301
    %v4336 = vpack.c.bf16 %v4304, %v4303
    %4337 = vst [vmem:[#allocation3 + $0x18] sm:$0xff] %v4305
    %4338 = vst [vmem:[#allocation3 + $0x60] sm:$0xff] %v4306
    %4339 = vst [vmem:[#allocation3 + $0xa8] sm:$0xff] %v4307
    %4340 = vst [vmem:[#allocation3 + $0xf0] sm:$0xff] %v4308
    %4341 = vst [vmem:[#allocation3 + $0x138] sm:$0xff] %v4309
    %4342 = vst [vmem:[#allocation3 + $0x180] sm:$0xff] %v4310
    %4343 = vst [vmem:[#allocation3 + $0x1c8] sm:$0xff] %v4311
    %4344 = vst [vmem:[#allocation3 + $0x210] sm:$0xff] %v4312
    %4345 = vst [vmem:[#allocation3 + $0x258] sm:$0xff] %v4313
    %4346 = vst [vmem:[#allocation3 + $0x2a0] sm:$0xff] %v4314
    %4347 = vst [vmem:[#allocation3 + $0x2e8] sm:$0xff] %v4315
    %4348 = vst [vmem:[#allocation3 + $0x330] sm:$0xff] %v4316
    %4349 = vst [vmem:[#allocation3 + $0x378] sm:$0xff] %v4317
    %4350 = vst [vmem:[#allocation3 + $0x3c0] sm:$0xff] %v4318
    %4351 = vst [vmem:[#allocation3 + $0x408] sm:$0xff] %v4319
    %4352 = vst [vmem:[#allocation3 + $0x450] sm:$0xff] %v4320
    %4353 = vst [vmem:[#allocation3 + $0x498] sm:$0xff] %v4321
    %4354 = vst [vmem:[#allocation3 + $0x4e0] sm:$0xff] %v4322
    %4355 = vst [vmem:[#allocation3 + $0x528] sm:$0xff] %v4323
    %4356 = vst [vmem:[#allocation3 + $0x570] sm:$0xff] %v4324
    %4357 = vst [vmem:[#allocation3 + $0x5b8] sm:$0xff] %v4325
    %4358 = vst [vmem:[#allocation3 + $0x600] sm:$0xff] %v4326
    %4359 = vst [vmem:[#allocation3 + $0x648] sm:$0xff] %v4327
    %4360 = vst [vmem:[#allocation3 + $0x690] sm:$0xff] %v4328
    %4361 = vst [vmem:[#allocation3 + $0x6d8] sm:$0xff] %v4329
    %4362 = vst [vmem:[#allocation3 + $0x720] sm:$0xff] %v4330
    %4363 = vst [vmem:[#allocation3 + $0x768] sm:$0xff] %v4331
    %4364 = vst [vmem:[#allocation3 + $0x7b0] sm:$0xff] %v4332
    %4365 = vst [vmem:[#allocation3 + $0x7f8] sm:$0xff] %v4333
    %4366 = vst [vmem:[#allocation3 + $0x840] sm:$0xff] %v4334
    %4367 = vst [vmem:[#allocation3 + $0x888] sm:$0xff] %v4335
    %4368 = vst [vmem:[#allocation3 + $0x8d0] sm:$0xff] %v4336
    %v4369 = vld [vmem:[%s194 + $0x1] sm:$0xff]
    %v4370 = vld [vmem:[%s194 + $0x9] sm:$0xff]
    %v4371 = vld [vmem:[%s194 + $0x19] sm:$0xff]
    %v4372 = vld [vmem:[%s194 + $0x21] sm:$0xff]
    %v4373 = vld [vmem:[%s194 + $0x31] sm:$0xff]
    %v4374 = vld [vmem:[%s194 + $0x39] sm:$0xff]
    %v4375 = vld [vmem:[%s194 + $0x49] sm:$0xff]
    %v4376 = vld [vmem:[%s194 + $0x51] sm:$0xff]
    %v4377 = vld [vmem:[%s194 + $0x61] sm:$0xff]
    %v4378 = vld [vmem:[%s194 + $0x69] sm:$0xff]
    %v4379 = vld [vmem:[%s194 + $0x79] sm:$0xff]
    %v4380 = vld [vmem:[%s194 + $0x81] sm:$0xff]
    %v4381 = vld [vmem:[%s194 + $0x91] sm:$0xff]
    %v4382 = vld [vmem:[%s194 + $0x99] sm:$0xff]
    %v4383 = vld [vmem:[%s194 + $0xa9] sm:$0xff]
    %v4384 = vld [vmem:[%s194 + $0xb1] sm:$0xff]
    %v4385 = vld [vmem:[%s194 + $0xc1] sm:$0xff]
    %v4386 = vld [vmem:[%s194 + $0xc9] sm:$0xff]
    %v4387 = vld [vmem:[%s194 + $0xd9] sm:$0xff]
    %v4388 = vld [vmem:[%s194 + $0xe1] sm:$0xff]
    %v4389 = vld [vmem:[%s194 + $0xf1] sm:$0xff]
    %v4390 = vld [vmem:[%s194 + $0xf9] sm:$0xff]
    %v4391 = vld [vmem:[%s194 + $0x109] sm:$0xff]
    %v4392 = vld [vmem:[%s194 + $0x111] sm:$0xff]
    %v4393 = vld [vmem:[%s194 + $0x121] sm:$0xff]
    %v4394 = vld [vmem:[%s194 + $0x129] sm:$0xff]
    %v4395 = vld [vmem:[%s194 + $0x139] sm:$0xff]
    %v4396 = vld [vmem:[%s194 + $0x141] sm:$0xff]
    %v4397 = vld [vmem:[%s194 + $0x151] sm:$0xff]
    %v4398 = vld [vmem:[%s194 + $0x159] sm:$0xff]
    %v4399 = vld [vmem:[%s194 + $0x169] sm:$0xff]
    %v4400 = vld [vmem:[%s194 + $0x171] sm:$0xff]
    %v4401 = vld [vmem:[%s194 + $0x1b1] sm:$0xff]
    %v4402 = vld [vmem:[%s194 + $0x1b9] sm:$0xff]
    %v4403 = vld [vmem:[%s194 + $0x1c9] sm:$0xff]
    %v4404 = vld [vmem:[%s194 + $0x1d1] sm:$0xff]
    %v4405 = vld [vmem:[%s194 + $0x1e1] sm:$0xff]
    %v4406 = vld [vmem:[%s194 + $0x1e9] sm:$0xff]
    %v4407 = vld [vmem:[%s194 + $0x1f9] sm:$0xff]
    %v4408 = vld [vmem:[%s194 + $0x201] sm:$0xff]
    %v4409 = vld [vmem:[%s194 + $0x211] sm:$0xff]
    %v4410 = vld [vmem:[%s194 + $0x219] sm:$0xff]
    %v4411 = vld [vmem:[%s194 + $0x229] sm:$0xff]
    %v4412 = vld [vmem:[%s194 + $0x231] sm:$0xff]
    %v4413 = vld [vmem:[%s194 + $0x241] sm:$0xff]
    %v4414 = vld [vmem:[%s194 + $0x249] sm:$0xff]
    %v4415 = vld [vmem:[%s194 + $0x259] sm:$0xff]
    %v4416 = vld [vmem:[%s194 + $0x261] sm:$0xff]
    %v4417 = vld [vmem:[%s194 + $0x271] sm:$0xff]
    %v4418 = vld [vmem:[%s194 + $0x279] sm:$0xff]
    %v4419 = vld [vmem:[%s194 + $0x289] sm:$0xff]
    %v4420 = vld [vmem:[%s194 + $0x291] sm:$0xff]
    %v4421 = vld [vmem:[%s194 + $0x2a1] sm:$0xff]
    %v4422 = vld [vmem:[%s194 + $0x2a9] sm:$0xff]
    %v4423 = vld [vmem:[%s194 + $0x2b9] sm:$0xff]
    %v4424 = vld [vmem:[%s194 + $0x2c1] sm:$0xff]
    %v4425 = vld [vmem:[%s194 + $0x2d1] sm:$0xff]
    %v4426 = vld [vmem:[%s194 + $0x2d9] sm:$0xff]
    %v4427 = vld [vmem:[%s194 + $0x2e9] sm:$0xff]
    %v4428 = vld [vmem:[%s194 + $0x2f1] sm:$0xff]
    %v4429 = vld [vmem:[%s194 + $0x301] sm:$0xff]
    %v4430 = vld [vmem:[%s194 + $0x309] sm:$0xff]
    %v4431 = vld [vmem:[%s194 + $0x319] sm:$0xff]
    %v4432 = vld [vmem:[%s194 + $0x321] sm:$0xff]
    %v4433 = vpack.c.bf16 %v4370, %v4369
    %v4434 = vpack.c.bf16 %v4372, %v4371
    %v4435 = vpack.c.bf16 %v4374, %v4373
    %v4436 = vpack.c.bf16 %v4376, %v4375
    %v4437 = vpack.c.bf16 %v4378, %v4377
    %v4438 = vpack.c.bf16 %v4380, %v4379
    %v4439 = vpack.c.bf16 %v4382, %v4381
    %v4440 = vpack.c.bf16 %v4384, %v4383
    %v4441 = vpack.c.bf16 %v4386, %v4385
    %v4442 = vpack.c.bf16 %v4388, %v4387
    %v4443 = vpack.c.bf16 %v4390, %v4389
    %v4444 = vpack.c.bf16 %v4392, %v4391
    %v4445 = vpack.c.bf16 %v4394, %v4393
    %v4446 = vpack.c.bf16 %v4396, %v4395
    %v4447 = vpack.c.bf16 %v4398, %v4397
    %v4448 = vpack.c.bf16 %v4400, %v4399
    %v4449 = vpack.c.bf16 %v4402, %v4401
    %v4450 = vpack.c.bf16 %v4404, %v4403
    %v4451 = vpack.c.bf16 %v4406, %v4405
    %v4452 = vpack.c.bf16 %v4408, %v4407
    %v4453 = vpack.c.bf16 %v4410, %v4409
    %v4454 = vpack.c.bf16 %v4412, %v4411
    %v4455 = vpack.c.bf16 %v4414, %v4413
    %v4456 = vpack.c.bf16 %v4416, %v4415
    %v4457 = vpack.c.bf16 %v4418, %v4417
    %v4458 = vpack.c.bf16 %v4420, %v4419
    %v4459 = vpack.c.bf16 %v4422, %v4421
    %v4460 = vpack.c.bf16 %v4424, %v4423
    %v4461 = vpack.c.bf16 %v4426, %v4425
    %v4462 = vpack.c.bf16 %v4428, %v4427
    %v4463 = vpack.c.bf16 %v4430, %v4429
    %v4464 = vpack.c.bf16 %v4432, %v4431
    %4465 = vst [vmem:[#allocation3 + $0x20] sm:$0xff] %v4433
    %4466 = vst [vmem:[#allocation3 + $0x68] sm:$0xff] %v4434
    %4467 = vst [vmem:[#allocation3 + $0xb0] sm:$0xff] %v4435
    %4468 = vst [vmem:[#allocation3 + $0xf8] sm:$0xff] %v4436
    %4469 = vst [vmem:[#allocation3 + $0x140] sm:$0xff] %v4437
    %4470 = vst [vmem:[#allocation3 + $0x188] sm:$0xff] %v4438
    %4471 = vst [vmem:[#allocation3 + $0x1d0] sm:$0xff] %v4439
    %4472 = vst [vmem:[#allocation3 + $0x218] sm:$0xff] %v4440
    %4473 = vst [vmem:[#allocation3 + $0x260] sm:$0xff] %v4441
    %4474 = vst [vmem:[#allocation3 + $0x2a8] sm:$0xff] %v4442
    %4475 = vst [vmem:[#allocation3 + $0x2f0] sm:$0xff] %v4443
    %4476 = vst [vmem:[#allocation3 + $0x338] sm:$0xff] %v4444
    %4477 = vst [vmem:[#allocation3 + $0x380] sm:$0xff] %v4445
    %4478 = vst [vmem:[#allocation3 + $0x3c8] sm:$0xff] %v4446
    %4479 = vst [vmem:[#allocation3 + $0x410] sm:$0xff] %v4447
    %4480 = vst [vmem:[#allocation3 + $0x458] sm:$0xff] %v4448
    %4481 = vst [vmem:[#allocation3 + $0x4a0] sm:$0xff] %v4449
    %4482 = vst [vmem:[#allocation3 + $0x4e8] sm:$0xff] %v4450
    %4483 = vst [vmem:[#allocation3 + $0x530] sm:$0xff] %v4451
    %4484 = vst [vmem:[#allocation3 + $0x578] sm:$0xff] %v4452
    %4485 = vst [vmem:[#allocation3 + $0x5c0] sm:$0xff] %v4453
    %4486 = vst [vmem:[#allocation3 + $0x608] sm:$0xff] %v4454
    %4487 = vst [vmem:[#allocation3 + $0x650] sm:$0xff] %v4455
    %4488 = vst [vmem:[#allocation3 + $0x698] sm:$0xff] %v4456
    %4489 = vst [vmem:[#allocation3 + $0x6e0] sm:$0xff] %v4457
    %4490 = vst [vmem:[#allocation3 + $0x728] sm:$0xff] %v4458
    %4491 = vst [vmem:[#allocation3 + $0x770] sm:$0xff] %v4459
    %4492 = vst [vmem:[#allocation3 + $0x7b8] sm:$0xff] %v4460
    %4493 = vst [vmem:[#allocation3 + $0x800] sm:$0xff] %v4461
    %4494 = vst [vmem:[#allocation3 + $0x848] sm:$0xff] %v4462
    %4495 = vst [vmem:[#allocation3 + $0x890] sm:$0xff] %v4463
    %4496 = vst [vmem:[#allocation3 + $0x8d8] sm:$0xff] %v4464
    %v4497 = vld [vmem:[%s194 + $0x2] sm:$0xff]
    %v4498 = vld [vmem:[%s194 + $0xa] sm:$0xff]
    %v4499 = vld [vmem:[%s194 + $0x1a] sm:$0xff]
    %v4500 = vld [vmem:[%s194 + $0x22] sm:$0xff]
    %v4501 = vld [vmem:[%s194 + $0x32] sm:$0xff]
    %v4502 = vld [vmem:[%s194 + $0x3a] sm:$0xff]
    %v4503 = vld [vmem:[%s194 + $0x4a] sm:$0xff]
    %v4504 = vld [vmem:[%s194 + $0x52] sm:$0xff]
    %v4505 = vld [vmem:[%s194 + $0x62] sm:$0xff]
    %v4506 = vld [vmem:[%s194 + $0x6a] sm:$0xff]
    %v4507 = vld [vmem:[%s194 + $0x7a] sm:$0xff]
    %v4508 = vld [vmem:[%s194 + $0x82] sm:$0xff]
    %v4509 = vld [vmem:[%s194 + $0x92] sm:$0xff]
    %v4510 = vld [vmem:[%s194 + $0x9a] sm:$0xff]
    %v4511 = vld [vmem:[%s194 + $0xaa] sm:$0xff]
    %v4512 = vld [vmem:[%s194 + $0xb2] sm:$0xff]
    %v4513 = vld [vmem:[%s194 + $0xc2] sm:$0xff]
    %v4514 = vld [vmem:[%s194 + $0xca] sm:$0xff]
    %v4515 = vld [vmem:[%s194 + $0xda] sm:$0xff]
    %v4516 = vld [vmem:[%s194 + $0xe2] sm:$0xff]
    %v4517 = vld [vmem:[%s194 + $0xf2] sm:$0xff]
    %v4518 = vld [vmem:[%s194 + $0xfa] sm:$0xff]
    %v4519 = vld [vmem:[%s194 + $0x10a] sm:$0xff]
    %v4520 = vld [vmem:[%s194 + $0x112] sm:$0xff]
    %v4521 = vld [vmem:[%s194 + $0x122] sm:$0xff]
    %v4522 = vld [vmem:[%s194 + $0x12a] sm:$0xff]
    %v4523 = vld [vmem:[%s194 + $0x13a] sm:$0xff]
    %v4524 = vld [vmem:[%s194 + $0x142] sm:$0xff]
    %v4525 = vld [vmem:[%s194 + $0x152] sm:$0xff]
    %v4526 = vld [vmem:[%s194 + $0x15a] sm:$0xff]
    %v4527 = vld [vmem:[%s194 + $0x16a] sm:$0xff]
    %v4528 = vld [vmem:[%s194 + $0x172] sm:$0xff]
    %v4529 = vld [vmem:[%s194 + $0x1b2] sm:$0xff]
    %v4530 = vld [vmem:[%s194 + $0x1ba] sm:$0xff]
    %v4531 = vld [vmem:[%s194 + $0x1ca] sm:$0xff]
    %v4532 = vld [vmem:[%s194 + $0x1d2] sm:$0xff]
    %v4533 = vld [vmem:[%s194 + $0x1e2] sm:$0xff]
    %v4534 = vld [vmem:[%s194 + $0x1ea] sm:$0xff]
    %v4535 = vld [vmem:[%s194 + $0x1fa] sm:$0xff]
    %v4536 = vld [vmem:[%s194 + $0x202] sm:$0xff]
    %v4537 = vld [vmem:[%s194 + $0x212] sm:$0xff]
    %v4538 = vld [vmem:[%s194 + $0x21a] sm:$0xff]
    %v4539 = vld [vmem:[%s194 + $0x22a] sm:$0xff]
    %v4540 = vld [vmem:[%s194 + $0x232] sm:$0xff]
    %v4541 = vld [vmem:[%s194 + $0x242] sm:$0xff]
    %v4542 = vld [vmem:[%s194 + $0x24a] sm:$0xff]
    %v4543 = vld [vmem:[%s194 + $0x25a] sm:$0xff]
    %v4544 = vld [vmem:[%s194 + $0x262] sm:$0xff]
    %v4545 = vld [vmem:[%s194 + $0x272] sm:$0xff]
    %v4546 = vld [vmem:[%s194 + $0x27a] sm:$0xff]
    %v4547 = vld [vmem:[%s194 + $0x28a] sm:$0xff]
    %v4548 = vld [vmem:[%s194 + $0x292] sm:$0xff]
    %v4549 = vld [vmem:[%s194 + $0x2a2] sm:$0xff]
    %v4550 = vld [vmem:[%s194 + $0x2aa] sm:$0xff]
    %v4551 = vld [vmem:[%s194 + $0x2ba] sm:$0xff]
    %v4552 = vld [vmem:[%s194 + $0x2c2] sm:$0xff]
    %v4553 = vld [vmem:[%s194 + $0x2d2] sm:$0xff]
    %v4554 = vld [vmem:[%s194 + $0x2da] sm:$0xff]
    %v4555 = vld [vmem:[%s194 + $0x2ea] sm:$0xff]
    %v4556 = vld [vmem:[%s194 + $0x2f2] sm:$0xff]
    %v4557 = vld [vmem:[%s194 + $0x302] sm:$0xff]
    %v4558 = vld [vmem:[%s194 + $0x30a] sm:$0xff]
    %v4559 = vld [vmem:[%s194 + $0x31a] sm:$0xff]
    %v4560 = vld [vmem:[%s194 + $0x322] sm:$0xff]
    %v4561 = vpack.c.bf16 %v4498, %v4497
    %v4562 = vpack.c.bf16 %v4500, %v4499
    %v4563 = vpack.c.bf16 %v4502, %v4501
    %v4564 = vpack.c.bf16 %v4504, %v4503
    %v4565 = vpack.c.bf16 %v4506, %v4505
    %v4566 = vpack.c.bf16 %v4508, %v4507
    %v4567 = vpack.c.bf16 %v4510, %v4509
    %v4568 = vpack.c.bf16 %v4512, %v4511
    %v4569 = vpack.c.bf16 %v4514, %v4513
    %v4570 = vpack.c.bf16 %v4516, %v4515
    %v4571 = vpack.c.bf16 %v4518, %v4517
    %v4572 = vpack.c.bf16 %v4520, %v4519
    %v4573 = vpack.c.bf16 %v4522, %v4521
    %v4574 = vpack.c.bf16 %v4524, %v4523
    %v4575 = vpack.c.bf16 %v4526, %v4525
    %v4576 = vpack.c.bf16 %v4528, %v4527
    %v4577 = vpack.c.bf16 %v4530, %v4529
    %v4578 = vpack.c.bf16 %v4532, %v4531
    %v4579 = vpack.c.bf16 %v4534, %v4533
    %v4580 = vpack.c.bf16 %v4536, %v4535
    %v4581 = vpack.c.bf16 %v4538, %v4537
    %v4582 = vpack.c.bf16 %v4540, %v4539
    %v4583 = vpack.c.bf16 %v4542, %v4541
    %v4584 = vpack.c.bf16 %v4544, %v4543
    %v4585 = vpack.c.bf16 %v4546, %v4545
    %v4586 = vpack.c.bf16 %v4548, %v4547
    %v4587 = vpack.c.bf16 %v4550, %v4549
    %v4588 = vpack.c.bf16 %v4552, %v4551
    %v4589 = vpack.c.bf16 %v4554, %v4553
    %v4590 = vpack.c.bf16 %v4556, %v4555
    %v4591 = vpack.c.bf16 %v4558, %v4557
    %v4592 = vpack.c.bf16 %v4560, %v4559
    %4593 = vst [vmem:[#allocation3 + $0x28] sm:$0xff] %v4561
    %4594 = vst [vmem:[#allocation3 + $0x70] sm:$0xff] %v4562
    %4595 = vst [vmem:[#allocation3 + $0xb8] sm:$0xff] %v4563
    %4596 = vst [vmem:[#allocation3 + $0x100] sm:$0xff] %v4564
    %4597 = vst [vmem:[#allocation3 + $0x148] sm:$0xff] %v4565
    %4598 = vst [vmem:[#allocation3 + $0x190] sm:$0xff] %v4566
    %4599 = vst [vmem:[#allocation3 + $0x1d8] sm:$0xff] %v4567
    %4600 = vst [vmem:[#allocation3 + $0x220] sm:$0xff] %v4568
    %4601 = vst [vmem:[#allocation3 + $0x268] sm:$0xff] %v4569
    %4602 = vst [vmem:[#allocation3 + $0x2b0] sm:$0xff] %v4570
    %4603 = vst [vmem:[#allocation3 + $0x2f8] sm:$0xff] %v4571
    %4604 = vst [vmem:[#allocation3 + $0x340] sm:$0xff] %v4572
    %4605 = vst [vmem:[#allocation3 + $0x388] sm:$0xff] %v4573
    %4606 = vst [vmem:[#allocation3 + $0x3d0] sm:$0xff] %v4574
    %4607 = vst [vmem:[#allocation3 + $0x418] sm:$0xff] %v4575
    %4608 = vst [vmem:[#allocation3 + $0x460] sm:$0xff] %v4576
    %4609 = vst [vmem:[#allocation3 + $0x4a8] sm:$0xff] %v4577
    %4610 = vst [vmem:[#allocation3 + $0x4f0] sm:$0xff] %v4578
    %4611 = vst [vmem:[#allocation3 + $0x538] sm:$0xff] %v4579
    %4612 = vst [vmem:[#allocation3 + $0x580] sm:$0xff] %v4580
    %4613 = vst [vmem:[#allocation3 + $0x5c8] sm:$0xff] %v4581
    %4614 = vst [vmem:[#allocation3 + $0x610] sm:$0xff] %v4582
    %4615 = vst [vmem:[#allocation3 + $0x658] sm:$0xff] %v4583
    %4616 = vst [vmem:[#allocation3 + $0x6a0] sm:$0xff] %v4584
    %4617 = vst [vmem:[#allocation3 + $0x6e8] sm:$0xff] %v4585
    %4618 = vst [vmem:[#allocation3 + $0x730] sm:$0xff] %v4586
    %4619 = vst [vmem:[#allocation3 + $0x778] sm:$0xff] %v4587
    %4620 = vst [vmem:[#allocation3 + $0x7c0] sm:$0xff] %v4588
    %4621 = vst [vmem:[#allocation3 + $0x808] sm:$0xff] %v4589
    %4622 = vst [vmem:[#allocation3 + $0x850] sm:$0xff] %v4590
    %4623 = vst [vmem:[#allocation3 + $0x898] sm:$0xff] %v4591
    %4624 = vst [vmem:[#allocation3 + $0x8e0] sm:$0xff] %v4592
    %v4625 = vld [vmem:[%s1028] sm:$0xff]
    %v4626 = vld [vmem:[%s1028 + $0x8] sm:$0xff]
    %v4627 = vld [vmem:[%s1028 + $0x18] sm:$0xff]
    %v4628 = vld [vmem:[%s1028 + $0x20] sm:$0xff]
    %v4629 = vld [vmem:[%s1028 + $0x30] sm:$0xff]
    %v4630 = vld [vmem:[%s1028 + $0x38] sm:$0xff]
    %v4631 = vld [vmem:[%s1028 + $0x48] sm:$0xff]
    %v4632 = vld [vmem:[%s1028 + $0x50] sm:$0xff]
    %v4633 = vld [vmem:[%s1028 + $0x60] sm:$0xff]
    %v4634 = vld [vmem:[%s1028 + $0x68] sm:$0xff]
    %v4635 = vld [vmem:[%s1028 + $0x78] sm:$0xff]
    %v4636 = vld [vmem:[%s1028 + $0x80] sm:$0xff]
    %v4637 = vld [vmem:[%s1028 + $0x90] sm:$0xff]
    %v4638 = vld [vmem:[%s1028 + $0x98] sm:$0xff]
    %v4639 = vld [vmem:[%s1028 + $0xa8] sm:$0xff]
    %v4640 = vld [vmem:[%s1028 + $0xb0] sm:$0xff]
    %v4641 = vld [vmem:[%s1028 + $0xc0] sm:$0xff]
    %v4642 = vld [vmem:[%s1028 + $0xc8] sm:$0xff]
    %v4643 = vld [vmem:[%s1028 + $0xd8] sm:$0xff]
    %v4644 = vld [vmem:[%s1028 + $0xe0] sm:$0xff]
    %v4645 = vld [vmem:[%s1028 + $0xf0] sm:$0xff]
    %v4646 = vld [vmem:[%s1028 + $0xf8] sm:$0xff]
    %v4647 = vld [vmem:[%s1028 + $0x108] sm:$0xff]
    %v4648 = vld [vmem:[%s1028 + $0x110] sm:$0xff]
    %v4649 = vld [vmem:[%s1028 + $0x120] sm:$0xff]
    %v4650 = vld [vmem:[%s1028 + $0x128] sm:$0xff]
    %v4651 = vld [vmem:[%s1028 + $0x138] sm:$0xff]
    %v4652 = vld [vmem:[%s1028 + $0x140] sm:$0xff]
    %v4653 = vld [vmem:[%s1028 + $0x150] sm:$0xff]
    %v4654 = vld [vmem:[%s1028 + $0x158] sm:$0xff]
    %v4655 = vld [vmem:[%s1028 + $0x168] sm:$0xff]
    %v4656 = vld [vmem:[%s1028 + $0x170] sm:$0xff]
    %v4657 = vld [vmem:[%s1028 + $0x1b0] sm:$0xff]
    %v4658 = vld [vmem:[%s1028 + $0x1b8] sm:$0xff]
    %v4659 = vld [vmem:[%s1028 + $0x1c8] sm:$0xff]
    %v4660 = vld [vmem:[%s1028 + $0x1d0] sm:$0xff]
    %v4661 = vld [vmem:[%s1028 + $0x1e0] sm:$0xff]
    %v4662 = vld [vmem:[%s1028 + $0x1e8] sm:$0xff]
    %v4663 = vld [vmem:[%s1028 + $0x1f8] sm:$0xff]
    %v4664 = vld [vmem:[%s1028 + $0x200] sm:$0xff]
    %v4665 = vld [vmem:[%s1028 + $0x210] sm:$0xff]
    %v4666 = vld [vmem:[%s1028 + $0x218] sm:$0xff]
    %v4667 = vld [vmem:[%s1028 + $0x228] sm:$0xff]
    %v4668 = vld [vmem:[%s1028 + $0x230] sm:$0xff]
    %v4669 = vld [vmem:[%s1028 + $0x240] sm:$0xff]
    %v4670 = vld [vmem:[%s1028 + $0x248] sm:$0xff]
    %v4671 = vld [vmem:[%s1028 + $0x258] sm:$0xff]
    %v4672 = vld [vmem:[%s1028 + $0x260] sm:$0xff]
    %v4673 = vld [vmem:[%s1028 + $0x270] sm:$0xff]
    %v4674 = vld [vmem:[%s1028 + $0x278] sm:$0xff]
    %v4675 = vld [vmem:[%s1028 + $0x288] sm:$0xff]
    %v4676 = vld [vmem:[%s1028 + $0x290] sm:$0xff]
    %v4677 = vld [vmem:[%s1028 + $0x2a0] sm:$0xff]
    %v4678 = vld [vmem:[%s1028 + $0x2a8] sm:$0xff]
    %v4679 = vld [vmem:[%s1028 + $0x2b8] sm:$0xff]
    %v4680 = vld [vmem:[%s1028 + $0x2c0] sm:$0xff]
    %v4681 = vld [vmem:[%s1028 + $0x2d0] sm:$0xff]
    %v4682 = vld [vmem:[%s1028 + $0x2d8] sm:$0xff]
    %v4683 = vld [vmem:[%s1028 + $0x2e8] sm:$0xff]
    %v4684 = vld [vmem:[%s1028 + $0x2f0] sm:$0xff]
    %v4685 = vld [vmem:[%s1028 + $0x300] sm:$0xff]
    %v4686 = vld [vmem:[%s1028 + $0x308] sm:$0xff]
    %v4687 = vld [vmem:[%s1028 + $0x318] sm:$0xff]
    %v4688 = vld [vmem:[%s1028 + $0x320] sm:$0xff]
    %v4689 = vpack.c.bf16 %v4626, %v4625
    %v4690 = vpack.c.bf16 %v4628, %v4627
    %v4691 = vpack.c.bf16 %v4630, %v4629
    %v4692 = vpack.c.bf16 %v4632, %v4631
    %v4693 = vpack.c.bf16 %v4634, %v4633
    %v4694 = vpack.c.bf16 %v4636, %v4635
    %v4695 = vpack.c.bf16 %v4638, %v4637
    %v4696 = vpack.c.bf16 %v4640, %v4639
    %v4697 = vpack.c.bf16 %v4642, %v4641
    %v4698 = vpack.c.bf16 %v4644, %v4643
    %v4699 = vpack.c.bf16 %v4646, %v4645
    %v4700 = vpack.c.bf16 %v4648, %v4647
    %v4701 = vpack.c.bf16 %v4650, %v4649
    %v4702 = vpack.c.bf16 %v4652, %v4651
    %v4703 = vpack.c.bf16 %v4654, %v4653
    %v4704 = vpack.c.bf16 %v4656, %v4655
    %v4705 = vpack.c.bf16 %v4658, %v4657
    %v4706 = vpack.c.bf16 %v4660, %v4659
    %v4707 = vpack.c.bf16 %v4662, %v4661
    %v4708 = vpack.c.bf16 %v4664, %v4663
    %v4709 = vpack.c.bf16 %v4666, %v4665
    %v4710 = vpack.c.bf16 %v4668, %v4667
    %v4711 = vpack.c.bf16 %v4670, %v4669
    %v4712 = vpack.c.bf16 %v4672, %v4671
    %v4713 = vpack.c.bf16 %v4674, %v4673
    %v4714 = vpack.c.bf16 %v4676, %v4675
    %v4715 = vpack.c.bf16 %v4678, %v4677
    %v4716 = vpack.c.bf16 %v4680, %v4679
    %v4717 = vpack.c.bf16 %v4682, %v4681
    %v4718 = vpack.c.bf16 %v4684, %v4683
    %v4719 = vpack.c.bf16 %v4686, %v4685
    %v4720 = vpack.c.bf16 %v4688, %v4687
    %4721 = vst [vmem:[#allocation3 + $0x30] sm:$0xff] %v4689
    %4722 = vst [vmem:[#allocation3 + $0x78] sm:$0xff] %v4690
    %4723 = vst [vmem:[#allocation3 + $0xc0] sm:$0xff] %v4691
    %4724 = vst [vmem:[#allocation3 + $0x108] sm:$0xff] %v4692
    %4725 = vst [vmem:[#allocation3 + $0x150] sm:$0xff] %v4693
    %4726 = vst [vmem:[#allocation3 + $0x198] sm:$0xff] %v4694
    %4727 = vst [vmem:[#allocation3 + $0x1e0] sm:$0xff] %v4695
    %4728 = vst [vmem:[#allocation3 + $0x228] sm:$0xff] %v4696
    %4729 = vst [vmem:[#allocation3 + $0x270] sm:$0xff] %v4697
    %4730 = vst [vmem:[#allocation3 + $0x2b8] sm:$0xff] %v4698
    %4731 = vst [vmem:[#allocation3 + $0x300] sm:$0xff] %v4699
    %4732 = vst [vmem:[#allocation3 + $0x348] sm:$0xff] %v4700
    %4733 = vst [vmem:[#allocation3 + $0x390] sm:$0xff] %v4701
    %4734 = vst [vmem:[#allocation3 + $0x3d8] sm:$0xff] %v4702
    %4735 = vst [vmem:[#allocation3 + $0x420] sm:$0xff] %v4703
    %4736 = vst [vmem:[#allocation3 + $0x468] sm:$0xff] %v4704
    %4737 = vst [vmem:[#allocation3 + $0x4b0] sm:$0xff] %v4705
    %4738 = vst [vmem:[#allocation3 + $0x4f8] sm:$0xff] %v4706
    %4739 = vst [vmem:[#allocation3 + $0x540] sm:$0xff] %v4707
    %4740 = vst [vmem:[#allocation3 + $0x588] sm:$0xff] %v4708
    %4741 = vst [vmem:[#allocation3 + $0x5d0] sm:$0xff] %v4709
    %4742 = vst [vmem:[#allocation3 + $0x618] sm:$0xff] %v4710
    %4743 = vst [vmem:[#allocation3 + $0x660] sm:$0xff] %v4711
    %4744 = vst [vmem:[#allocation3 + $0x6a8] sm:$0xff] %v4712
    %4745 = vst [vmem:[#allocation3 + $0x6f0] sm:$0xff] %v4713
    %4746 = vst [vmem:[#allocation3 + $0x738] sm:$0xff] %v4714
    %4747 = vst [vmem:[#allocation3 + $0x780] sm:$0xff] %v4715
    %4748 = vst [vmem:[#allocation3 + $0x7c8] sm:$0xff] %v4716
    %4749 = vst [vmem:[#allocation3 + $0x810] sm:$0xff] %v4717
    %4750 = vst [vmem:[#allocation3 + $0x858] sm:$0xff] %v4718
    %4751 = vst [vmem:[#allocation3 + $0x8a0] sm:$0xff] %v4719
    %4752 = vst [vmem:[#allocation3 + $0x8e8] sm:$0xff] %v4720
    %v4753 = vld [vmem:[%s1028 + $0x1] sm:$0xff]
    %v4754 = vld [vmem:[%s1028 + $0x9] sm:$0xff]
    %v4755 = vld [vmem:[%s1028 + $0x19] sm:$0xff]
    %v4756 = vld [vmem:[%s1028 + $0x21] sm:$0xff]
    %v4757 = vld [vmem:[%s1028 + $0x31] sm:$0xff]
    %v4758 = vld [vmem:[%s1028 + $0x39] sm:$0xff]
    %v4759 = vld [vmem:[%s1028 + $0x49] sm:$0xff]
    %v4760 = vld [vmem:[%s1028 + $0x51] sm:$0xff]
    %v4761 = vld [vmem:[%s1028 + $0x61] sm:$0xff]
    %v4762 = vld [vmem:[%s1028 + $0x69] sm:$0xff]
    %v4763 = vld [vmem:[%s1028 + $0x79] sm:$0xff]
    %v4764 = vld [vmem:[%s1028 + $0x81] sm:$0xff]
    %v4765 = vld [vmem:[%s1028 + $0x91] sm:$0xff]
    %v4766 = vld [vmem:[%s1028 + $0x99] sm:$0xff]
    %v4767 = vld [vmem:[%s1028 + $0xa9] sm:$0xff]
    %v4768 = vld [vmem:[%s1028 + $0xb1] sm:$0xff]
    %v4769 = vld [vmem:[%s1028 + $0xc1] sm:$0xff]
    %v4770 = vld [vmem:[%s1028 + $0xc9] sm:$0xff]
    %v4771 = vld [vmem:[%s1028 + $0xd9] sm:$0xff]
    %v4772 = vld [vmem:[%s1028 + $0xe1] sm:$0xff]
    %v4773 = vld [vmem:[%s1028 + $0xf1] sm:$0xff]
    %v4774 = vld [vmem:[%s1028 + $0xf9] sm:$0xff]
    %v4775 = vld [vmem:[%s1028 + $0x109] sm:$0xff]
    %v4776 = vld [vmem:[%s1028 + $0x111] sm:$0xff]
    %v4777 = vld [vmem:[%s1028 + $0x121] sm:$0xff]
    %v4778 = vld [vmem:[%s1028 + $0x129] sm:$0xff]
    %v4779 = vld [vmem:[%s1028 + $0x139] sm:$0xff]
    %v4780 = vld [vmem:[%s1028 + $0x141] sm:$0xff]
    %v4781 = vld [vmem:[%s1028 + $0x151] sm:$0xff]
    %v4782 = vld [vmem:[%s1028 + $0x159] sm:$0xff]
    %v4783 = vld [vmem:[%s1028 + $0x169] sm:$0xff]
    %v4784 = vld [vmem:[%s1028 + $0x171] sm:$0xff]
    %v4785 = vld [vmem:[%s1028 + $0x1b1] sm:$0xff]
    %v4786 = vld [vmem:[%s1028 + $0x1b9] sm:$0xff]
    %v4787 = vld [vmem:[%s1028 + $0x1c9] sm:$0xff]
    %v4788 = vld [vmem:[%s1028 + $0x1d1] sm:$0xff]
    %v4789 = vld [vmem:[%s1028 + $0x1e1] sm:$0xff]
    %v4790 = vld [vmem:[%s1028 + $0x1e9] sm:$0xff]
    %v4791 = vld [vmem:[%s1028 + $0x1f9] sm:$0xff]
    %v4792 = vld [vmem:[%s1028 + $0x201] sm:$0xff]
    %v4793 = vld [vmem:[%s1028 + $0x211] sm:$0xff]
    %v4794 = vld [vmem:[%s1028 + $0x219] sm:$0xff]
    %v4795 = vld [vmem:[%s1028 + $0x229] sm:$0xff]
    %v4796 = vld [vmem:[%s1028 + $0x231] sm:$0xff]
    %v4797 = vld [vmem:[%s1028 + $0x241] sm:$0xff]
    %v4798 = vld [vmem:[%s1028 + $0x249] sm:$0xff]
    %v4799 = vld [vmem:[%s1028 + $0x259] sm:$0xff]
    %v4800 = vld [vmem:[%s1028 + $0x261] sm:$0xff]
    %v4801 = vld [vmem:[%s1028 + $0x271] sm:$0xff]
    %v4802 = vld [vmem:[%s1028 + $0x279] sm:$0xff]
    %v4803 = vld [vmem:[%s1028 + $0x289] sm:$0xff]
    %v4804 = vld [vmem:[%s1028 + $0x291] sm:$0xff]
    %v4805 = vld [vmem:[%s1028 + $0x2a1] sm:$0xff]
    %v4806 = vld [vmem:[%s1028 + $0x2a9] sm:$0xff]
    %v4807 = vld [vmem:[%s1028 + $0x2b9] sm:$0xff]
    %v4808 = vld [vmem:[%s1028 + $0x2c1] sm:$0xff]
    %v4809 = vld [vmem:[%s1028 + $0x2d1] sm:$0xff]
    %v4810 = vld [vmem:[%s1028 + $0x2d9] sm:$0xff]
    %v4811 = vld [vmem:[%s1028 + $0x2e9] sm:$0xff]
    %v4812 = vld [vmem:[%s1028 + $0x2f1] sm:$0xff]
    %v4813 = vld [vmem:[%s1028 + $0x301] sm:$0xff]
    %v4814 = vld [vmem:[%s1028 + $0x309] sm:$0xff]
    %v4815 = vld [vmem:[%s1028 + $0x319] sm:$0xff]
    %v4816 = vld [vmem:[%s1028 + $0x321] sm:$0xff]
    %v4817 = vpack.c.bf16 %v4754, %v4753
    %v4818 = vpack.c.bf16 %v4756, %v4755
    %v4819 = vpack.c.bf16 %v4758, %v4757
    %v4820 = vpack.c.bf16 %v4760, %v4759
    %v4821 = vpack.c.bf16 %v4762, %v4761
    %v4822 = vpack.c.bf16 %v4764, %v4763
    %v4823 = vpack.c.bf16 %v4766, %v4765
    %v4824 = vpack.c.bf16 %v4768, %v4767
    %v4825 = vpack.c.bf16 %v4770, %v4769
    %v4826 = vpack.c.bf16 %v4772, %v4771
    %v4827 = vpack.c.bf16 %v4774, %v4773
    %v4828 = vpack.c.bf16 %v4776, %v4775
    %v4829 = vpack.c.bf16 %v4778, %v4777
    %v4830 = vpack.c.bf16 %v4780, %v4779
    %v4831 = vpack.c.bf16 %v4782, %v4781
    %v4832 = vpack.c.bf16 %v4784, %v4783
    %v4833 = vpack.c.bf16 %v4786, %v4785
    %v4834 = vpack.c.bf16 %v4788, %v4787
    %v4835 = vpack.c.bf16 %v4790, %v4789
    %v4836 = vpack.c.bf16 %v4792, %v4791
    %v4837 = vpack.c.bf16 %v4794, %v4793
    %v4838 = vpack.c.bf16 %v4796, %v4795
    %v4839 = vpack.c.bf16 %v4798, %v4797
    %v4840 = vpack.c.bf16 %v4800, %v4799
    %v4841 = vpack.c.bf16 %v4802, %v4801
    %v4842 = vpack.c.bf16 %v4804, %v4803
    %v4843 = vpack.c.bf16 %v4806, %v4805
    %v4844 = vpack.c.bf16 %v4808, %v4807
    %v4845 = vpack.c.bf16 %v4810, %v4809
    %v4846 = vpack.c.bf16 %v4812, %v4811
    %v4847 = vpack.c.bf16 %v4814, %v4813
    %v4848 = vpack.c.bf16 %v4816, %v4815
    %4849 = vst [vmem:[#allocation3 + $0x38] sm:$0xff] %v4817
    %4850 = vst [vmem:[#allocation3 + $0x80] sm:$0xff] %v4818
    %4851 = vst [vmem:[#allocation3 + $0xc8] sm:$0xff] %v4819
    %4852 = vst [vmem:[#allocation3 + $0x110] sm:$0xff] %v4820
    %4853 = vst [vmem:[#allocation3 + $0x158] sm:$0xff] %v4821
    %4854 = vst [vmem:[#allocation3 + $0x1a0] sm:$0xff] %v4822
    %4855 = vst [vmem:[#allocation3 + $0x1e8] sm:$0xff] %v4823
    %4856 = vst [vmem:[#allocation3 + $0x230] sm:$0xff] %v4824
    %4857 = vst [vmem:[#allocation3 + $0x278] sm:$0xff] %v4825
    %4858 = vst [vmem:[#allocation3 + $0x2c0] sm:$0xff] %v4826
    %4859 = vst [vmem:[#allocation3 + $0x308] sm:$0xff] %v4827
    %4860 = vst [vmem:[#allocation3 + $0x350] sm:$0xff] %v4828
    %4861 = vst [vmem:[#allocation3 + $0x398] sm:$0xff] %v4829
    %4862 = vst [vmem:[#allocation3 + $0x3e0] sm:$0xff] %v4830
    %4863 = vst [vmem:[#allocation3 + $0x428] sm:$0xff] %v4831
    %4864 = vst [vmem:[#allocation3 + $0x470] sm:$0xff] %v4832
    %4865 = vst [vmem:[#allocation3 + $0x4b8] sm:$0xff] %v4833
    %4866 = vst [vmem:[#allocation3 + $0x500] sm:$0xff] %v4834
    %4867 = vst [vmem:[#allocation3 + $0x548] sm:$0xff] %v4835
    %4868 = vst [vmem:[#allocation3 + $0x590] sm:$0xff] %v4836
    %4869 = vst [vmem:[#allocation3 + $0x5d8] sm:$0xff] %v4837
    %4870 = vst [vmem:[#allocation3 + $0x620] sm:$0xff] %v4838
    %4871 = vst [vmem:[#allocation3 + $0x668] sm:$0xff] %v4839
    %4872 = vst [vmem:[#allocation3 + $0x6b0] sm:$0xff] %v4840
    %4873 = vst [vmem:[#allocation3 + $0x6f8] sm:$0xff] %v4841
    %4874 = vst [vmem:[#allocation3 + $0x740] sm:$0xff] %v4842
    %4875 = vst [vmem:[#allocation3 + $0x788] sm:$0xff] %v4843
    %4876 = vst [vmem:[#allocation3 + $0x7d0] sm:$0xff] %v4844
    %4877 = vst [vmem:[#allocation3 + $0x818] sm:$0xff] %v4845
    %4878 = vst [vmem:[#allocation3 + $0x860] sm:$0xff] %v4846
    %4879 = vst [vmem:[#allocation3 + $0x8a8] sm:$0xff] %v4847
    %4880 = vst [vmem:[#allocation3 + $0x8f0] sm:$0xff] %v4848
    %v4881 = vld [vmem:[%s1028 + $0x2] sm:$0xff]
    %v4882 = vld [vmem:[%s1028 + $0xa] sm:$0xff]
    %v4883 = vld [vmem:[%s1028 + $0x1a] sm:$0xff]
    %v4884 = vld [vmem:[%s1028 + $0x22] sm:$0xff]
    %v4885 = vld [vmem:[%s1028 + $0x32] sm:$0xff]
    %v4886 = vld [vmem:[%s1028 + $0x3a] sm:$0xff]
    %v4887 = vld [vmem:[%s1028 + $0x4a] sm:$0xff]
    %v4888 = vld [vmem:[%s1028 + $0x52] sm:$0xff]
    %v4889 = vld [vmem:[%s1028 + $0x62] sm:$0xff]
    %v4890 = vld [vmem:[%s1028 + $0x6a] sm:$0xff]
    %v4891 = vld [vmem:[%s1028 + $0x7a] sm:$0xff]
    %v4892 = vld [vmem:[%s1028 + $0x82] sm:$0xff]
    %v4893 = vld [vmem:[%s1028 + $0x92] sm:$0xff]
    %v4894 = vld [vmem:[%s1028 + $0x9a] sm:$0xff]
    %v4895 = vld [vmem:[%s1028 + $0xaa] sm:$0xff]
    %v4896 = vld [vmem:[%s1028 + $0xb2] sm:$0xff]
    %v4897 = vld [vmem:[%s1028 + $0xc2] sm:$0xff]
    %v4898 = vld [vmem:[%s1028 + $0xca] sm:$0xff]
    %v4899 = vld [vmem:[%s1028 + $0xda] sm:$0xff]
    %v4900 = vld [vmem:[%s1028 + $0xe2] sm:$0xff]
    %v4901 = vld [vmem:[%s1028 + $0xf2] sm:$0xff]
    %v4902 = vld [vmem:[%s1028 + $0xfa] sm:$0xff]
    %v4903 = vld [vmem:[%s1028 + $0x10a] sm:$0xff]
    %v4904 = vld [vmem:[%s1028 + $0x112] sm:$0xff]
    %v4905 = vld [vmem:[%s1028 + $0x122] sm:$0xff]
    %v4906 = vld [vmem:[%s1028 + $0x12a] sm:$0xff]
    %v4907 = vld [vmem:[%s1028 + $0x13a] sm:$0xff]
    %v4908 = vld [vmem:[%s1028 + $0x142] sm:$0xff]
    %v4909 = vld [vmem:[%s1028 + $0x152] sm:$0xff]
    %v4910 = vld [vmem:[%s1028 + $0x15a] sm:$0xff]
    %v4911 = vld [vmem:[%s1028 + $0x16a] sm:$0xff]
    %v4912 = vld [vmem:[%s1028 + $0x172] sm:$0xff]
    %v4913 = vld [vmem:[%s1028 + $0x1b2] sm:$0xff]
    %v4914 = vld [vmem:[%s1028 + $0x1ba] sm:$0xff]
    %v4915 = vld [vmem:[%s1028 + $0x1ca] sm:$0xff]
    %v4916 = vld [vmem:[%s1028 + $0x1d2] sm:$0xff]
    %v4917 = vld [vmem:[%s1028 + $0x1e2] sm:$0xff]
    %v4918 = vld [vmem:[%s1028 + $0x1ea] sm:$0xff]
    %v4919 = vld [vmem:[%s1028 + $0x1fa] sm:$0xff]
    %v4920 = vld [vmem:[%s1028 + $0x202] sm:$0xff]
    %v4921 = vld [vmem:[%s1028 + $0x212] sm:$0xff]
    %v4922 = vld [vmem:[%s1028 + $0x21a] sm:$0xff]
    %v4923 = vld [vmem:[%s1028 + $0x22a] sm:$0xff]
    %v4924 = vld [vmem:[%s1028 + $0x232] sm:$0xff]
    %v4925 = vld [vmem:[%s1028 + $0x242] sm:$0xff]
    %v4926 = vld [vmem:[%s1028 + $0x24a] sm:$0xff]
    %v4927 = vld [vmem:[%s1028 + $0x25a] sm:$0xff]
    %v4928 = vld [vmem:[%s1028 + $0x262] sm:$0xff]
    %v4929 = vld [vmem:[%s1028 + $0x272] sm:$0xff]
    %v4930 = vld [vmem:[%s1028 + $0x27a] sm:$0xff]
    %v4931 = vld [vmem:[%s1028 + $0x28a] sm:$0xff]
    %v4932 = vld [vmem:[%s1028 + $0x292] sm:$0xff]
    %v4933 = vld [vmem:[%s1028 + $0x2a2] sm:$0xff]
    %v4934 = vld [vmem:[%s1028 + $0x2aa] sm:$0xff]
    %v4935 = vld [vmem:[%s1028 + $0x2ba] sm:$0xff]
    %v4936 = vld [vmem:[%s1028 + $0x2c2] sm:$0xff]
    %v4937 = vld [vmem:[%s1028 + $0x2d2] sm:$0xff]
    %v4938 = vld [vmem:[%s1028 + $0x2da] sm:$0xff]
    %v4939 = vld [vmem:[%s1028 + $0x2ea] sm:$0xff]
    %v4940 = vld [vmem:[%s1028 + $0x2f2] sm:$0xff]
    %v4941 = vld [vmem:[%s1028 + $0x302] sm:$0xff]
    %v4942 = vld [vmem:[%s1028 + $0x30a] sm:$0xff]
    %v4943 = vld [vmem:[%s1028 + $0x31a] sm:$0xff]
    %v4944 = vld [vmem:[%s1028 + $0x322] sm:$0xff]
    %v4945 = vpack.c.bf16 %v4882, %v4881
    %v4946 = vpack.c.bf16 %v4884, %v4883
    %v4947 = vpack.c.bf16 %v4886, %v4885
    %v4948 = vpack.c.bf16 %v4888, %v4887
    %v4949 = vpack.c.bf16 %v4890, %v4889
    %v4950 = vpack.c.bf16 %v4892, %v4891
    %v4951 = vpack.c.bf16 %v4894, %v4893
    %v4952 = vpack.c.bf16 %v4896, %v4895
    %v4953 = vpack.c.bf16 %v4898, %v4897
    %v4954 = vpack.c.bf16 %v4900, %v4899
    %v4955 = vpack.c.bf16 %v4902, %v4901
    %v4956 = vpack.c.bf16 %v4904, %v4903
    %v4957 = vpack.c.bf16 %v4906, %v4905
    %v4958 = vpack.c.bf16 %v4908, %v4907
    %v4959 = vpack.c.bf16 %v4910, %v4909
    %v4960 = vpack.c.bf16 %v4912, %v4911
    %v4961 = vpack.c.bf16 %v4914, %v4913
    %v4962 = vpack.c.bf16 %v4916, %v4915
    %v4963 = vpack.c.bf16 %v4918, %v4917
    %v4964 = vpack.c.bf16 %v4920, %v4919
    %v4965 = vpack.c.bf16 %v4922, %v4921
    %v4966 = vpack.c.bf16 %v4924, %v4923
    %v4967 = vpack.c.bf16 %v4926, %v4925
    %v4968 = vpack.c.bf16 %v4928, %v4927
    %v4969 = vpack.c.bf16 %v4930, %v4929
    %v4970 = vpack.c.bf16 %v4932, %v4931
    %v4971 = vpack.c.bf16 %v4934, %v4933
    %v4972 = vpack.c.bf16 %v4936, %v4935
    %v4973 = vpack.c.bf16 %v4938, %v4937
    %v4974 = vpack.c.bf16 %v4940, %v4939
    %v4975 = vpack.c.bf16 %v4942, %v4941
    %v4976 = vpack.c.bf16 %v4944, %v4943
    %4977 = vst [vmem:[#allocation3 + $0x40] sm:$0xff] %v4945
    %4978 = vst [vmem:[#allocation3 + $0x88] sm:$0xff] %v4946
    %4979 = vst [vmem:[#allocation3 + $0xd0] sm:$0xff] %v4947
    %4980 = vst [vmem:[#allocation3 + $0x118] sm:$0xff] %v4948
    %4981 = vst [vmem:[#allocation3 + $0x160] sm:$0xff] %v4949
    %4982 = vst [vmem:[#allocation3 + $0x1a8] sm:$0xff] %v4950
    %4983 = vst [vmem:[#allocation3 + $0x1f0] sm:$0xff] %v4951
    %4984 = vst [vmem:[#allocation3 + $0x238] sm:$0xff] %v4952
    %4985 = vst [vmem:[#allocation3 + $0x280] sm:$0xff] %v4953
    %4986 = vst [vmem:[#allocation3 + $0x2c8] sm:$0xff] %v4954
    %4987 = vst [vmem:[#allocation3 + $0x310] sm:$0xff] %v4955
    %4988 = vst [vmem:[#allocation3 + $0x358] sm:$0xff] %v4956
    %4989 = vst [vmem:[#allocation3 + $0x3a0] sm:$0xff] %v4957
    %4990 = vst [vmem:[#allocation3 + $0x3e8] sm:$0xff] %v4958
    %4991 = vst [vmem:[#allocation3 + $0x430] sm:$0xff] %v4959
    %4992 = vst [vmem:[#allocation3 + $0x478] sm:$0xff] %v4960
    %4993 = vst [vmem:[#allocation3 + $0x4c0] sm:$0xff] %v4961
    %4994 = vst [vmem:[#allocation3 + $0x508] sm:$0xff] %v4962
    %4995 = vst [vmem:[#allocation3 + $0x550] sm:$0xff] %v4963
    %4996 = vst [vmem:[#allocation3 + $0x598] sm:$0xff] %v4964
    %4997 = vst [vmem:[#allocation3 + $0x5e0] sm:$0xff] %v4965
    %4998 = vst [vmem:[#allocation3 + $0x628] sm:$0xff] %v4966
    %4999 = vst [vmem:[#allocation3 + $0x670] sm:$0xff] %v4967
    %5000 = vst [vmem:[#allocation3 + $0x6b8] sm:$0xff] %v4968
    %5001 = vst [vmem:[#allocation3 + $0x700] sm:$0xff] %v4969
    %5002 = vst [vmem:[#allocation3 + $0x748] sm:$0xff] %v4970
    %5003 = vst [vmem:[#allocation3 + $0x790] sm:$0xff] %v4971
    %5004 = vst [vmem:[#allocation3 + $0x7d8] sm:$0xff] %v4972
    %5005 = vst [vmem:[#allocation3 + $0x820] sm:$0xff] %v4973
    %5006 = vst [vmem:[#allocation3 + $0x868] sm:$0xff] %v4974
    %5007 = vst [vmem:[#allocation3 + $0x8b0] sm:$0xff] %v4975
    %5008 = vst [vmem:[#allocation3 + $0x8f8] sm:$0xff] %v4976
    %v5009 = vld [vmem:[#allocation3] sm:$0xff]
    %v5010 = vld [vmem:[#allocation3 + $0x8] sm:$0xff]
    %v5011 = vld [vmem:[#allocation3 + $0x10] sm:$0xff]
    %v5012 = vld [vmem:[#allocation3 + $0x18] sm:$0xff]
    %v5013 = vld [vmem:[#allocation3 + $0x20] sm:$0xff]
    %v5014 = vld [vmem:[#allocation3 + $0x28] sm:$0xff]
    %v5015 = vld [vmem:[#allocation3 + $0x30] sm:$0xff]
    %v5016 = vld [vmem:[#allocation3 + $0x38] sm:$0xff]
    %v5017 = vld [vmem:[#allocation3 + $0x40] sm:$0xff]
    %v5018 = vld [vmem:[#allocation3 + $0x48] sm:$0xff]
    %v5019 = vld [vmem:[#allocation3 + $0x50] sm:$0xff]
    %v5020 = vld [vmem:[#allocation3 + $0x58] sm:$0xff]
    %v5021 = vld [vmem:[#allocation3 + $0x60] sm:$0xff]
    %v5022 = vld [vmem:[#allocation3 + $0x68] sm:$0xff]
    %v5023 = vld [vmem:[#allocation3 + $0x70] sm:$0xff]
    %v5024 = vld [vmem:[#allocation3 + $0x78] sm:$0xff]
    %v5025 = vld [vmem:[#allocation3 + $0x80] sm:$0xff]
    %v5026 = vld [vmem:[#allocation3 + $0x88] sm:$0xff]
    %v5027 = vld [vmem:[#allocation3 + $0x90] sm:$0xff]
    %v5028 = vld [vmem:[#allocation3 + $0x98] sm:$0xff]
    %v5029 = vld [vmem:[#allocation3 + $0xa0] sm:$0xff]
    %v5030 = vld [vmem:[#allocation3 + $0xa8] sm:$0xff]
    %v5031 = vld [vmem:[#allocation3 + $0xb0] sm:$0xff]
    %v5032 = vld [vmem:[#allocation3 + $0xb8] sm:$0xff]
    %v5033 = vld [vmem:[#allocation3 + $0xc0] sm:$0xff]
    %v5034 = vld [vmem:[#allocation3 + $0xc8] sm:$0xff]
    %v5035 = vld [vmem:[#allocation3 + $0xd0] sm:$0xff]
    %v5036 = vld [vmem:[#allocation3 + $0xd8] sm:$0xff]
    %v5037 = vld [vmem:[#allocation3 + $0xe0] sm:$0xff]
    %v5038 = vld [vmem:[#allocation3 + $0xe8] sm:$0xff]
    %v5039 = vld [vmem:[#allocation3 + $0xf0] sm:$0xff]
    %v5040 = vld [vmem:[#allocation3 + $0xf8] sm:$0xff]
    %v5041 = vld [vmem:[#allocation3 + $0x100] sm:$0xff]
    %v5042 = vld [vmem:[#allocation3 + $0x108] sm:$0xff]
    %v5043 = vld [vmem:[#allocation3 + $0x110] sm:$0xff]
    %v5044 = vld [vmem:[#allocation3 + $0x118] sm:$0xff]
    %v5045 = vld [vmem:[#allocation3 + $0x120] sm:$0xff]
    %v5046 = vld [vmem:[#allocation3 + $0x128] sm:$0xff]
    %v5047 = vld [vmem:[#allocation3 + $0x130] sm:$0xff]
    %v5048 = vld [vmem:[#allocation3 + $0x138] sm:$0xff]
    %v5049 = vld [vmem:[#allocation3 + $0x140] sm:$0xff]
    %v5050 = vld [vmem:[#allocation3 + $0x148] sm:$0xff]
    %v5051 = vld [vmem:[#allocation3 + $0x150] sm:$0xff]
    %v5052 = vld [vmem:[#allocation3 + $0x158] sm:$0xff]
    %v5053 = vld [vmem:[#allocation3 + $0x160] sm:$0xff]
    %v5054 = vld [vmem:[#allocation3 + $0x168] sm:$0xff]
    %v5055 = vld [vmem:[#allocation3 + $0x170] sm:$0xff]
    %v5056 = vld [vmem:[#allocation3 + $0x178] sm:$0xff]
    %v5057 = vld [vmem:[#allocation3 + $0x180] sm:$0xff]
    %v5058 = vld [vmem:[#allocation3 + $0x188] sm:$0xff]
    %v5059 = vld [vmem:[#allocation3 + $0x190] sm:$0xff]
    %v5060 = vld [vmem:[#allocation3 + $0x198] sm:$0xff]
    %v5061 = vld [vmem:[#allocation3 + $0x1a0] sm:$0xff]
    %v5062 = vld [vmem:[#allocation3 + $0x1a8] sm:$0xff]
    %v5063 = vld [vmem:[#allocation3 + $0x1b0] sm:$0xff]
    %v5064 = vld [vmem:[#allocation3 + $0x1b8] sm:$0xff]
    %v5065 = vld [vmem:[#allocation3 + $0x1c0] sm:$0xff]
    %v5066 = vld [vmem:[#allocation3 + $0x1c8] sm:$0xff]
    %v5067 = vld [vmem:[#allocation3 + $0x1d0] sm:$0xff]
    %v5068 = vld [vmem:[#allocation3 + $0x1d8] sm:$0xff]
    %v5069 = vld [vmem:[#allocation3 + $0x1e0] sm:$0xff]
    %v5070 = vld [vmem:[#allocation3 + $0x1e8] sm:$0xff]
    %v5071 = vld [vmem:[#allocation3 + $0x1f0] sm:$0xff]
    %v5072 = vld [vmem:[#allocation3 + $0x1f8] sm:$0xff]
    %v5073 = vld [vmem:[#allocation3 + $0x200] sm:$0xff]
    %v5074 = vld [vmem:[#allocation3 + $0x208] sm:$0xff]
    %v5075 = vld [vmem:[#allocation3 + $0x210] sm:$0xff]
    %v5076 = vld [vmem:[#allocation3 + $0x218] sm:$0xff]
    %v5077 = vld [vmem:[#allocation3 + $0x220] sm:$0xff]
    %v5078 = vld [vmem:[#allocation3 + $0x228] sm:$0xff]
    %v5079 = vld [vmem:[#allocation3 + $0x230] sm:$0xff]
    %v5080 = vld [vmem:[#allocation3 + $0x238] sm:$0xff]
    %v5081 = vld [vmem:[#allocation3 + $0x240] sm:$0xff]
    %v5082 = vld [vmem:[#allocation3 + $0x248] sm:$0xff]
    %v5083 = vld [vmem:[#allocation3 + $0x250] sm:$0xff]
    %v5084 = vld [vmem:[#allocation3 + $0x258] sm:$0xff]
    %v5085 = vld [vmem:[#allocation3 + $0x260] sm:$0xff]
    %v5086 = vld [vmem:[#allocation3 + $0x268] sm:$0xff]
    %v5087 = vld [vmem:[#allocation3 + $0x270] sm:$0xff]
    %v5088 = vld [vmem:[#allocation3 + $0x278] sm:$0xff]
    %v5089 = vld [vmem:[#allocation3 + $0x280] sm:$0xff]
    %v5090 = vld [vmem:[#allocation3 + $0x288] sm:$0xff]
    %v5091 = vld [vmem:[#allocation3 + $0x290] sm:$0xff]
    %v5092 = vld [vmem:[#allocation3 + $0x298] sm:$0xff]
    %v5093 = vld [vmem:[#allocation3 + $0x2a0] sm:$0xff]
    %v5094 = vld [vmem:[#allocation3 + $0x2a8] sm:$0xff]
    %v5095 = vld [vmem:[#allocation3 + $0x2b0] sm:$0xff]
    %v5096 = vld [vmem:[#allocation3 + $0x2b8] sm:$0xff]
    %v5097 = vld [vmem:[#allocation3 + $0x2c0] sm:$0xff]
    %v5098 = vld [vmem:[#allocation3 + $0x2c8] sm:$0xff]
    %v5099 = vld [vmem:[#allocation3 + $0x2d0] sm:$0xff]
    %v5100 = vld [vmem:[#allocation3 + $0x2d8] sm:$0xff]
    %v5101 = vld [vmem:[#allocation3 + $0x2e0] sm:$0xff]
    %v5102 = vld [vmem:[#allocation3 + $0x2e8] sm:$0xff]
    %v5103 = vld [vmem:[#allocation3 + $0x2f0] sm:$0xff]
    %v5104 = vld [vmem:[#allocation3 + $0x2f8] sm:$0xff]
    %v5105 = vld [vmem:[#allocation3 + $0x300] sm:$0xff]
    %v5106 = vld [vmem:[#allocation3 + $0x308] sm:$0xff]
    %v5107 = vld [vmem:[#allocation3 + $0x310] sm:$0xff]
    %v5108 = vld [vmem:[#allocation3 + $0x318] sm:$0xff]
    %v5109 = vld [vmem:[#allocation3 + $0x320] sm:$0xff]
    %v5110 = vld [vmem:[#allocation3 + $0x328] sm:$0xff]
    %v5111 = vld [vmem:[#allocation3 + $0x330] sm:$0xff]
    %v5112 = vld [vmem:[#allocation3 + $0x338] sm:$0xff]
    %v5113 = vld [vmem:[#allocation3 + $0x340] sm:$0xff]
    %v5114 = vld [vmem:[#allocation3 + $0x348] sm:$0xff]
    %v5115 = vld [vmem:[#allocation3 + $0x350] sm:$0xff]
    %v5116 = vld [vmem:[#allocation3 + $0x358] sm:$0xff]
    %v5117 = vld [vmem:[#allocation3 + $0x360] sm:$0xff]
    %v5118 = vld [vmem:[#allocation3 + $0x368] sm:$0xff]
    %v5119 = vld [vmem:[#allocation3 + $0x370] sm:$0xff]
    %v5120 = vld [vmem:[#allocation3 + $0x378] sm:$0xff]
    %v5121 = vld [vmem:[#allocation3 + $0x380] sm:$0xff]
    %v5122 = vld [vmem:[#allocation3 + $0x388] sm:$0xff]
    %v5123 = vld [vmem:[#allocation3 + $0x390] sm:$0xff]
    %v5124 = vld [vmem:[#allocation3 + $0x398] sm:$0xff]
    %v5125 = vld [vmem:[#allocation3 + $0x3a0] sm:$0xff]
    %v5126 = vld [vmem:[#allocation3 + $0x3a8] sm:$0xff]
    %v5127 = vld [vmem:[#allocation3 + $0x3b0] sm:$0xff]
    %v5128 = vld [vmem:[#allocation3 + $0x3b8] sm:$0xff]
    %v5129 = vld [vmem:[#allocation3 + $0x3c0] sm:$0xff]
    %v5130 = vld [vmem:[#allocation3 + $0x3c8] sm:$0xff]
    %v5131 = vld [vmem:[#allocation3 + $0x3d0] sm:$0xff]
    %v5132 = vld [vmem:[#allocation3 + $0x3d8] sm:$0xff]
    %v5133 = vld [vmem:[#allocation3 + $0x3e0] sm:$0xff]
    %v5134 = vld [vmem:[#allocation3 + $0x3e8] sm:$0xff]
    %v5135 = vld [vmem:[#allocation3 + $0x3f0] sm:$0xff]
    %v5136 = vld [vmem:[#allocation3 + $0x3f8] sm:$0xff]
    %v5137 = vld [vmem:[#allocation3 + $0x400] sm:$0xff]
    %v5138 = vld [vmem:[#allocation3 + $0x408] sm:$0xff]
    %v5139 = vld [vmem:[#allocation3 + $0x410] sm:$0xff]
    %v5140 = vld [vmem:[#allocation3 + $0x418] sm:$0xff]
    %v5141 = vld [vmem:[#allocation3 + $0x420] sm:$0xff]
    %v5142 = vld [vmem:[#allocation3 + $0x428] sm:$0xff]
    %v5143 = vld [vmem:[#allocation3 + $0x430] sm:$0xff]
    %v5144 = vld [vmem:[#allocation3 + $0x438] sm:$0xff]
    %v5145 = vld [vmem:[#allocation3 + $0x440] sm:$0xff]
    %v5146 = vld [vmem:[#allocation3 + $0x448] sm:$0xff]
    %v5147 = vld [vmem:[#allocation3 + $0x450] sm:$0xff]
    %v5148 = vld [vmem:[#allocation3 + $0x458] sm:$0xff]
    %v5149 = vld [vmem:[#allocation3 + $0x460] sm:$0xff]
    %v5150 = vld [vmem:[#allocation3 + $0x468] sm:$0xff]
    %v5151 = vld [vmem:[#allocation3 + $0x470] sm:$0xff]
    %v5152 = vld [vmem:[#allocation3 + $0x478] sm:$0xff]
    %v5153 = vld [vmem:[#allocation3 + $0x480] sm:$0xff]
    %v5154 = vld [vmem:[#allocation3 + $0x488] sm:$0xff]
    %v5155 = vld [vmem:[#allocation3 + $0x490] sm:$0xff]
    %v5156 = vld [vmem:[#allocation3 + $0x498] sm:$0xff]
    %v5157 = vld [vmem:[#allocation3 + $0x4a0] sm:$0xff]
    %v5158 = vld [vmem:[#allocation3 + $0x4a8] sm:$0xff]
    %v5159 = vld [vmem:[#allocation3 + $0x4b0] sm:$0xff]
    %v5160 = vld [vmem:[#allocation3 + $0x4b8] sm:$0xff]
    %v5161 = vld [vmem:[#allocation3 + $0x4c0] sm:$0xff]
    %v5162 = vld [vmem:[#allocation3 + $0x4c8] sm:$0xff]
    %v5163 = vld [vmem:[#allocation3 + $0x4d0] sm:$0xff]
    %v5164 = vld [vmem:[#allocation3 + $0x4d8] sm:$0xff]
    %v5165 = vld [vmem:[#allocation3 + $0x4e0] sm:$0xff]
    %v5166 = vld [vmem:[#allocation3 + $0x4e8] sm:$0xff]
    %v5167 = vld [vmem:[#allocation3 + $0x4f0] sm:$0xff]
    %v5168 = vld [vmem:[#allocation3 + $0x4f8] sm:$0xff]
    %v5169 = vld [vmem:[#allocation3 + $0x500] sm:$0xff]
    %v5170 = vld [vmem:[#allocation3 + $0x508] sm:$0xff]
    %v5171 = vld [vmem:[#allocation3 + $0x510] sm:$0xff]
    %v5172 = vld [vmem:[#allocation3 + $0x518] sm:$0xff]
    %v5173 = vld [vmem:[#allocation3 + $0x520] sm:$0xff]
    %v5174 = vld [vmem:[#allocation3 + $0x528] sm:$0xff]
    %v5175 = vld [vmem:[#allocation3 + $0x530] sm:$0xff]
    %v5176 = vld [vmem:[#allocation3 + $0x538] sm:$0xff]
    %v5177 = vld [vmem:[#allocation3 + $0x540] sm:$0xff]
    %v5178 = vld [vmem:[#allocation3 + $0x548] sm:$0xff]
    %v5179 = vld [vmem:[#allocation3 + $0x550] sm:$0xff]
    %v5180 = vld [vmem:[#allocation3 + $0x558] sm:$0xff]
    %v5181 = vld [vmem:[#allocation3 + $0x560] sm:$0xff]
    %v5182 = vld [vmem:[#allocation3 + $0x568] sm:$0xff]
    %v5183 = vld [vmem:[#allocation3 + $0x570] sm:$0xff]
    %v5184 = vld [vmem:[#allocation3 + $0x578] sm:$0xff]
    %v5185 = vld [vmem:[#allocation3 + $0x580] sm:$0xff]
    %v5186 = vld [vmem:[#allocation3 + $0x588] sm:$0xff]
    %v5187 = vld [vmem:[#allocation3 + $0x590] sm:$0xff]
    %v5188 = vld [vmem:[#allocation3 + $0x598] sm:$0xff]
    %v5189 = vld [vmem:[#allocation3 + $0x5a0] sm:$0xff]
    %v5190 = vld [vmem:[#allocation3 + $0x5a8] sm:$0xff]
    %v5191 = vld [vmem:[#allocation3 + $0x5b0] sm:$0xff]
    %v5192 = vld [vmem:[#allocation3 + $0x5b8] sm:$0xff]
    %v5193 = vld [vmem:[#allocation3 + $0x5c0] sm:$0xff]
    %v5194 = vld [vmem:[#allocation3 + $0x5c8] sm:$0xff]
    %v5195 = vld [vmem:[#allocation3 + $0x5d0] sm:$0xff]
    %v5196 = vld [vmem:[#allocation3 + $0x5d8] sm:$0xff]
    %v5197 = vld [vmem:[#allocation3 + $0x5e0] sm:$0xff]
    %v5198 = vld [vmem:[#allocation3 + $0x5e8] sm:$0xff]
    %v5199 = vld [vmem:[#allocation3 + $0x5f0] sm:$0xff]
    %v5200 = vld [vmem:[#allocation3 + $0x5f8] sm:$0xff]
    %v5201 = vld [vmem:[#allocation3 + $0x600] sm:$0xff]
    %v5202 = vld [vmem:[#allocation3 + $0x608] sm:$0xff]
    %v5203 = vld [vmem:[#allocation3 + $0x610] sm:$0xff]
    %v5204 = vld [vmem:[#allocation3 + $0x618] sm:$0xff]
    %v5205 = vld [vmem:[#allocation3 + $0x620] sm:$0xff]
    %v5206 = vld [vmem:[#allocation3 + $0x628] sm:$0xff]
    %v5207 = vld [vmem:[#allocation3 + $0x630] sm:$0xff]
    %v5208 = vld [vmem:[#allocation3 + $0x638] sm:$0xff]
    %v5209 = vld [vmem:[#allocation3 + $0x640] sm:$0xff]
    %v5210 = vld [vmem:[#allocation3 + $0x648] sm:$0xff]
    %v5211 = vld [vmem:[#allocation3 + $0x650] sm:$0xff]
    %v5212 = vld [vmem:[#allocation3 + $0x658] sm:$0xff]
    %v5213 = vld [vmem:[#allocation3 + $0x660] sm:$0xff]
    %v5214 = vld [vmem:[#allocation3 + $0x668] sm:$0xff]
    %v5215 = vld [vmem:[#allocation3 + $0x670] sm:$0xff]
    %v5216 = vld [vmem:[#allocation3 + $0x678] sm:$0xff]
    %v5217 = vld [vmem:[#allocation3 + $0x680] sm:$0xff]
    %v5218 = vld [vmem:[#allocation3 + $0x688] sm:$0xff]
    %v5219 = vld [vmem:[#allocation3 + $0x690] sm:$0xff]
    %v5220 = vld [vmem:[#allocation3 + $0x698] sm:$0xff]
    %v5221 = vld [vmem:[#allocation3 + $0x6a0] sm:$0xff]
    %v5222 = vld [vmem:[#allocation3 + $0x6a8] sm:$0xff]
    %v5223 = vld [vmem:[#allocation3 + $0x6b0] sm:$0xff]
    %v5224 = vld [vmem:[#allocation3 + $0x6b8] sm:$0xff]
    %v5225 = vld [vmem:[#allocation3 + $0x6c0] sm:$0xff]
    %v5226 = vld [vmem:[#allocation3 + $0x6c8] sm:$0xff]
    %v5227 = vld [vmem:[#allocation3 + $0x6d0] sm:$0xff]
    %v5228 = vld [vmem:[#allocation3 + $0x6d8] sm:$0xff]
    %v5229 = vld [vmem:[#allocation3 + $0x6e0] sm:$0xff]
    %v5230 = vld [vmem:[#allocation3 + $0x6e8] sm:$0xff]
    %v5231 = vld [vmem:[#allocation3 + $0x6f0] sm:$0xff]
    %v5232 = vld [vmem:[#allocation3 + $0x6f8] sm:$0xff]
    %v5233 = vld [vmem:[#allocation3 + $0x700] sm:$0xff]
    %v5234 = vld [vmem:[#allocation3 + $0x708] sm:$0xff]
    %v5235 = vld [vmem:[#allocation3 + $0x710] sm:$0xff]
    %v5236 = vld [vmem:[#allocation3 + $0x718] sm:$0xff]
    %v5237 = vld [vmem:[#allocation3 + $0x720] sm:$0xff]
    %v5238 = vld [vmem:[#allocation3 + $0x728] sm:$0xff]
    %v5239 = vld [vmem:[#allocation3 + $0x730] sm:$0xff]
    %v5240 = vld [vmem:[#allocation3 + $0x738] sm:$0xff]
    %v5241 = vld [vmem:[#allocation3 + $0x740] sm:$0xff]
    %v5242 = vld [vmem:[#allocation3 + $0x748] sm:$0xff]
    %v5243 = vld [vmem:[#allocation3 + $0x750] sm:$0xff]
    %v5244 = vld [vmem:[#allocation3 + $0x758] sm:$0xff]
    %v5245 = vld [vmem:[#allocation3 + $0x760] sm:$0xff]
    %v5246 = vld [vmem:[#allocation3 + $0x768] sm:$0xff]
    %v5247 = vld [vmem:[#allocation3 + $0x770] sm:$0xff]
    %v5248 = vld [vmem:[#allocation3 + $0x778] sm:$0xff]
    %v5249 = vld [vmem:[#allocation3 + $0x780] sm:$0xff]
    %v5250 = vld [vmem:[#allocation3 + $0x788] sm:$0xff]
    %v5251 = vld [vmem:[#allocation3 + $0x790] sm:$0xff]
    %v5252 = vld [vmem:[#allocation3 + $0x798] sm:$0xff]
    %v5253 = vld [vmem:[#allocation3 + $0x7a0] sm:$0xff]
    %v5254 = vld [vmem:[#allocation3 + $0x7a8] sm:$0xff]
    %v5255 = vld [vmem:[#allocation3 + $0x7b0] sm:$0xff]
    %v5256 = vld [vmem:[#allocation3 + $0x7b8] sm:$0xff]
    %v5257 = vld [vmem:[#allocation3 + $0x7c0] sm:$0xff]
    %v5258 = vld [vmem:[#allocation3 + $0x7c8] sm:$0xff]
    %v5259 = vld [vmem:[#allocation3 + $0x7d0] sm:$0xff]
    %v5260 = vld [vmem:[#allocation3 + $0x7d8] sm:$0xff]
    %v5261 = vld [vmem:[#allocation3 + $0x7e0] sm:$0xff]
    %v5262 = vld [vmem:[#allocation3 + $0x7e8] sm:$0xff]
    %v5263 = vld [vmem:[#allocation3 + $0x7f0] sm:$0xff]
    %v5264 = vld [vmem:[#allocation3 + $0x7f8] sm:$0xff]
    %v5265 = vld [vmem:[#allocation3 + $0x800] sm:$0xff]
    %v5266 = vld [vmem:[#allocation3 + $0x808] sm:$0xff]
    %v5267 = vld [vmem:[#allocation3 + $0x810] sm:$0xff]
    %v5268 = vld [vmem:[#allocation3 + $0x818] sm:$0xff]
    %v5269 = vld [vmem:[#allocation3 + $0x820] sm:$0xff]
    %v5270 = vld [vmem:[#allocation3 + $0x828] sm:$0xff]
    %v5271 = vld [vmem:[#allocation3 + $0x830] sm:$0xff]
    %v5272 = vld [vmem:[#allocation3 + $0x838] sm:$0xff]
    %v5273 = vld [vmem:[#allocation3 + $0x840] sm:$0xff]
    %v5274 = vld [vmem:[#allocation3 + $0x848] sm:$0xff]
    %v5275 = vld [vmem:[#allocation3 + $0x850] sm:$0xff]
    %v5276 = vld [vmem:[#allocation3 + $0x858] sm:$0xff]
    %v5277 = vld [vmem:[#allocation3 + $0x860] sm:$0xff]
    %v5278 = vld [vmem:[#allocation3 + $0x868] sm:$0xff]
    %v5279 = vld [vmem:[#allocation3 + $0x870] sm:$0xff]
    %v5280 = vld [vmem:[#allocation3 + $0x878] sm:$0xff]
    %v5281 = vld [vmem:[#allocation3 + $0x880] sm:$0xff]
    %v5282 = vld [vmem:[#allocation3 + $0x888] sm:$0xff]
    %v5283 = vld [vmem:[#allocation3 + $0x890] sm:$0xff]
    %v5284 = vld [vmem:[#allocation3 + $0x898] sm:$0xff]
    %v5285 = vld [vmem:[#allocation3 + $0x8a0] sm:$0xff]
    %v5286 = vld [vmem:[#allocation3 + $0x8a8] sm:$0xff]
    %v5287 = vld [vmem:[#allocation3 + $0x8b0] sm:$0xff]
    %v5288 = vld [vmem:[#allocation3 + $0x8b8] sm:$0xff]
    %v5289 = vld [vmem:[#allocation3 + $0x8c0] sm:$0xff]
    %v5290 = vld [vmem:[#allocation3 + $0x8c8] sm:$0xff]
    %v5291 = vld [vmem:[#allocation3 + $0x8d0] sm:$0xff]
    %v5292 = vld [vmem:[#allocation3 + $0x8d8] sm:$0xff]
    %v5293 = vld [vmem:[#allocation3 + $0x8e0] sm:$0xff]
    %v5294 = vld [vmem:[#allocation3 + $0x8e8] sm:$0xff]
    %v5295 = vld [vmem:[#allocation3 + $0x8f0] sm:$0xff]
    %v5296 = vld [vmem:[#allocation3 + $0x8f8] sm:$0xff]
    %v5297 = vld [vmem:[%s3] sm:$0xf]
    %v5298 = vld [vmem:[%s3 + $0x4] sm:$0xf]
    %v5299 = vld [vmem:[%s3 + $0x8] sm:$0xf]
    %v5300 = vld [vmem:[%s3 + $0xc] sm:$0xf]
    %v5301 = vld [vmem:[%s3 + $0x10] sm:$0xf]
    %v5302 = vld [vmem:[%s3 + $0x14] sm:$0xf]
    %v5303 = vld [vmem:[%s3 + $0x18] sm:$0xf]
    %v5304 = vld [vmem:[%s3 + $0x1c] sm:$0xf]
    %v5305 = vld [vmem:[%s3 + $0x20] sm:$0xf]
    %v5306 = vld [vmem:[%s3 + $0x24] sm:$0xf]
    %v5307 = vld [vmem:[%s3 + $0x28] sm:$0xf]
    %v5308 = vld [vmem:[%s3 + $0x2c] sm:$0xf]
    %v5309 = vld [vmem:[%s3 + $0x30] sm:$0xf]
    %v5310 = vld [vmem:[%s3 + $0x34] sm:$0xf]
    %v5311 = vld [vmem:[%s3 + $0x38] sm:$0xf]
    %v5312 = vld [vmem:[%s3 + $0x3c] sm:$0xf]
    %v5313 = vld [vmem:[%s3 + $0x40] sm:$0xf]
    %v5314 = vld [vmem:[%s3 + $0x44] sm:$0xf]
    %v5315 = vld [vmem:[%s3 + $0x48] sm:$0xf]
    %v5316 = vld [vmem:[%s3 + $0x4c] sm:$0xf]
    %v5317 = vld [vmem:[%s3 + $0x50] sm:$0xf]
    %v5318 = vld [vmem:[%s3 + $0x54] sm:$0xf]
    %v5319 = vld [vmem:[%s3 + $0x58] sm:$0xf]
    %v5320 = vld [vmem:[%s3 + $0x5c] sm:$0xf]
    %v5321 = vld [vmem:[%s3 + $0x60] sm:$0xf]
    %v5322 = vld [vmem:[%s3 + $0x64] sm:$0xf]
    %v5323 = vld [vmem:[%s3 + $0x68] sm:$0xf]
    %v5324 = vld [vmem:[%s3 + $0x6c] sm:$0xf]
    %v5325 = vld [vmem:[%s3 + $0x70] sm:$0xf]
    %v5326 = vld [vmem:[%s3 + $0x74] sm:$0xf]
    %v5327 = vld [vmem:[%s3 + $0x78] sm:$0xf]
    %v5328 = vld [vmem:[%s3 + $0x7c] sm:$0xf]
    %v5329 = vld [vmem:[%s3 + $0x80] sm:$0xf]
    %v5330 = vld [vmem:[%s3 + $0x84] sm:$0xf]
    %v5331 = vld [vmem:[%s3 + $0x88] sm:$0xf]
    %v5332 = vld [vmem:[%s3 + $0x8c] sm:$0xf]
    %v5333 = vld [vmem:[%s3 + $0x90] sm:$0xf]
    %v5334 = vld [vmem:[%s3 + $0x94] sm:$0xf]
    %v5335 = vld [vmem:[%s3 + $0x98] sm:$0xf]
    %v5336 = vld [vmem:[%s3 + $0x9c] sm:$0xf]
    %v5337 = vld [vmem:[%s3 + $0xa0] sm:$0xf]
    %v5338 = vld [vmem:[%s3 + $0xa4] sm:$0xf]
    %v5339 = vld [vmem:[%s3 + $0xa8] sm:$0xf]
    %v5340 = vld [vmem:[%s3 + $0xac] sm:$0xf]
    %v5341 = vld [vmem:[%s3 + $0xb0] sm:$0xf]
    %v5342 = vld [vmem:[%s3 + $0xb4] sm:$0xf]
    %v5343 = vld [vmem:[%s3 + $0xb8] sm:$0xf]
    %v5344 = vld [vmem:[%s3 + $0xbc] sm:$0xf]
    %v5345 = vld [vmem:[%s3 + $0xc0] sm:$0xf]
    %v5346 = vld [vmem:[%s3 + $0xc4] sm:$0xf]
    %v5347 = vld [vmem:[%s3 + $0xc8] sm:$0xf]
    %v5348 = vld [vmem:[%s3 + $0xcc] sm:$0xf]
    %v5349 = vld [vmem:[%s3 + $0xd0] sm:$0xf]
    %v5350 = vld [vmem:[%s3 + $0xd4] sm:$0xf]
    %v5351 = vld [vmem:[%s3 + $0xd8] sm:$0xf]
    %v5352 = vld [vmem:[%s3 + $0xdc] sm:$0xf]
    %v5353 = vld [vmem:[%s3 + $0xe0] sm:$0xf]
    %v5354 = vld [vmem:[%s3 + $0xe4] sm:$0xf]
    %v5355 = vld [vmem:[%s3 + $0xe8] sm:$0xf]
    %v5356 = vld [vmem:[%s3 + $0xec] sm:$0xf]
    %v5357 = vld [vmem:[%s3 + $0xf0] sm:$0xf]
    %v5358 = vld [vmem:[%s3 + $0xf4] sm:$0xf]
    %v5359 = vld [vmem:[%s3 + $0xf8] sm:$0xf]
    %v5360 = vld [vmem:[%s3 + $0xfc] sm:$0xf]
    %v5361 = vld [vmem:[%s3 + $0x100] sm:$0xf]
    %v5362 = vld [vmem:[%s3 + $0x104] sm:$0xf]
    %v5363 = vld [vmem:[%s3 + $0x108] sm:$0xf]
    %v5364 = vld [vmem:[%s3 + $0x10c] sm:$0xf]
    %v5365 = vld [vmem:[%s3 + $0x110] sm:$0xf]
    %v5366 = vld [vmem:[%s3 + $0x114] sm:$0xf]
    %v5367 = vld [vmem:[%s3 + $0x118] sm:$0xf]
    %v5368 = vld [vmem:[%s3 + $0x11c] sm:$0xf]
    %v5369 = vld [vmem:[%s3 + $0x120] sm:$0xf]
    %v5370 = vld [vmem:[%s3 + $0x124] sm:$0xf]
    %v5371 = vld [vmem:[%s3 + $0x128] sm:$0xf]
    %v5372 = vld [vmem:[%s3 + $0x12c] sm:$0xf]
    %v5373 = vld [vmem:[%s3 + $0x130] sm:$0xf]
    %v5374 = vld [vmem:[%s3 + $0x134] sm:$0xf]
    %v5375 = vld [vmem:[%s3 + $0x138] sm:$0xf]
    %v5376 = vld [vmem:[%s3 + $0x13c] sm:$0xf]
    %v5377 = vld [vmem:[%s3 + $0x140] sm:$0xf]
    %v5378 = vld [vmem:[%s3 + $0x144] sm:$0xf]
    %v5379 = vld [vmem:[%s3 + $0x148] sm:$0xf]
    %v5380 = vld [vmem:[%s3 + $0x14c] sm:$0xf]
    %v5381 = vld [vmem:[%s3 + $0x150] sm:$0xf]
    %v5382 = vld [vmem:[%s3 + $0x154] sm:$0xf]
    %v5383 = vld [vmem:[%s3 + $0x158] sm:$0xf]
    %v5384 = vld [vmem:[%s3 + $0x15c] sm:$0xf]
    %v5385 = vld [vmem:[%s3 + $0x160] sm:$0xf]
    %v5386 = vld [vmem:[%s3 + $0x164] sm:$0xf]
    %v5387 = vld [vmem:[%s3 + $0x168] sm:$0xf]
    %v5388 = vld [vmem:[%s3 + $0x16c] sm:$0xf]
    %v5389 = vld [vmem:[%s3 + $0x170] sm:$0xf]
    %v5390 = vld [vmem:[%s3 + $0x174] sm:$0xf]
    %v5391 = vld [vmem:[%s3 + $0x178] sm:$0xf]
    %v5392 = vld [vmem:[%s3 + $0x17c] sm:$0xf]
    %v5393 = vld [vmem:[%s3 + $0x180] sm:$0xf]
    %v5394 = vld [vmem:[%s3 + $0x184] sm:$0xf]
    %v5395 = vld [vmem:[%s3 + $0x188] sm:$0xf]
    %v5396 = vld [vmem:[%s3 + $0x18c] sm:$0xf]
    %v5397 = vld [vmem:[%s3 + $0x190] sm:$0xf]
    %v5398 = vld [vmem:[%s3 + $0x194] sm:$0xf]
    %v5399 = vld [vmem:[%s3 + $0x198] sm:$0xf]
    %v5400 = vld [vmem:[%s3 + $0x19c] sm:$0xf]
    %v5401 = vld [vmem:[%s3 + $0x1a0] sm:$0xf]
    %v5402 = vld [vmem:[%s3 + $0x1a4] sm:$0xf]
    %v5403 = vld [vmem:[%s3 + $0x1a8] sm:$0xf]
    %v5404 = vld [vmem:[%s3 + $0x1ac] sm:$0xf]
    %v5405 = vld [vmem:[%s3 + $0x1b0] sm:$0xf]
    %v5406 = vld [vmem:[%s3 + $0x1b4] sm:$0xf]
    %v5407 = vld [vmem:[%s3 + $0x1b8] sm:$0xf]
    %v5408 = vld [vmem:[%s3 + $0x1bc] sm:$0xf]
    %v5409 = vld [vmem:[%s3 + $0x1c0] sm:$0xf]
    %v5410 = vld [vmem:[%s3 + $0x1c4] sm:$0xf]
    %v5411 = vld [vmem:[%s3 + $0x1c8] sm:$0xf]
    %v5412 = vld [vmem:[%s3 + $0x1cc] sm:$0xf]
    %v5413 = vld [vmem:[%s3 + $0x1d0] sm:$0xf]
    %v5414 = vld [vmem:[%s3 + $0x1d4] sm:$0xf]
    %v5415 = vld [vmem:[%s3 + $0x1d8] sm:$0xf]
    %v5416 = vld [vmem:[%s3 + $0x1dc] sm:$0xf]
    %v5417 = vld [vmem:[%s3 + $0x1e0] sm:$0xf]
    %v5418 = vld [vmem:[%s3 + $0x1e4] sm:$0xf]
    %v5419 = vld [vmem:[%s3 + $0x1e8] sm:$0xf]
    %v5420 = vld [vmem:[%s3 + $0x1ec] sm:$0xf]
    %v5421 = vld [vmem:[%s3 + $0x1f0] sm:$0xf]
    %v5422 = vld [vmem:[%s3 + $0x1f4] sm:$0xf]
    %v5423 = vld [vmem:[%s3 + $0x1f8] sm:$0xf]
    %v5424 = vld [vmem:[%s3 + $0x1fc] sm:$0xf]
    %v5425 = vld [vmem:[%s3 + $0x200] sm:$0xf]
    %v5426 = vld [vmem:[%s3 + $0x204] sm:$0xf]
    %v5427 = vld [vmem:[%s3 + $0x208] sm:$0xf]
    %v5428 = vld [vmem:[%s3 + $0x20c] sm:$0xf]
    %v5429 = vld [vmem:[%s3 + $0x210] sm:$0xf]
    %v5430 = vld [vmem:[%s3 + $0x214] sm:$0xf]
    %v5431 = vld [vmem:[%s3 + $0x218] sm:$0xf]
    %v5432 = vld [vmem:[%s3 + $0x21c] sm:$0xf]
    %v5433 = vld [vmem:[%s3 + $0x220] sm:$0xf]
    %v5434 = vld [vmem:[%s3 + $0x224] sm:$0xf]
    %v5435 = vld [vmem:[%s3 + $0x228] sm:$0xf]
    %v5436 = vld [vmem:[%s3 + $0x22c] sm:$0xf]
    %v5437 = vld [vmem:[%s3 + $0x230] sm:$0xf]
    %v5438 = vld [vmem:[%s3 + $0x234] sm:$0xf]
    %v5439 = vld [vmem:[%s3 + $0x238] sm:$0xf]
    %v5440 = vld [vmem:[%s3 + $0x23c] sm:$0xf]
    %v5441 = vld [vmem:[%s4] sm:$0x1]
    %v5443 = vlaneseq
    %v5444 = vshrl.u32 %v5443, 7
    %v5445 = vsub.s32 0, %v5444
    %v5446 = vrot.slane %v5441, %v5445
    %v5592 = vunpack.c.l.b16 %v5297
    %v5593 = vunpack.c.l.b16 %v5298
    %v5594 = vunpack.c.l.b16 %v5299
    %v5595 = vunpack.c.l.b16 %v5300
    %v5596 = vunpack.c.l.b16 %v5301
    %v5597 = vunpack.c.l.b16 %v5302
    %v5598 = vunpack.c.l.b16 %v5303
    %v5599 = vunpack.c.l.b16 %v5304
    %v5600 = vunpack.c.l.b16 %v5305
    %v5601 = vunpack.c.l.b16 %v5306
    %v5602 = vunpack.c.l.b16 %v5307
    %v5603 = vunpack.c.l.b16 %v5308
    %v5604 = vunpack.c.l.b16 %v5309
    %v5605 = vunpack.c.l.b16 %v5310
    %v5606 = vunpack.c.l.b16 %v5311
    %v5607 = vunpack.c.l.b16 %v5312
    %v5608 = vunpack.c.l.b16 %v5313
    %v5609 = vunpack.c.l.b16 %v5314
    %v5610 = vunpack.c.l.b16 %v5315
    %v5611 = vunpack.c.l.b16 %v5316
    %v5612 = vunpack.c.l.b16 %v5317
    %v5613 = vunpack.c.l.b16 %v5318
    %v5614 = vunpack.c.l.b16 %v5319
    %v5615 = vunpack.c.l.b16 %v5320
    %v5616 = vunpack.c.l.b16 %v5321
    %v5617 = vunpack.c.l.b16 %v5322
    %v5618 = vunpack.c.l.b16 %v5323
    %v5619 = vunpack.c.l.b16 %v5324
    %v5620 = vunpack.c.l.b16 %v5325
    %v5621 = vunpack.c.l.b16 %v5326
    %v5622 = vunpack.c.l.b16 %v5327
    %v5623 = vunpack.c.l.b16 %v5328
    %v5624 = vunpack.c.l.b16 %v5329
    %v5625 = vunpack.c.l.b16 %v5330
    %v5626 = vunpack.c.l.b16 %v5331
    %v5627 = vunpack.c.l.b16 %v5332
    %v5628 = vunpack.c.l.b16 %v5333
    %v5629 = vunpack.c.l.b16 %v5334
    %v5630 = vunpack.c.l.b16 %v5335
    %v5631 = vunpack.c.l.b16 %v5336
    %v5632 = vunpack.c.l.b16 %v5337
    %v5633 = vunpack.c.l.b16 %v5338
    %v5634 = vunpack.c.l.b16 %v5339
    %v5635 = vunpack.c.l.b16 %v5340
    %v5636 = vunpack.c.l.b16 %v5341
    %v5637 = vunpack.c.l.b16 %v5342
    %v5638 = vunpack.c.l.b16 %v5343
    %v5639 = vunpack.c.l.b16 %v5344
    %v5640 = vunpack.c.l.b16 %v5345
    %v5641 = vunpack.c.l.b16 %v5346
    %v5642 = vunpack.c.l.b16 %v5347
    %v5643 = vunpack.c.l.b16 %v5348
    %v5644 = vunpack.c.l.b16 %v5349
    %v5645 = vunpack.c.l.b16 %v5350
    %v5646 = vunpack.c.l.b16 %v5351
    %v5647 = vunpack.c.l.b16 %v5352
    %v5648 = vunpack.c.l.b16 %v5353
    %v5649 = vunpack.c.l.b16 %v5354
    %v5650 = vunpack.c.l.b16 %v5355
    %v5651 = vunpack.c.l.b16 %v5356
    %v5652 = vunpack.c.l.b16 %v5357
    %v5653 = vunpack.c.l.b16 %v5358
    %v5654 = vunpack.c.l.b16 %v5359
    %v5655 = vunpack.c.l.b16 %v5360
    %v5656 = vunpack.c.l.b16 %v5361
    %v5657 = vunpack.c.l.b16 %v5362
    %v5658 = vunpack.c.l.b16 %v5363
    %v5659 = vunpack.c.l.b16 %v5364
    %v5660 = vunpack.c.l.b16 %v5365
    %v5661 = vunpack.c.l.b16 %v5366
    %v5662 = vunpack.c.l.b16 %v5367
    %v5663 = vunpack.c.l.b16 %v5368
    %v5664 = vunpack.c.l.b16 %v5369
    %v5665 = vunpack.c.l.b16 %v5370
    %v5666 = vunpack.c.l.b16 %v5371
    %v5667 = vunpack.c.l.b16 %v5372
    %v5668 = vunpack.c.l.b16 %v5373
    %v5669 = vunpack.c.l.b16 %v5374
    %v5670 = vunpack.c.l.b16 %v5375
    %v5671 = vunpack.c.l.b16 %v5376
    %v5672 = vunpack.c.l.b16 %v5377
    %v5673 = vunpack.c.l.b16 %v5378
    %v5674 = vunpack.c.l.b16 %v5379
    %v5675 = vunpack.c.l.b16 %v5380
    %v5676 = vunpack.c.l.b16 %v5381
    %v5677 = vunpack.c.l.b16 %v5382
    %v5678 = vunpack.c.l.b16 %v5383
    %v5679 = vunpack.c.l.b16 %v5384
    %v5680 = vunpack.c.l.b16 %v5385
    %v5681 = vunpack.c.l.b16 %v5386
    %v5682 = vunpack.c.l.b16 %v5387
    %v5683 = vunpack.c.l.b16 %v5388
    %v5684 = vunpack.c.l.b16 %v5389
    %v5685 = vunpack.c.l.b16 %v5390
    %v5686 = vunpack.c.l.b16 %v5391
    %v5687 = vunpack.c.l.b16 %v5392
    %v5688 = vunpack.c.l.b16 %v5393
    %v5689 = vunpack.c.l.b16 %v5394
    %v5690 = vunpack.c.l.b16 %v5395
    %v5691 = vunpack.c.l.b16 %v5396
    %v5692 = vunpack.c.l.b16 %v5397
    %v5693 = vunpack.c.l.b16 %v5398
    %v5694 = vunpack.c.l.b16 %v5399
    %v5695 = vunpack.c.l.b16 %v5400
    %v5696 = vunpack.c.l.b16 %v5401
    %v5697 = vunpack.c.l.b16 %v5402
    %v5698 = vunpack.c.l.b16 %v5403
    %v5699 = vunpack.c.l.b16 %v5404
    %v5700 = vunpack.c.l.b16 %v5405
    %v5701 = vunpack.c.l.b16 %v5406
    %v5702 = vunpack.c.l.b16 %v5407
    %v5703 = vunpack.c.l.b16 %v5408
    %v5704 = vunpack.c.l.b16 %v5409
    %v5705 = vunpack.c.l.b16 %v5410
    %v5706 = vunpack.c.l.b16 %v5411
    %v5707 = vunpack.c.l.b16 %v5412
    %v5708 = vunpack.c.l.b16 %v5413
    %v5709 = vunpack.c.l.b16 %v5414
    %v5710 = vunpack.c.l.b16 %v5415
    %v5711 = vunpack.c.l.b16 %v5416
    %v5712 = vunpack.c.l.b16 %v5417
    %v5713 = vunpack.c.l.b16 %v5418
    %v5714 = vunpack.c.l.b16 %v5419
    %v5715 = vunpack.c.l.b16 %v5420
    %v5716 = vunpack.c.l.b16 %v5421
    %v5717 = vunpack.c.l.b16 %v5422
    %v5718 = vunpack.c.l.b16 %v5423
    %v5719 = vunpack.c.l.b16 %v5424
    %v5720 = vunpack.c.l.b16 %v5425
    %v5721 = vunpack.c.l.b16 %v5426
    %v5722 = vunpack.c.l.b16 %v5427
    %v5723 = vunpack.c.l.b16 %v5428
    %v5724 = vunpack.c.l.b16 %v5429
    %v5725 = vunpack.c.l.b16 %v5430
    %v5726 = vunpack.c.l.b16 %v5431
    %v5727 = vunpack.c.l.b16 %v5432
    %v5728 = vunpack.c.l.b16 %v5433
    %v5729 = vunpack.c.l.b16 %v5434
    %v5730 = vunpack.c.l.b16 %v5435
    %v5731 = vunpack.c.l.b16 %v5436
    %v5732 = vunpack.c.l.b16 %v5437
    %v5733 = vunpack.c.l.b16 %v5438
    %v5734 = vunpack.c.l.b16 %v5439
    %v5735 = vunpack.c.l.b16 %v5440
    %v5736 = vpack.c.b16 %v5593, %v5592
    %v5737 = vpack.c.b16 %v5595, %v5594
    %v5738 = vpack.c.b16 %v5597, %v5596
    %v5739 = vpack.c.b16 %v5599, %v5598
    %v5740 = vpack.c.b16 %v5601, %v5600
    %v5741 = vpack.c.b16 %v5603, %v5602
    %v5742 = vpack.c.b16 %v5605, %v5604
    %v5743 = vpack.c.b16 %v5607, %v5606
    %v5744 = vpack.c.b16 %v5609, %v5608
    %v5745 = vpack.c.b16 %v5611, %v5610
    %v5746 = vpack.c.b16 %v5613, %v5612
    %v5747 = vpack.c.b16 %v5615, %v5614
    %v5748 = vpack.c.b16 %v5617, %v5616
    %v5749 = vpack.c.b16 %v5619, %v5618
    %v5750 = vpack.c.b16 %v5621, %v5620
    %v5751 = vpack.c.b16 %v5623, %v5622
    %v5752 = vpack.c.b16 %v5625, %v5624
    %v5753 = vpack.c.b16 %v5627, %v5626
    %v5754 = vpack.c.b16 %v5629, %v5628
    %v5755 = vpack.c.b16 %v5631, %v5630
    %v5756 = vpack.c.b16 %v5633, %v5632
    %v5757 = vpack.c.b16 %v5635, %v5634
    %v5758 = vpack.c.b16 %v5637, %v5636
    %v5759 = vpack.c.b16 %v5639, %v5638
    %v5760 = vpack.c.b16 %v5641, %v5640
    %v5761 = vpack.c.b16 %v5643, %v5642
    %v5762 = vpack.c.b16 %v5645, %v5644
    %v5763 = vpack.c.b16 %v5647, %v5646
    %v5764 = vpack.c.b16 %v5649, %v5648
    %v5765 = vpack.c.b16 %v5651, %v5650
    %v5766 = vpack.c.b16 %v5653, %v5652
    %v5767 = vpack.c.b16 %v5655, %v5654
    %v5768 = vpack.c.b16 %v5657, %v5656
    %v5769 = vpack.c.b16 %v5659, %v5658
    %v5770 = vpack.c.b16 %v5661, %v5660
    %v5771 = vpack.c.b16 %v5663, %v5662
    %v5772 = vpack.c.b16 %v5665, %v5664
    %v5773 = vpack.c.b16 %v5667, %v5666
    %v5774 = vpack.c.b16 %v5669, %v5668
    %v5775 = vpack.c.b16 %v5671, %v5670
    %v5776 = vpack.c.b16 %v5673, %v5672
    %v5777 = vpack.c.b16 %v5675, %v5674
    %v5778 = vpack.c.b16 %v5677, %v5676
    %v5779 = vpack.c.b16 %v5679, %v5678
    %v5780 = vpack.c.b16 %v5681, %v5680
    %v5781 = vpack.c.b16 %v5683, %v5682
    %v5782 = vpack.c.b16 %v5685, %v5684
    %v5783 = vpack.c.b16 %v5687, %v5686
    %v5784 = vpack.c.b16 %v5689, %v5688
    %v5785 = vpack.c.b16 %v5691, %v5690
    %v5786 = vpack.c.b16 %v5693, %v5692
    %v5787 = vpack.c.b16 %v5695, %v5694
    %v5788 = vpack.c.b16 %v5697, %v5696
    %v5789 = vpack.c.b16 %v5699, %v5698
    %v5790 = vpack.c.b16 %v5701, %v5700
    %v5791 = vpack.c.b16 %v5703, %v5702
    %v5792 = vpack.c.b16 %v5705, %v5704
    %v5793 = vpack.c.b16 %v5707, %v5706
    %v5794 = vpack.c.b16 %v5709, %v5708
    %v5795 = vpack.c.b16 %v5711, %v5710
    %v5796 = vpack.c.b16 %v5713, %v5712
    %v5797 = vpack.c.b16 %v5715, %v5714
    %v5798 = vpack.c.b16 %v5717, %v5716
    %v5799 = vpack.c.b16 %v5719, %v5718
    %v5800 = vpack.c.b16 %v5721, %v5720
    %v5801 = vpack.c.b16 %v5723, %v5722
    %v5802 = vpack.c.b16 %v5725, %v5724
    %v5803 = vpack.c.b16 %v5727, %v5726
    %v5804 = vpack.c.b16 %v5729, %v5728
    %v5805 = vpack.c.b16 %v5731, %v5730
    %v5806 = vpack.c.b16 %v5733, %v5732
    %v5807 = vpack.c.b16 %v5735, %v5734
    %5880 = vmatprep.subr.bf16.mxu0 0
    %5881 = vmatpush1.bf16.msra.mxu0 %v5736
    %5882 = vmatprep.subr.bf16.mxu0 0
    %5883 = vmatpush1.bf16.msra.mxu0 %v5737
    %5884 = vmatprep.subr.bf16.mxu0 0
    %5885 = vmatpush1.bf16.msra.mxu0 %v5738
    %5886 = vmatprep.subr.bf16.mxu0 0
    %5887 = vmatpush1.bf16.msra.mxu0 %v5739
    %5888 = vmatprep.subr.bf16.mxu0 0
    %5889 = vmatpush1.bf16.msra.mxu0 %v5740
    %5890 = vmatprep.subr.bf16.mxu0 0
    %5891 = vmatpush1.bf16.msra.mxu0 %v5741
    %5892 = vmatprep.subr.bf16.mxu0 0
    %5893 = vmatpush1.bf16.msra.mxu0 %v5742
    %5894 = vmatprep.subr.bf16.mxu0 0
    %5895 = vmatpush1.bf16.msra.mxu0 %v5743
    %5896 = vmatprep.subr.bf16.mxu0 0
    %5897 = vmatpush1.bf16.msra.mxu0 %v5744
    %5898 = vmatprep.subr.bf16.mxu0 0
    %5899 = vmatpush1.bf16.msra.mxu0 %v5745
    %5900 = vmatprep.subr.bf16.mxu0 0
    %5901 = vmatpush1.bf16.msra.mxu0 %v5746
    %5902 = vmatprep.subr.bf16.mxu0 0
    %5903 = vmatpush1.bf16.msra.mxu0 %v5747
    %5904 = vmatprep.subr.bf16.mxu0 0
    %5905 = vmatpush1.bf16.msra.mxu0 %v5748
    %5906 = vmatprep.subr.bf16.mxu0 0
    %5907 = vmatpush1.bf16.msra.mxu0 %v5749
    %5908 = vmatprep.subr.bf16.mxu0 0
    %5909 = vmatpush1.bf16.msra.mxu0 %v5750
    %5910 = vmatprep.subr.bf16.mxu0 0
    %5911 = vmatpush1.bf16.msra.mxu0 %v5751
    %5912 = vmatprep.mubr.bf16.mxu0 %v5010
    %5913 = vmatmul.mubr.bf16.gmra.mrb[0].mxu0 %v5009
    %v5914 = vpop.f32.mrb[0].mxu0
    %v5915 = vadd.f32 %v5446, %v5914
    %v5916 = vpop.f32.mrb[0].mxu0
    %v5917 = vpop.f32.mrb[0].mxu0
    %v5918 = vadd.f32 %v5446, %v5917
    %v5919 = vpop.f32.mrb[0].mxu0
    %5920 = vmatprep.mubr.bf16.mxu0 %v5019
    %5921 = vmatmul.mubr.bf16.gmra.mrb[0].mxu0 %v5018
    %v5922 = vpop.f32.mrb[0].mxu0
    %v5923 = vadd.f32 %v5446, %v5922
    %v5924 = vpop.f32.mrb[0].mxu0
    %v5925 = vpop.f32.mrb[0].mxu0
    %v5926 = vadd.f32 %v5446, %v5925
    %v5927 = vpop.f32.mrb[0].mxu0
    %5928 = vmatprep.mubr.bf16.mxu0 %v5028
    %5929 = vmatmul.mubr.bf16.gmra.mrb[0].mxu0 %v5027
    %v5930 = vpop.f32.mrb[0].mxu0
    %v5931 = vadd.f32 %v5446, %v5930
    %v5932 = vpop.f32.mrb[0].mxu0
    %v5933 = vpop.f32.mrb[0].mxu0
    %v5934 = vadd.f32 %v5446, %v5933
    %v5935 = vpop.f32.mrb[0].mxu0
    %5936 = vmatprep.mubr.bf16.mxu0 %v5037
    %5937 = vmatmul.mubr.bf16.gmra.mrb[0].mxu0 %v5036
    %v5938 = vpop.f32.mrb[0].mxu0
    %v5939 = vadd.f32 %v5446, %v5938
    %v5940 = vpop.f32.mrb[0].mxu0
    %v5941 = vpop.f32.mrb[0].mxu0
    %v5942 = vadd.f32 %v5446, %v5941
    %v5943 = vpop.f32.mrb[0].mxu0
    %5944 = vmatprep.mubr.bf16.mxu0 %v5046
    %5945 = vmatmul.mubr.bf16.gmra.mrb[0].mxu0 %v5045
    %v5946 = vpop.f32.mrb[0].mxu0
    %v5947 = vadd.f32 %v5446, %v5946
    %v5948 = vpop.f32.mrb[0].mxu0
    %v5949 = vpop.f32.mrb[0].mxu0
    %v5950 = vadd.f32 %v5446, %v5949
    %v5951 = vpop.f32.mrb[0].mxu0
    %5952 = vmatprep.mubr.bf16.mxu0 %v5055
    %5953 = vmatmul.mubr.bf16.gmra.mrb[0].mxu0 %v5054
    %v5954 = vpop.f32.mrb[0].mxu0
    %v5955 = vadd.f32 %v5446, %v5954
    %v5956 = vpop.f32.mrb[0].mxu0
    %v5957 = vpop.f32.mrb[0].mxu0
    %v5958 = vadd.f32 %v5446, %v5957
    %v5959 = vpop.f32.mrb[0].mxu0
    %5960 = vmatprep.mubr.bf16.mxu0 %v5064
    %5961 = vmatmul.mubr.bf16.gmra.mrb[0].mxu0 %v5063
    %v5962 = vpop.f32.mrb[0].mxu0
    %v5963 = vadd.f32 %v5446, %v5962
    %v5964 = vpop.f32.mrb[0].mxu0
    %v5965 = vpop.f32.mrb[0].mxu0
    %v5966 = vadd.f32 %v5446, %v5965
    %v5967 = vpop.f32.mrb[0].mxu0
    %5968 = vmatprep.mubr.bf16.mxu0 %v5073
    %5969 = vmatmul.mubr.bf16.gmra.mrb[0].mxu0 %v5072
    %v5970 = vpop.f32.mrb[0].mxu0
    %v5971 = vadd.f32 %v5446, %v5970
    %v5972 = vpop.f32.mrb[0].mxu0
    %v5973 = vpop.f32.mrb[0].mxu0
    %v5974 = vadd.f32 %v5446, %v5973
    %v5975 = vpop.f32.mrb[0].mxu0
    %5976 = vmatprep.mubr.bf16.mxu0 %v5082
    %5977 = vmatmul.mubr.bf16.gmra.mrb[0].mxu0 %v5081
    %v5978 = vpop.f32.mrb[0].mxu0
    %v5979 = vadd.f32 %v5446, %v5978
    %v5980 = vpop.f32.mrb[0].mxu0
    %v5981 = vpop.f32.mrb[0].mxu0
    %v5982 = vadd.f32 %v5446, %v5981
    %v5983 = vpop.f32.mrb[0].mxu0
    %5984 = vmatprep.mubr.bf16.mxu0 %v5091
    %5985 = vmatmul.mubr.bf16.gmra.mrb[0].mxu0 %v5090
    %v5986 = vpop.f32.mrb[0].mxu0
    %v5987 = vadd.f32 %v5446, %v5986
    %v5988 = vpop.f32.mrb[0].mxu0
    %v5989 = vpop.f32.mrb[0].mxu0
    %v5990 = vadd.f32 %v5446, %v5989
    %v5991 = vpop.f32.mrb[0].mxu0
    %5992 = vmatprep.mubr.bf16.mxu0 %v5100
    %5993 = vmatmul.mubr.bf16.gmra.mrb[0].mxu0 %v5099
    %v5994 = vpop.f32.mrb[0].mxu0
    %v5995 = vadd.f32 %v5446, %v5994
    %v5996 = vpop.f32.mrb[0].mxu0
    %v5997 = vpop.f32.mrb[0].mxu0
    %v5998 = vadd.f32 %v5446, %v5997
    %v5999 = vpop.f32.mrb[0].mxu0
    %6000 = vmatprep.mubr.bf16.mxu0 %v5109
    %6001 = vmatmul.mubr.bf16.gmra.mrb[0].mxu0 %v5108
    %v6002 = vpop.f32.mrb[0].mxu0
    %v6003 = vadd.f32 %v5446, %v6002
    %v6004 = vpop.f32.mrb[0].mxu0
    %v6005 = vpop.f32.mrb[0].mxu0
    %v6006 = vadd.f32 %v5446, %v6005
    %v6007 = vpop.f32.mrb[0].mxu0
    %6008 = vmatprep.mubr.bf16.mxu0 %v5118
    %6009 = vmatmul.mubr.bf16.gmra.mrb[0].mxu0 %v5117
    %v6010 = vpop.f32.mrb[0].mxu0
    %v6011 = vadd.f32 %v5446, %v6010
    %v6012 = vpop.f32.mrb[0].mxu0
    %v6013 = vpop.f32.mrb[0].mxu0
    %v6014 = vadd.f32 %v5446, %v6013
    %v6015 = vpop.f32.mrb[0].mxu0
    %6016 = vmatprep.mubr.bf16.mxu0 %v5127
    %6017 = vmatmul.mubr.bf16.gmra.mrb[0].mxu0 %v5126
    %v6018 = vpop.f32.mrb[0].mxu0
    %v6019 = vadd.f32 %v5446, %v6018
    %v6020 = vpop.f32.mrb[0].mxu0
    %v6021 = vpop.f32.mrb[0].mxu0
    %v6022 = vadd.f32 %v5446, %v6021
    %v6023 = vpop.f32.mrb[0].mxu0
    %6024 = vmatprep.mubr.bf16.mxu0 %v5136
    %6025 = vmatmul.mubr.bf16.gmra.mrb[0].mxu0 %v5135
    %v6026 = vpop.f32.mrb[0].mxu0
    %v6027 = vadd.f32 %v5446, %v6026
    %v6028 = vpop.f32.mrb[0].mxu0
    %v6029 = vpop.f32.mrb[0].mxu0
    %v6030 = vadd.f32 %v5446, %v6029
    %v6031 = vpop.f32.mrb[0].mxu0
    %6032 = vmatprep.mubr.bf16.mxu0 %v5145
    %6033 = vmatmul.mubr.bf16.gmra.mrb[0].mxu0 %v5144
    %v6034 = vpop.f32.mrb[0].mxu0
    %v6035 = vadd.f32 %v5446, %v6034
    %v6036 = vpop.f32.mrb[0].mxu0
    %v6037 = vpop.f32.mrb[0].mxu0
    %v6038 = vadd.f32 %v5446, %v6037
    %v6039 = vpop.f32.mrb[0].mxu0
    %6040 = vmatprep.mubr.bf16.mxu0 %v5154
    %6041 = vmatmul.mubr.bf16.gmra.mrb[0].mxu0 %v5153
    %v6042 = vpop.f32.mrb[0].mxu0
    %v6043 = vadd.f32 %v5446, %v6042
    %v6044 = vpop.f32.mrb[0].mxu0
    %v6045 = vpop.f32.mrb[0].mxu0
    %v6046 = vadd.f32 %v5446, %v6045
    %v6047 = vpop.f32.mrb[0].mxu0
    %6048 = vmatprep.mubr.bf16.mxu0 %v5163
    %6049 = vmatmul.mubr.bf16.gmra.mrb[0].mxu0 %v5162
    %v6050 = vpop.f32.mrb[0].mxu0
    %v6051 = vadd.f32 %v5446, %v6050
    %v6052 = vpop.f32.mrb[0].mxu0
    %v6053 = vpop.f32.mrb[0].mxu0
    %v6054 = vadd.f32 %v5446, %v6053
    %v6055 = vpop.f32.mrb[0].mxu0
    %6056 = vmatprep.mubr.bf16.mxu0 %v5172
    %6057 = vmatmul.mubr.bf16.gmra.mrb[0].mxu0 %v5171
    %v6058 = vpop.f32.mrb[0].mxu0
    %v6059 = vadd.f32 %v5446, %v6058
    %v6060 = vpop.f32.mrb[0].mxu0
    %v6061 = vpop.f32.mrb[0].mxu0
    %v6062 = vadd.f32 %v5446, %v6061
    %v6063 = vpop.f32.mrb[0].mxu0
    %6064 = vmatprep.mubr.bf16.mxu0 %v5181
    %6065 = vmatmul.mubr.bf16.gmra.mrb[0].mxu0 %v5180
    %v6066 = vpop.f32.mrb[0].mxu0
    %v6067 = vadd.f32 %v5446, %v6066
    %v6068 = vpop.f32.mrb[0].mxu0
    %v6069 = vpop.f32.mrb[0].mxu0
    %v6070 = vadd.f32 %v5446, %v6069
    %v6071 = vpop.f32.mrb[0].mxu0
    %6072 = vmatprep.mubr.bf16.mxu0 %v5190
    %6073 = vmatmul.mubr.bf16.gmra.mrb[0].mxu0 %v5189
    %v6074 = vpop.f32.mrb[0].mxu0
    %v6075 = vadd.f32 %v5446, %v6074
    %v6076 = vpop.f32.mrb[0].mxu0
    %v6077 = vpop.f32.mrb[0].mxu0
    %v6078 = vadd.f32 %v5446, %v6077
    %v6079 = vpop.f32.mrb[0].mxu0
    %6080 = vmatprep.mubr.bf16.mxu0 %v5199
    %6081 = vmatmul.mubr.bf16.gmra.mrb[0].mxu0 %v5198
    %v6082 = vpop.f32.mrb[0].mxu0
    %v6083 = vadd.f32 %v5446, %v6082
    %v6084 = vpop.f32.mrb[0].mxu0
    %v6085 = vpop.f32.mrb[0].mxu0
    %v6086 = vadd.f32 %v5446, %v6085
    %v6087 = vpop.f32.mrb[0].mxu0
    %6088 = vmatprep.mubr.bf16.mxu0 %v5208
    %6089 = vmatmul.mubr.bf16.gmra.mrb[0].mxu0 %v5207
    %v6090 = vpop.f32.mrb[0].mxu0
    %v6091 = vadd.f32 %v5446, %v6090
    %v6092 = vpop.f32.mrb[0].mxu0
    %v6093 = vpop.f32.mrb[0].mxu0
    %v6094 = vadd.f32 %v5446, %v6093
    %v6095 = vpop.f32.mrb[0].mxu0
    %6096 = vmatprep.mubr.bf16.mxu0 %v5217
    %6097 = vmatmul.mubr.bf16.gmra.mrb[0].mxu0 %v5216
    %v6098 = vpop.f32.mrb[0].mxu0
    %v6099 = vadd.f32 %v5446, %v6098
    %v6100 = vpop.f32.mrb[0].mxu0
    %v6101 = vpop.f32.mrb[0].mxu0
    %v6102 = vadd.f32 %v5446, %v6101
    %v6103 = vpop.f32.mrb[0].mxu0
    %6104 = vmatprep.mubr.bf16.mxu0 %v5226
    %6105 = vmatmul.mubr.bf16.gmra.mrb[0].mxu0 %v5225
    %v6106 = vpop.f32.mrb[0].mxu0
    %v6107 = vadd.f32 %v5446, %v6106
    %v6108 = vpop.f32.mrb[0].mxu0
    %v6109 = vpop.f32.mrb[0].mxu0
    %v6110 = vadd.f32 %v5446, %v6109
    %v6111 = vpop.f32.mrb[0].mxu0
    %6112 = vmatprep.mubr.bf16.mxu0 %v5235
    %6113 = vmatmul.mubr.bf16.gmra.mrb[0].mxu0 %v5234
    %v6114 = vpop.f32.mrb[0].mxu0
    %v6115 = vadd.f32 %v5446, %v6114
    %v6116 = vpop.f32.mrb[0].mxu0
    %v6117 = vpop.f32.mrb[0].mxu0
    %v6118 = vadd.f32 %v5446, %v6117
    %v6119 = vpop.f32.mrb[0].mxu0
    %6120 = vmatprep.mubr.bf16.mxu0 %v5244
    %6121 = vmatmul.mubr.bf16.gmra.mrb[0].mxu0 %v5243
    %v6122 = vpop.f32.mrb[0].mxu0
    %v6123 = vadd.f32 %v5446, %v6122
    %v6124 = vpop.f32.mrb[0].mxu0
    %v6125 = vpop.f32.mrb[0].mxu0
    %v6126 = vadd.f32 %v5446, %v6125
    %v6127 = vpop.f32.mrb[0].mxu0
    %6128 = vmatprep.mubr.bf16.mxu0 %v5253
    %6129 = vmatmul.mubr.bf16.gmra.mrb[0].mxu0 %v5252
    %v6130 = vpop.f32.mrb[0].mxu0
    %v6131 = vadd.f32 %v5446, %v6130
    %v6132 = vpop.f32.mrb[0].mxu0
    %v6133 = vpop.f32.mrb[0].mxu0
    %v6134 = vadd.f32 %v5446, %v6133
    %v6135 = vpop.f32.mrb[0].mxu0
    %6136 = vmatprep.mubr.bf16.mxu0 %v5262
    %6137 = vmatmul.mubr.bf16.gmra.mrb[0].mxu0 %v5261
    %v6138 = vpop.f32.mrb[0].mxu0
    %v6139 = vadd.f32 %v5446, %v6138
    %v6140 = vpop.f32.mrb[0].mxu0
    %v6141 = vpop.f32.mrb[0].mxu0
    %v6142 = vadd.f32 %v5446, %v6141
    %v6143 = vpop.f32.mrb[0].mxu0
    %6144 = vmatprep.mubr.bf16.mxu0 %v5271
    %6145 = vmatmul.mubr.bf16.gmra.mrb[0].mxu0 %v5270
    %v6146 = vpop.f32.mrb[0].mxu0
    %v6147 = vadd.f32 %v5446, %v6146
    %v6148 = vpop.f32.mrb[0].mxu0
    %v6149 = vpop.f32.mrb[0].mxu0
    %v6150 = vadd.f32 %v5446, %v6149
    %v6151 = vpop.f32.mrb[0].mxu0
    %6152 = vmatprep.mubr.bf16.mxu0 %v5280
    %6153 = vmatmul.mubr.bf16.gmra.mrb[0].mxu0 %v5279
    %v6154 = vpop.f32.mrb[0].mxu0
    %v6155 = vadd.f32 %v5446, %v6154
    %v6156 = vpop.f32.mrb[0].mxu0
    %v6157 = vpop.f32.mrb[0].mxu0
    %v6158 = vadd.f32 %v5446, %v6157
    %v6159 = vpop.f32.mrb[0].mxu0
    %6160 = vmatprep.mubr.bf16.mxu0 %v5289
    %6161 = vmatmul.mubr.bf16.gmra.mrb[0].mxu0 %v5288
    %v6162 = vpop.f32.mrb[0].mxu0
    %v6163 = vadd.f32 %v5446, %v6162
    %v6164 = vpop.f32.mrb[0].mxu0
    %v6165 = vpop.f32.mrb[0].mxu0
    %v6166 = vadd.f32 %v5446, %v6165
    %v6167 = vpop.f32.mrb[0].mxu0
    %6168 = vdwg.mxu0
    %6169 = vmatprep.subr.bf16.mxu0 0
    %6170 = vmatpush1.bf16.msra.mxu0 %v5752
    %6171 = vmatprep.subr.bf16.mxu0 0
    %6172 = vmatpush1.bf16.msra.mxu0 %v5753
    %6173 = vmatprep.subr.bf16.mxu0 0
    %6174 = vmatpush1.bf16.msra.mxu0 %v5754
    %6175 = vmatprep.subr.bf16.mxu0 0
    %6176 = vmatpush1.bf16.msra.mxu0 %v5755
    %6177 = vmatprep.subr.bf16.mxu0 0
    %6178 = vmatpush1.bf16.msra.mxu0 %v5756
    %6179 = vmatprep.subr.bf16.mxu0 0
    %6180 = vmatpush1.bf16.msra.mxu0 %v5757
    %6181 = vmatprep.subr.bf16.mxu0 0
    %6182 = vmatpush1.bf16.msra.mxu0 %v5758
    %6183 = vmatprep.subr.bf16.mxu0 0
    %6184 = vmatpush1.bf16.msra.mxu0 %v5759
    %6185 = vmatprep.subr.bf16.mxu0 0
    %6186 = vmatpush1.bf16.msra.mxu0 %v5760
    %6187 = vmatprep.subr.bf16.mxu0 0
    %6188 = vmatpush1.bf16.msra.mxu0 %v5761
    %6189 = vmatprep.subr.bf16.mxu0 0
    %6190 = vmatpush1.bf16.msra.mxu0 %v5762
    %6191 = vmatprep.subr.bf16.mxu0 0
    %6192 = vmatpush1.bf16.msra.mxu0 %v5763
    %6193 = vmatprep.subr.bf16.mxu0 0
    %6194 = vmatpush1.bf16.msra.mxu0 %v5764
    %6195 = vmatprep.subr.bf16.mxu0 0
    %6196 = vmatpush1.bf16.msra.mxu0 %v5765
    %6197 = vmatprep.subr.bf16.mxu0 0
    %6198 = vmatpush1.bf16.msra.mxu0 %v5766
    %6199 = vmatprep.subr.bf16.mxu0 0
    %6200 = vmatpush1.bf16.msra.mxu0 %v5767
    %6201 = vmatprep.mubr.bf16.mxu0 %v5012
    %6202 = vmatmul.mubr.bf16.gmra.mrb[0].mxu0 %v5011
    %v6203 = vpop.f32.mrb[0].mxu0
    %v6204 = vadd.f32 %v5915, %v6203
    %v6205 = vpop.f32.mrb[0].mxu0
    %v6206 = vpop.f32.mrb[0].mxu0
    %v6207 = vadd.f32 %v5918, %v6206
    %v6208 = vpop.f32.mrb[0].mxu0
    %6209 = vmatprep.mubr.bf16.mxu0 %v5021
    %6210 = vmatmul.mubr.bf16.gmra.mrb[0].mxu0 %v5020
    %v6211 = vpop.f32.mrb[0].mxu0
    %v6212 = vadd.f32 %v5923, %v6211
    %v6213 = vpop.f32.mrb[0].mxu0
    %v6214 = vpop.f32.mrb[0].mxu0
    %v6215 = vadd.f32 %v5926, %v6214
    %v6216 = vpop.f32.mrb[0].mxu0
    %6217 = vmatprep.mubr.bf16.mxu0 %v5030
    %6218 = vmatmul.mubr.bf16.gmra.mrb[0].mxu0 %v5029
    %v6219 = vpop.f32.mrb[0].mxu0
    %v6220 = vadd.f32 %v5931, %v6219
    %v6221 = vpop.f32.mrb[0].mxu0
    %v6222 = vpop.f32.mrb[0].mxu0
    %v6223 = vadd.f32 %v5934, %v6222
    %v6224 = vpop.f32.mrb[0].mxu0
    %6225 = vmatprep.mubr.bf16.mxu0 %v5039
    %6226 = vmatmul.mubr.bf16.gmra.mrb[0].mxu0 %v5038
    %v6227 = vpop.f32.mrb[0].mxu0
    %v6228 = vadd.f32 %v5939, %v6227
    %v6229 = vpop.f32.mrb[0].mxu0
    %v6230 = vpop.f32.mrb[0].mxu0
    %v6231 = vadd.f32 %v5942, %v6230
    %v6232 = vpop.f32.mrb[0].mxu0
    %6233 = vmatprep.mubr.bf16.mxu0 %v5048
    %6234 = vmatmul.mubr.bf16.gmra.mrb[0].mxu0 %v5047
    %v6235 = vpop.f32.mrb[0].mxu0
    %v6236 = vadd.f32 %v5947, %v6235
    %v6237 = vpop.f32.mrb[0].mxu0
    %v6238 = vpop.f32.mrb[0].mxu0
    %v6239 = vadd.f32 %v5950, %v6238
    %v6240 = vpop.f32.mrb[0].mxu0
    %6241 = vmatprep.mubr.bf16.mxu0 %v5057
    %6242 = vmatmul.mubr.bf16.gmra.mrb[0].mxu0 %v5056
    %v6243 = vpop.f32.mrb[0].mxu0
    %v6244 = vadd.f32 %v5955, %v6243
    %v6245 = vpop.f32.mrb[0].mxu0
    %v6246 = vpop.f32.mrb[0].mxu0
    %v6247 = vadd.f32 %v5958, %v6246
    %v6248 = vpop.f32.mrb[0].mxu0
    %6249 = vmatprep.mubr.bf16.mxu0 %v5066
    %6250 = vmatmul.mubr.bf16.gmra.mrb[0].mxu0 %v5065
    %v6251 = vpop.f32.mrb[0].mxu0
    %v6252 = vadd.f32 %v5963, %v6251
    %v6253 = vpop.f32.mrb[0].mxu0
    %v6254 = vpop.f32.mrb[0].mxu0
    %v6255 = vadd.f32 %v5966, %v6254
    %v6256 = vpop.f32.mrb[0].mxu0
    %6257 = vmatprep.mubr.bf16.mxu0 %v5075
    %6258 = vmatmul.mubr.bf16.gmra.mrb[0].mxu0 %v5074
    %v6259 = vpop.f32.mrb[0].mxu0
    %v6260 = vadd.f32 %v5971, %v6259
    %v6261 = vpop.f32.mrb[0].mxu0
    %v6262 = vpop.f32.mrb[0].mxu0
    %v6263 = vadd.f32 %v5974, %v6262
    %v6264 = vpop.f32.mrb[0].mxu0
    %6265 = vmatprep.mubr.bf16.mxu0 %v5084
    %6266 = vmatmul.mubr.bf16.gmra.mrb[0].mxu0 %v5083
    %v6267 = vpop.f32.mrb[0].mxu0
    %v6268 = vadd.f32 %v5979, %v6267
    %v6269 = vpop.f32.mrb[0].mxu0
    %v6270 = vpop.f32.mrb[0].mxu0
    %v6271 = vadd.f32 %v5982, %v6270
    %v6272 = vpop.f32.mrb[0].mxu0
    %6273 = vmatprep.mubr.bf16.mxu0 %v5093
    %6274 = vmatmul.mubr.bf16.gmra.mrb[0].mxu0 %v5092
    %v6275 = vpop.f32.mrb[0].mxu0
    %v6276 = vadd.f32 %v5987, %v6275
    %v6277 = vpop.f32.mrb[0].mxu0
    %v6278 = vpop.f32.mrb[0].mxu0
    %v6279 = vadd.f32 %v5990, %v6278
    %v6280 = vpop.f32.mrb[0].mxu0
    %6281 = vmatprep.mubr.bf16.mxu0 %v5102
    %6282 = vmatmul.mubr.bf16.gmra.mrb[0].mxu0 %v5101
    %v6283 = vpop.f32.mrb[0].mxu0
    %v6284 = vadd.f32 %v5995, %v6283
    %v6285 = vpop.f32.mrb[0].mxu0
    %v6286 = vpop.f32.mrb[0].mxu0
    %v6287 = vadd.f32 %v5998, %v6286
    %v6288 = vpop.f32.mrb[0].mxu0
    %6289 = vmatprep.mubr.bf16.mxu0 %v5111
    %6290 = vmatmul.mubr.bf16.gmra.mrb[0].mxu0 %v5110
    %v6291 = vpop.f32.mrb[0].mxu0
    %v6292 = vadd.f32 %v6003, %v6291
    %v6293 = vpop.f32.mrb[0].mxu0
    %v6294 = vpop.f32.mrb[0].mxu0
    %v6295 = vadd.f32 %v6006, %v6294
    %v6296 = vpop.f32.mrb[0].mxu0
    %6297 = vmatprep.mubr.bf16.mxu0 %v5120
    %6298 = vmatmul.mubr.bf16.gmra.mrb[0].mxu0 %v5119
    %v6299 = vpop.f32.mrb[0].mxu0
    %v6300 = vadd.f32 %v6011, %v6299
    %v6301 = vpop.f32.mrb[0].mxu0
    %v6302 = vpop.f32.mrb[0].mxu0
    %v6303 = vadd.f32 %v6014, %v6302
    %v6304 = vpop.f32.mrb[0].mxu0
    %6305 = vmatprep.mubr.bf16.mxu0 %v5129
    %6306 = vmatmul.mubr.bf16.gmra.mrb[0].mxu0 %v5128
    %v6307 = vpop.f32.mrb[0].mxu0
    %v6308 = vadd.f32 %v6019, %v6307
    %v6309 = vpop.f32.mrb[0].mxu0
    %v6310 = vpop.f32.mrb[0].mxu0
    %v6311 = vadd.f32 %v6022, %v6310
    %v6312 = vpop.f32.mrb[0].mxu0
    %6313 = vmatprep.mubr.bf16.mxu0 %v5138
    %6314 = vmatmul.mubr.bf16.gmra.mrb[0].mxu0 %v5137
    %v6315 = vpop.f32.mrb[0].mxu0
    %v6316 = vadd.f32 %v6027, %v6315
    %v6317 = vpop.f32.mrb[0].mxu0
    %v6318 = vpop.f32.mrb[0].mxu0
    %v6319 = vadd.f32 %v6030, %v6318
    %v6320 = vpop.f32.mrb[0].mxu0
    %6321 = vmatprep.mubr.bf16.mxu0 %v5147
    %6322 = vmatmul.mubr.bf16.gmra.mrb[0].mxu0 %v5146
    %v6323 = vpop.f32.mrb[0].mxu0
    %v6324 = vadd.f32 %v6035, %v6323
    %v6325 = vpop.f32.mrb[0].mxu0
    %v6326 = vpop.f32.mrb[0].mxu0
    %v6327 = vadd.f32 %v6038, %v6326
    %v6328 = vpop.f32.mrb[0].mxu0
    %6329 = vmatprep.mubr.bf16.mxu0 %v5156
    %6330 = vmatmul.mubr.bf16.gmra.mrb[0].mxu0 %v5155
    %v6331 = vpop.f32.mrb[0].mxu0
    %v6332 = vadd.f32 %v6043, %v6331
    %v6333 = vpop.f32.mrb[0].mxu0
    %v6334 = vpop.f32.mrb[0].mxu0
    %v6335 = vadd.f32 %v6046, %v6334
    %v6336 = vpop.f32.mrb[0].mxu0
    %6337 = vmatprep.mubr.bf16.mxu0 %v5165
    %6338 = vmatmul.mubr.bf16.gmra.mrb[0].mxu0 %v5164
    %v6339 = vpop.f32.mrb[0].mxu0
    %v6340 = vadd.f32 %v6051, %v6339
    %v6341 = vpop.f32.mrb[0].mxu0
    %v6342 = vpop.f32.mrb[0].mxu0
    %v6343 = vadd.f32 %v6054, %v6342
    %v6344 = vpop.f32.mrb[0].mxu0
    %6345 = vmatprep.mubr.bf16.mxu0 %v5174
    %6346 = vmatmul.mubr.bf16.gmra.mrb[0].mxu0 %v5173
    %v6347 = vpop.f32.mrb[0].mxu0
    %v6348 = vadd.f32 %v6059, %v6347
    %v6349 = vpop.f32.mrb[0].mxu0
    %v6350 = vpop.f32.mrb[0].mxu0
    %v6351 = vadd.f32 %v6062, %v6350
    %v6352 = vpop.f32.mrb[0].mxu0
    %6353 = vmatprep.mubr.bf16.mxu0 %v5183
    %6354 = vmatmul.mubr.bf16.gmra.mrb[0].mxu0 %v5182
    %v6355 = vpop.f32.mrb[0].mxu0
    %v6356 = vadd.f32 %v6067, %v6355
    %v6357 = vpop.f32.mrb[0].mxu0
    %v6358 = vpop.f32.mrb[0].mxu0
    %v6359 = vadd.f32 %v6070, %v6358
    %v6360 = vpop.f32.mrb[0].mxu0
    %6361 = vmatprep.mubr.bf16.mxu0 %v5192
    %6362 = vmatmul.mubr.bf16.gmra.mrb[0].mxu0 %v5191
    %v6363 = vpop.f32.mrb[0].mxu0
    %v6364 = vadd.f32 %v6075, %v6363
    %v6365 = vpop.f32.mrb[0].mxu0
    %v6366 = vpop.f32.mrb[0].mxu0
    %v6367 = vadd.f32 %v6078, %v6366
    %v6368 = vpop.f32.mrb[0].mxu0
    %6369 = vmatprep.mubr.bf16.mxu0 %v5201
    %6370 = vmatmul.mubr.bf16.gmra.mrb[0].mxu0 %v5200
    %v6371 = vpop.f32.mrb[0].mxu0
    %v6372 = vadd.f32 %v6083, %v6371
    %v6373 = vpop.f32.mrb[0].mxu0
    %v6374 = vpop.f32.mrb[0].mxu0
    %v6375 = vadd.f32 %v6086, %v6374
    %v6376 = vpop.f32.mrb[0].mxu0
    %6377 = vmatprep.mubr.bf16.mxu0 %v5210
    %6378 = vmatmul.mubr.bf16.gmra.mrb[0].mxu0 %v5209
    %v6379 = vpop.f32.mrb[0].mxu0
    %v6380 = vadd.f32 %v6091, %v6379
    %v6381 = vpop.f32.mrb[0].mxu0
    %v6382 = vpop.f32.mrb[0].mxu0
    %v6383 = vadd.f32 %v6094, %v6382
    %v6384 = vpop.f32.mrb[0].mxu0
    %6385 = vmatprep.mubr.bf16.mxu0 %v5219
    %6386 = vmatmul.mubr.bf16.gmra.mrb[0].mxu0 %v5218
    %v6387 = vpop.f32.mrb[0].mxu0
    %v6388 = vadd.f32 %v6099, %v6387
    %v6389 = vpop.f32.mrb[0].mxu0
    %v6390 = vpop.f32.mrb[0].mxu0
    %v6391 = vadd.f32 %v6102, %v6390
    %v6392 = vpop.f32.mrb[0].mxu0
    %6393 = vmatprep.mubr.bf16.mxu0 %v5228
    %6394 = vmatmul.mubr.bf16.gmra.mrb[0].mxu0 %v5227
    %v6395 = vpop.f32.mrb[0].mxu0
    %v6396 = vadd.f32 %v6107, %v6395
    %v6397 = vpop.f32.mrb[0].mxu0
    %v6398 = vpop.f32.mrb[0].mxu0
    %v6399 = vadd.f32 %v6110, %v6398
    %v6400 = vpop.f32.mrb[0].mxu0
    %6401 = vmatprep.mubr.bf16.mxu0 %v5237
    %6402 = vmatmul.mubr.bf16.gmra.mrb[0].mxu0 %v5236
    %v6403 = vpop.f32.mrb[0].mxu0
    %v6404 = vadd.f32 %v6115, %v6403
    %v6405 = vpop.f32.mrb[0].mxu0
    %v6406 = vpop.f32.mrb[0].mxu0
    %v6407 = vadd.f32 %v6118, %v6406
    %v6408 = vpop.f32.mrb[0].mxu0
    %6409 = vmatprep.mubr.bf16.mxu0 %v5246
    %6410 = vmatmul.mubr.bf16.gmra.mrb[0].mxu0 %v5245
    %v6411 = vpop.f32.mrb[0].mxu0
    %v6412 = vadd.f32 %v6123, %v6411
    %v6413 = vpop.f32.mrb[0].mxu0
    %v6414 = vpop.f32.mrb[0].mxu0
    %v6415 = vadd.f32 %v6126, %v6414
    %v6416 = vpop.f32.mrb[0].mxu0
    %6417 = vmatprep.mubr.bf16.mxu0 %v5255
    %6418 = vmatmul.mubr.bf16.gmra.mrb[0].mxu0 %v5254
    %v6419 = vpop.f32.mrb[0].mxu0
    %v6420 = vadd.f32 %v6131, %v6419
    %v6421 = vpop.f32.mrb[0].mxu0
    %v6422 = vpop.f32.mrb[0].mxu0
    %v6423 = vadd.f32 %v6134, %v6422
    %v6424 = vpop.f32.mrb[0].mxu0
    %6425 = vmatprep.mubr.bf16.mxu0 %v5264
    %6426 = vmatmul.mubr.bf16.gmra.mrb[0].mxu0 %v5263
    %v6427 = vpop.f32.mrb[0].mxu0
    %v6428 = vadd.f32 %v6139, %v6427
    %v6429 = vpop.f32.mrb[0].mxu0
    %v6430 = vpop.f32.mrb[0].mxu0
    %v6431 = vadd.f32 %v6142, %v6430
    %v6432 = vpop.f32.mrb[0].mxu0
    %6433 = vmatprep.mubr.bf16.mxu0 %v5273
    %6434 = vmatmul.mubr.bf16.gmra.mrb[0].mxu0 %v5272
    %v6435 = vpop.f32.mrb[0].mxu0
    %v6436 = vadd.f32 %v6147, %v6435
    %v6437 = vpop.f32.mrb[0].mxu0
    %v6438 = vpop.f32.mrb[0].mxu0
    %v6439 = vadd.f32 %v6150, %v6438
    %v6440 = vpop.f32.mrb[0].mxu0
    %6441 = vmatprep.mubr.bf16.mxu0 %v5282
    %6442 = vmatmul.mubr.bf16.gmra.mrb[0].mxu0 %v5281
    %v6443 = vpop.f32.mrb[0].mxu0
    %v6444 = vadd.f32 %v6155, %v6443
    %v6445 = vpop.f32.mrb[0].mxu0
    %v6446 = vpop.f32.mrb[0].mxu0
    %v6447 = vadd.f32 %v6158, %v6446
    %v6448 = vpop.f32.mrb[0].mxu0
    %6449 = vmatprep.mubr.bf16.mxu0 %v5291
    %6450 = vmatmul.mubr.bf16.gmra.mrb[0].mxu0 %v5290
    %v6451 = vpop.f32.mrb[0].mxu0
    %v6452 = vadd.f32 %v6163, %v6451
    %v6453 = vpop.f32.mrb[0].mxu0
    %v6454 = vpop.f32.mrb[0].mxu0
    %v6455 = vadd.f32 %v6166, %v6454
    %v6456 = vpop.f32.mrb[0].mxu0
    %6457 = vdwg.mxu0
    %6458 = vmatprep.subr.bf16.mxu0 0
    %6459 = vmatpush1.bf16.msra.mxu0 %v5768
    %6460 = vmatprep.subr.bf16.mxu0 0
    %6461 = vmatpush1.bf16.msra.mxu0 %v5769
    %6462 = vmatprep.subr.bf16.mxu0 0
    %6463 = vmatpush1.bf16.msra.mxu0 %v5770
    %6464 = vmatprep.subr.bf16.mxu0 0
    %6465 = vmatpush1.bf16.msra.mxu0 %v5771
    %6466 = vmatprep.subr.bf16.mxu0 0
    %6467 = vmatpush1.bf16.msra.mxu0 %v5772
    %6468 = vmatprep.subr.bf16.mxu0 0
    %6469 = vmatpush1.bf16.msra.mxu0 %v5773
    %6470 = vmatprep.subr.bf16.mxu0 0
    %6471 = vmatpush1.bf16.msra.mxu0 %v5774
    %6472 = vmatprep.subr.bf16.mxu0 0
    %6473 = vmatpush1.bf16.msra.mxu0 %v5775
    %6474 = vmatprep.subr.bf16.mxu0 0
    %6475 = vmatpush1.bf16.msra.mxu0 %v5776
    %6476 = vmatprep.subr.bf16.mxu0 0
    %6477 = vmatpush1.bf16.msra.mxu0 %v5777
    %6478 = vmatprep.subr.bf16.mxu0 0
    %6479 = vmatpush1.bf16.msra.mxu0 %v5778
    %6480 = vmatprep.subr.bf16.mxu0 0
    %6481 = vmatpush1.bf16.msra.mxu0 %v5779
    %6482 = vmatprep.subr.bf16.mxu0 0
    %6483 = vmatpush1.bf16.msra.mxu0 %v5780
    %6484 = vmatprep.subr.bf16.mxu0 0
    %6485 = vmatpush1.bf16.msra.mxu0 %v5781
    %6486 = vmatprep.subr.bf16.mxu0 0
    %6487 = vmatpush1.bf16.msra.mxu0 %v5782
    %6488 = vmatprep.subr.bf16.mxu0 0
    %6489 = vmatpush1.bf16.msra.mxu0 %v5783
    %6490 = vmatprep.mubr.bf16.mxu0 %v5014
    %6491 = vmatmul.mubr.bf16.gmra.mrb[0].mxu0 %v5013
    %v6492 = vpop.f32.mrb[0].mxu0
    %v6493 = vadd.f32 %v6204, %v6492
    %v6494 = vpop.f32.mrb[0].mxu0
    %v6495 = vpop.f32.mrb[0].mxu0
    %v6496 = vadd.f32 %v6207, %v6495
    %v6497 = vpop.f32.mrb[0].mxu0
    %6498 = vmatprep.mubr.bf16.mxu0 %v5023
    %6499 = vmatmul.mubr.bf16.gmra.mrb[0].mxu0 %v5022
    %v6500 = vpop.f32.mrb[0].mxu0
    %v6501 = vadd.f32 %v6212, %v6500
    %v6502 = vpop.f32.mrb[0].mxu0
    %v6503 = vpop.f32.mrb[0].mxu0
    %v6504 = vadd.f32 %v6215, %v6503
    %v6505 = vpop.f32.mrb[0].mxu0
    %6506 = vmatprep.mubr.bf16.mxu0 %v5032
    %6507 = vmatmul.mubr.bf16.gmra.mrb[0].mxu0 %v5031
    %v6508 = vpop.f32.mrb[0].mxu0
    %v6509 = vadd.f32 %v6220, %v6508
    %v6510 = vpop.f32.mrb[0].mxu0
    %v6511 = vpop.f32.mrb[0].mxu0
    %v6512 = vadd.f32 %v6223, %v6511
    %v6513 = vpop.f32.mrb[0].mxu0
    %6514 = vmatprep.mubr.bf16.mxu0 %v5041
    %6515 = vmatmul.mubr.bf16.gmra.mrb[0].mxu0 %v5040
    %v6516 = vpop.f32.mrb[0].mxu0
    %v6517 = vadd.f32 %v6228, %v6516
    %v6518 = vpop.f32.mrb[0].mxu0
    %v6519 = vpop.f32.mrb[0].mxu0
    %v6520 = vadd.f32 %v6231, %v6519
    %v6521 = vpop.f32.mrb[0].mxu0
    %6522 = vmatprep.mubr.bf16.mxu0 %v5050
    %6523 = vmatmul.mubr.bf16.gmra.mrb[0].mxu0 %v5049
    %v6524 = vpop.f32.mrb[0].mxu0
    %v6525 = vadd.f32 %v6236, %v6524
    %v6526 = vpop.f32.mrb[0].mxu0
    %v6527 = vpop.f32.mrb[0].mxu0
    %v6528 = vadd.f32 %v6239, %v6527
    %v6529 = vpop.f32.mrb[0].mxu0
    %6530 = vmatprep.mubr.bf16.mxu0 %v5059
    %6531 = vmatmul.mubr.bf16.gmra.mrb[0].mxu0 %v5058
    %v6532 = vpop.f32.mrb[0].mxu0
    %v6533 = vadd.f32 %v6244, %v6532
    %v6534 = vpop.f32.mrb[0].mxu0
    %v6535 = vpop.f32.mrb[0].mxu0
    %v6536 = vadd.f32 %v6247, %v6535
    %v6537 = vpop.f32.mrb[0].mxu0
    %6538 = vmatprep.mubr.bf16.mxu0 %v5068
    %6539 = vmatmul.mubr.bf16.gmra.mrb[0].mxu0 %v5067
    %v6540 = vpop.f32.mrb[0].mxu0
    %v6541 = vadd.f32 %v6252, %v6540
    %v6542 = vpop.f32.mrb[0].mxu0
    %v6543 = vpop.f32.mrb[0].mxu0
    %v6544 = vadd.f32 %v6255, %v6543
    %v6545 = vpop.f32.mrb[0].mxu0
    %6546 = vmatprep.mubr.bf16.mxu0 %v5077
    %6547 = vmatmul.mubr.bf16.gmra.mrb[0].mxu0 %v5076
    %v6548 = vpop.f32.mrb[0].mxu0
    %v6549 = vadd.f32 %v6260, %v6548
    %v6550 = vpop.f32.mrb[0].mxu0
    %v6551 = vpop.f32.mrb[0].mxu0
    %v6552 = vadd.f32 %v6263, %v6551
    %v6553 = vpop.f32.mrb[0].mxu0
    %6554 = vmatprep.mubr.bf16.mxu0 %v5086
    %6555 = vmatmul.mubr.bf16.gmra.mrb[0].mxu0 %v5085
    %v6556 = vpop.f32.mrb[0].mxu0
    %v6557 = vadd.f32 %v6268, %v6556
    %v6558 = vpop.f32.mrb[0].mxu0
    %v6559 = vpop.f32.mrb[0].mxu0
    %v6560 = vadd.f32 %v6271, %v6559
    %v6561 = vpop.f32.mrb[0].mxu0
    %6562 = vmatprep.mubr.bf16.mxu0 %v5095
    %6563 = vmatmul.mubr.bf16.gmra.mrb[0].mxu0 %v5094
    %v6564 = vpop.f32.mrb[0].mxu0
    %v6565 = vadd.f32 %v6276, %v6564
    %v6566 = vpop.f32.mrb[0].mxu0
    %v6567 = vpop.f32.mrb[0].mxu0
    %v6568 = vadd.f32 %v6279, %v6567
    %v6569 = vpop.f32.mrb[0].mxu0
    %6570 = vmatprep.mubr.bf16.mxu0 %v5104
    %6571 = vmatmul.mubr.bf16.gmra.mrb[0].mxu0 %v5103
    %v6572 = vpop.f32.mrb[0].mxu0
    %v6573 = vadd.f32 %v6284, %v6572
    %v6574 = vpop.f32.mrb[0].mxu0
    %v6575 = vpop.f32.mrb[0].mxu0
    %v6576 = vadd.f32 %v6287, %v6575
    %v6577 = vpop.f32.mrb[0].mxu0
    %6578 = vmatprep.mubr.bf16.mxu0 %v5113
    %6579 = vmatmul.mubr.bf16.gmra.mrb[0].mxu0 %v5112
    %v6580 = vpop.f32.mrb[0].mxu0
    %v6581 = vadd.f32 %v6292, %v6580
    %v6582 = vpop.f32.mrb[0].mxu0
    %v6583 = vpop.f32.mrb[0].mxu0
    %v6584 = vadd.f32 %v6295, %v6583
    %v6585 = vpop.f32.mrb[0].mxu0
    %6586 = vmatprep.mubr.bf16.mxu0 %v5122
    %6587 = vmatmul.mubr.bf16.gmra.mrb[0].mxu0 %v5121
    %v6588 = vpop.f32.mrb[0].mxu0
    %v6589 = vadd.f32 %v6300, %v6588
    %v6590 = vpop.f32.mrb[0].mxu0
    %v6591 = vpop.f32.mrb[0].mxu0
    %v6592 = vadd.f32 %v6303, %v6591
    %v6593 = vpop.f32.mrb[0].mxu0
    %6594 = vmatprep.mubr.bf16.mxu0 %v5131
    %6595 = vmatmul.mubr.bf16.gmra.mrb[0].mxu0 %v5130
    %v6596 = vpop.f32.mrb[0].mxu0
    %v6597 = vadd.f32 %v6308, %v6596
    %v6598 = vpop.f32.mrb[0].mxu0
    %v6599 = vpop.f32.mrb[0].mxu0
    %v6600 = vadd.f32 %v6311, %v6599
    %v6601 = vpop.f32.mrb[0].mxu0
    %6602 = vmatprep.mubr.bf16.mxu0 %v5140
    %6603 = vmatmul.mubr.bf16.gmra.mrb[0].mxu0 %v5139
    %v6604 = vpop.f32.mrb[0].mxu0
    %v6605 = vadd.f32 %v6316, %v6604
    %v6606 = vpop.f32.mrb[0].mxu0
    %v6607 = vpop.f32.mrb[0].mxu0
    %v6608 = vadd.f32 %v6319, %v6607
    %v6609 = vpop.f32.mrb[0].mxu0
    %6610 = vmatprep.mubr.bf16.mxu0 %v5149
    %6611 = vmatmul.mubr.bf16.gmra.mrb[0].mxu0 %v5148
    %v6612 = vpop.f32.mrb[0].mxu0
    %v6613 = vadd.f32 %v6324, %v6612
    %v6614 = vpop.f32.mrb[0].mxu0
    %v6615 = vpop.f32.mrb[0].mxu0
    %v6616 = vadd.f32 %v6327, %v6615
    %v6617 = vpop.f32.mrb[0].mxu0
    %6618 = vmatprep.mubr.bf16.mxu0 %v5158
    %6619 = vmatmul.mubr.bf16.gmra.mrb[0].mxu0 %v5157
    %v6620 = vpop.f32.mrb[0].mxu0
    %v6621 = vadd.f32 %v6332, %v6620
    %v6622 = vpop.f32.mrb[0].mxu0
    %v6623 = vpop.f32.mrb[0].mxu0
    %v6624 = vadd.f32 %v6335, %v6623
    %v6625 = vpop.f32.mrb[0].mxu0
    %6626 = vmatprep.mubr.bf16.mxu0 %v5167
    %6627 = vmatmul.mubr.bf16.gmra.mrb[0].mxu0 %v5166
    %v6628 = vpop.f32.mrb[0].mxu0
    %v6629 = vadd.f32 %v6340, %v6628
    %v6630 = vpop.f32.mrb[0].mxu0
    %v6631 = vpop.f32.mrb[0].mxu0
    %v6632 = vadd.f32 %v6343, %v6631
    %v6633 = vpop.f32.mrb[0].mxu0
    %6634 = vmatprep.mubr.bf16.mxu0 %v5176
    %6635 = vmatmul.mubr.bf16.gmra.mrb[0].mxu0 %v5175
    %v6636 = vpop.f32.mrb[0].mxu0
    %v6637 = vadd.f32 %v6348, %v6636
    %v6638 = vpop.f32.mrb[0].mxu0
    %v6639 = vpop.f32.mrb[0].mxu0
    %v6640 = vadd.f32 %v6351, %v6639
    %v6641 = vpop.f32.mrb[0].mxu0
    %6642 = vmatprep.mubr.bf16.mxu0 %v5185
    %6643 = vmatmul.mubr.bf16.gmra.mrb[0].mxu0 %v5184
    %v6644 = vpop.f32.mrb[0].mxu0
    %v6645 = vadd.f32 %v6356, %v6644
    %v6646 = vpop.f32.mrb[0].mxu0
    %v6647 = vpop.f32.mrb[0].mxu0
    %v6648 = vadd.f32 %v6359, %v6647
    %v6649 = vpop.f32.mrb[0].mxu0
    %6650 = vmatprep.mubr.bf16.mxu0 %v5194
    %6651 = vmatmul.mubr.bf16.gmra.mrb[0].mxu0 %v5193
    %v6652 = vpop.f32.mrb[0].mxu0
    %v6653 = vadd.f32 %v6364, %v6652
    %v6654 = vpop.f32.mrb[0].mxu0
    %v6655 = vpop.f32.mrb[0].mxu0
    %v6656 = vadd.f32 %v6367, %v6655
    %v6657 = vpop.f32.mrb[0].mxu0
    %6658 = vmatprep.mubr.bf16.mxu0 %v5203
    %6659 = vmatmul.mubr.bf16.gmra.mrb[0].mxu0 %v5202
    %v6660 = vpop.f32.mrb[0].mxu0
    %v6661 = vadd.f32 %v6372, %v6660
    %v6662 = vpop.f32.mrb[0].mxu0
    %v6663 = vpop.f32.mrb[0].mxu0
    %v6664 = vadd.f32 %v6375, %v6663
    %v6665 = vpop.f32.mrb[0].mxu0
    %6666 = vmatprep.mubr.bf16.mxu0 %v5212
    %6667 = vmatmul.mubr.bf16.gmra.mrb[0].mxu0 %v5211
    %v6668 = vpop.f32.mrb[0].mxu0
    %v6669 = vadd.f32 %v6380, %v6668
    %v6670 = vpop.f32.mrb[0].mxu0
    %v6671 = vpop.f32.mrb[0].mxu0
    %v6672 = vadd.f32 %v6383, %v6671
    %v6673 = vpop.f32.mrb[0].mxu0
    %6674 = vmatprep.mubr.bf16.mxu0 %v5221
    %6675 = vmatmul.mubr.bf16.gmra.mrb[0].mxu0 %v5220
    %v6676 = vpop.f32.mrb[0].mxu0
    %v6677 = vadd.f32 %v6388, %v6676
    %v6678 = vpop.f32.mrb[0].mxu0
    %v6679 = vpop.f32.mrb[0].mxu0
    %v6680 = vadd.f32 %v6391, %v6679
    %v6681 = vpop.f32.mrb[0].mxu0
    %6682 = vmatprep.mubr.bf16.mxu0 %v5230
    %6683 = vmatmul.mubr.bf16.gmra.mrb[0].mxu0 %v5229
    %v6684 = vpop.f32.mrb[0].mxu0
    %v6685 = vadd.f32 %v6396, %v6684
    %v6686 = vpop.f32.mrb[0].mxu0
    %v6687 = vpop.f32.mrb[0].mxu0
    %v6688 = vadd.f32 %v6399, %v6687
    %v6689 = vpop.f32.mrb[0].mxu0
    %6690 = vmatprep.mubr.bf16.mxu0 %v5239
    %6691 = vmatmul.mubr.bf16.gmra.mrb[0].mxu0 %v5238
    %v6692 = vpop.f32.mrb[0].mxu0
    %v6693 = vadd.f32 %v6404, %v6692
    %v6694 = vpop.f32.mrb[0].mxu0
    %v6695 = vpop.f32.mrb[0].mxu0
    %v6696 = vadd.f32 %v6407, %v6695
    %v6697 = vpop.f32.mrb[0].mxu0
    %6698 = vmatprep.mubr.bf16.mxu0 %v5248
    %6699 = vmatmul.mubr.bf16.gmra.mrb[0].mxu0 %v5247
    %v6700 = vpop.f32.mrb[0].mxu0
    %v6701 = vadd.f32 %v6412, %v6700
    %v6702 = vpop.f32.mrb[0].mxu0
    %v6703 = vpop.f32.mrb[0].mxu0
    %v6704 = vadd.f32 %v6415, %v6703
    %v6705 = vpop.f32.mrb[0].mxu0
    %6706 = vmatprep.mubr.bf16.mxu0 %v5257
    %6707 = vmatmul.mubr.bf16.gmra.mrb[0].mxu0 %v5256
    %v6708 = vpop.f32.mrb[0].mxu0
    %v6709 = vadd.f32 %v6420, %v6708
    %v6710 = vpop.f32.mrb[0].mxu0
    %v6711 = vpop.f32.mrb[0].mxu0
    %v6712 = vadd.f32 %v6423, %v6711
    %v6713 = vpop.f32.mrb[0].mxu0
    %6714 = vmatprep.mubr.bf16.mxu0 %v5266
    %6715 = vmatmul.mubr.bf16.gmra.mrb[0].mxu0 %v5265
    %v6716 = vpop.f32.mrb[0].mxu0
    %v6717 = vadd.f32 %v6428, %v6716
    %v6718 = vpop.f32.mrb[0].mxu0
    %v6719 = vpop.f32.mrb[0].mxu0
    %v6720 = vadd.f32 %v6431, %v6719
    %v6721 = vpop.f32.mrb[0].mxu0
    %6722 = vmatprep.mubr.bf16.mxu0 %v5275
    %6723 = vmatmul.mubr.bf16.gmra.mrb[0].mxu0 %v5274
    %v6724 = vpop.f32.mrb[0].mxu0
    %v6725 = vadd.f32 %v6436, %v6724
    %v6726 = vpop.f32.mrb[0].mxu0
    %v6727 = vpop.f32.mrb[0].mxu0
    %v6728 = vadd.f32 %v6439, %v6727
    %v6729 = vpop.f32.mrb[0].mxu0
    %6730 = vmatprep.mubr.bf16.mxu0 %v5284
    %6731 = vmatmul.mubr.bf16.gmra.mrb[0].mxu0 %v5283
    %v6732 = vpop.f32.mrb[0].mxu0
    %v6733 = vadd.f32 %v6444, %v6732
    %v6734 = vpop.f32.mrb[0].mxu0
    %v6735 = vpop.f32.mrb[0].mxu0
    %v6736 = vadd.f32 %v6447, %v6735
    %v6737 = vpop.f32.mrb[0].mxu0
    %6738 = vmatprep.mubr.bf16.mxu0 %v5293
    %6739 = vmatmul.mubr.bf16.gmra.mrb[0].mxu0 %v5292
    %v6740 = vpop.f32.mrb[0].mxu0
    %v6741 = vadd.f32 %v6452, %v6740
    %v6742 = vpop.f32.mrb[0].mxu0
    %v6743 = vpop.f32.mrb[0].mxu0
    %v6744 = vadd.f32 %v6455, %v6743
    %v6745 = vpop.f32.mrb[0].mxu0
    %6746 = vdwg.mxu0
    %6747 = vmatprep.subr.bf16.mxu0 0
    %6748 = vmatpush1.bf16.msra.mxu0 %v5784
    %6749 = vmatprep.subr.bf16.mxu0 0
    %6750 = vmatpush1.bf16.msra.mxu0 %v5785
    %6751 = vmatprep.subr.bf16.mxu0 0
    %6752 = vmatpush1.bf16.msra.mxu0 %v5786
    %6753 = vmatprep.subr.bf16.mxu0 0
    %6754 = vmatpush1.bf16.msra.mxu0 %v5787
    %6755 = vmatprep.subr.bf16.mxu0 0
    %6756 = vmatpush1.bf16.msra.mxu0 %v5788
    %6757 = vmatprep.subr.bf16.mxu0 0
    %6758 = vmatpush1.bf16.msra.mxu0 %v5789
    %6759 = vmatprep.subr.bf16.mxu0 0
    %6760 = vmatpush1.bf16.msra.mxu0 %v5790
    %6761 = vmatprep.subr.bf16.mxu0 0
    %6762 = vmatpush1.bf16.msra.mxu0 %v5791
    %6763 = vmatprep.subr.bf16.mxu0 0
    %6764 = vmatpush1.bf16.msra.mxu0 %v5792
    %6765 = vmatprep.subr.bf16.mxu0 0
    %6766 = vmatpush1.bf16.msra.mxu0 %v5793
    %6767 = vmatprep.subr.bf16.mxu0 0
    %6768 = vmatpush1.bf16.msra.mxu0 %v5794
    %6769 = vmatprep.subr.bf16.mxu0 0
    %6770 = vmatpush1.bf16.msra.mxu0 %v5795
    %6771 = vmatprep.subr.bf16.mxu0 0
    %6772 = vmatpush1.bf16.msra.mxu0 %v5796
    %6773 = vmatprep.subr.bf16.mxu0 0
    %6774 = vmatpush1.bf16.msra.mxu0 %v5797
    %6775 = vmatprep.subr.bf16.mxu0 0
    %6776 = vmatpush1.bf16.msra.mxu0 %v5798
    %6777 = vmatprep.subr.bf16.mxu0 0
    %6778 = vmatpush1.bf16.msra.mxu0 %v5799
    %6779 = vmatprep.mubr.bf16.mxu0 %v5016
    %6780 = vmatmul.mubr.bf16.gmra.mrb[0].mxu0 %v5015
    %v6781 = vpop.f32.mrb[0].mxu0
    %v6782 = vadd.f32 %v6493, %v6781
    %v6783 = vpop.f32.mrb[0].mxu0
    %v6784 = vpop.f32.mrb[0].mxu0
    %v6785 = vadd.f32 %v6496, %v6784
    %v6786 = vpop.f32.mrb[0].mxu0
    %6787 = vmatprep.mubr.bf16.mxu0 %v5025
    %6788 = vmatmul.mubr.bf16.gmra.mrb[0].mxu0 %v5024
    %v6789 = vpop.f32.mrb[0].mxu0
    %v6790 = vadd.f32 %v6501, %v6789
    %v6791 = vpop.f32.mrb[0].mxu0
    %v6792 = vpop.f32.mrb[0].mxu0
    %v6793 = vadd.f32 %v6504, %v6792
    %v6794 = vpop.f32.mrb[0].mxu0
    %6795 = vmatprep.mubr.bf16.mxu0 %v5034
    %6796 = vmatmul.mubr.bf16.gmra.mrb[0].mxu0 %v5033
    %v6797 = vpop.f32.mrb[0].mxu0
    %v6798 = vadd.f32 %v6509, %v6797
    %v6799 = vpop.f32.mrb[0].mxu0
    %v6800 = vpop.f32.mrb[0].mxu0
    %v6801 = vadd.f32 %v6512, %v6800
    %v6802 = vpop.f32.mrb[0].mxu0
    %6803 = vmatprep.mubr.bf16.mxu0 %v5043
    %6804 = vmatmul.mubr.bf16.gmra.mrb[0].mxu0 %v5042
    %v6805 = vpop.f32.mrb[0].mxu0
    %v6806 = vadd.f32 %v6517, %v6805
    %v6807 = vpop.f32.mrb[0].mxu0
    %v6808 = vpop.f32.mrb[0].mxu0
    %v6809 = vadd.f32 %v6520, %v6808
    %v6810 = vpop.f32.mrb[0].mxu0
    %6811 = vmatprep.mubr.bf16.mxu0 %v5052
    %6812 = vmatmul.mubr.bf16.gmra.mrb[0].mxu0 %v5051
    %v6813 = vpop.f32.mrb[0].mxu0
    %v6814 = vadd.f32 %v6525, %v6813
    %v6815 = vpop.f32.mrb[0].mxu0
    %v6816 = vpop.f32.mrb[0].mxu0
    %v6817 = vadd.f32 %v6528, %v6816
    %v6818 = vpop.f32.mrb[0].mxu0
    %6819 = vmatprep.mubr.bf16.mxu0 %v5061
    %6820 = vmatmul.mubr.bf16.gmra.mrb[0].mxu0 %v5060
    %v6821 = vpop.f32.mrb[0].mxu0
    %v6822 = vadd.f32 %v6533, %v6821
    %v6823 = vpop.f32.mrb[0].mxu0
    %v6824 = vpop.f32.mrb[0].mxu0
    %v6825 = vadd.f32 %v6536, %v6824
    %v6826 = vpop.f32.mrb[0].mxu0
    %6827 = vmatprep.mubr.bf16.mxu0 %v5070
    %6828 = vmatmul.mubr.bf16.gmra.mrb[0].mxu0 %v5069
    %v6829 = vpop.f32.mrb[0].mxu0
    %v6830 = vadd.f32 %v6541, %v6829
    %v6831 = vpop.f32.mrb[0].mxu0
    %v6832 = vpop.f32.mrb[0].mxu0
    %v6833 = vadd.f32 %v6544, %v6832
    %v6834 = vpop.f32.mrb[0].mxu0
    %6835 = vmatprep.mubr.bf16.mxu0 %v5079
    %6836 = vmatmul.mubr.bf16.gmra.mrb[0].mxu0 %v5078
    %v6837 = vpop.f32.mrb[0].mxu0
    %v6838 = vadd.f32 %v6549, %v6837
    %v6839 = vpop.f32.mrb[0].mxu0
    %v6840 = vpop.f32.mrb[0].mxu0
    %v6841 = vadd.f32 %v6552, %v6840
    %v6842 = vpop.f32.mrb[0].mxu0
    %6843 = vmatprep.mubr.bf16.mxu0 %v5088
    %6844 = vmatmul.mubr.bf16.gmra.mrb[0].mxu0 %v5087
    %v6845 = vpop.f32.mrb[0].mxu0
    %v6846 = vadd.f32 %v6557, %v6845
    %v6847 = vpop.f32.mrb[0].mxu0
    %v6848 = vpop.f32.mrb[0].mxu0
    %v6849 = vadd.f32 %v6560, %v6848
    %v6850 = vpop.f32.mrb[0].mxu0
    %6851 = vmatprep.mubr.bf16.mxu0 %v5097
    %6852 = vmatmul.mubr.bf16.gmra.mrb[0].mxu0 %v5096
    %v6853 = vpop.f32.mrb[0].mxu0
    %v6854 = vadd.f32 %v6565, %v6853
    %v6855 = vpop.f32.mrb[0].mxu0
    %v6856 = vpop.f32.mrb[0].mxu0
    %v6857 = vadd.f32 %v6568, %v6856
    %v6858 = vpop.f32.mrb[0].mxu0
    %6859 = vmatprep.mubr.bf16.mxu0 %v5106
    %6860 = vmatmul.mubr.bf16.gmra.mrb[0].mxu0 %v5105
    %v6861 = vpop.f32.mrb[0].mxu0
    %v6862 = vadd.f32 %v6573, %v6861
    %v6863 = vpop.f32.mrb[0].mxu0
    %v6864 = vpop.f32.mrb[0].mxu0
    %v6865 = vadd.f32 %v6576, %v6864
    %v6866 = vpop.f32.mrb[0].mxu0
    %6867 = vmatprep.mubr.bf16.mxu0 %v5115
    %6868 = vmatmul.mubr.bf16.gmra.mrb[0].mxu0 %v5114
    %v6869 = vpop.f32.mrb[0].mxu0
    %v6870 = vadd.f32 %v6581, %v6869
    %v6871 = vpop.f32.mrb[0].mxu0
    %v6872 = vpop.f32.mrb[0].mxu0
    %v6873 = vadd.f32 %v6584, %v6872
    %v6874 = vpop.f32.mrb[0].mxu0
    %6875 = vmatprep.mubr.bf16.mxu0 %v5124
    %6876 = vmatmul.mubr.bf16.gmra.mrb[0].mxu0 %v5123
    %v6877 = vpop.f32.mrb[0].mxu0
    %v6878 = vadd.f32 %v6589, %v6877
    %v6879 = vpop.f32.mrb[0].mxu0
    %v6880 = vpop.f32.mrb[0].mxu0
    %v6881 = vadd.f32 %v6592, %v6880
    %v6882 = vpop.f32.mrb[0].mxu0
    %6883 = vmatprep.mubr.bf16.mxu0 %v5133
    %6884 = vmatmul.mubr.bf16.gmra.mrb[0].mxu0 %v5132
    %v6885 = vpop.f32.mrb[0].mxu0
    %v6886 = vadd.f32 %v6597, %v6885
    %v6887 = vpop.f32.mrb[0].mxu0
    %v6888 = vpop.f32.mrb[0].mxu0
    %v6889 = vadd.f32 %v6600, %v6888
    %v6890 = vpop.f32.mrb[0].mxu0
    %6891 = vmatprep.mubr.bf16.mxu0 %v5142
    %6892 = vmatmul.mubr.bf16.gmra.mrb[0].mxu0 %v5141
    %v6893 = vpop.f32.mrb[0].mxu0
    %v6894 = vadd.f32 %v6605, %v6893
    %v6895 = vpop.f32.mrb[0].mxu0
    %v6896 = vpop.f32.mrb[0].mxu0
    %v6897 = vadd.f32 %v6608, %v6896
    %v6898 = vpop.f32.mrb[0].mxu0
    %6899 = vmatprep.mubr.bf16.mxu0 %v5151
    %6900 = vmatmul.mubr.bf16.gmra.mrb[0].mxu0 %v5150
    %v6901 = vpop.f32.mrb[0].mxu0
    %v6902 = vadd.f32 %v6613, %v6901
    %v6903 = vpop.f32.mrb[0].mxu0
    %v6904 = vpop.f32.mrb[0].mxu0
    %v6905 = vadd.f32 %v6616, %v6904
    %v6906 = vpop.f32.mrb[0].mxu0
    %6907 = vmatprep.mubr.bf16.mxu0 %v5160
    %6908 = vmatmul.mubr.bf16.gmra.mrb[0].mxu0 %v5159
    %v6909 = vpop.f32.mrb[0].mxu0
    %v6910 = vadd.f32 %v6621, %v6909
    %v6911 = vpop.f32.mrb[0].mxu0
    %v6912 = vpop.f32.mrb[0].mxu0
    %v6913 = vadd.f32 %v6624, %v6912
    %v6914 = vpop.f32.mrb[0].mxu0
    %6915 = vmatprep.mubr.bf16.mxu0 %v5169
    %6916 = vmatmul.mubr.bf16.gmra.mrb[0].mxu0 %v5168
    %v6917 = vpop.f32.mrb[0].mxu0
    %v6918 = vadd.f32 %v6629, %v6917
    %v6919 = vpop.f32.mrb[0].mxu0
    %v6920 = vpop.f32.mrb[0].mxu0
    %v6921 = vadd.f32 %v6632, %v6920
    %v6922 = vpop.f32.mrb[0].mxu0
    %6923 = vmatprep.mubr.bf16.mxu0 %v5178
    %6924 = vmatmul.mubr.bf16.gmra.mrb[0].mxu0 %v5177
    %v6925 = vpop.f32.mrb[0].mxu0
    %v6926 = vadd.f32 %v6637, %v6925
    %v6927 = vpop.f32.mrb[0].mxu0
    %v6928 = vpop.f32.mrb[0].mxu0
    %v6929 = vadd.f32 %v6640, %v6928
    %v6930 = vpop.f32.mrb[0].mxu0
    %6931 = vmatprep.mubr.bf16.mxu0 %v5187
    %6932 = vmatmul.mubr.bf16.gmra.mrb[0].mxu0 %v5186
    %v6933 = vpop.f32.mrb[0].mxu0
    %v6934 = vadd.f32 %v6645, %v6933
    %v6935 = vpop.f32.mrb[0].mxu0
    %v6936 = vpop.f32.mrb[0].mxu0
    %v6937 = vadd.f32 %v6648, %v6936
    %v6938 = vpop.f32.mrb[0].mxu0
    %6939 = vmatprep.mubr.bf16.mxu0 %v5196
    %6940 = vmatmul.mubr.bf16.gmra.mrb[0].mxu0 %v5195
    %v6941 = vpop.f32.mrb[0].mxu0
    %v6942 = vadd.f32 %v6653, %v6941
    %v6943 = vpop.f32.mrb[0].mxu0
    %v6944 = vpop.f32.mrb[0].mxu0
    %v6945 = vadd.f32 %v6656, %v6944
    %v6946 = vpop.f32.mrb[0].mxu0
    %6947 = vmatprep.mubr.bf16.mxu0 %v5205
    %6948 = vmatmul.mubr.bf16.gmra.mrb[0].mxu0 %v5204
    %v6949 = vpop.f32.mrb[0].mxu0
    %v6950 = vadd.f32 %v6661, %v6949
    %v6951 = vpop.f32.mrb[0].mxu0
    %v6952 = vpop.f32.mrb[0].mxu0
    %v6953 = vadd.f32 %v6664, %v6952
    %v6954 = vpop.f32.mrb[0].mxu0
    %6955 = vmatprep.mubr.bf16.mxu0 %v5214
    %6956 = vmatmul.mubr.bf16.gmra.mrb[0].mxu0 %v5213
    %v6957 = vpop.f32.mrb[0].mxu0
    %v6958 = vadd.f32 %v6669, %v6957
    %v6959 = vpop.f32.mrb[0].mxu0
    %v6960 = vpop.f32.mrb[0].mxu0
    %v6961 = vadd.f32 %v6672, %v6960
    %v6962 = vpop.f32.mrb[0].mxu0
    %6963 = vmatprep.mubr.bf16.mxu0 %v5223
    %6964 = vmatmul.mubr.bf16.gmra.mrb[0].mxu0 %v5222
    %v6965 = vpop.f32.mrb[0].mxu0
    %v6966 = vadd.f32 %v6677, %v6965
    %v6967 = vpop.f32.mrb[0].mxu0
    %v6968 = vpop.f32.mrb[0].mxu0
    %v6969 = vadd.f32 %v6680, %v6968
    %v6970 = vpop.f32.mrb[0].mxu0
    %6971 = vmatprep.mubr.bf16.mxu0 %v5232
    %6972 = vmatmul.mubr.bf16.gmra.mrb[0].mxu0 %v5231
    %v6973 = vpop.f32.mrb[0].mxu0
    %v6974 = vadd.f32 %v6685, %v6973
    %v6975 = vpop.f32.mrb[0].mxu0
    %v6976 = vpop.f32.mrb[0].mxu0
    %v6977 = vadd.f32 %v6688, %v6976
    %v6978 = vpop.f32.mrb[0].mxu0
    %6979 = vmatprep.mubr.bf16.mxu0 %v5241
    %6980 = vmatmul.mubr.bf16.gmra.mrb[0].mxu0 %v5240
    %v6981 = vpop.f32.mrb[0].mxu0
    %v6982 = vadd.f32 %v6693, %v6981
    %v6983 = vpop.f32.mrb[0].mxu0
    %v6984 = vpop.f32.mrb[0].mxu0
    %v6985 = vadd.f32 %v6696, %v6984
    %v6986 = vpop.f32.mrb[0].mxu0
    %6987 = vmatprep.mubr.bf16.mxu0 %v5250
    %6988 = vmatmul.mubr.bf16.gmra.mrb[0].mxu0 %v5249
    %v6989 = vpop.f32.mrb[0].mxu0
    %v6990 = vadd.f32 %v6701, %v6989
    %v6991 = vpop.f32.mrb[0].mxu0
    %v6992 = vpop.f32.mrb[0].mxu0
    %v6993 = vadd.f32 %v6704, %v6992
    %v6994 = vpop.f32.mrb[0].mxu0
    %6995 = vmatprep.mubr.bf16.mxu0 %v5259
    %6996 = vmatmul.mubr.bf16.gmra.mrb[0].mxu0 %v5258
    %v6997 = vpop.f32.mrb[0].mxu0
    %v6998 = vadd.f32 %v6709, %v6997
    %v6999 = vpop.f32.mrb[0].mxu0
    %v7000 = vpop.f32.mrb[0].mxu0
    %v7001 = vadd.f32 %v6712, %v7000
    %v7002 = vpop.f32.mrb[0].mxu0
    %7003 = vmatprep.mubr.bf16.mxu0 %v5268
    %7004 = vmatmul.mubr.bf16.gmra.mrb[0].mxu0 %v5267
    %v7005 = vpop.f32.mrb[0].mxu0
    %v7006 = vadd.f32 %v6717, %v7005
    %v7007 = vpop.f32.mrb[0].mxu0
    %v7008 = vpop.f32.mrb[0].mxu0
    %v7009 = vadd.f32 %v6720, %v7008
    %v7010 = vpop.f32.mrb[0].mxu0
    %7011 = vmatprep.mubr.bf16.mxu0 %v5277
    %7012 = vmatmul.mubr.bf16.gmra.mrb[0].mxu0 %v5276
    %v7013 = vpop.f32.mrb[0].mxu0
    %v7014 = vadd.f32 %v6725, %v7013
    %v7015 = vpop.f32.mrb[0].mxu0
    %v7016 = vpop.f32.mrb[0].mxu0
    %v7017 = vadd.f32 %v6728, %v7016
    %v7018 = vpop.f32.mrb[0].mxu0
    %7019 = vmatprep.mubr.bf16.mxu0 %v5286
    %7020 = vmatmul.mubr.bf16.gmra.mrb[0].mxu0 %v5285
    %v7021 = vpop.f32.mrb[0].mxu0
    %v7022 = vadd.f32 %v6733, %v7021
    %v7023 = vpop.f32.mrb[0].mxu0
    %v7024 = vpop.f32.mrb[0].mxu0
    %v7025 = vadd.f32 %v6736, %v7024
    %v7026 = vpop.f32.mrb[0].mxu0
    %7027 = vmatprep.mubr.bf16.mxu0 %v5295
    %7028 = vmatmul.mubr.bf16.gmra.mrb[0].mxu0 %v5294
    %v7029 = vpop.f32.mrb[0].mxu0
    %v7030 = vadd.f32 %v6741, %v7029
    %v7031 = vpop.f32.mrb[0].mxu0
    %v7032 = vpop.f32.mrb[0].mxu0
    %v7033 = vadd.f32 %v6744, %v7032
    %v7034 = vpop.f32.mrb[0].mxu0
    %7035 = vdwg.mxu0
    %7036 = vmatprep.subr.bf16.mxu0 0
    %7037 = vmatpush1.bf16.msra.mxu0 %v5800
    %7038 = vmatprep.subr.bf16.mxu0 0
    %7039 = vmatpush1.bf16.msra.mxu0 %v5801
    %7040 = vmatprep.subr.bf16.mxu0 0
    %7041 = vmatpush1.bf16.msra.mxu0 %v5802
    %7042 = vmatprep.subr.bf16.mxu0 0
    %7043 = vmatpush1.bf16.msra.mxu0 %v5803
    %7044 = vmatprep.subr.bf16.mxu0 0
    %7045 = vmatpush1.bf16.msra.mxu0 %v5804
    %7046 = vmatprep.subr.bf16.mxu0 0
    %7047 = vmatpush1.bf16.msra.mxu0 %v5805
    %7048 = vmatprep.subr.bf16.mxu0 0
    %7049 = vmatpush1.bf16.msra.mxu0 %v5806
    %7050 = vmatprep.subr.bf16.mxu0 0
    %7051 = vmatpush1.bf16.msra.mxu0 %v5807
    %7052 = vmatprep.subr.bf16.mxu0 0
    %7053 = vmatpush1.bf16.msra.mxu0 0
    %7054 = vmatprep.subr.bf16.mxu0 0
    %7055 = vmatpush1.bf16.msra.mxu0 0
    %7056 = vmatprep.subr.bf16.mxu0 0
    %7057 = vmatpush1.bf16.msra.mxu0 0
    %7058 = vmatprep.subr.bf16.mxu0 0
    %7059 = vmatpush1.bf16.msra.mxu0 0
    %7060 = vmatprep.subr.bf16.mxu0 0
    %7061 = vmatpush1.bf16.msra.mxu0 0
    %7062 = vmatprep.subr.bf16.mxu0 0
    %7063 = vmatpush1.bf16.msra.mxu0 0
    %7064 = vmatprep.subr.bf16.mxu0 0
    %7065 = vmatpush1.bf16.msra.mxu0 0
    %7066 = vmatprep.subr.bf16.mxu0 0
    %7067 = vmatpush1.bf16.msra.mxu0 0
    %7068 = vmatprep.mubr.bf16.mxu0 0
    %7069 = vmatmul.mubr.bf16.gmra.mrb[0].mxu0 %v5017
    %v7070 = vpop.f32.mrb[0].mxu0
    %v7071 = vadd.f32 %v6782, %v7070
    %v7072 = vpop.f32.mrb[0].mxu0
    %v7073 = vpop.f32.mrb[0].mxu0
    %v7074 = vadd.f32 %v6785, %v7073
    %v7075 = vpop.f32.mrb[0].mxu0
    %7076 = vmatprep.mubr.bf16.mxu0 0
    %7077 = vmatmul.mubr.bf16.gmra.mrb[0].mxu0 %v5026
    %v7078 = vpop.f32.mrb[0].mxu0
    %v7079 = vadd.f32 %v6790, %v7078
    %v7080 = vpop.f32.mrb[0].mxu0
    %v7081 = vpop.f32.mrb[0].mxu0
    %v7082 = vadd.f32 %v6793, %v7081
    %v7083 = vpop.f32.mrb[0].mxu0
    %7084 = vmatprep.mubr.bf16.mxu0 0
    %7085 = vmatmul.mubr.bf16.gmra.mrb[0].mxu0 %v5035
    %v7086 = vpop.f32.mrb[0].mxu0
    %v7087 = vadd.f32 %v6798, %v7086
    %v7088 = vpop.f32.mrb[0].mxu0
    %v7089 = vpop.f32.mrb[0].mxu0
    %v7090 = vadd.f32 %v6801, %v7089
    %v7091 = vpop.f32.mrb[0].mxu0
    %7092 = vmatprep.mubr.bf16.mxu0 0
    %7093 = vmatmul.mubr.bf16.gmra.mrb[0].mxu0 %v5044
    %v7094 = vpop.f32.mrb[0].mxu0
    %v7095 = vadd.f32 %v6806, %v7094
    %v7096 = vpop.f32.mrb[0].mxu0
    %v7097 = vpop.f32.mrb[0].mxu0
    %v7098 = vadd.f32 %v6809, %v7097
    %v7099 = vpop.f32.mrb[0].mxu0
    %7100 = vmatprep.mubr.bf16.mxu0 0
    %7101 = vmatmul.mubr.bf16.gmra.mrb[0].mxu0 %v5053
    %v7102 = vpop.f32.mrb[0].mxu0
    %v7103 = vadd.f32 %v6814, %v7102
    %v7104 = vpop.f32.mrb[0].mxu0
    %v7105 = vpop.f32.mrb[0].mxu0
    %v7106 = vadd.f32 %v6817, %v7105
    %v7107 = vpop.f32.mrb[0].mxu0
    %7108 = vmatprep.mubr.bf16.mxu0 0
    %7109 = vmatmul.mubr.bf16.gmra.mrb[0].mxu0 %v5062
    %v7110 = vpop.f32.mrb[0].mxu0
    %v7111 = vadd.f32 %v6822, %v7110
    %v7112 = vpop.f32.mrb[0].mxu0
    %v7113 = vpop.f32.mrb[0].mxu0
    %v7114 = vadd.f32 %v6825, %v7113
    %v7115 = vpop.f32.mrb[0].mxu0
    %7116 = vmatprep.mubr.bf16.mxu0 0
    %7117 = vmatmul.mubr.bf16.gmra.mrb[0].mxu0 %v5071
    %v7118 = vpop.f32.mrb[0].mxu0
    %v7119 = vadd.f32 %v6830, %v7118
    %v7120 = vpop.f32.mrb[0].mxu0
    %v7121 = vpop.f32.mrb[0].mxu0
    %v7122 = vadd.f32 %v6833, %v7121
    %v7123 = vpop.f32.mrb[0].mxu0
    %7124 = vmatprep.mubr.bf16.mxu0 0
    %7125 = vmatmul.mubr.bf16.gmra.mrb[0].mxu0 %v5080
    %v7126 = vpop.f32.mrb[0].mxu0
    %v7127 = vadd.f32 %v6838, %v7126
    %v7128 = vpop.f32.mrb[0].mxu0
    %v7129 = vpop.f32.mrb[0].mxu0
    %v7130 = vadd.f32 %v6841, %v7129
    %v7131 = vpop.f32.mrb[0].mxu0
    %7132 = vmatprep.mubr.bf16.mxu0 0
    %7133 = vmatmul.mubr.bf16.gmra.mrb[0].mxu0 %v5089
    %v7134 = vpop.f32.mrb[0].mxu0
    %v7135 = vadd.f32 %v6846, %v7134
    %v7136 = vpop.f32.mrb[0].mxu0
    %v7137 = vpop.f32.mrb[0].mxu0
    %v7138 = vadd.f32 %v6849, %v7137
    %v7139 = vpop.f32.mrb[0].mxu0
    %7140 = vmatprep.mubr.bf16.mxu0 0
    %7141 = vmatmul.mubr.bf16.gmra.mrb[0].mxu0 %v5098
    %v7142 = vpop.f32.mrb[0].mxu0
    %v7143 = vadd.f32 %v6854, %v7142
    %v7144 = vpop.f32.mrb[0].mxu0
    %v7145 = vpop.f32.mrb[0].mxu0
    %v7146 = vadd.f32 %v6857, %v7145
    %v7147 = vpop.f32.mrb[0].mxu0
    %7148 = vmatprep.mubr.bf16.mxu0 0
    %7149 = vmatmul.mubr.bf16.gmra.mrb[0].mxu0 %v5107
    %v7150 = vpop.f32.mrb[0].mxu0
    %v7151 = vadd.f32 %v6862, %v7150
    %v7152 = vpop.f32.mrb[0].mxu0
    %v7153 = vpop.f32.mrb[0].mxu0
    %v7154 = vadd.f32 %v6865, %v7153
    %v7155 = vpop.f32.mrb[0].mxu0
    %7156 = vmatprep.mubr.bf16.mxu0 0
    %7157 = vmatmul.mubr.bf16.gmra.mrb[0].mxu0 %v5116
    %v7158 = vpop.f32.mrb[0].mxu0
    %v7159 = vadd.f32 %v6870, %v7158
    %v7160 = vpop.f32.mrb[0].mxu0
    %v7161 = vpop.f32.mrb[0].mxu0
    %v7162 = vadd.f32 %v6873, %v7161
    %v7163 = vpop.f32.mrb[0].mxu0
    %7164 = vmatprep.mubr.bf16.mxu0 0
    %7165 = vmatmul.mubr.bf16.gmra.mrb[0].mxu0 %v5125
    %v7166 = vpop.f32.mrb[0].mxu0
    %v7167 = vadd.f32 %v6878, %v7166
    %v7168 = vpop.f32.mrb[0].mxu0
    %v7169 = vpop.f32.mrb[0].mxu0
    %v7170 = vadd.f32 %v6881, %v7169
    %v7171 = vpop.f32.mrb[0].mxu0
    %7172 = vmatprep.mubr.bf16.mxu0 0
    %7173 = vmatmul.mubr.bf16.gmra.mrb[0].mxu0 %v5134
    %v7174 = vpop.f32.mrb[0].mxu0
    %v7175 = vadd.f32 %v6886, %v7174
    %v7176 = vpop.f32.mrb[0].mxu0
    %v7177 = vpop.f32.mrb[0].mxu0
    %v7178 = vadd.f32 %v6889, %v7177
    %v7179 = vpop.f32.mrb[0].mxu0
    %7180 = vmatprep.mubr.bf16.mxu0 0
    %7181 = vmatmul.mubr.bf16.gmra.mrb[0].mxu0 %v5143
    %v7182 = vpop.f32.mrb[0].mxu0
    %v7183 = vadd.f32 %v6894, %v7182
    %v7184 = vpop.f32.mrb[0].mxu0
    %v7185 = vpop.f32.mrb[0].mxu0
    %v7186 = vadd.f32 %v6897, %v7185
    %v7187 = vpop.f32.mrb[0].mxu0
    %7188 = vmatprep.mubr.bf16.mxu0 0
    %7189 = vmatmul.mubr.bf16.gmra.mrb[0].mxu0 %v5152
    %v7190 = vpop.f32.mrb[0].mxu0
    %v7191 = vadd.f32 %v6902, %v7190
    %v7192 = vpop.f32.mrb[0].mxu0
    %v7193 = vpop.f32.mrb[0].mxu0
    %v7194 = vadd.f32 %v6905, %v7193
    %v7195 = vpop.f32.mrb[0].mxu0
    %7196 = vmatprep.mubr.bf16.mxu0 0
    %7197 = vmatmul.mubr.bf16.gmra.mrb[0].mxu0 %v5161
    %v7198 = vpop.f32.mrb[0].mxu0
    %v7199 = vadd.f32 %v6910, %v7198
    %v7200 = vpop.f32.mrb[0].mxu0
    %v7201 = vpop.f32.mrb[0].mxu0
    %v7202 = vadd.f32 %v6913, %v7201
    %v7203 = vpop.f32.mrb[0].mxu0
    %7204 = vmatprep.mubr.bf16.mxu0 0
    %7205 = vmatmul.mubr.bf16.gmra.mrb[0].mxu0 %v5170
    %v7206 = vpop.f32.mrb[0].mxu0
    %v7207 = vadd.f32 %v6918, %v7206
    %v7208 = vpop.f32.mrb[0].mxu0
    %v7209 = vpop.f32.mrb[0].mxu0
    %v7210 = vadd.f32 %v6921, %v7209
    %v7211 = vpop.f32.mrb[0].mxu0
    %7212 = vmatprep.mubr.bf16.mxu0 0
    %7213 = vmatmul.mubr.bf16.gmra.mrb[0].mxu0 %v5179
    %v7214 = vpop.f32.mrb[0].mxu0
    %v7215 = vadd.f32 %v6926, %v7214
    %v7216 = vpop.f32.mrb[0].mxu0
    %v7217 = vpop.f32.mrb[0].mxu0
    %v7218 = vadd.f32 %v6929, %v7217
    %v7219 = vpop.f32.mrb[0].mxu0
    %7220 = vmatprep.mubr.bf16.mxu0 0
    %7221 = vmatmul.mubr.bf16.gmra.mrb[0].mxu0 %v5188
    %v7222 = vpop.f32.mrb[0].mxu0
    %v7223 = vadd.f32 %v6934, %v7222
    %v7224 = vpop.f32.mrb[0].mxu0
    %v7225 = vpop.f32.mrb[0].mxu0
    %v7226 = vadd.f32 %v6937, %v7225
    %v7227 = vpop.f32.mrb[0].mxu0
    %7228 = vmatprep.mubr.bf16.mxu0 0
    %7229 = vmatmul.mubr.bf16.gmra.mrb[0].mxu0 %v5197
    %v7230 = vpop.f32.mrb[0].mxu0
    %v7231 = vadd.f32 %v6942, %v7230
    %v7232 = vpop.f32.mrb[0].mxu0
    %v7233 = vpop.f32.mrb[0].mxu0
    %v7234 = vadd.f32 %v6945, %v7233
    %v7235 = vpop.f32.mrb[0].mxu0
    %7236 = vmatprep.mubr.bf16.mxu0 0
    %7237 = vmatmul.mubr.bf16.gmra.mrb[0].mxu0 %v5206
    %v7238 = vpop.f32.mrb[0].mxu0
    %v7239 = vadd.f32 %v6950, %v7238
    %v7240 = vpop.f32.mrb[0].mxu0
    %v7241 = vpop.f32.mrb[0].mxu0
    %v7242 = vadd.f32 %v6953, %v7241
    %v7243 = vpop.f32.mrb[0].mxu0
    %7244 = vmatprep.mubr.bf16.mxu0 0
    %7245 = vmatmul.mubr.bf16.gmra.mrb[0].mxu0 %v5215
    %v7246 = vpop.f32.mrb[0].mxu0
    %v7247 = vadd.f32 %v6958, %v7246
    %v7248 = vpop.f32.mrb[0].mxu0
    %v7249 = vpop.f32.mrb[0].mxu0
    %v7250 = vadd.f32 %v6961, %v7249
    %v7251 = vpop.f32.mrb[0].mxu0
    %7252 = vmatprep.mubr.bf16.mxu0 0
    %7253 = vmatmul.mubr.bf16.gmra.mrb[0].mxu0 %v5224
    %v7254 = vpop.f32.mrb[0].mxu0
    %v7255 = vadd.f32 %v6966, %v7254
    %v7256 = vpop.f32.mrb[0].mxu0
    %v7257 = vpop.f32.mrb[0].mxu0
    %v7258 = vadd.f32 %v6969, %v7257
    %v7259 = vpop.f32.mrb[0].mxu0
    %7260 = vmatprep.mubr.bf16.mxu0 0
    %7261 = vmatmul.mubr.bf16.gmra.mrb[0].mxu0 %v5233
    %v7262 = vpop.f32.mrb[0].mxu0
    %v7263 = vadd.f32 %v6974, %v7262
    %v7264 = vpop.f32.mrb[0].mxu0
    %v7265 = vpop.f32.mrb[0].mxu0
    %v7266 = vadd.f32 %v6977, %v7265
    %v7267 = vpop.f32.mrb[0].mxu0
    %7268 = vmatprep.mubr.bf16.mxu0 0
    %7269 = vmatmul.mubr.bf16.gmra.mrb[0].mxu0 %v5242
    %v7270 = vpop.f32.mrb[0].mxu0
    %v7271 = vadd.f32 %v6982, %v7270
    %v7272 = vpop.f32.mrb[0].mxu0
    %v7273 = vpop.f32.mrb[0].mxu0
    %v7274 = vadd.f32 %v6985, %v7273
    %v7275 = vpop.f32.mrb[0].mxu0
    %7276 = vmatprep.mubr.bf16.mxu0 0
    %7277 = vmatmul.mubr.bf16.gmra.mrb[0].mxu0 %v5251
    %v7278 = vpop.f32.mrb[0].mxu0
    %v7279 = vadd.f32 %v6990, %v7278
    %v7280 = vpop.f32.mrb[0].mxu0
    %v7281 = vpop.f32.mrb[0].mxu0
    %v7282 = vadd.f32 %v6993, %v7281
    %v7283 = vpop.f32.mrb[0].mxu0
    %7284 = vmatprep.mubr.bf16.mxu0 0
    %7285 = vmatmul.mubr.bf16.gmra.mrb[0].mxu0 %v5260
    %v7286 = vpop.f32.mrb[0].mxu0
    %v7287 = vadd.f32 %v6998, %v7286
    %v7288 = vpop.f32.mrb[0].mxu0
    %v7289 = vpop.f32.mrb[0].mxu0
    %v7290 = vadd.f32 %v7001, %v7289
    %v7291 = vpop.f32.mrb[0].mxu0
    %7292 = vmatprep.mubr.bf16.mxu0 0
    %7293 = vmatmul.mubr.bf16.gmra.mrb[0].mxu0 %v5269
    %v7294 = vpop.f32.mrb[0].mxu0
    %v7295 = vadd.f32 %v7006, %v7294
    %v7296 = vpop.f32.mrb[0].mxu0
    %v7297 = vpop.f32.mrb[0].mxu0
    %v7298 = vadd.f32 %v7009, %v7297
    %v7299 = vpop.f32.mrb[0].mxu0
    %7300 = vmatprep.mubr.bf16.mxu0 0
    %7301 = vmatmul.mubr.bf16.gmra.mrb[0].mxu0 %v5278
    %v7302 = vpop.f32.mrb[0].mxu0
    %v7303 = vadd.f32 %v7014, %v7302
    %v7304 = vpop.f32.mrb[0].mxu0
    %v7305 = vpop.f32.mrb[0].mxu0
    %v7306 = vadd.f32 %v7017, %v7305
    %v7307 = vpop.f32.mrb[0].mxu0
    %7308 = vmatprep.mubr.bf16.mxu0 0
    %7309 = vmatmul.mubr.bf16.gmra.mrb[0].mxu0 %v5287
    %v7310 = vpop.f32.mrb[0].mxu0
    %v7311 = vadd.f32 %v7022, %v7310
    %v7312 = vpop.f32.mrb[0].mxu0
    %v7313 = vpop.f32.mrb[0].mxu0
    %v7314 = vadd.f32 %v7025, %v7313
    %v7315 = vpop.f32.mrb[0].mxu0
    %7316 = vmatprep.mubr.bf16.mxu0 0
    %7317 = vmatmul.mubr.bf16.gmra.mrb[0].mxu0 %v5296
    %v7318 = vpop.f32.mrb[0].mxu0
    %v7319 = vadd.f32 %v7030, %v7318
    %v7320 = vpop.f32.mrb[0].mxu0
    %v7321 = vpop.f32.mrb[0].mxu0
    %v7322 = vadd.f32 %v7033, %v7321
    %v7323 = vpop.f32.mrb[0].mxu0
    %7324 = vdwg.mxu0
    %v7325 = vadd.f32 %v7071, %v130
    %v7326 = vadd.f32 %v7074, %v131
    %v7327 = vadd.f32 %v7079, %v132
    %v7328 = vadd.f32 %v7082, %v133
    %v7329 = vadd.f32 %v7087, %v134
    %v7330 = vadd.f32 %v7090, %v135
    %v7331 = vadd.f32 %v7095, %v136
    %v7332 = vadd.f32 %v7098, %v137
    %v7333 = vadd.f32 %v7103, %v138
    %v7334 = vadd.f32 %v7106, %v139
    %v7335 = vadd.f32 %v7111, %v140
    %v7336 = vadd.f32 %v7114, %v141
    %v7337 = vadd.f32 %v7119, %v142
    %v7338 = vadd.f32 %v7122, %v143
    %v7339 = vadd.f32 %v7127, %v144
    %v7340 = vadd.f32 %v7130, %v145
    %v7341 = vadd.f32 %v7135, %v146
    %v7342 = vadd.f32 %v7138, %v147
    %v7343 = vadd.f32 %v7143, %v148
    %v7344 = vadd.f32 %v7146, %v149
    %v7345 = vadd.f32 %v7151, %v150
    %v7346 = vadd.f32 %v7154, %v151
    %v7347 = vadd.f32 %v7159, %v152
    %v7348 = vadd.f32 %v7162, %v153
    %v7349 = vadd.f32 %v7167, %v154
    %v7350 = vadd.f32 %v7170, %v155
    %v7351 = vadd.f32 %v7175, %v156
    %v7352 = vadd.f32 %v7178, %v157
    %v7353 = vadd.f32 %v7183, %v158
    %v7354 = vadd.f32 %v7186, %v159
    %v7355 = vadd.f32 %v7191, %v160
    %v7356 = vadd.f32 %v7194, %v161
    %v7357 = vadd.f32 %v7199, %v162
    %v7358 = vadd.f32 %v7202, %v163
    %v7359 = vadd.f32 %v7207, %v164
    %v7360 = vadd.f32 %v7210, %v165
    %v7361 = vadd.f32 %v7215, %v166
    %v7362 = vadd.f32 %v7218, %v167
    %v7363 = vadd.f32 %v7223, %v168
    %v7364 = vadd.f32 %v7226, %v169
    %v7365 = vadd.f32 %v7231, %v170
    %v7366 = vadd.f32 %v7234, %v171
    %v7367 = vadd.f32 %v7239, %v172
    %v7368 = vadd.f32 %v7242, %v173
    %v7369 = vadd.f32 %v7247, %v174
    %v7370 = vadd.f32 %v7250, %v175
    %v7371 = vadd.f32 %v7255, %v176
    %v7372 = vadd.f32 %v7258, %v177
    %v7373 = vadd.f32 %v7263, %v178
    %v7374 = vadd.f32 %v7266, %v179
    %v7375 = vadd.f32 %v7271, %v180
    %v7376 = vadd.f32 %v7274, %v181
    %v7377 = vadd.f32 %v7279, %v182
    %v7378 = vadd.f32 %v7282, %v183
    %v7379 = vadd.f32 %v7287, %v184
    %v7380 = vadd.f32 %v7290, %v185
    %v7381 = vadd.f32 %v7295, %v186
    %v7382 = vadd.f32 %v7298, %v187
    %v7383 = vadd.f32 %v7303, %v188
    %v7384 = vadd.f32 %v7306, %v189
    %v7385 = vadd.f32 %v7311, %v190
    %v7386 = vadd.f32 %v7314, %v191
    %v7387 = vadd.f32 %v7319, %v192
    %v7388 = vadd.f32 %v7322, %v193
    %v7389 = vmax.f32 %v7325, 0.0
    %v7390 = vmax.f32 %v7326, 0.0
    %v7391 = vmax.f32 %v7327, 0.0
    %v7392 = vmax.f32 %v7328, 0.0
    %v7393 = vmax.f32 %v7329, 0.0
    %v7394 = vmax.f32 %v7330, 0.0
    %v7395 = vmax.f32 %v7331, 0.0
    %v7396 = vmax.f32 %v7332, 0.0
    %v7397 = vmax.f32 %v7333, 0.0
    %v7398 = vmax.f32 %v7334, 0.0
    %v7399 = vmax.f32 %v7335, 0.0
    %v7400 = vmax.f32 %v7336, 0.0
    %v7401 = vmax.f32 %v7337, 0.0
    %v7402 = vmax.f32 %v7338, 0.0
    %v7403 = vmax.f32 %v7339, 0.0
    %v7404 = vmax.f32 %v7340, 0.0
    %v7405 = vmax.f32 %v7341, 0.0
    %v7406 = vmax.f32 %v7342, 0.0
    %v7407 = vmax.f32 %v7343, 0.0
    %v7408 = vmax.f32 %v7344, 0.0
    %v7409 = vmax.f32 %v7345, 0.0
    %v7410 = vmax.f32 %v7346, 0.0
    %v7411 = vmax.f32 %v7347, 0.0
    %v7412 = vmax.f32 %v7348, 0.0
    %v7413 = vmax.f32 %v7349, 0.0
    %v7414 = vmax.f32 %v7350, 0.0
    %v7415 = vmax.f32 %v7351, 0.0
    %v7416 = vmax.f32 %v7352, 0.0
    %v7417 = vmax.f32 %v7353, 0.0
    %v7418 = vmax.f32 %v7354, 0.0
    %v7419 = vmax.f32 %v7355, 0.0
    %v7420 = vmax.f32 %v7356, 0.0
    %v7421 = vmax.f32 %v7357, 0.0
    %v7422 = vmax.f32 %v7358, 0.0
    %v7423 = vmax.f32 %v7359, 0.0
    %v7424 = vmax.f32 %v7360, 0.0
    %v7425 = vmax.f32 %v7361, 0.0
    %v7426 = vmax.f32 %v7362, 0.0
    %v7427 = vmax.f32 %v7363, 0.0
    %v7428 = vmax.f32 %v7364, 0.0
    %v7429 = vmax.f32 %v7365, 0.0
    %v7430 = vmax.f32 %v7366, 0.0
    %v7431 = vmax.f32 %v7367, 0.0
    %v7432 = vmax.f32 %v7368, 0.0
    %v7433 = vmax.f32 %v7369, 0.0
    %v7434 = vmax.f32 %v7370, 0.0
    %v7435 = vmax.f32 %v7371, 0.0
    %v7436 = vmax.f32 %v7372, 0.0
    %v7437 = vmax.f32 %v7373, 0.0
    %v7438 = vmax.f32 %v7374, 0.0
    %v7439 = vmax.f32 %v7375, 0.0
    %v7440 = vmax.f32 %v7376, 0.0
    %v7441 = vmax.f32 %v7377, 0.0
    %v7442 = vmax.f32 %v7378, 0.0
    %v7443 = vmax.f32 %v7379, 0.0
    %v7444 = vmax.f32 %v7380, 0.0
    %v7445 = vmax.f32 %v7381, 0.0
    %v7446 = vmax.f32 %v7382, 0.0
    %v7447 = vmax.f32 %v7383, 0.0
    %v7448 = vmax.f32 %v7384, 0.0
    %v7449 = vmax.f32 %v7385, 0.0
    %v7450 = vmax.f32 %v7386, 0.0
    %v7451 = vmax.f32 %v7387, 0.0
    %v7452 = vmax.f32 %v7388, 0.0
    %7453 = vxpose.xlu0.b32.start [1/16] %v7389, 128
    %7454 = vxpose.xlu0.b32.cont [2/16] %v7390, 128
    %7455 = vxpose.xlu0.b32.cont [3/16] %v7391, 128
    %7456 = vxpose.xlu0.b32.cont [4/16] %v7392, 128
    %7457 = vxpose.xlu0.b32.cont [5/16] %v7393, 128
    %7458 = vxpose.xlu0.b32.cont [6/16] %v7394, 128
    %7459 = vxpose.xlu0.b32.cont [7/16] %v7395, 128
    %7460 = vxpose.xlu0.b32.cont [8/16] %v7396, 128
    %7461 = vxpose.xlu0.b32.cont [9/16] %v7397, 128
    %7462 = vxpose.xlu0.b32.cont [10/16] %v7398, 128
    %7463 = vxpose.xlu0.b32.cont [11/16] %v7399, 128
    %7464 = vxpose.xlu0.b32.cont [12/16] %v7400, 128
    %7465 = vxpose.xlu0.b32.cont [13/16] %v7401, 128
    %7466 = vxpose.xlu0.b32.cont [14/16] %v7402, 128
    %7467 = vxpose.xlu0.b32.cont [15/16] %v7403, 128
    %7468 = vxpose.xlu0.b32.end [16/16] %v7404, 128
    %v7469 = vpop.trf.xlu0
    %v7470 = vpop.trf.xlu0
    %v7471 = vpop.trf.xlu0
    %v7472 = vpop.trf.xlu0
    %v7473 = vpop.trf.xlu0
    %v7474 = vpop.trf.xlu0
    %v7475 = vpop.trf.xlu0
    %v7476 = vpop.trf.xlu0
    %v7477 = vpop.trf.xlu0
    %v7478 = vpop.trf.xlu0
    %v7479 = vpop.trf.xlu0
    %v7480 = vpop.trf.xlu0
    %v7481 = vpop.trf.xlu0
    %v7482 = vpop.trf.xlu0
    %v7483 = vpop.trf.xlu0
    %v7484 = vpop.trf.xlu0
    %7485 = vxpose.xlu0.b32.start [1/16] %v7405, 128
    %7486 = vxpose.xlu0.b32.cont [2/16] %v7406, 128
    %7487 = vxpose.xlu0.b32.cont [3/16] %v7407, 128
    %7488 = vxpose.xlu0.b32.cont [4/16] %v7408, 128
    %7489 = vxpose.xlu0.b32.cont [5/16] %v7409, 128
    %7490 = vxpose.xlu0.b32.cont [6/16] %v7410, 128
    %7491 = vxpose.xlu0.b32.cont [7/16] %v7411, 128
    %7492 = vxpose.xlu0.b32.cont [8/16] %v7412, 128
    %7493 = vxpose.xlu0.b32.cont [9/16] %v7413, 128
    %7494 = vxpose.xlu0.b32.cont [10/16] %v7414, 128
    %7495 = vxpose.xlu0.b32.cont [11/16] %v7415, 128
    %7496 = vxpose.xlu0.b32.cont [12/16] %v7416, 128
    %7497 = vxpose.xlu0.b32.cont [13/16] %v7417, 128
    %7498 = vxpose.xlu0.b32.cont [14/16] %v7418, 128
    %7499 = vxpose.xlu0.b32.cont [15/16] %v7419, 128
    %7500 = vxpose.xlu0.b32.end [16/16] %v7420, 128
    %v7501 = vpop.trf.xlu0
    %v7502 = vpop.trf.xlu0
    %v7503 = vpop.trf.xlu0
    %v7504 = vpop.trf.xlu0
    %v7505 = vpop.trf.xlu0
    %v7506 = vpop.trf.xlu0
    %v7507 = vpop.trf.xlu0
    %v7508 = vpop.trf.xlu0
    %v7509 = vpop.trf.xlu0
    %v7510 = vpop.trf.xlu0
    %v7511 = vpop.trf.xlu0
    %v7512 = vpop.trf.xlu0
    %v7513 = vpop.trf.xlu0
    %v7514 = vpop.trf.xlu0
    %v7515 = vpop.trf.xlu0
    %v7516 = vpop.trf.xlu0
    %v7519 = vcombine.low %v7469, %v7501
    %7521 = vst [vmem:[#allocation4] sm:$0xff] %v7519
    %7522 = vxpose.xlu0.b32.start [1/16] %v7421, 128
    %7523 = vxpose.xlu0.b32.cont [2/16] %v7422, 128
    %7524 = vxpose.xlu0.b32.cont [3/16] %v7423, 128
    %7525 = vxpose.xlu0.b32.cont [4/16] %v7424, 128
    %7526 = vxpose.xlu0.b32.cont [5/16] %v7425, 128
    %7527 = vxpose.xlu0.b32.cont [6/16] %v7426, 128
    %7528 = vxpose.xlu0.b32.cont [7/16] %v7427, 128
    %7529 = vxpose.xlu0.b32.cont [8/16] %v7428, 128
    %7530 = vxpose.xlu0.b32.cont [9/16] %v7429, 128
    %7531 = vxpose.xlu0.b32.cont [10/16] %v7430, 128
    %7532 = vxpose.xlu0.b32.cont [11/16] %v7431, 128
    %7533 = vxpose.xlu0.b32.cont [12/16] %v7432, 128
    %7534 = vxpose.xlu0.b32.cont [13/16] %v7433, 128
    %7535 = vxpose.xlu0.b32.cont [14/16] %v7434, 128
    %7536 = vxpose.xlu0.b32.cont [15/16] %v7435, 128
    %7537 = vxpose.xlu0.b32.end [16/16] %v7436, 128
    %v7538 = vpop.trf.xlu0
    %v7539 = vpop.trf.xlu0
    %v7540 = vpop.trf.xlu0
    %v7541 = vpop.trf.xlu0
    %v7542 = vpop.trf.xlu0
    %v7543 = vpop.trf.xlu0
    %v7544 = vpop.trf.xlu0
    %v7545 = vpop.trf.xlu0
    %v7546 = vpop.trf.xlu0
    %v7547 = vpop.trf.xlu0
    %v7548 = vpop.trf.xlu0
    %v7549 = vpop.trf.xlu0
    %v7550 = vpop.trf.xlu0
    %v7551 = vpop.trf.xlu0
    %v7552 = vpop.trf.xlu0
    %v7553 = vpop.trf.xlu0
    %7554 = vxpose.xlu0.b32.start [1/16] %v7437, 128
    %7555 = vxpose.xlu0.b32.cont [2/16] %v7438, 128
    %7556 = vxpose.xlu0.b32.cont [3/16] %v7439, 128
    %7557 = vxpose.xlu0.b32.cont [4/16] %v7440, 128
    %7558 = vxpose.xlu0.b32.cont [5/16] %v7441, 128
    %7559 = vxpose.xlu0.b32.cont [6/16] %v7442, 128
    %7560 = vxpose.xlu0.b32.cont [7/16] %v7443, 128
    %7561 = vxpose.xlu0.b32.cont [8/16] %v7444, 128
    %7562 = vxpose.xlu0.b32.cont [9/16] %v7445, 128
    %7563 = vxpose.xlu0.b32.cont [10/16] %v7446, 128
    %7564 = vxpose.xlu0.b32.cont [11/16] %v7447, 128
    %7565 = vxpose.xlu0.b32.cont [12/16] %v7448, 128
    %7566 = vxpose.xlu0.b32.cont [13/16] %v7449, 128
    %7567 = vxpose.xlu0.b32.cont [14/16] %v7450, 128
    %7568 = vxpose.xlu0.b32.cont [15/16] %v7451, 128
    %7569 = vxpose.xlu0.b32.end [16/16] %v7452, 128
    %v7570 = vpop.trf.xlu0
    %v7571 = vpop.trf.xlu0
    %v7572 = vpop.trf.xlu0
    %v7573 = vpop.trf.xlu0
    %v7574 = vpop.trf.xlu0
    %v7575 = vpop.trf.xlu0
    %v7576 = vpop.trf.xlu0
    %v7577 = vpop.trf.xlu0
    %v7578 = vpop.trf.xlu0
    %v7579 = vpop.trf.xlu0
    %v7580 = vpop.trf.xlu0
    %v7581 = vpop.trf.xlu0
    %v7582 = vpop.trf.xlu0
    %v7583 = vpop.trf.xlu0
    %v7584 = vpop.trf.xlu0
    %v7585 = vpop.trf.xlu0
    %v7588 = vcombine.low %v7538, %v7570
    %s7590 = scalar_lea.vmem [#allocation4], 8
    %7591 = vst [vmem:[%s7590] sm:$0xff] %v7588
    // Predicated region
    $region22: #{tpu_custom_call.1} parent=1 // pred_check
      _
    $region23: #{tpu_custom_call.1} parent=1 // pred_check_branch
      %7593 = sbr.rel (0) target = $region25
    $region24: #{tpu_custom_call.1} parent=1 // pred_region
      %s7595 = ssub.s32 256, 256
      %7596 = vsyncadd [#allocation5], %s7595
      %s7597 = sshll.u32 [#allocation4], 4
      %s7598 = int_to_ptr.vmem [resolvable:$true] %s7597
      %7603 = dma.vmem_to_hbm [thread:$0]  %s7598, 256, %s5, [#allocation5], 128, 128, 8
    $region25: #{tpu_custom_call.1} parent=1 // pred_fallthru
      _
    // Predicated region
    $region26: #{tpu_custom_call.1} parent=1 // pred_check
      _
    $region27: #{tpu_custom_call.1} parent=1 // pred_check_branch
      %7605 = sbr.rel (0) target = $region29
    $region28: #{tpu_custom_call.1} parent=1 // pred_region
      %7606 = dma.done [#allocation5], 256
    $region29: #{tpu_custom_call.1} parent=1 // pred_fallthru
      _
    %7607 = vsyncpa [#allocation5], 1

</llo_original>
